<compile_context>
chip_gen: v6e
topology: v6e:2x2x1
jax: 0.10.0
libtpu: 0.0.40
codegen_flags: <defaults>
</compile_context>

<pallas_src>
import jax
import jax.numpy as jnp
from jax.experimental import pallas as pl
from jax.experimental.pallas import tpu as pltpu


# ----------------------------------------------------------------------------
# Pallas kernels
# ----------------------------------------------------------------------------
def _cdan_fused_kernel(x_ref, fw_ref, fb_ref, bw_ref, bb_ref, cw_ref, cb_ref,
                       d1b_ref, d2b_ref, d3w_ref, d3b_ref,
                       d1w_hbm, d2w_hbm,
                       y_ref, dom_ref,
                       op_vmem, wbuf, sem):
    """Entire CDAN forward fused into one kernel.

    d1w_hbm / d2w_hbm are raw HBM refs (memory_space=pl.ANY, bf16).  Their rows
    are streamed in CH-sized chunks through the 2-slot VMEM buffer `wbuf`
    (manual double-buffered DMA): disc1 chunks first, then disc2 chunks, so the
    next chunk's transfer always overlaps the current chunk's matmul.
    """
    K1, hidden = d1w_hbm.shape          # disc1: (C*D, hidden)
    K2 = d2w_hbm.shape[0]               # disc2: (hidden, hidden)
    CH = wbuf.shape[1]                  # chunk rows
    n1 = K1 // CH
    n2 = K2 // CH
    n_total = n1 + n2
    B = x_ref.shape[0]
    D = bw_ref.shape[1]                 # bottleneck_dim
    C = cw_ref.shape[1]                 # num_classes

    def chunk_copy(j, slot):            # j is a static Python int (unrolled)
        if j < n1:
            src = d1w_hbm.at[pl.ds(j * CH, CH), :]
        else:
            src = d2w_hbm.at[pl.ds((j - n1) * CH, CH), :]
        return pltpu.make_async_copy(src, wbuf.at[slot], sem.at[slot])

    # Prime the weight stream: chunk 0 (disc1) overlaps the upstream matmuls.
    chunk_copy(0, 0).start()

    x = x_ref[...]                                           # (B, in_flat) f32

    # featurizer (synthetic): Linear + ReLU
    h = jnp.dot(x, fw_ref[...], preferred_element_type=jnp.float32) + fb_ref[...]
    h = jnp.maximum(h, 0.0)

    # bottleneck
    f = jnp.dot(h, bw_ref[...], preferred_element_type=jnp.float32) + bb_ref[...]

    # classifier
    y = jnp.dot(f, cw_ref[...], preferred_element_type=jnp.float32) + cb_ref[...]
    y_ref[...] = y.astype(y_ref.dtype)

    # softmax(y_pred, dim=1).detach()  (detach is a no-op in the forward pass)
    m = jnp.max(y, axis=1, keepdims=True)
    e = jnp.exp(y - m)
    p = e * pl.reciprocal(jnp.sum(e, axis=1, keepdims=True), approx=True)

    # CDAN conditioning map: op_out[b, c*D + d] = p[b, c] * f[b, d].
    # Built DIRECTLY in (B, C*D) layout by column-slab writes (no (B,C,D)
    # reshape -> no VMEM relayout).  Scaling in f32, then cast to bf16 for the
    # MXU.  gradient_reverse_layer(op_out, coeff) is identity in the forward.
    for c in range(C):                                       # small, static
        op_vmem[:, c * D:(c + 1) * D] = (p[:, c:c + 1] * f).astype(op_vmem.dtype)

    # Stream the big discriminator weights; disc1 first so its (single,
    # K = C*D) matmul starts as early as possible, disc2 chunks follow.
    acc1 = jnp.zeros((B, hidden), jnp.float32)
    acc2 = jnp.zeros((B, hidden), jnp.float32)
    d1_bf = None
    for j in range(n_total):                                 # static unroll
        slot = j % 2
        chunk_copy(j, slot).wait()
        if j + 1 < n_total:
            chunk_copy(j + 1, 1 - slot).start()              # prefetch next chunk
        if j < n1:
            acc1 = acc1 + jnp.dot(op_vmem[:, j * CH:(j + 1) * CH], wbuf[slot],
                                  preferred_element_type=jnp.float32)
            if j == n1 - 1:
                d1 = jnp.maximum(acc1 + d1b_ref[...], 0.0)
                # TODO(synk): Dropout(0.5) after ReLU is train-only; eval = identity.
                d1_bf = d1.astype(jnp.bfloat16)
        else:
            jj = j - n1
            acc2 = acc2 + jnp.dot(d1_bf[:, jj * CH:(jj + 1) * CH], wbuf[slot],
                                  preferred_element_type=jnp.float32)

    d2 = jnp.maximum(acc2 + d2b_ref[...], 0.0)
    # TODO(synk): second Dropout(0.5) is also train-only; eval = identity.
    dom = jnp.dot(d2, d3w_ref[...], preferred_element_type=jnp.float32) + d3b_ref[...]
    dom_ref[...] = dom.astype(dom_ref.dtype)


def _cls_only_kernel(x_ref, fw_ref, fb_ref, bw_ref, bb_ref, cw_ref, cb_ref, y_ref):
    """domain_classifier=False path: featurizer -> bottleneck -> classifier."""
    h = jnp.dot(x_ref[...], fw_ref[...], preferred_element_type=jnp.float32) + fb_ref[...]
    h = jnp.maximum(h, 0.0)
    f = jnp.dot(h, bw_ref[...], preferred_element_type=jnp.float32) + bb_ref[...]
    y = jnp.dot(f, cw_ref[...], preferred_element_type=jnp.float32) + cb_ref[...]
    y_ref[...] = y.astype(y_ref.dtype)


def _vmem2d(shape):
    """Full-array VMEM block for a 2-D operand under a grid=(1,) call."""
    return pl.BlockSpec(shape, lambda i: (0, 0))


_CPARAMS = pltpu.CompilerParams(dimension_semantics=("arbitrary",))


# ----------------------------------------------------------------------------
# Model: parameters + forward
# ----------------------------------------------------------------------------
def init_params(key, *, in_flat, d_out, bottleneck_dim, num_classes,
                n_domains, hidden_size):
    ks = jax.random.split(key, 6)

    def lin(k, fan_in, fan_out, dtype=jnp.float32):
        w = (0.02 * jax.random.normal(k, (fan_in, fan_out), jnp.float32)).astype(dtype)
        b = jnp.zeros((fan_out,), jnp.float32)
        return w, b

    return {
        # synthetic featurizer: flatten NCHW -> Linear -> ReLU, d_out features
        "feat": lin(ks[0], in_flat, d_out),
        # bottleneck: Linear(featurizer.d_out, bottleneck_dim)
        "bottleneck": lin(ks[1], d_out, bottleneck_dim),
        # classifier: Linear(bottleneck_dim, num_classes)
        "classifier": lin(ks[2], bottleneck_dim, num_classes),
        # DomainDiscriminator(bottleneck_dim * num_classes, n_domains,
        #                     hidden_size, batch_norm=False)
        # Big discriminator weights stored bf16 ONCE at init (no per-call cast).
        "disc1": lin(ks[3], bottleneck_dim * num_classes, hidden_size, jnp.bfloat16),
        "disc2": lin(ks[4], hidden_size, hidden_size, jnp.bfloat16),
        "disc3": lin(ks[5], hidden_size, n_domains),
    }


def cdan_forward(params, x, coeff=1.0, domain_classifier=True):
    del coeff  # gradient-reverse coeff only affects the backward pass
    B = x.shape[0]
    # glue: flatten NCHW row-major (same as torch .view(B, -1))
    x_flat = x.reshape(B, -1).astype(jnp.float32)

    fw, fb = params["feat"]
    bw, bb = params["bottleneck"]
    cw, cb = params["classifier"]
    d1w, d1b = params["disc1"]
    d2w, d2b = params["disc2"]
    d3w, d3b = params["disc3"]

    in_flat, d_out = fw.shape
    bot = bw.shape[1]
    num_classes = cw.shape[1]
    hidden = d1w.shape[1]
    n_domains = d3w.shape[1]

    fb2, bb2, cb2 = fb.reshape(1, -1), bb.reshape(1, -1), cb.reshape(1, -1)
    d1b2, d2b2, d3b2 = d1b.reshape(1, -1), d2b.reshape(1, -1), d3b.reshape(1, -1)

    if not domain_classifier:
        return pl.pallas_call(
            _cls_only_kernel,
            out_shape=jax.ShapeDtypeStruct((B, num_classes), jnp.float32),
            grid=(1,),
            in_specs=[
                _vmem2d((B, in_flat)),
                _vmem2d((in_flat, d_out)), _vmem2d((1, d_out)),
                _vmem2d((d_out, bot)), _vmem2d((1, bot)),
                _vmem2d((bot, num_classes)), _vmem2d((1, num_classes)),
            ],
            out_specs=_vmem2d((B, num_classes)),
            compiler_params=_CPARAMS,
        )(x_flat, fw, fb2, bw, bb2, cw, cb2)

    # Chunk rows for streaming the disc1/disc2 weights; must divide both
    # K1 = num_classes*bot and K2 = hidden.  Two in-flight chunks stay tiny
    # relative to VMEM, so this scales to production dims (and v7x's 64 MiB).
    K1, K2 = num_classes * bot, hidden
    ch = 256
    while (K1 % ch) or (K2 % ch):
        ch //= 2
    assert ch >= 8, "chunk size degenerated; pick dims with a common factor >= 8"

    fused = pl.pallas_call(
        _cdan_fused_kernel,
        out_shape=(jax.ShapeDtypeStruct((B, num_classes), jnp.float32),
                   jax.ShapeDtypeStruct((B, n_domains), jnp.float32)),
        grid=(1,),
        in_specs=[
            _vmem2d((B, in_flat)),                 # x
            _vmem2d((in_flat, d_out)),             # feat W
            _vmem2d((1, d_out)),                   # feat b
            _vmem2d((d_out, bot)),                 # bottleneck W
            _vmem2d((1, bot)),                     # bottleneck b
            _vmem2d((bot, num_classes)),           # classifier W
            _vmem2d((1, num_classes)),             # classifier b
            _vmem2d((1, hidden)),                  # disc1 b
            _vmem2d((1, hidden)),                  # disc2 b
            _vmem2d((hidden, n_domains)),          # disc3 W
            _vmem2d((1, n_domains)),               # disc3 b
            pl.BlockSpec(memory_space=pl.ANY),     # disc1 W (HBM, streamed DMA)
            pl.BlockSpec(memory_space=pl.ANY),     # disc2 W (HBM, streamed DMA)
        ],
        out_specs=(_vmem2d((B, num_classes)), _vmem2d((B, n_domains))),
        scratch_shapes=[
            pltpu.VMEM((B, K1), jnp.bfloat16),          # op_out slab (B, C*D)
            pltpu.VMEM((2, ch, hidden), jnp.bfloat16),  # double-buffered W chunks
            pltpu.SemaphoreType.DMA((2,)),
        ],
        compiler_params=_CPARAMS,
    )
    y_pred, domains_pred = fused(
        x_flat, fw, fb2, bw, bb2, cw, cb2, d1b2, d2b2, d3w, d3b2, d1w, d2w)
    return y_pred, domains_pred


# ----------------------------------------------------------------------------
# Reference (plain JAX, f32 compute on the same stored weights)
# ----------------------------------------------------------------------------
def cdan_forward_ref(params, x):
    B = x.shape[0]
    x_flat = x.reshape(B, -1).astype(jnp.float32)
    h = jnp.maximum(x_flat @ params["feat"][0] + params["feat"][1], 0.0)
    features = h @ params["bottleneck"][0] + params["bottleneck"][1]
    y_pred = features @ params["classifier"][0] + params["classifier"][1]
    p = jax.nn.softmax(y_pred, axis=1)
    op = (p[:, :, None] * features[:, None, :]).reshape(B, -1)
    d = jnp.maximum(op @ params["disc1"][0].astype(jnp.float32) + params["disc1"][1], 0.0)
    d = jnp.maximum(d @ params["disc2"][0].astype(jnp.float32) + params["disc2"][1], 0.0)
    domains_pred = d @ params["disc3"][0] + params["disc3"][1]
    return y_pred, domains_pred


# ----------------------------------------------------------------------------
if __name__ == "__main__":
    # Small, module-consistent shapes.
    B, C_in, H, W = 8, 4, 16, 16        # input images, NCHW
    d_out = 64                          # featurizer.d_out
    bottleneck_dim = 128
    num_classes = 8
    n_domains = 4
    hidden_size = 1024                  # DomainDiscriminator default

    key = jax.random.PRNGKey(0)
    k_x, k_p = jax.random.split(key)
    x = jax.random.normal(k_x, (B, C_in, H, W), jnp.float32)
    params = init_params(
        k_p,
        in_flat=C_in * H * W,
        d_out=d_out,
        bottleneck_dim=bottleneck_dim,
        num_classes=num_classes,
        n_domains=n_domains,
        hidden_size=hidden_size,
    )

    y_pred, domains_pred = jax.block_until_ready(
        cdan_forward(params, x, coeff=1.0, domain_classifier=True)
    )
    assert y_pred.shape == (B, num_classes)
    assert domains_pred.shape == (B, n_domains)

    # classifier-only path (domain_classifier=False) must agree with y_pred
    y_only = jax.block_until_ready(
        cdan_forward(params, x, domain_classifier=False))
    assert jnp.allclose(y_only, y_pred, atol=1e-5, rtol=1e-5)

    y_ref, d_ref = cdan_forward_ref(params, x)
    # y_pred path is pure f32 in the kernel.
    assert jnp.allclose(y_pred, y_ref, atol=1e-4, rtol=1e-4)
    # domains_pred intentionally uses bf16 MXU operands + approx reciprocal.
    assert jnp.allclose(domains_pred, d_ref, atol=5e-3, rtol=5e-2)

    print("KERNEL_OK")
</pallas_src>

<mosaic_0001>
module attributes {stable_mosaic.version = 11 : i64} {
  func.func @_cdan_fused_kernel(%arg0: i32, %arg1: memref<8x1024xf32, #tpu.memory_space<vmem>>, %arg2: memref<1024x64xf32, #tpu.memory_space<vmem>>, %arg3: memref<1x64xf32, #tpu.memory_space<vmem>>, %arg4: memref<64x128xf32, #tpu.memory_space<vmem>>, %arg5: memref<1x128xf32, #tpu.memory_space<vmem>>, %arg6: memref<128x8xf32, #tpu.memory_space<vmem>>, %arg7: memref<1x8xf32, #tpu.memory_space<vmem>>, %arg8: memref<1x1024xf32, #tpu.memory_space<vmem>>, %arg9: memref<1x1024xf32, #tpu.memory_space<vmem>>, %arg10: memref<1024x4xf32, #tpu.memory_space<vmem>>, %arg11: memref<1x4xf32, #tpu.memory_space<vmem>>, %arg12: memref<1024x1024xbf16, #tpu.memory_space<any>>, %arg13: memref<1024x1024xbf16, #tpu.memory_space<any>>, %arg14: memref<8x8xf32, #tpu.memory_space<vmem>>, %arg15: memref<8x4xf32, #tpu.memory_space<vmem>>, %arg16: memref<8x1024xbf16, #tpu.memory_space<vmem>>, %arg17: memref<2x256x1024xbf16, #tpu.memory_space<vmem>>, %arg18: memref<2x!tpu.dma_semaphore, #tpu.memory_space<semaphore_mem>>) attributes {dimension_semantics = [#tpu.dimension_semantics<arbitrary>], iteration_bounds = array<i64: 1>, scalar_prefetch = 0 : i64, scratch_operands = 3 : i64, tpu.core_type = #tpu.core_type<tc>, window_params = [{pipeline_mode = #tpu.pipeline_mode<synchronous>, transform_indices = @transform_0, window_bounds = array<i64: 8, 1024>}, {pipeline_mode = #tpu.pipeline_mode<synchronous>, transform_indices = @transform_1, window_bounds = array<i64: 1024, 64>}, {pipeline_mode = #tpu.pipeline_mode<synchronous>, transform_indices = @transform_2, window_bounds = array<i64: 1, 64>}, {pipeline_mode = #tpu.pipeline_mode<synchronous>, transform_indices = @transform_3, window_bounds = array<i64: 64, 128>}, {pipeline_mode = #tpu.pipeline_mode<synchronous>, transform_indices = @transform_4, window_bounds = array<i64: 1, 128>}, {pipeline_mode = #tpu.pipeline_mode<synchronous>, transform_indices = @transform_5, window_bounds = array<i64: 128, 8>}, {pipeline_mode = #tpu.pipeline_mode<synchronous>, transform_indices = @transform_6, window_bounds = array<i64: 1, 8>}, {pipeline_mode = #tpu.pipeline_mode<synchronous>, transform_indices = @transform_7, window_bounds = array<i64: 1, 1024>}, {pipeline_mode = #tpu.pipeline_mode<synchronous>, transform_indices = @transform_8, window_bounds = array<i64: 1, 1024>}, {pipeline_mode = #tpu.pipeline_mode<synchronous>, transform_indices = @transform_9, window_bounds = array<i64: 1024, 4>}, {pipeline_mode = #tpu.pipeline_mode<synchronous>, transform_indices = @transform_10, window_bounds = array<i64: 1, 4>}, {}, {}, {pipeline_mode = #tpu.pipeline_mode<synchronous>, transform_indices = @transform_13, window_bounds = array<i64: 8, 8>}, {pipeline_mode = #tpu.pipeline_mode<synchronous>, transform_indices = @transform_14, window_bounds = array<i64: 8, 4>}]} {
    %c0_i32 = arith.constant 0 : i32
    %c0_i32_0 = arith.constant 0 : i32
    %c0_i32_1 = arith.constant 0 : i32
    %c0_i32_2 = arith.constant 0 : i32
    %0 = tpu.memref_slice %arg12[%c0_i32_1, %c0_i32_2] : memref<1024x1024xbf16, #tpu.memory_space<any>> -> memref<256x1024xbf16, #tpu.memory_space<any>>
    %c0_i32_3 = arith.constant 0 : i32
    %c0_i32_4 = arith.constant 0 : i32
    %1 = tpu.memref_slice %arg17[%c0_i32, %c0_i32_3, %c0_i32_4] : memref<2x256x1024xbf16, #tpu.memory_space<vmem>> -> memref<1x256x1024xbf16, #tpu.memory_space<vmem>>
    %2 = tpu.memref_squeeze %1 : memref<1x256x1024xbf16, #tpu.memory_space<vmem>> -> memref<256x1024xbf16, #tpu.memory_space<vmem>>
    %3 = tpu.memref_slice %arg18[%c0_i32_0] : memref<2x!tpu.dma_semaphore, #tpu.memory_space<semaphore_mem>> -> memref<1x!tpu.dma_semaphore, #tpu.memory_space<semaphore_mem>>
    %4 = tpu.memref_squeeze %3 : memref<1x!tpu.dma_semaphore, #tpu.memory_space<semaphore_mem>> -> memref<!tpu.dma_semaphore, #tpu.memory_space<semaphore_mem>>
    tpu.enqueue_dma source(%0 : memref<256x1024xbf16, #tpu.memory_space<any>>) target(%2 : memref<256x1024xbf16, #tpu.memory_space<vmem>>) target_semaphore(%4 : memref<!tpu.dma_semaphore, #tpu.memory_space<semaphore_mem>>)
    %c0 = arith.constant 0 : index
    %c0_5 = arith.constant 0 : index
    %5 = vector.load %arg1[%c0, %c0_5] : memref<8x1024xf32, #tpu.memory_space<vmem>>, vector<8x1024xf32>
    %c0_6 = arith.constant 0 : index
    %c0_7 = arith.constant 0 : index
    %6 = vector.load %arg2[%c0_6, %c0_7] : memref<1024x64xf32, #tpu.memory_space<vmem>>, vector<1024x64xf32>
    %cst = arith.constant dense<0.000000e+00> : vector<8x64xf32>
    %7 = tpu.matmul %5, %6, %cst {dimension_numbers = #tpu.dot_dimension_numbers<[1], [0], [0], [1], [0, 0, 1, 1], [], []>} : vector<8x1024xf32>, vector<1024x64xf32>, vector<8x64xf32> -> vector<8x64xf32>
    %c0_8 = arith.constant 0 : index
    %c0_9 = arith.constant 0 : index
    %8 = vector.load %arg3[%c0_8, %c0_9] : memref<1x64xf32, #tpu.memory_space<vmem>>, vector<1x64xf32>
    %9 = vector.broadcast %8 : vector<1x64xf32> to vector<8x64xf32>
    %10 = arith.addf %7, %9 : vector<8x64xf32>
    %cst_10 = arith.constant 0.000000e+00 : f32
    %11 = vector.broadcast %cst_10 : f32 to vector<8x64xf32>
    %12 = arith.maximumf %10, %11 : vector<8x64xf32>
    %c0_11 = arith.constant 0 : index
    %c0_12 = arith.constant 0 : index
    %13 = vector.load %arg4[%c0_11, %c0_12] : memref<64x128xf32, #tpu.memory_space<vmem>>, vector<64x128xf32>
    %cst_13 = arith.constant dense<0.000000e+00> : vector<8x128xf32>
    %14 = tpu.matmul %12, %13, %cst_13 {dimension_numbers = #tpu.dot_dimension_numbers<[1], [0], [0], [1], [0, 0, 1, 1], [], []>} : vector<8x64xf32>, vector<64x128xf32>, vector<8x128xf32> -> vector<8x128xf32>
    %c0_14 = arith.constant 0 : index
    %c0_15 = arith.constant 0 : index
    %15 = vector.load %arg5[%c0_14, %c0_15] : memref<1x128xf32, #tpu.memory_space<vmem>>, vector<1x128xf32>
    %16 = vector.broadcast %15 : vector<1x128xf32> to vector<8x128xf32>
    %17 = arith.addf %14, %16 : vector<8x128xf32>
    %c0_16 = arith.constant 0 : index
    %c0_17 = arith.constant 0 : index
    %18 = vector.load %arg6[%c0_16, %c0_17] : memref<128x8xf32, #tpu.memory_space<vmem>>, vector<128x8xf32>
    %cst_18 = arith.constant dense<0.000000e+00> : vector<8x8xf32>
    %19 = tpu.matmul %17, %18, %cst_18 {dimension_numbers = #tpu.dot_dimension_numbers<[1], [0], [0], [1], [0, 0, 1, 1], [], []>} : vector<8x128xf32>, vector<128x8xf32>, vector<8x8xf32> -> vector<8x8xf32>
    %c0_19 = arith.constant 0 : index
    %c0_20 = arith.constant 0 : index
    %20 = vector.load %arg7[%c0_19, %c0_20] : memref<1x8xf32, #tpu.memory_space<vmem>>, vector<1x8xf32>
    %21 = vector.broadcast %20 : vector<1x8xf32> to vector<8x8xf32>
    %22 = arith.addf %19, %21 : vector<8x8xf32>
    %c0_21 = arith.constant 0 : index
    %c0_22 = arith.constant 0 : index
    %23 = vector.load %arg14[%c0_21, %c0_22] : memref<8x8xf32, #tpu.memory_space<vmem>>, vector<8x8xf32>
    tpu.vector_store %arg14[%c0_21, %c0_22], %22 {strides = array<i32>} : memref<8x8xf32, #tpu.memory_space<vmem>>, vector<8x8xf32>,
    %cst_23 = arith.constant dense<0xFF800000> : vector<8xf32>
    %24 = vector.multi_reduction <maximumf>, %22, %cst_23 [1] : vector<8x8xf32> to vector<8xf32>
    %25 = vector.shape_cast %24 : vector<8xf32> to vector<8x1xf32>
    %26 = vector.broadcast %25 : vector<8x1xf32> to vector<8x8xf32>
    %27 = arith.subf %22, %26 : vector<8x8xf32>
    %28 = math.exp %27 : vector<8x8xf32>
    %cst_24 = arith.constant dense<0.000000e+00> : vector<8xf32>
    %29 = vector.multi_reduction <add>, %28, %cst_24 [1] : vector<8x8xf32> to vector<8xf32>
    %30 = vector.shape_cast %29 : vector<8xf32> to vector<8x1xf32>
    %31 = tpu.reciprocal %30 {approx = true} : vector<8x1xf32> -> vector<8x1xf32>
    %32 = vector.broadcast %31 : vector<8x1xf32> to vector<8x8xf32>
    %33 = arith.mulf %28, %32 : vector<8x8xf32>
    %34 = vector.extract_strided_slice %33 {offsets = [0, 0], sizes = [8, 1], strides = [1, 1]} : vector<8x8xf32> to vector<8x1xf32>
    %35 = vector.broadcast %34 : vector<8x1xf32> to vector<8x128xf32>
    %36 = arith.mulf %35, %17 : vector<8x128xf32>
    %37 = arith.truncf %36 : vector<8x128xf32> to vector<8x128xbf16>
    %c0_25 = arith.constant 0 : index
    %c0_26 = arith.constant 0 : index
    %38 = vector.load %arg16[%c0_25, %c0_26] : memref<8x1024xbf16, #tpu.memory_space<vmem>>, vector<8x128xbf16>
    tpu.vector_store %arg16[%c0_25, %c0_26], %37 {strides = array<i32>} : memref<8x1024xbf16, #tpu.memory_space<vmem>>, vector<8x128xbf16>,
    %39 = vector.extract_strided_slice %33 {offsets = [0, 1], sizes = [8, 1], strides = [1, 1]} : vector<8x8xf32> to vector<8x1xf32>
    %40 = vector.broadcast %39 : vector<8x1xf32> to vector<8x128xf32>
    %41 = arith.mulf %40, %17 : vector<8x128xf32>
    %42 = arith.truncf %41 : vector<8x128xf32> to vector<8x128xbf16>
    %c0_27 = arith.constant 0 : index
    %c128 = arith.constant 128 : index
    %43 = vector.load %arg16[%c0_27, %c128] : memref<8x1024xbf16, #tpu.memory_space<vmem>>, vector<8x128xbf16>
    tpu.vector_store %arg16[%c0_27, %c128], %42 {strides = array<i32>} : memref<8x1024xbf16, #tpu.memory_space<vmem>>, vector<8x128xbf16>,
    %44 = vector.extract_strided_slice %33 {offsets = [0, 2], sizes = [8, 1], strides = [1, 1]} : vector<8x8xf32> to vector<8x1xf32>
    %45 = vector.broadcast %44 : vector<8x1xf32> to vector<8x128xf32>
    %46 = arith.mulf %45, %17 : vector<8x128xf32>
    %47 = arith.truncf %46 : vector<8x128xf32> to vector<8x128xbf16>
    %c0_28 = arith.constant 0 : index
    %c256 = arith.constant 256 : index
    %48 = vector.load %arg16[%c0_28, %c256] : memref<8x1024xbf16, #tpu.memory_space<vmem>>, vector<8x128xbf16>
    tpu.vector_store %arg16[%c0_28, %c256], %47 {strides = array<i32>} : memref<8x1024xbf16, #tpu.memory_space<vmem>>, vector<8x128xbf16>,
    %49 = vector.extract_strided_slice %33 {offsets = [0, 3], sizes = [8, 1], strides = [1, 1]} : vector<8x8xf32> to vector<8x1xf32>
    %50 = vector.broadcast %49 : vector<8x1xf32> to vector<8x128xf32>
    %51 = arith.mulf %50, %17 : vector<8x128xf32>
    %52 = arith.truncf %51 : vector<8x128xf32> to vector<8x128xbf16>
    %c0_29 = arith.constant 0 : index
    %c384 = arith.constant 384 : index
    %53 = vector.load %arg16[%c0_29, %c384] : memref<8x1024xbf16, #tpu.memory_space<vmem>>, vector<8x128xbf16>
    tpu.vector_store %arg16[%c0_29, %c384], %52 {strides = array<i32>} : memref<8x1024xbf16, #tpu.memory_space<vmem>>, vector<8x128xbf16>,
    %54 = vector.extract_strided_slice %33 {offsets = [0, 4], sizes = [8, 1], strides = [1, 1]} : vector<8x8xf32> to vector<8x1xf32>
    %55 = vector.broadcast %54 : vector<8x1xf32> to vector<8x128xf32>
    %56 = arith.mulf %55, %17 : vector<8x128xf32>
    %57 = arith.truncf %56 : vector<8x128xf32> to vector<8x128xbf16>
    %c0_30 = arith.constant 0 : index
    %c512 = arith.constant 512 : index
    %58 = vector.load %arg16[%c0_30, %c512] : memref<8x1024xbf16, #tpu.memory_space<vmem>>, vector<8x128xbf16>
    tpu.vector_store %arg16[%c0_30, %c512], %57 {strides = array<i32>} : memref<8x1024xbf16, #tpu.memory_space<vmem>>, vector<8x128xbf16>,
    %59 = vector.extract_strided_slice %33 {offsets = [0, 5], sizes = [8, 1], strides = [1, 1]} : vector<8x8xf32> to vector<8x1xf32>
    %60 = vector.broadcast %59 : vector<8x1xf32> to vector<8x128xf32>
    %61 = arith.mulf %60, %17 : vector<8x128xf32>
    %62 = arith.truncf %61 : vector<8x128xf32> to vector<8x128xbf16>
    %c0_31 = arith.constant 0 : index
    %c640 = arith.constant 640 : index
    %63 = vector.load %arg16[%c0_31, %c640] : memref<8x1024xbf16, #tpu.memory_space<vmem>>, vector<8x128xbf16>
    tpu.vector_store %arg16[%c0_31, %c640], %62 {strides = array<i32>} : memref<8x1024xbf16, #tpu.memory_space<vmem>>, vector<8x128xbf16>,
    %64 = vector.extract_strided_slice %33 {offsets = [0, 6], sizes = [8, 1], strides = [1, 1]} : vector<8x8xf32> to vector<8x1xf32>
    %65 = vector.broadcast %64 : vector<8x1xf32> to vector<8x128xf32>
    %66 = arith.mulf %65, %17 : vector<8x128xf32>
    %67 = arith.truncf %66 : vector<8x128xf32> to vector<8x128xbf16>
    %c0_32 = arith.constant 0 : index
    %c768 = arith.constant 768 : index
    %68 = vector.load %arg16[%c0_32, %c768] : memref<8x1024xbf16, #tpu.memory_space<vmem>>, vector<8x128xbf16>
    tpu.vector_store %arg16[%c0_32, %c768], %67 {strides = array<i32>} : memref<8x1024xbf16, #tpu.memory_space<vmem>>, vector<8x128xbf16>,
    %69 = vector.extract_strided_slice %33 {offsets = [0, 7], sizes = [8, 1], strides = [1, 1]} : vector<8x8xf32> to vector<8x1xf32>
    %70 = vector.broadcast %69 : vector<8x1xf32> to vector<8x128xf32>
    %71 = arith.mulf %70, %17 : vector<8x128xf32>
    %72 = arith.truncf %71 : vector<8x128xf32> to vector<8x128xbf16>
    %c0_33 = arith.constant 0 : index
    %c896 = arith.constant 896 : index
    %73 = vector.load %arg16[%c0_33, %c896] : memref<8x1024xbf16, #tpu.memory_space<vmem>>, vector<8x128xbf16>
    tpu.vector_store %arg16[%c0_33, %c896], %72 {strides = array<i32>} : memref<8x1024xbf16, #tpu.memory_space<vmem>>, vector<8x128xbf16>,
    %cst_34 = arith.constant 0.000000e+00 : f32
    %74 = vector.broadcast %cst_34 : f32 to vector<8x1024xf32>
    %cst_35 = arith.constant 0.000000e+00 : f32
    %75 = vector.broadcast %cst_35 : f32 to vector<8x1024xf32>
    %c0_i32_36 = arith.constant 0 : i32
    %c0_i32_37 = arith.constant 0 : i32
    %c0_i32_38 = arith.constant 0 : i32
    %c0_i32_39 = arith.constant 0 : i32
    %76 = tpu.memref_slice %arg12[%c0_i32_38, %c0_i32_39] : memref<1024x1024xbf16, #tpu.memory_space<any>> -> memref<256x1024xbf16, #tpu.memory_space<any>>
    %c0_i32_40 = arith.constant 0 : i32
    %c0_i32_41 = arith.constant 0 : i32
    %77 = tpu.memref_slice %arg17[%c0_i32_36, %c0_i32_40, %c0_i32_41] : memref<2x256x1024xbf16, #tpu.memory_space<vmem>> -> memref<1x256x1024xbf16, #tpu.memory_space<vmem>>
    %78 = tpu.memref_squeeze %77 : memref<1x256x1024xbf16, #tpu.memory_space<vmem>> -> memref<256x1024xbf16, #tpu.memory_space<vmem>>
    %79 = tpu.memref_slice %arg18[%c0_i32_37] : memref<2x!tpu.dma_semaphore, #tpu.memory_space<semaphore_mem>> -> memref<1x!tpu.dma_semaphore, #tpu.memory_space<semaphore_mem>>
    %80 = tpu.memref_squeeze %79 : memref<1x!tpu.dma_semaphore, #tpu.memory_space<semaphore_mem>> -> memref<!tpu.dma_semaphore, #tpu.memory_space<semaphore_mem>>
    tpu.wait_dma2 semaphore(%80 : memref<!tpu.dma_semaphore, #tpu.memory_space<semaphore_mem>>) src(%76 : memref<256x1024xbf16, #tpu.memory_space<any>>) dst(%78 : memref<256x1024xbf16, #tpu.memory_space<vmem>>)
    %c1_i32 = arith.constant 1 : i32
    %c1_i32_42 = arith.constant 1 : i32
    %c256_i32 = arith.constant 256 : i32
    %c0_i32_43 = arith.constant 0 : i32
    %81 = tpu.memref_slice %arg12[%c256_i32, %c0_i32_43] : memref<1024x1024xbf16, #tpu.memory_space<any>> -> memref<256x1024xbf16, #tpu.memory_space<any>>
    %c0_i32_44 = arith.constant 0 : i32
    %c0_i32_45 = arith.constant 0 : i32
    %82 = tpu.memref_slice %arg17[%c1_i32, %c0_i32_44, %c0_i32_45] : memref<2x256x1024xbf16, #tpu.memory_space<vmem>> -> memref<1x256x1024xbf16, #tpu.memory_space<vmem>>
    %83 = tpu.memref_squeeze %82 : memref<1x256x1024xbf16, #tpu.memory_space<vmem>> -> memref<256x1024xbf16, #tpu.memory_space<vmem>>
    %84 = tpu.memref_slice %arg18[%c1_i32_42] : memref<2x!tpu.dma_semaphore, #tpu.memory_space<semaphore_mem>> -> memref<1x!tpu.dma_semaphore, #tpu.memory_space<semaphore_mem>>
    %85 = tpu.memref_squeeze %84 : memref<1x!tpu.dma_semaphore, #tpu.memory_space<semaphore_mem>> -> memref<!tpu.dma_semaphore, #tpu.memory_space<semaphore_mem>>
    tpu.enqueue_dma source(%81 : memref<256x1024xbf16, #tpu.memory_space<any>>) target(%83 : memref<256x1024xbf16, #tpu.memory_space<vmem>>) target_semaphore(%85 : memref<!tpu.dma_semaphore, #tpu.memory_space<semaphore_mem>>)
    %c0_46 = arith.constant 0 : index
    %c0_47 = arith.constant 0 : index
    %86 = vector.load %arg16[%c0_46, %c0_47] : memref<8x1024xbf16, #tpu.memory_space<vmem>>, vector<8x256xbf16>
    %c0_48 = arith.constant 0 : index
    %c0_49 = arith.constant 0 : index
    %c0_50 = arith.constant 0 : index
    %87 = vector.load %arg17[%c0_48, %c0_49, %c0_50] : memref<2x256x1024xbf16, #tpu.memory_space<vmem>>, vector<1x256x1024xbf16>
    %88 = vector.shape_cast %87 : vector<1x256x1024xbf16> to vector<256x1024xbf16>
    %cst_51 = arith.constant dense<0.000000e+00> : vector<8x1024xf32>
    %89 = tpu.matmul %86, %88, %cst_51 {dimension_numbers = #tpu.dot_dimension_numbers<[1], [0], [0], [1], [0, 0, 1, 1], [], []>} : vector<8x256xbf16>, vector<256x1024xbf16>, vector<8x1024xf32> -> vector<8x1024xf32>
    %90 = arith.addf %74, %89 : vector<8x1024xf32>
    %c1_i32_52 = arith.constant 1 : i32
    %c1_i32_53 = arith.constant 1 : i32
    %c256_i32_54 = arith.constant 256 : i32
    %c0_i32_55 = arith.constant 0 : i32
    %91 = tpu.memref_slice %arg12[%c256_i32_54, %c0_i32_55] : memref<1024x1024xbf16, #tpu.memory_space<any>> -> memref<256x1024xbf16, #tpu.memory_space<any>>
    %c0_i32_56 = arith.constant 0 : i32
    %c0_i32_57 = arith.constant 0 : i32
    %92 = tpu.memref_slice %arg17[%c1_i32_52, %c0_i32_56, %c0_i32_57] : memref<2x256x1024xbf16, #tpu.memory_space<vmem>> -> memref<1x256x1024xbf16, #tpu.memory_space<vmem>>
    %93 = tpu.memref_squeeze %92 : memref<1x256x1024xbf16, #tpu.memory_space<vmem>> -> memref<256x1024xbf16, #tpu.memory_space<vmem>>
    %94 = tpu.memref_slice %arg18[%c1_i32_53] : memref<2x!tpu.dma_semaphore, #tpu.memory_space<semaphore_mem>> -> memref<1x!tpu.dma_semaphore, #tpu.memory_space<semaphore_mem>>
    %95 = tpu.memref_squeeze %94 : memref<1x!tpu.dma_semaphore, #tpu.memory_space<semaphore_mem>> -> memref<!tpu.dma_semaphore, #tpu.memory_space<semaphore_mem>>
    tpu.wait_dma2 semaphore(%95 : memref<!tpu.dma_semaphore, #tpu.memory_space<semaphore_mem>>) src(%91 : memref<256x1024xbf16, #tpu.memory_space<any>>) dst(%93 : memref<256x1024xbf16, #tpu.memory_space<vmem>>)
    %c0_i32_58 = arith.constant 0 : i32
    %c0_i32_59 = arith.constant 0 : i32
    %c512_i32 = arith.constant 512 : i32
    %c0_i32_60 = arith.constant 0 : i32
    %96 = tpu.memref_slice %arg12[%c512_i32, %c0_i32_60] : memref<1024x1024xbf16, #tpu.memory_space<any>> -> memref<256x1024xbf16, #tpu.memory_space<any>>
    %c0_i32_61 = arith.constant 0 : i32
    %c0_i32_62 = arith.constant 0 : i32
    %97 = tpu.memref_slice %arg17[%c0_i32_58, %c0_i32_61, %c0_i32_62] : memref<2x256x1024xbf16, #tpu.memory_space<vmem>> -> memref<1x256x1024xbf16, #tpu.memory_space<vmem>>
    %98 = tpu.memref_squeeze %97 : memref<1x256x1024xbf16, #tpu.memory_space<vmem>> -> memref<256x1024xbf16, #tpu.memory_space<vmem>>
    %99 = tpu.memref_slice %arg18[%c0_i32_59] : memref<2x!tpu.dma_semaphore, #tpu.memory_space<semaphore_mem>> -> memref<1x!tpu.dma_semaphore, #tpu.memory_space<semaphore_mem>>
    %100 = tpu.memref_squeeze %99 : memref<1x!tpu.dma_semaphore, #tpu.memory_space<semaphore_mem>> -> memref<!tpu.dma_semaphore, #tpu.memory_space<semaphore_mem>>
    tpu.enqueue_dma source(%96 : memref<256x1024xbf16, #tpu.memory_space<any>>) target(%98 : memref<256x1024xbf16, #tpu.memory_space<vmem>>) target_semaphore(%100 : memref<!tpu.dma_semaphore, #tpu.memory_space<semaphore_mem>>)
    %c0_63 = arith.constant 0 : index
    %c256_64 = arith.constant 256 : index
    %101 = vector.load %arg16[%c0_63, %c256_64] : memref<8x1024xbf16, #tpu.memory_space<vmem>>, vector<8x256xbf16>
    %c1 = arith.constant 1 : index
    %c0_65 = arith.constant 0 : index
    %c0_66 = arith.constant 0 : index
    %102 = vector.load %arg17[%c1, %c0_65, %c0_66] : memref<2x256x1024xbf16, #tpu.memory_space<vmem>>, vector<1x256x1024xbf16>
    %103 = vector.shape_cast %102 : vector<1x256x1024xbf16> to vector<256x1024xbf16>
    %cst_67 = arith.constant dense<0.000000e+00> : vector<8x1024xf32>
    %104 = tpu.matmul %101, %103, %cst_67 {dimension_numbers = #tpu.dot_dimension_numbers<[1], [0], [0], [1], [0, 0, 1, 1], [], []>} : vector<8x256xbf16>, vector<256x1024xbf16>, vector<8x1024xf32> -> vector<8x1024xf32>
    %105 = arith.addf %90, %104 : vector<8x1024xf32>
    %c0_i32_68 = arith.constant 0 : i32
    %c0_i32_69 = arith.constant 0 : i32
    %c512_i32_70 = arith.constant 512 : i32
    %c0_i32_71 = arith.constant 0 : i32
    %106 = tpu.memref_slice %arg12[%c512_i32_70, %c0_i32_71] : memref<1024x1024xbf16, #tpu.memory_space<any>> -> memref<256x1024xbf16, #tpu.memory_space<any>>
    %c0_i32_72 = arith.constant 0 : i32
    %c0_i32_73 = arith.constant 0 : i32
    %107 = tpu.memref_slice %arg17[%c0_i32_68, %c0_i32_72, %c0_i32_73] : memref<2x256x1024xbf16, #tpu.memory_space<vmem>> -> memref<1x256x1024xbf16, #tpu.memory_space<vmem>>
    %108 = tpu.memref_squeeze %107 : memref<1x256x1024xbf16, #tpu.memory_space<vmem>> -> memref<256x1024xbf16, #tpu.memory_space<vmem>>
    %109 = tpu.memref_slice %arg18[%c0_i32_69] : memref<2x!tpu.dma_semaphore, #tpu.memory_space<semaphore_mem>> -> memref<1x!tpu.dma_semaphore, #tpu.memory_space<semaphore_mem>>
    %110 = tpu.memref_squeeze %109 : memref<1x!tpu.dma_semaphore, #tpu.memory_space<semaphore_mem>> -> memref<!tpu.dma_semaphore, #tpu.memory_space<semaphore_mem>>
    tpu.wait_dma2 semaphore(%110 : memref<!tpu.dma_semaphore, #tpu.memory_space<semaphore_mem>>) src(%106 : memref<256x1024xbf16, #tpu.memory_space<any>>) dst(%108 : memref<256x1024xbf16, #tpu.memory_space<vmem>>)
    %c1_i32_74 = arith.constant 1 : i32
    %c1_i32_75 = arith.constant 1 : i32
    %c768_i32 = arith.constant 768 : i32
    %c0_i32_76 = arith.constant 0 : i32
    %111 = tpu.memref_slice %arg12[%c768_i32, %c0_i32_76] : memref<1024x1024xbf16, #tpu.memory_space<any>> -> memref<256x1024xbf16, #tpu.memory_space<any>>
    %c0_i32_77 = arith.constant 0 : i32
    %c0_i32_78 = arith.constant 0 : i32
    %112 = tpu.memref_slice %arg17[%c1_i32_74, %c0_i32_77, %c0_i32_78] : memref<2x256x1024xbf16, #tpu.memory_space<vmem>> -> memref<1x256x1024xbf16, #tpu.memory_space<vmem>>
    %113 = tpu.memref_squeeze %112 : memref<1x256x1024xbf16, #tpu.memory_space<vmem>> -> memref<256x1024xbf16, #tpu.memory_space<vmem>>
    %114 = tpu.memref_slice %arg18[%c1_i32_75] : memref<2x!tpu.dma_semaphore, #tpu.memory_space<semaphore_mem>> -> memref<1x!tpu.dma_semaphore, #tpu.memory_space<semaphore_mem>>
    %115 = tpu.memref_squeeze %114 : memref<1x!tpu.dma_semaphore, #tpu.memory_space<semaphore_mem>> -> memref<!tpu.dma_semaphore, #tpu.memory_space<semaphore_mem>>
    tpu.enqueue_dma source(%111 : memref<256x1024xbf16, #tpu.memory_space<any>>) target(%113 : memref<256x1024xbf16, #tpu.memory_space<vmem>>) target_semaphore(%115 : memref<!tpu.dma_semaphore, #tpu.memory_space<semaphore_mem>>)
    %c0_79 = arith.constant 0 : index
    %c512_80 = arith.constant 512 : index
    %116 = vector.load %arg16[%c0_79, %c512_80] : memref<8x1024xbf16, #tpu.memory_space<vmem>>, vector<8x256xbf16>
    %c0_81 = arith.constant 0 : index
    %c0_82 = arith.constant 0 : index
    %c0_83 = arith.constant 0 : index
    %117 = vector.load %arg17[%c0_81, %c0_82, %c0_83] : memref<2x256x1024xbf16, #tpu.memory_space<vmem>>, vector<1x256x1024xbf16>
    %118 = vector.shape_cast %117 : vector<1x256x1024xbf16> to vector<256x1024xbf16>
    %cst_84 = arith.constant dense<0.000000e+00> : vector<8x1024xf32>
    %119 = tpu.matmul %116, %118, %cst_84 {dimension_numbers = #tpu.dot_dimension_numbers<[1], [0], [0], [1], [0, 0, 1, 1], [], []>} : vector<8x256xbf16>, vector<256x1024xbf16>, vector<8x1024xf32> -> vector<8x1024xf32>
    %120 = arith.addf %105, %119 : vector<8x1024xf32>
    %c1_i32_85 = arith.constant 1 : i32
    %c1_i32_86 = arith.constant 1 : i32
    %c768_i32_87 = arith.constant 768 : i32
    %c0_i32_88 = arith.constant 0 : i32
    %121 = tpu.memref_slice %arg12[%c768_i32_87, %c0_i32_88] : memref<1024x1024xbf16, #tpu.memory_space<any>> -> memref<256x1024xbf16, #tpu.memory_space<any>>
    %c0_i32_89 = arith.constant 0 : i32
    %c0_i32_90 = arith.constant 0 : i32
    %122 = tpu.memref_slice %arg17[%c1_i32_85, %c0_i32_89, %c0_i32_90] : memref<2x256x1024xbf16, #tpu.memory_space<vmem>> -> memref<1x256x1024xbf16, #tpu.memory_space<vmem>>
    %123 = tpu.memref_squeeze %122 : memref<1x256x1024xbf16, #tpu.memory_space<vmem>> -> memref<256x1024xbf16, #tpu.memory_space<vmem>>
    %124 = tpu.memref_slice %arg18[%c1_i32_86] : memref<2x!tpu.dma_semaphore, #tpu.memory_space<semaphore_mem>> -> memref<1x!tpu.dma_semaphore, #tpu.memory_space<semaphore_mem>>
    %125 = tpu.memref_squeeze %124 : memref<1x!tpu.dma_semaphore, #tpu.memory_space<semaphore_mem>> -> memref<!tpu.dma_semaphore, #tpu.memory_space<semaphore_mem>>
    tpu.wait_dma2 semaphore(%125 : memref<!tpu.dma_semaphore, #tpu.memory_space<semaphore_mem>>) src(%121 : memref<256x1024xbf16, #tpu.memory_space<any>>) dst(%123 : memref<256x1024xbf16, #tpu.memory_space<vmem>>)
    %c0_i32_91 = arith.constant 0 : i32
    %c0_i32_92 = arith.constant 0 : i32
    %c0_i32_93 = arith.constant 0 : i32
    %c0_i32_94 = arith.constant 0 : i32
    %126 = tpu.memref_slice %arg13[%c0_i32_93, %c0_i32_94] : memref<1024x1024xbf16, #tpu.memory_space<any>> -> memref<256x1024xbf16, #tpu.memory_space<any>>
    %c0_i32_95 = arith.constant 0 : i32
    %c0_i32_96 = arith.constant 0 : i32
    %127 = tpu.memref_slice %arg17[%c0_i32_91, %c0_i32_95, %c0_i32_96] : memref<2x256x1024xbf16, #tpu.memory_space<vmem>> -> memref<1x256x1024xbf16, #tpu.memory_space<vmem>>
    %128 = tpu.memref_squeeze %127 : memref<1x256x1024xbf16, #tpu.memory_space<vmem>> -> memref<256x1024xbf16, #tpu.memory_space<vmem>>
    %129 = tpu.memref_slice %arg18[%c0_i32_92] : memref<2x!tpu.dma_semaphore, #tpu.memory_space<semaphore_mem>> -> memref<1x!tpu.dma_semaphore, #tpu.memory_space<semaphore_mem>>
    %130 = tpu.memref_squeeze %129 : memref<1x!tpu.dma_semaphore, #tpu.memory_space<semaphore_mem>> -> memref<!tpu.dma_semaphore, #tpu.memory_space<semaphore_mem>>
    tpu.enqueue_dma source(%126 : memref<256x1024xbf16, #tpu.memory_space<any>>) target(%128 : memref<256x1024xbf16, #tpu.memory_space<vmem>>) target_semaphore(%130 : memref<!tpu.dma_semaphore, #tpu.memory_space<semaphore_mem>>)
    %c0_97 = arith.constant 0 : index
    %c768_98 = arith.constant 768 : index
    %131 = vector.load %arg16[%c0_97, %c768_98] : memref<8x1024xbf16, #tpu.memory_space<vmem>>, vector<8x256xbf16>
    %c1_99 = arith.constant 1 : index
    %c0_100 = arith.constant 0 : index
    %c0_101 = arith.constant 0 : index
    %132 = vector.load %arg17[%c1_99, %c0_100, %c0_101] : memref<2x256x1024xbf16, #tpu.memory_space<vmem>>, vector<1x256x1024xbf16>
    %133 = vector.shape_cast %132 : vector<1x256x1024xbf16> to vector<256x1024xbf16>
    %cst_102 = arith.constant dense<0.000000e+00> : vector<8x1024xf32>
    %134 = tpu.matmul %131, %133, %cst_102 {dimension_numbers = #tpu.dot_dimension_numbers<[1], [0], [0], [1], [0, 0, 1, 1], [], []>} : vector<8x256xbf16>, vector<256x1024xbf16>, vector<8x1024xf32> -> vector<8x1024xf32>
    %135 = arith.addf %120, %134 : vector<8x1024xf32>
    %c0_103 = arith.constant 0 : index
    %c0_104 = arith.constant 0 : index
    %136 = vector.load %arg8[%c0_103, %c0_104] : memref<1x1024xf32, #tpu.memory_space<vmem>>, vector<1x1024xf32>
    %137 = vector.broadcast %136 : vector<1x1024xf32> to vector<8x1024xf32>
    %138 = arith.addf %135, %137 : vector<8x1024xf32>
    %cst_105 = arith.constant 0.000000e+00 : f32
    %139 = vector.broadcast %cst_105 : f32 to vector<8x1024xf32>
    %140 = arith.maximumf %138, %139 : vector<8x1024xf32>
    %141 = arith.truncf %140 : vector<8x1024xf32> to vector<8x1024xbf16>
    %c0_i32_106 = arith.constant 0 : i32
    %c0_i32_107 = arith.constant 0 : i32
    %c0_i32_108 = arith.constant 0 : i32
    %c0_i32_109 = arith.constant 0 : i32
    %142 = tpu.memref_slice %arg13[%c0_i32_108, %c0_i32_109] : memref<1024x1024xbf16, #tpu.memory_space<any>> -> memref<256x1024xbf16, #tpu.memory_space<any>>
    %c0_i32_110 = arith.constant 0 : i32
    %c0_i32_111 = arith.constant 0 : i32
    %143 = tpu.memref_slice %arg17[%c0_i32_106, %c0_i32_110, %c0_i32_111] : memref<2x256x1024xbf16, #tpu.memory_space<vmem>> -> memref<1x256x1024xbf16, #tpu.memory_space<vmem>>
    %144 = tpu.memref_squeeze %143 : memref<1x256x1024xbf16, #tpu.memory_space<vmem>> -> memref<256x1024xbf16, #tpu.memory_space<vmem>>
    %145 = tpu.memref_slice %arg18[%c0_i32_107] : memref<2x!tpu.dma_semaphore, #tpu.memory_space<semaphore_mem>> -> memref<1x!tpu.dma_semaphore, #tpu.memory_space<semaphore_mem>>
    %146 = tpu.memref_squeeze %145 : memref<1x!tpu.dma_semaphore, #tpu.memory_space<semaphore_mem>> -> memref<!tpu.dma_semaphore, #tpu.memory_space<semaphore_mem>>
    tpu.wait_dma2 semaphore(%146 : memref<!tpu.dma_semaphore, #tpu.memory_space<semaphore_mem>>) src(%142 : memref<256x1024xbf16, #tpu.memory_space<any>>) dst(%144 : memref<256x1024xbf16, #tpu.memory_space<vmem>>)
    %c1_i32_112 = arith.constant 1 : i32
    %c1_i32_113 = arith.constant 1 : i32
    %c256_i32_114 = arith.constant 256 : i32
    %c0_i32_115 = arith.constant 0 : i32
    %147 = tpu.memref_slice %arg13[%c256_i32_114, %c0_i32_115] : memref<1024x1024xbf16, #tpu.memory_space<any>> -> memref<256x1024xbf16, #tpu.memory_space<any>>
    %c0_i32_116 = arith.constant 0 : i32
    %c0_i32_117 = arith.constant 0 : i32
    %148 = tpu.memref_slice %arg17[%c1_i32_112, %c0_i32_116, %c0_i32_117] : memref<2x256x1024xbf16, #tpu.memory_space<vmem>> -> memref<1x256x1024xbf16, #tpu.memory_space<vmem>>
    %149 = tpu.memref_squeeze %148 : memref<1x256x1024xbf16, #tpu.memory_space<vmem>> -> memref<256x1024xbf16, #tpu.memory_space<vmem>>
    %150 = tpu.memref_slice %arg18[%c1_i32_113] : memref<2x!tpu.dma_semaphore, #tpu.memory_space<semaphore_mem>> -> memref<1x!tpu.dma_semaphore, #tpu.memory_space<semaphore_mem>>
    %151 = tpu.memref_squeeze %150 : memref<1x!tpu.dma_semaphore, #tpu.memory_space<semaphore_mem>> -> memref<!tpu.dma_semaphore, #tpu.memory_space<semaphore_mem>>
    tpu.enqueue_dma source(%147 : memref<256x1024xbf16, #tpu.memory_space<any>>) target(%149 : memref<256x1024xbf16, #tpu.memory_space<vmem>>) target_semaphore(%151 : memref<!tpu.dma_semaphore, #tpu.memory_space<semaphore_mem>>)
    %152 = vector.extract_strided_slice %141 {offsets = [0, 0], sizes = [8, 256], strides = [1, 1]} : vector<8x1024xbf16> to vector<8x256xbf16>
    %c0_118 = arith.constant 0 : index
    %c0_119 = arith.constant 0 : index
    %c0_120 = arith.constant 0 : index
    %153 = vector.load %arg17[%c0_118, %c0_119, %c0_120] : memref<2x256x1024xbf16, #tpu.memory_space<vmem>>, vector<1x256x1024xbf16>
    %154 = vector.shape_cast %153 : vector<1x256x1024xbf16> to vector<256x1024xbf16>
    %cst_121 = arith.constant dense<0.000000e+00> : vector<8x1024xf32>
    %155 = tpu.matmul %152, %154, %cst_121 {dimension_numbers = #tpu.dot_dimension_numbers<[1], [0], [0], [1], [0, 0, 1, 1], [], []>} : vector<8x256xbf16>, vector<256x1024xbf16>, vector<8x1024xf32> -> vector<8x1024xf32>
    %156 = arith.addf %75, %155 : vector<8x1024xf32>
    %c1_i32_122 = arith.constant 1 : i32
    %c1_i32_123 = arith.constant 1 : i32
    %c256_i32_124 = arith.constant 256 : i32
    %c0_i32_125 = arith.constant 0 : i32
    %157 = tpu.memref_slice %arg13[%c256_i32_124, %c0_i32_125] : memref<1024x1024xbf16, #tpu.memory_space<any>> -> memref<256x1024xbf16, #tpu.memory_space<any>>
    %c0_i32_126 = arith.constant 0 : i32
    %c0_i32_127 = arith.constant 0 : i32
    %158 = tpu.memref_slice %arg17[%c1_i32_122, %c0_i32_126, %c0_i32_127] : memref<2x256x1024xbf16, #tpu.memory_space<vmem>> -> memref<1x256x1024xbf16, #tpu.memory_space<vmem>>
    %159 = tpu.memref_squeeze %158 : memref<1x256x1024xbf16, #tpu.memory_space<vmem>> -> memref<256x1024xbf16, #tpu.memory_space<vmem>>
    %160 = tpu.memref_slice %arg18[%c1_i32_123] : memref<2x!tpu.dma_semaphore, #tpu.memory_space<semaphore_mem>> -> memref<1x!tpu.dma_semaphore, #tpu.memory_space<semaphore_mem>>
    %161 = tpu.memref_squeeze %160 : memref<1x!tpu.dma_semaphore, #tpu.memory_space<semaphore_mem>> -> memref<!tpu.dma_semaphore, #tpu.memory_space<semaphore_mem>>
    tpu.wait_dma2 semaphore(%161 : memref<!tpu.dma_semaphore, #tpu.memory_space<semaphore_mem>>) src(%157 : memref<256x1024xbf16, #tpu.memory_space<any>>) dst(%159 : memref<256x1024xbf16, #tpu.memory_space<vmem>>)
    %c0_i32_128 = arith.constant 0 : i32
    %c0_i32_129 = arith.constant 0 : i32
    %c512_i32_130 = arith.constant 512 : i32
    %c0_i32_131 = arith.constant 0 : i32
    %162 = tpu.memref_slice %arg13[%c512_i32_130, %c0_i32_131] : memref<1024x1024xbf16, #tpu.memory_space<any>> -> memref<256x1024xbf16, #tpu.memory_space<any>>
    %c0_i32_132 = arith.constant 0 : i32
    %c0_i32_133 = arith.constant 0 : i32
    %163 = tpu.memref_slice %arg17[%c0_i32_128, %c0_i32_132, %c0_i32_133] : memref<2x256x1024xbf16, #tpu.memory_space<vmem>> -> memref<1x256x1024xbf16, #tpu.memory_space<vmem>>
    %164 = tpu.memref_squeeze %163 : memref<1x256x1024xbf16, #tpu.memory_space<vmem>> -> memref<256x1024xbf16, #tpu.memory_space<vmem>>
    %165 = tpu.memref_slice %arg18[%c0_i32_129] : memref<2x!tpu.dma_semaphore, #tpu.memory_space<semaphore_mem>> -> memref<1x!tpu.dma_semaphore, #tpu.memory_space<semaphore_mem>>
    %166 = tpu.memref_squeeze %165 : memref<1x!tpu.dma_semaphore, #tpu.memory_space<semaphore_mem>> -> memref<!tpu.dma_semaphore, #tpu.memory_space<semaphore_mem>>
    tpu.enqueue_dma source(%162 : memref<256x1024xbf16, #tpu.memory_space<any>>) target(%164 : memref<256x1024xbf16, #tpu.memory_space<vmem>>) target_semaphore(%166 : memref<!tpu.dma_semaphore, #tpu.memory_space<semaphore_mem>>)
    %167 = vector.extract_strided_slice %141 {offsets = [0, 256], sizes = [8, 256], strides = [1, 1]} : vector<8x1024xbf16> to vector<8x256xbf16>
    %c1_134 = arith.constant 1 : index
    %c0_135 = arith.constant 0 : index
    %c0_136 = arith.constant 0 : index
    %168 = vector.load %arg17[%c1_134, %c0_135, %c0_136] : memref<2x256x1024xbf16, #tpu.memory_space<vmem>>, vector<1x256x1024xbf16>
    %169 = vector.shape_cast %168 : vector<1x256x1024xbf16> to vector<256x1024xbf16>
    %cst_137 = arith.constant dense<0.000000e+00> : vector<8x1024xf32>
    %170 = tpu.matmul %167, %169, %cst_137 {dimension_numbers = #tpu.dot_dimension_numbers<[1], [0], [0], [1], [0, 0, 1, 1], [], []>} : vector<8x256xbf16>, vector<256x1024xbf16>, vector<8x1024xf32> -> vector<8x1024xf32>
    %171 = arith.addf %156, %170 : vector<8x1024xf32>
    %c0_i32_138 = arith.constant 0 : i32
    %c0_i32_139 = arith.constant 0 : i32
    %c512_i32_140 = arith.constant 512 : i32
    %c0_i32_141 = arith.constant 0 : i32
    %172 = tpu.memref_slice %arg13[%c512_i32_140, %c0_i32_141] : memref<1024x1024xbf16, #tpu.memory_space<any>> -> memref<256x1024xbf16, #tpu.memory_space<any>>
    %c0_i32_142 = arith.constant 0 : i32
    %c0_i32_143 = arith.constant 0 : i32
    %173 = tpu.memref_slice %arg17[%c0_i32_138, %c0_i32_142, %c0_i32_143] : memref<2x256x1024xbf16, #tpu.memory_space<vmem>> -> memref<1x256x1024xbf16, #tpu.memory_space<vmem>>
    %174 = tpu.memref_squeeze %173 : memref<1x256x1024xbf16, #tpu.memory_space<vmem>> -> memref<256x1024xbf16, #tpu.memory_space<vmem>>
    %175 = tpu.memref_slice %arg18[%c0_i32_139] : memref<2x!tpu.dma_semaphore, #tpu.memory_space<semaphore_mem>> -> memref<1x!tpu.dma_semaphore, #tpu.memory_space<semaphore_mem>>
    %176 = tpu.memref_squeeze %175 : memref<1x!tpu.dma_semaphore, #tpu.memory_space<semaphore_mem>> -> memref<!tpu.dma_semaphore, #tpu.memory_space<semaphore_mem>>
    tpu.wait_dma2 semaphore(%176 : memref<!tpu.dma_semaphore, #tpu.memory_space<semaphore_mem>>) src(%172 : memref<256x1024xbf16, #tpu.memory_space<any>>) dst(%174 : memref<256x1024xbf16, #tpu.memory_space<vmem>>)
    %c1_i32_144 = arith.constant 1 : i32
    %c1_i32_145 = arith.constant 1 : i32
    %c768_i32_146 = arith.constant 768 : i32
    %c0_i32_147 = arith.constant 0 : i32
    %177 = tpu.memref_slice %arg13[%c768_i32_146, %c0_i32_147] : memref<1024x1024xbf16, #tpu.memory_space<any>> -> memref<256x1024xbf16, #tpu.memory_space<any>>
    %c0_i32_148 = arith.constant 0 : i32
    %c0_i32_149 = arith.constant 0 : i32
    %178 = tpu.memref_slice %arg17[%c1_i32_144, %c0_i32_148, %c0_i32_149] : memref<2x256x1024xbf16, #tpu.memory_space<vmem>> -> memref<1x256x1024xbf16, #tpu.memory_space<vmem>>
    %179 = tpu.memref_squeeze %178 : memref<1x256x1024xbf16, #tpu.memory_space<vmem>> -> memref<256x1024xbf16, #tpu.memory_space<vmem>>
    %180 = tpu.memref_slice %arg18[%c1_i32_145] : memref<2x!tpu.dma_semaphore, #tpu.memory_space<semaphore_mem>> -> memref<1x!tpu.dma_semaphore, #tpu.memory_space<semaphore_mem>>
    %181 = tpu.memref_squeeze %180 : memref<1x!tpu.dma_semaphore, #tpu.memory_space<semaphore_mem>> -> memref<!tpu.dma_semaphore, #tpu.memory_space<semaphore_mem>>
    tpu.enqueue_dma source(%177 : memref<256x1024xbf16, #tpu.memory_space<any>>) target(%179 : memref<256x1024xbf16, #tpu.memory_space<vmem>>) target_semaphore(%181 : memref<!tpu.dma_semaphore, #tpu.memory_space<semaphore_mem>>)
    %182 = vector.extract_strided_slice %141 {offsets = [0, 512], sizes = [8, 256], strides = [1, 1]} : vector<8x1024xbf16> to vector<8x256xbf16>
    %c0_150 = arith.constant 0 : index
    %c0_151 = arith.constant 0 : index
    %c0_152 = arith.constant 0 : index
    %183 = vector.load %arg17[%c0_150, %c0_151, %c0_152] : memref<2x256x1024xbf16, #tpu.memory_space<vmem>>, vector<1x256x1024xbf16>
    %184 = vector.shape_cast %183 : vector<1x256x1024xbf16> to vector<256x1024xbf16>
    %cst_153 = arith.constant dense<0.000000e+00> : vector<8x1024xf32>
    %185 = tpu.matmul %182, %184, %cst_153 {dimension_numbers = #tpu.dot_dimension_numbers<[1], [0], [0], [1], [0, 0, 1, 1], [], []>} : vector<8x256xbf16>, vector<256x1024xbf16>, vector<8x1024xf32> -> vector<8x1024xf32>
    %186 = arith.addf %171, %185 : vector<8x1024xf32>
    %c1_i32_154 = arith.constant 1 : i32
    %c1_i32_155 = arith.constant 1 : i32
    %c768_i32_156 = arith.constant 768 : i32
    %c0_i32_157 = arith.constant 0 : i32
    %187 = tpu.memref_slice %arg13[%c768_i32_156, %c0_i32_157] : memref<1024x1024xbf16, #tpu.memory_space<any>> -> memref<256x1024xbf16, #tpu.memory_space<any>>
    %c0_i32_158 = arith.constant 0 : i32
    %c0_i32_159 = arith.constant 0 : i32
    %188 = tpu.memref_slice %arg17[%c1_i32_154, %c0_i32_158, %c0_i32_159] : memref<2x256x1024xbf16, #tpu.memory_space<vmem>> -> memref<1x256x1024xbf16, #tpu.memory_space<vmem>>
    %189 = tpu.memref_squeeze %188 : memref<1x256x1024xbf16, #tpu.memory_space<vmem>> -> memref<256x1024xbf16, #tpu.memory_space<vmem>>
    %190 = tpu.memref_slice %arg18[%c1_i32_155] : memref<2x!tpu.dma_semaphore, #tpu.memory_space<semaphore_mem>> -> memref<1x!tpu.dma_semaphore, #tpu.memory_space<semaphore_mem>>
    %191 = tpu.memref_squeeze %190 : memref<1x!tpu.dma_semaphore, #tpu.memory_space<semaphore_mem>> -> memref<!tpu.dma_semaphore, #tpu.memory_space<semaphore_mem>>
    tpu.wait_dma2 semaphore(%191 : memref<!tpu.dma_semaphore, #tpu.memory_space<semaphore_mem>>) src(%187 : memref<256x1024xbf16, #tpu.memory_space<any>>) dst(%189 : memref<256x1024xbf16, #tpu.memory_space<vmem>>)
    %192 = vector.extract_strided_slice %141 {offsets = [0, 768], sizes = [8, 256], strides = [1, 1]} : vector<8x1024xbf16> to vector<8x256xbf16>
    %c1_160 = arith.constant 1 : index
    %c0_161 = arith.constant 0 : index
    %c0_162 = arith.constant 0 : index
    %193 = vector.load %arg17[%c1_160, %c0_161, %c0_162] : memref<2x256x1024xbf16, #tpu.memory_space<vmem>>, vector<1x256x1024xbf16>
    %194 = vector.shape_cast %193 : vector<1x256x1024xbf16> to vector<256x1024xbf16>
    %cst_163 = arith.constant dense<0.000000e+00> : vector<8x1024xf32>
    %195 = tpu.matmul %192, %194, %cst_163 {dimension_numbers = #tpu.dot_dimension_numbers<[1], [0], [0], [1], [0, 0, 1, 1], [], []>} : vector<8x256xbf16>, vector<256x1024xbf16>, vector<8x1024xf32> -> vector<8x1024xf32>
    %196 = arith.addf %186, %195 : vector<8x1024xf32>
    %c0_164 = arith.constant 0 : index
    %c0_165 = arith.constant 0 : index
    %197 = vector.load %arg9[%c0_164, %c0_165] : memref<1x1024xf32, #tpu.memory_space<vmem>>, vector<1x1024xf32>
    %198 = vector.broadcast %197 : vector<1x1024xf32> to vector<8x1024xf32>
    %199 = arith.addf %196, %198 : vector<8x1024xf32>
    %cst_166 = arith.constant 0.000000e+00 : f32
    %200 = vector.broadcast %cst_166 : f32 to vector<8x1024xf32>
    %201 = arith.maximumf %199, %200 : vector<8x1024xf32>
    %c0_167 = arith.constant 0 : index
    %c0_168 = arith.constant 0 : index
    %202 = vector.load %arg10[%c0_167, %c0_168] : memref<1024x4xf32, #tpu.memory_space<vmem>>, vector<1024x4xf32>
    %cst_169 = arith.constant dense<0.000000e+00> : vector<8x4xf32>
    %203 = tpu.matmul %201, %202, %cst_169 {dimension_numbers = #tpu.dot_dimension_numbers<[1], [0], [0], [1], [0, 0, 1, 1], [], []>} : vector<8x1024xf32>, vector<1024x4xf32>, vector<8x4xf32> -> vector<8x4xf32>
    %c0_170 = arith.constant 0 : index
    %c0_171 = arith.constant 0 : index
    %204 = vector.load %arg11[%c0_170, %c0_171] : memref<1x4xf32, #tpu.memory_space<vmem>>, vector<1x4xf32>
    %205 = vector.broadcast %204 : vector<1x4xf32> to vector<8x4xf32>
    %206 = arith.addf %203, %205 : vector<8x4xf32>
    %c0_172 = arith.constant 0 : index
    %c0_173 = arith.constant 0 : index
    %207 = vector.load %arg15[%c0_172, %c0_173] : memref<8x4xf32, #tpu.memory_space<vmem>>, vector<8x4xf32>
    tpu.vector_store %arg15[%c0_172, %c0_173], %206 {strides = array<i32>} : memref<8x4xf32, #tpu.memory_space<vmem>>, vector<8x4xf32>,
    return
  }
  func.func @transform_0(%arg0: i32) -> (i32, i32) {
    %c0_i32 = arith.constant 0 : i32
    %c0_i32_0 = arith.constant 0 : i32
    %c0_i32_1 = arith.constant 0 : i32
    return %c0_i32, %c0_i32_0 : i32, i32
  }
  func.func @transform_1(%arg0: i32) -> (i32, i32) {
    %c0_i32 = arith.constant 0 : i32
    %c0_i32_0 = arith.constant 0 : i32
    %c0_i32_1 = arith.constant 0 : i32
    return %c0_i32, %c0_i32_0 : i32, i32
  }
  func.func @transform_2(%arg0: i32) -> (i32, i32) {
    %c0_i32 = arith.constant 0 : i32
    %c0_i32_0 = arith.constant 0 : i32
    %c0_i32_1 = arith.constant 0 : i32
    return %c0_i32, %c0_i32_0 : i32, i32
  }
  func.func @transform_3(%arg0: i32) -> (i32, i32) {
    %c0_i32 = arith.constant 0 : i32
    %c0_i32_0 = arith.constant 0 : i32
    %c0_i32_1 = arith.constant 0 : i32
    return %c0_i32, %c0_i32_0 : i32, i32
  }
  func.func @transform_4(%arg0: i32) -> (i32, i32) {
    %c0_i32 = arith.constant 0 : i32
    %c0_i32_0 = arith.constant 0 : i32
    %c0_i32_1 = arith.constant 0 : i32
    return %c0_i32, %c0_i32_0 : i32, i32
  }
  func.func @transform_5(%arg0: i32) -> (i32, i32) {
    %c0_i32 = arith.constant 0 : i32
    %c0_i32_0 = arith.constant 0 : i32
    %c0_i32_1 = arith.constant 0 : i32
    return %c0_i32, %c0_i32_0 : i32, i32
  }
  func.func @transform_6(%arg0: i32) -> (i32, i32) {
    %c0_i32 = arith.constant 0 : i32
    %c0_i32_0 = arith.constant 0 : i32
    %c0_i32_1 = arith.constant 0 : i32
    return %c0_i32, %c0_i32_0 : i32, i32
  }
  func.func @transform_7(%arg0: i32) -> (i32, i32) {
    %c0_i32 = arith.constant 0 : i32
    %c0_i32_0 = arith.constant 0 : i32
    %c0_i32_1 = arith.constant 0 : i32
    return %c0_i32, %c0_i32_0 : i32, i32
  }
  func.func @transform_8(%arg0: i32) -> (i32, i32) {
    %c0_i32 = arith.constant 0 : i32
    %c0_i32_0 = arith.constant 0 : i32
    %c0_i32_1 = arith.constant 0 : i32
    return %c0_i32, %c0_i32_0 : i32, i32
  }
  func.func @transform_9(%arg0: i32) -> (i32, i32) {
    %c0_i32 = arith.constant 0 : i32
    %c0_i32_0 = arith.constant 0 : i32
    %c0_i32_1 = arith.constant 0 : i32
    return %c0_i32, %c0_i32_0 : i32, i32
  }
  func.func @transform_10(%arg0: i32) -> (i32, i32) {
    %c0_i32 = arith.constant 0 : i32
    %c0_i32_0 = arith.constant 0 : i32
    %c0_i32_1 = arith.constant 0 : i32
    return %c0_i32, %c0_i32_0 : i32, i32
  }
  func.func @transform_13(%arg0: i32) -> (i32, i32) {
    %c0_i32 = arith.constant 0 : i32
    %c0_i32_0 = arith.constant 0 : i32
    %c0_i32_1 = arith.constant 0 : i32
    return %c0_i32, %c0_i32_0 : i32, i32
  }
  func.func @transform_14(%arg0: i32) -> (i32, i32) {
    %c0_i32 = arith.constant 0 : i32
    %c0_i32_0 = arith.constant 0 : i32
    %c0_i32_1 = arith.constant 0 : i32
    return %c0_i32, %c0_i32_0 : i32, i32
  }
}

</mosaic_0001>

<llo_original>
// kernel: tpu_custom_call.1
$region0: #{tpu_custom_call.1}
  #allocation0 [shape = 'u32[]', space=smem, size = 0x4, offset = 0x4, fixed_abs, tag = 'smem constant byte address 0x4 - core index']
  #allocation1 [shape = 'u32[144,128]{1,0:T(1,128)}', space=vmem, size = 0x12000, scoped, tag = 'internal scratch']
  #allocation2 [shape = 'bf16[8,1024]{1,0:T(8,128)(2,1)}', space=vmem, size = 0x4000, scoped, tag = 'scratch operand']
  #allocation3 [shape = 'bf16[2,256,1024]{2,1,0:T(8,128)(2,1)}', space=vmem, size = 0x100000, scoped, tag = 'scratch operand']
  #allocation4 [shape = 's32[2]{0}', space=sflag, size = 0x8, scoped, tag = 'scratch operand']
  #allocation20 [shape = 's32[]', space=sflag, size = 0x4, offset = 0, fixed_abs, tag = 'sflag constant byte address 0x0 - dummy sync flag']
  #allocation21 [shape = 's32[]', space=sflag, size = 0x4, offset = 0, fixed_abs, tag = 'sflag constant byte address 0x0 - dummy sync flag']
  #allocation22 [shape = 'u32[]', space=smem, size = 0x4, offset = 0x44, fixed_abs, tag = 'smem constant byte address 0x44 - assertion arg 0']
  #allocation23 [shape = 'u32[]', space=smem, size = 0x4, offset = 0x48, fixed_abs, tag = 'smem constant byte address 0x48 - assertion arg 1']
  #allocation24 [shape = 's32[]', space=sflag, size = 0x4, offset = 0, fixed_abs, tag = 'sflag constant byte address 0x0 - dummy sync flag']
  #allocation25 [shape = 's32[]', space=sflag, size = 0x4, offset = 0, fixed_abs, tag = 'sflag constant byte address 0x0 - dummy sync flag']
  #allocation26 [shape = 's32[]', space=sflag, size = 0x4, offset = 0, fixed_abs, tag = 'sflag constant byte address 0x0 - dummy sync flag']
  #allocation27 [shape = 's32[]', space=sflag, size = 0x4, offset = 0, fixed_abs, tag = 'sflag constant byte address 0x0 - dummy sync flag']
  #allocation28 [shape = 's32[]', space=sflag, size = 0x4, offset = 0, fixed_abs, tag = 'sflag constant byte address 0x0 - dummy sync flag']
  #allocation29 [shape = 's32[]', space=sflag, size = 0x4, offset = 0, fixed_abs, tag = 'sflag constant byte address 0x0 - dummy sync flag']
  #allocation30 [shape = 's32[]', space=sflag, size = 0x4, offset = 0, fixed_abs, tag = 'sflag constant byte address 0x0 - dummy sync flag']
  #allocation31 [shape = 's32[]', space=sflag, size = 0x4, offset = 0, fixed_abs, tag = 'sflag constant byte address 0x0 - dummy sync flag']
  #allocation32 [shape = 's32[]', space=sflag, size = 0x4, offset = 0, fixed_abs, tag = 'sflag constant byte address 0x0 - dummy sync flag']
  #allocation33 [shape = 's32[]', space=sflag, size = 0x4, offset = 0, fixed_abs, tag = 'sflag constant byte address 0x0 - dummy sync flag']
  #allocation34 [shape = 's32[]', space=sflag, size = 0x4, offset = 0, fixed_abs, tag = 'sflag constant byte address 0x0 - dummy sync flag']
  #allocation35 [shape = 's32[]', space=sflag, size = 0x4, offset = 0, fixed_abs, tag = 'sflag constant byte address 0x0 - dummy sync flag']
  #allocation36 [shape = 's32[]', space=sflag, size = 0x4, offset = 0, fixed_abs, tag = 'sflag constant byte address 0x0 - dummy sync flag']
  #allocation37 [shape = 's32[]', space=sflag, size = 0x4, offset = 0, fixed_abs, tag = 'sflag constant byte address 0x0 - dummy sync flag']
  %s0 = inlined_call_operand.hbm [shape: f32[8,1024], index: 0, kind: input, shape index: {}]
  %s1 = inlined_call_operand.vmem [shape: f32[1024,64], index: 1, kind: input, shape index: {}]
  %s2 = inlined_call_operand.hbm [shape: f32[1,64], index: 2, kind: input, shape index: {}]
  %s3 = inlined_call_operand.hbm [shape: f32[64,128], index: 3, kind: input, shape index: {}]
  %s4 = inlined_call_operand.hbm [shape: f32[1,128], index: 4, kind: input, shape index: {}]
  %s5 = inlined_call_operand.vmem [shape: f32[128,8], index: 5, kind: input, shape index: {}]
  %s6 = inlined_call_operand.hbm [shape: f32[1,8], index: 6, kind: input, shape index: {}]
  %s7 = inlined_call_operand.hbm [shape: f32[1,1024], index: 7, kind: input, shape index: {}]
  %s8 = inlined_call_operand.hbm [shape: f32[1,1024], index: 8, kind: input, shape index: {}]
  %s9 = inlined_call_operand.vmem [shape: f32[1024,4], index: 9, kind: input, shape index: {}]
  %s10 = inlined_call_operand.hbm [shape: f32[1,4], index: 10, kind: input, shape index: {}]
  %s11 = inlined_call_operand.hbm [shape: bf16[1024,1024], index: 11, kind: input, shape index: {}]
  %s12 = inlined_call_operand.hbm [shape: bf16[1024,1024], index: 12, kind: input, shape index: {}]
  %s13 = inlined_call_operand.hbm [shape: f32[8,8], index: 13, kind: output, shape index: {0}]
  %s14 = inlined_call_operand.vmem [shape: f32[8,4], index: 14, kind: output, shape index: {1}]
  %15 = xla_tuple %s13, %s14
  %s16 = sld [smem:[#allocation0]]
  $region126: #{tpu_custom_call.1} parent=0
    _
  %s18 = ssub.s32 1, %s16
  %s19 = scalar_select 0, %s18, %s16
  $region1: #{tpu_custom_call.1} parent=0
    #allocation5 [shape = 'u8[32768]{0}', space=vmem, size = 0x8000, scoped, tag = 'input window, operand 0, single buffered']
    #allocation6 [shape = 's32[1]{0}', space=sflag, size = 0x4, scoped, tag = 'scoped memory for tpu_custom_call.1']
    #allocation7 [shape = 's32[1]{0}', space=sflag, size = 0x4, scoped, tag = 'scoped memory for tpu_custom_call.1']
    #allocation8 [shape = 'u8[512]{0}', space=vmem, size = 0x400, scoped, tag = 'input window, operand 2, single buffered']
    #allocation9 [shape = 's32[1]{0}', space=sflag, size = 0x4, scoped, tag = 'scoped memory for tpu_custom_call.1']
    #allocation10 [shape = 'u8[32768]{0}', space=vmem, size = 0x8000, scoped, tag = 'input window, operand 3, single buffered']
    #allocation11 [shape = 'u8[512]{0}', space=vmem, size = 0x400, scoped, tag = 'input window, operand 4, single buffered']
    #allocation12 [shape = 's32[1]{0}', space=sflag, size = 0x4, scoped, tag = 'scoped memory for tpu_custom_call.1']
    #allocation13 [shape = 'u8[512]{0}', space=vmem, size = 0x400, scoped, tag = 'input window, operand 6, single buffered']
    #allocation14 [shape = 'u8[4096]{0}', space=vmem, size = 0x1000, scoped, tag = 'input window, operand 7, single buffered']
    #allocation15 [shape = 's32[1]{0}', space=sflag, size = 0x4, scoped, tag = 'scoped memory for tpu_custom_call.1']
    #allocation16 [shape = 'u8[4096]{0}', space=vmem, size = 0x1000, scoped, tag = 'input window, operand 8, single buffered']
    #allocation17 [shape = 'u8[512]{0}', space=vmem, size = 0x400, scoped, tag = 'input window, operand 10, single buffered']
    #allocation18 [shape = 's32[1]{0}', space=sflag, size = 0x4, scoped, tag = 'scoped memory for tpu_custom_call.1']
    #allocation19 [shape = 'u8[4096]{0}', space=vmem, size = 0x1000, scoped, tag = 'output window, operand 0, single buffered']
    %20 = vsyncpa [#allocation6], 0
    %21 = vsyncpa [#allocation9], 0
    %22 = vsyncpa [#allocation12], 0
    %23 = vsyncpa [#allocation15], 0
    %24 = vsyncpa [#allocation18], 0
    %25 = vsyncpa [#allocation7], 0
    // Predicated region
    $region2: #{tpu_custom_call.1} parent=1 // pred_check
      _
    $region3: #{tpu_custom_call.1} parent=1 // pred_check_branch
      %27 = sbr.rel (0) target = $region5
    $region4: #{tpu_custom_call.1} parent=1 // pred_region
      %s29 = ssub.s32 1024, 1024
      %30 = vsyncadd [#allocation6], %s29
      %s32 = sshll.u32 [#allocation5], 4
      %s33 = int_to_ptr.vmem [resolvable:$true] %s32
      %35 = dma.hbm_to_vmem [thread:$0]  %s0, 1024, %s33, [#allocation6]
    $region5: #{tpu_custom_call.1} parent=1 // pred_fallthru
      _
    // Predicated region
    $region6: #{tpu_custom_call.1} parent=1 // pred_check
      _
    $region7: #{tpu_custom_call.1} parent=1 // pred_check_branch
      %37 = sbr.rel (0) target = $region9
    $region8: #{tpu_custom_call.1} parent=1 // pred_region
      _
    $region9: #{tpu_custom_call.1} parent=1 // pred_fallthru
      _
    // Predicated region
    $region10: #{tpu_custom_call.1} parent=1 // pred_check
      _
    $region11: #{tpu_custom_call.1} parent=1 // pred_check_branch
      %39 = sbr.rel (0) target = $region13
    $region12: #{tpu_custom_call.1} parent=1 // pred_region
      %s41 = ssub.s32 16, 16
      %42 = vsyncadd [#allocation9], %s41
      %s44 = sshll.u32 [#allocation8], 4
      %s45 = int_to_ptr.vmem [resolvable:$true] %s44
      %47 = dma.hbm_to_vmem [thread:$0]  %s2, 16, %s45, [#allocation9]
    $region13: #{tpu_custom_call.1} parent=1 // pred_fallthru
      _
    // Predicated region
    $region14: #{tpu_custom_call.1} parent=1 // pred_check
      _
    $region15: #{tpu_custom_call.1} parent=1 // pred_check_branch
      %49 = sbr.rel (0) target = $region17
    $region16: #{tpu_custom_call.1} parent=1 // pred_region
      %s51 = ssub.s32 1024, 1024
      %52 = vsyncadd [#allocation9], %s51
      %s53 = sshll.u32 [#allocation10], 4
      %s54 = int_to_ptr.vmem [resolvable:$true] %s53
      %59 = dma.hbm_to_vmem [thread:$0]  %s3, 1024, %s54, [#allocation9], 128, 128, 8
    $region17: #{tpu_custom_call.1} parent=1 // pred_fallthru
      _
    // Predicated region
    $region18: #{tpu_custom_call.1} parent=1 // pred_check
      _
    $region19: #{tpu_custom_call.1} parent=1 // pred_check_branch
      %61 = sbr.rel (0) target = $region21
    $region20: #{tpu_custom_call.1} parent=1 // pred_region
      %s63 = ssub.s32 16, 16
      %64 = vsyncadd [#allocation12], %s63
      %s66 = sshll.u32 [#allocation11], 4
      %s67 = int_to_ptr.vmem [resolvable:$true] %s66
      %69 = dma.hbm_to_vmem [thread:$0]  %s4, 16, %s67, [#allocation12]
    $region21: #{tpu_custom_call.1} parent=1 // pred_fallthru
      _
    // Predicated region
    $region22: #{tpu_custom_call.1} parent=1 // pred_check
      _
    $region23: #{tpu_custom_call.1} parent=1 // pred_check_branch
      %71 = sbr.rel (0) target = $region25
    $region24: #{tpu_custom_call.1} parent=1 // pred_region
      _
    $region25: #{tpu_custom_call.1} parent=1 // pred_fallthru
      _
    // Predicated region
    $region26: #{tpu_custom_call.1} parent=1 // pred_check
      _
    $region27: #{tpu_custom_call.1} parent=1 // pred_check_branch
      %73 = sbr.rel (0) target = $region29
    $region28: #{tpu_custom_call.1} parent=1 // pred_region
      %s75 = ssub.s32 16, 16
      %76 = vsyncadd [#allocation12], %s75
      %s78 = sshll.u32 [#allocation13], 4
      %s79 = int_to_ptr.vmem [resolvable:$true] %s78
      %81 = dma.hbm_to_vmem [thread:$0]  %s6, 16, %s79, [#allocation12]
    $region29: #{tpu_custom_call.1} parent=1 // pred_fallthru
      _
    // Predicated region
    $region30: #{tpu_custom_call.1} parent=1 // pred_check
      _
    $region31: #{tpu_custom_call.1} parent=1 // pred_check_branch
      %83 = sbr.rel (0) target = $region33
    $region32: #{tpu_custom_call.1} parent=1 // pred_region
      %s85 = ssub.s32 128, 128
      %86 = vsyncadd [#allocation15], %s85
      %s88 = sshll.u32 [#allocation14], 4
      %s89 = int_to_ptr.vmem [resolvable:$true] %s88
      %91 = dma.hbm_to_vmem [thread:$0]  %s7, 128, %s89, [#allocation15]
    $region33: #{tpu_custom_call.1} parent=1 // pred_fallthru
      _
    // Predicated region
    $region34: #{tpu_custom_call.1} parent=1 // pred_check
      _
    $region35: #{tpu_custom_call.1} parent=1 // pred_check_branch
      %93 = sbr.rel (0) target = $region37
    $region36: #{tpu_custom_call.1} parent=1 // pred_region
      %s95 = ssub.s32 128, 128
      %96 = vsyncadd [#allocation15], %s95
      %s98 = sshll.u32 [#allocation16], 4
      %s99 = int_to_ptr.vmem [resolvable:$true] %s98
      %101 = dma.hbm_to_vmem [thread:$0]  %s8, 128, %s99, [#allocation15]
    $region37: #{tpu_custom_call.1} parent=1 // pred_fallthru
      _
    // Predicated region
    $region38: #{tpu_custom_call.1} parent=1 // pred_check
      _
    $region39: #{tpu_custom_call.1} parent=1 // pred_check_branch
      %103 = sbr.rel (0) target = $region41
    $region40: #{tpu_custom_call.1} parent=1 // pred_region
      _
    $region41: #{tpu_custom_call.1} parent=1 // pred_fallthru
      _
    // Predicated region
    $region42: #{tpu_custom_call.1} parent=1 // pred_check
      _
    $region43: #{tpu_custom_call.1} parent=1 // pred_check_branch
      %105 = sbr.rel (0) target = $region45
    $region44: #{tpu_custom_call.1} parent=1 // pred_region
      %s107 = ssub.s32 16, 16
      %108 = vsyncadd [#allocation18], %s107
      %s110 = sshll.u32 [#allocation17], 4
      %s111 = int_to_ptr.vmem [resolvable:$true] %s110
      %113 = dma.hbm_to_vmem [thread:$0]  %s10, 16, %s111, [#allocation18]
    $region45: #{tpu_custom_call.1} parent=1 // pred_fallthru
      _
    // Predicated region
    $region46: #{tpu_custom_call.1} parent=1 // pred_check
      _
    $region47: #{tpu_custom_call.1} parent=1 // pred_check_branch
      %115 = sbr.rel (0) target = $region49
    $region48: #{tpu_custom_call.1} parent=1 // pred_region
      %116 = dma.done [#allocation6], 1024
    $region49: #{tpu_custom_call.1} parent=1 // pred_fallthru
      _
    // Predicated region
    $region50: #{tpu_custom_call.1} parent=1 // pred_check
      _
    $region51: #{tpu_custom_call.1} parent=1 // pred_check_branch
      %118 = sbr.rel (0) target = $region53
    $region52: #{tpu_custom_call.1} parent=1 // pred_region
      %119 = dma.done [#allocation9], 16
    $region53: #{tpu_custom_call.1} parent=1 // pred_fallthru
      _
    // Predicated region
    $region54: #{tpu_custom_call.1} parent=1 // pred_check
      _
    $region55: #{tpu_custom_call.1} parent=1 // pred_check_branch
      %121 = sbr.rel (0) target = $region57
    $region56: #{tpu_custom_call.1} parent=1 // pred_region
      %122 = dma.done [#allocation9], 1024
    $region57: #{tpu_custom_call.1} parent=1 // pred_fallthru
      _
    // Predicated region
    $region58: #{tpu_custom_call.1} parent=1 // pred_check
      _
    $region59: #{tpu_custom_call.1} parent=1 // pred_check_branch
      %124 = sbr.rel (0) target = $region61
    $region60: #{tpu_custom_call.1} parent=1 // pred_region
      %125 = dma.done [#allocation12], 16
    $region61: #{tpu_custom_call.1} parent=1 // pred_fallthru
      _
    // Predicated region
    $region62: #{tpu_custom_call.1} parent=1 // pred_check
      _
    $region63: #{tpu_custom_call.1} parent=1 // pred_check_branch
      %127 = sbr.rel (0) target = $region65
    $region64: #{tpu_custom_call.1} parent=1 // pred_region
      %128 = dma.done [#allocation12], 16
    $region65: #{tpu_custom_call.1} parent=1 // pred_fallthru
      _
    // Predicated region
    $region66: #{tpu_custom_call.1} parent=1 // pred_check
      _
    $region67: #{tpu_custom_call.1} parent=1 // pred_check_branch
      %130 = sbr.rel (0) target = $region69
    $region68: #{tpu_custom_call.1} parent=1 // pred_region
      %131 = dma.done [#allocation15], 128
    $region69: #{tpu_custom_call.1} parent=1 // pred_fallthru
      _
    // Predicated region
    $region70: #{tpu_custom_call.1} parent=1 // pred_check
      _
    $region71: #{tpu_custom_call.1} parent=1 // pred_check_branch
      %133 = sbr.rel (0) target = $region73
    $region72: #{tpu_custom_call.1} parent=1 // pred_region
      %134 = dma.done [#allocation15], 128
    $region73: #{tpu_custom_call.1} parent=1 // pred_fallthru
      _
    // Predicated region
    $region74: #{tpu_custom_call.1} parent=1 // pred_check
      _
    $region75: #{tpu_custom_call.1} parent=1 // pred_check_branch
      %136 = sbr.rel (0) target = $region77
    $region76: #{tpu_custom_call.1} parent=1 // pred_region
      %137 = dma.done [#allocation18], 16
    $region77: #{tpu_custom_call.1} parent=1 // pred_fallthru
      _
    // Predicated region
    $region78: #{tpu_custom_call.1} parent=1 // pred_check
      _
    $region79: #{tpu_custom_call.1} parent=1 // pred_check_branch
      %139 = sbr.rel target = $region81
    $region80: #{tpu_custom_call.1} parent=1 // pred_region
      %140 = sst [smem:[#allocation22]] [#allocation21]
      %141 = sst [smem:[#allocation23]] [#allocation20]
    $region81: #{tpu_custom_call.1} parent=1 // pred_fallthru
      _
    %143 = shalt.err (0)
    %s145 = sshll.u32 [#allocation3], 4
    %s146 = int_to_ptr.vmem [resolvable:$true] %s145
    %148 = dma.hbm_to_vmem [thread:$0]  %s11, 16384, %s146, [#allocation4]
    %v149 = vld [vmem:[#allocation5] sm:$0xff]
    %v150 = vld [vmem:[#allocation5 + $0x8] sm:$0xff]
    %v151 = vld [vmem:[#allocation5 + $0x10] sm:$0xff]
    %v152 = vld [vmem:[#allocation5 + $0x18] sm:$0xff]
    %v153 = vld [vmem:[#allocation5 + $0x20] sm:$0xff]
    %v154 = vld [vmem:[#allocation5 + $0x28] sm:$0xff]
    %v155 = vld [vmem:[#allocation5 + $0x30] sm:$0xff]
    %v156 = vld [vmem:[#allocation5 + $0x38] sm:$0xff]
    %v157 = vld [vmem:[%s1] sm:$0xff]
    %v158 = vld [vmem:[%s1 + $0x8] sm:$0xff]
    %v159 = vld [vmem:[%s1 + $0x10] sm:$0xff]
    %v160 = vld [vmem:[%s1 + $0x18] sm:$0xff]
    %v161 = vld [vmem:[%s1 + $0x20] sm:$0xff]
    %v162 = vld [vmem:[%s1 + $0x28] sm:$0xff]
    %v163 = vld [vmem:[%s1 + $0x30] sm:$0xff]
    %v164 = vld [vmem:[%s1 + $0x38] sm:$0xff]
    %v165 = vld [vmem:[%s1 + $0x40] sm:$0xff]
    %v166 = vld [vmem:[%s1 + $0x48] sm:$0xff]
    %v167 = vld [vmem:[%s1 + $0x50] sm:$0xff]
    %v168 = vld [vmem:[%s1 + $0x58] sm:$0xff]
    %v169 = vld [vmem:[%s1 + $0x60] sm:$0xff]
    %v170 = vld [vmem:[%s1 + $0x68] sm:$0xff]
    %v171 = vld [vmem:[%s1 + $0x70] sm:$0xff]
    %v172 = vld [vmem:[%s1 + $0x78] sm:$0xff]
    %v173 = vld [vmem:[%s1 + $0x80] sm:$0xff]
    %v174 = vld [vmem:[%s1 + $0x88] sm:$0xff]
    %v175 = vld [vmem:[%s1 + $0x90] sm:$0xff]
    %v176 = vld [vmem:[%s1 + $0x98] sm:$0xff]
    %v177 = vld [vmem:[%s1 + $0xa0] sm:$0xff]
    %v178 = vld [vmem:[%s1 + $0xa8] sm:$0xff]
    %v179 = vld [vmem:[%s1 + $0xb0] sm:$0xff]
    %v180 = vld [vmem:[%s1 + $0xb8] sm:$0xff]
    %v181 = vld [vmem:[%s1 + $0xc0] sm:$0xff]
    %v182 = vld [vmem:[%s1 + $0xc8] sm:$0xff]
    %v183 = vld [vmem:[%s1 + $0xd0] sm:$0xff]
    %v184 = vld [vmem:[%s1 + $0xd8] sm:$0xff]
    %v185 = vld [vmem:[%s1 + $0xe0] sm:$0xff]
    %v186 = vld [vmem:[%s1 + $0xe8] sm:$0xff]
    %v187 = vld [vmem:[%s1 + $0xf0] sm:$0xff]
    %v188 = vld [vmem:[%s1 + $0xf8] sm:$0xff]
    %v189 = vld [vmem:[%s1 + $0x100] sm:$0xff]
    %v190 = vld [vmem:[%s1 + $0x108] sm:$0xff]
    %v191 = vld [vmem:[%s1 + $0x110] sm:$0xff]
    %v192 = vld [vmem:[%s1 + $0x118] sm:$0xff]
    %v193 = vld [vmem:[%s1 + $0x120] sm:$0xff]
    %v194 = vld [vmem:[%s1 + $0x128] sm:$0xff]
    %v195 = vld [vmem:[%s1 + $0x130] sm:$0xff]
    %v196 = vld [vmem:[%s1 + $0x138] sm:$0xff]
    %v197 = vld [vmem:[%s1 + $0x140] sm:$0xff]
    %v198 = vld [vmem:[%s1 + $0x148] sm:$0xff]
    %v199 = vld [vmem:[%s1 + $0x150] sm:$0xff]
    %v200 = vld [vmem:[%s1 + $0x158] sm:$0xff]
    %v201 = vld [vmem:[%s1 + $0x160] sm:$0xff]
    %v202 = vld [vmem:[%s1 + $0x168] sm:$0xff]
    %v203 = vld [vmem:[%s1 + $0x170] sm:$0xff]
    %v204 = vld [vmem:[%s1 + $0x178] sm:$0xff]
    %v205 = vld [vmem:[%s1 + $0x180] sm:$0xff]
    %v206 = vld [vmem:[%s1 + $0x188] sm:$0xff]
    %v207 = vld [vmem:[%s1 + $0x190] sm:$0xff]
    %v208 = vld [vmem:[%s1 + $0x198] sm:$0xff]
    %v209 = vld [vmem:[%s1 + $0x1a0] sm:$0xff]
    %v210 = vld [vmem:[%s1 + $0x1a8] sm:$0xff]
    %v211 = vld [vmem:[%s1 + $0x1b0] sm:$0xff]
    %v212 = vld [vmem:[%s1 + $0x1b8] sm:$0xff]
    %v213 = vld [vmem:[%s1 + $0x1c0] sm:$0xff]
    %v214 = vld [vmem:[%s1 + $0x1c8] sm:$0xff]
    %v215 = vld [vmem:[%s1 + $0x1d0] sm:$0xff]
    %v216 = vld [vmem:[%s1 + $0x1d8] sm:$0xff]
    %v217 = vld [vmem:[%s1 + $0x1e0] sm:$0xff]
    %v218 = vld [vmem:[%s1 + $0x1e8] sm:$0xff]
    %v219 = vld [vmem:[%s1 + $0x1f0] sm:$0xff]
    %v220 = vld [vmem:[%s1 + $0x1f8] sm:$0xff]
    %v221 = vld [vmem:[%s1 + $0x200] sm:$0xff]
    %v222 = vld [vmem:[%s1 + $0x208] sm:$0xff]
    %v223 = vld [vmem:[%s1 + $0x210] sm:$0xff]
    %v224 = vld [vmem:[%s1 + $0x218] sm:$0xff]
    %v225 = vld [vmem:[%s1 + $0x220] sm:$0xff]
    %v226 = vld [vmem:[%s1 + $0x228] sm:$0xff]
    %v227 = vld [vmem:[%s1 + $0x230] sm:$0xff]
    %v228 = vld [vmem:[%s1 + $0x238] sm:$0xff]
    %v229 = vld [vmem:[%s1 + $0x240] sm:$0xff]
    %v230 = vld [vmem:[%s1 + $0x248] sm:$0xff]
    %v231 = vld [vmem:[%s1 + $0x250] sm:$0xff]
    %v232 = vld [vmem:[%s1 + $0x258] sm:$0xff]
    %v233 = vld [vmem:[%s1 + $0x260] sm:$0xff]
    %v234 = vld [vmem:[%s1 + $0x268] sm:$0xff]
    %v235 = vld [vmem:[%s1 + $0x270] sm:$0xff]
    %v236 = vld [vmem:[%s1 + $0x278] sm:$0xff]
    %v237 = vld [vmem:[%s1 + $0x280] sm:$0xff]
    %v238 = vld [vmem:[%s1 + $0x288] sm:$0xff]
    %v239 = vld [vmem:[%s1 + $0x290] sm:$0xff]
    %v240 = vld [vmem:[%s1 + $0x298] sm:$0xff]
    %v241 = vld [vmem:[%s1 + $0x2a0] sm:$0xff]
    %v242 = vld [vmem:[%s1 + $0x2a8] sm:$0xff]
    %v243 = vld [vmem:[%s1 + $0x2b0] sm:$0xff]
    %v244 = vld [vmem:[%s1 + $0x2b8] sm:$0xff]
    %v245 = vld [vmem:[%s1 + $0x2c0] sm:$0xff]
    %v246 = vld [vmem:[%s1 + $0x2c8] sm:$0xff]
    %v247 = vld [vmem:[%s1 + $0x2d0] sm:$0xff]
    %v248 = vld [vmem:[%s1 + $0x2d8] sm:$0xff]
    %v249 = vld [vmem:[%s1 + $0x2e0] sm:$0xff]
    %v250 = vld [vmem:[%s1 + $0x2e8] sm:$0xff]
    %v251 = vld [vmem:[%s1 + $0x2f0] sm:$0xff]
    %v252 = vld [vmem:[%s1 + $0x2f8] sm:$0xff]
    %v253 = vld [vmem:[%s1 + $0x300] sm:$0xff]
    %v254 = vld [vmem:[%s1 + $0x308] sm:$0xff]
    %v255 = vld [vmem:[%s1 + $0x310] sm:$0xff]
    %v256 = vld [vmem:[%s1 + $0x318] sm:$0xff]
    %v257 = vld [vmem:[%s1 + $0x320] sm:$0xff]
    %v258 = vld [vmem:[%s1 + $0x328] sm:$0xff]
    %v259 = vld [vmem:[%s1 + $0x330] sm:$0xff]
    %v260 = vld [vmem:[%s1 + $0x338] sm:$0xff]
    %v261 = vld [vmem:[%s1 + $0x340] sm:$0xff]
    %v262 = vld [vmem:[%s1 + $0x348] sm:$0xff]
    %v263 = vld [vmem:[%s1 + $0x350] sm:$0xff]
    %v264 = vld [vmem:[%s1 + $0x358] sm:$0xff]
    %v265 = vld [vmem:[%s1 + $0x360] sm:$0xff]
    %v266 = vld [vmem:[%s1 + $0x368] sm:$0xff]
    %v267 = vld [vmem:[%s1 + $0x370] sm:$0xff]
    %v268 = vld [vmem:[%s1 + $0x378] sm:$0xff]
    %v269 = vld [vmem:[%s1 + $0x380] sm:$0xff]
    %v270 = vld [vmem:[%s1 + $0x388] sm:$0xff]
    %v271 = vld [vmem:[%s1 + $0x390] sm:$0xff]
    %v272 = vld [vmem:[%s1 + $0x398] sm:$0xff]
    %v273 = vld [vmem:[%s1 + $0x3a0] sm:$0xff]
    %v274 = vld [vmem:[%s1 + $0x3a8] sm:$0xff]
    %v275 = vld [vmem:[%s1 + $0x3b0] sm:$0xff]
    %v276 = vld [vmem:[%s1 + $0x3b8] sm:$0xff]
    %v277 = vld [vmem:[%s1 + $0x3c0] sm:$0xff]
    %v278 = vld [vmem:[%s1 + $0x3c8] sm:$0xff]
    %v279 = vld [vmem:[%s1 + $0x3d0] sm:$0xff]
    %v280 = vld [vmem:[%s1 + $0x3d8] sm:$0xff]
    %v281 = vld [vmem:[%s1 + $0x3e0] sm:$0xff]
    %v282 = vld [vmem:[%s1 + $0x3e8] sm:$0xff]
    %v283 = vld [vmem:[%s1 + $0x3f0] sm:$0xff]
    %v284 = vld [vmem:[%s1 + $0x3f8] sm:$0xff]
    %v285 = vld [vmem:[#allocation8] sm:$0x1]
    %v287 = vlaneseq
    %v288 = vshrl.u32 %v287, 7
    %v289 = vsub.s32 0, %v288
    %v290 = vrot.slane %v285, %v289
    %292 = vmatprep.subr.mxu0 0.0
    %293 = vmatpush1.msra.mxu0 %v172
    %294 = vmatprep.subr.mxu0 0.0
    %295 = vmatpush1.msra.mxu0 %v171
    %296 = vmatprep.subr.mxu0 0.0
    %297 = vmatpush1.msra.mxu0 %v170
    %298 = vmatprep.subr.mxu0 0.0
    %299 = vmatpush1.msra.mxu0 %v169
    %300 = vmatprep.subr.mxu0 0.0
    %301 = vmatpush1.msra.mxu0 %v168
    %302 = vmatprep.subr.mxu0 0.0
    %303 = vmatpush1.msra.mxu0 %v167
    %304 = vmatprep.subr.mxu0 0.0
    %305 = vmatpush1.msra.mxu0 %v166
    %306 = vmatprep.subr.mxu0 0.0
    %307 = vmatpush1.msra.mxu0 %v165
    %308 = vmatprep.subr.mxu0 0.0
    %309 = vmatpush1.msra.mxu0 %v164
    %310 = vmatprep.subr.mxu0 0.0
    %311 = vmatpush1.msra.mxu0 %v163
    %312 = vmatprep.subr.mxu0 0.0
    %313 = vmatpush1.msra.mxu0 %v162
    %314 = vmatprep.subr.mxu0 0.0
    %315 = vmatpush1.msra.mxu0 %v161
    %316 = vmatprep.subr.mxu0 0.0
    %317 = vmatpush1.msra.mxu0 %v160
    %318 = vmatprep.subr.mxu0 0.0
    %319 = vmatpush1.msra.mxu0 %v159
    %320 = vmatprep.subr.mxu0 0.0
    %321 = vmatpush1.msra.mxu0 %v158
    %322 = vmatprep.subr.mxu0 0.0
    %323 = vmatpush1.msra.mxu0 %v157
    %324 = vmatprep.subr.mxu0 0.0
    %325 = vmatpush2.msra.mxu0 %v188
    %326 = vmatprep.subr.mxu0 0.0
    %327 = vmatpush2.msra.mxu0 %v187
    %328 = vmatprep.subr.mxu0 0.0
    %329 = vmatpush2.msra.mxu0 %v186
    %330 = vmatprep.subr.mxu0 0.0
    %331 = vmatpush2.msra.mxu0 %v185
    %332 = vmatprep.subr.mxu0 0.0
    %333 = vmatpush2.msra.mxu0 %v184
    %334 = vmatprep.subr.mxu0 0.0
    %335 = vmatpush2.msra.mxu0 %v183
    %336 = vmatprep.subr.mxu0 0.0
    %337 = vmatpush2.msra.mxu0 %v182
    %338 = vmatprep.subr.mxu0 0.0
    %339 = vmatpush2.msra.mxu0 %v181
    %340 = vmatprep.subr.mxu0 0.0
    %341 = vmatpush2.msra.mxu0 %v180
    %342 = vmatprep.subr.mxu0 0.0
    %343 = vmatpush2.msra.mxu0 %v179
    %344 = vmatprep.subr.mxu0 0.0
    %345 = vmatpush2.msra.mxu0 %v178
    %346 = vmatprep.subr.mxu0 0.0
    %347 = vmatpush2.msra.mxu0 %v177
    %348 = vmatprep.subr.mxu0 0.0
    %349 = vmatpush2.msra.mxu0 %v176
    %350 = vmatprep.subr.mxu0 0.0
    %351 = vmatpush2.msra.mxu0 %v175
    %352 = vmatprep.subr.mxu0 0.0
    %353 = vmatpush2.msra.mxu0 %v174
    %354 = vmatprep.subr.mxu0 0.0
    %355 = vmatpush2.msra.mxu0 %v173
    %356 = vmatprep.mubr.f32.mxu0 %v150
    %357 = vmatmul.mubr.f32.gmra.mxu0 %v149
    %v358 = vpop.f32.mrf.mxu0
    %v359 = vadd.f32 %v290, %v358
    %v360 = vpop.f32.mrf.mxu0
    %361 = vdwg.mxu0
    %362 = vmatprep.subr.mxu0 0.0
    %363 = vmatpush1.msra.mxu0 %v204
    %364 = vmatprep.subr.mxu0 0.0
    %365 = vmatpush1.msra.mxu0 %v203
    %366 = vmatprep.subr.mxu0 0.0
    %367 = vmatpush1.msra.mxu0 %v202
    %368 = vmatprep.subr.mxu0 0.0
    %369 = vmatpush1.msra.mxu0 %v201
    %370 = vmatprep.subr.mxu0 0.0
    %371 = vmatpush1.msra.mxu0 %v200
    %372 = vmatprep.subr.mxu0 0.0
    %373 = vmatpush1.msra.mxu0 %v199
    %374 = vmatprep.subr.mxu0 0.0
    %375 = vmatpush1.msra.mxu0 %v198
    %376 = vmatprep.subr.mxu0 0.0
    %377 = vmatpush1.msra.mxu0 %v197
    %378 = vmatprep.subr.mxu0 0.0
    %379 = vmatpush1.msra.mxu0 %v196
    %380 = vmatprep.subr.mxu0 0.0
    %381 = vmatpush1.msra.mxu0 %v195
    %382 = vmatprep.subr.mxu0 0.0
    %383 = vmatpush1.msra.mxu0 %v194
    %384 = vmatprep.subr.mxu0 0.0
    %385 = vmatpush1.msra.mxu0 %v193
    %386 = vmatprep.subr.mxu0 0.0
    %387 = vmatpush1.msra.mxu0 %v192
    %388 = vmatprep.subr.mxu0 0.0
    %389 = vmatpush1.msra.mxu0 %v191
    %390 = vmatprep.subr.mxu0 0.0
    %391 = vmatpush1.msra.mxu0 %v190
    %392 = vmatprep.subr.mxu0 0.0
    %393 = vmatpush1.msra.mxu0 %v189
    %394 = vmatprep.subr.mxu0 0.0
    %395 = vmatpush2.msra.mxu0 %v220
    %396 = vmatprep.subr.mxu0 0.0
    %397 = vmatpush2.msra.mxu0 %v219
    %398 = vmatprep.subr.mxu0 0.0
    %399 = vmatpush2.msra.mxu0 %v218
    %400 = vmatprep.subr.mxu0 0.0
    %401 = vmatpush2.msra.mxu0 %v217
    %402 = vmatprep.subr.mxu0 0.0
    %403 = vmatpush2.msra.mxu0 %v216
    %404 = vmatprep.subr.mxu0 0.0
    %405 = vmatpush2.msra.mxu0 %v215
    %406 = vmatprep.subr.mxu0 0.0
    %407 = vmatpush2.msra.mxu0 %v214
    %408 = vmatprep.subr.mxu0 0.0
    %409 = vmatpush2.msra.mxu0 %v213
    %410 = vmatprep.subr.mxu0 0.0
    %411 = vmatpush2.msra.mxu0 %v212
    %412 = vmatprep.subr.mxu0 0.0
    %413 = vmatpush2.msra.mxu0 %v211
    %414 = vmatprep.subr.mxu0 0.0
    %415 = vmatpush2.msra.mxu0 %v210
    %416 = vmatprep.subr.mxu0 0.0
    %417 = vmatpush2.msra.mxu0 %v209
    %418 = vmatprep.subr.mxu0 0.0
    %419 = vmatpush2.msra.mxu0 %v208
    %420 = vmatprep.subr.mxu0 0.0
    %421 = vmatpush2.msra.mxu0 %v207
    %422 = vmatprep.subr.mxu0 0.0
    %423 = vmatpush2.msra.mxu0 %v206
    %424 = vmatprep.subr.mxu0 0.0
    %425 = vmatpush2.msra.mxu0 %v205
    %426 = vmatprep.mubr.f32.mxu0 %v152
    %427 = vmatmul.mubr.f32.gmra.mxu0 %v151
    %v428 = vpop.f32.mrf.mxu0
    %v429 = vadd.f32 %v359, %v428
    %v430 = vpop.f32.mrf.mxu0
    %431 = vdwg.mxu0
    %432 = vmatprep.subr.mxu0 0.0
    %433 = vmatpush1.msra.mxu0 %v236
    %434 = vmatprep.subr.mxu0 0.0
    %435 = vmatpush1.msra.mxu0 %v235
    %436 = vmatprep.subr.mxu0 0.0
    %437 = vmatpush1.msra.mxu0 %v234
    %438 = vmatprep.subr.mxu0 0.0
    %439 = vmatpush1.msra.mxu0 %v233
    %440 = vmatprep.subr.mxu0 0.0
    %441 = vmatpush1.msra.mxu0 %v232
    %442 = vmatprep.subr.mxu0 0.0
    %443 = vmatpush1.msra.mxu0 %v231
    %444 = vmatprep.subr.mxu0 0.0
    %445 = vmatpush1.msra.mxu0 %v230
    %446 = vmatprep.subr.mxu0 0.0
    %447 = vmatpush1.msra.mxu0 %v229
    %448 = vmatprep.subr.mxu0 0.0
    %449 = vmatpush1.msra.mxu0 %v228
    %450 = vmatprep.subr.mxu0 0.0
    %451 = vmatpush1.msra.mxu0 %v227
    %452 = vmatprep.subr.mxu0 0.0
    %453 = vmatpush1.msra.mxu0 %v226
    %454 = vmatprep.subr.mxu0 0.0
    %455 = vmatpush1.msra.mxu0 %v225
    %456 = vmatprep.subr.mxu0 0.0
    %457 = vmatpush1.msra.mxu0 %v224
    %458 = vmatprep.subr.mxu0 0.0
    %459 = vmatpush1.msra.mxu0 %v223
    %460 = vmatprep.subr.mxu0 0.0
    %461 = vmatpush1.msra.mxu0 %v222
    %462 = vmatprep.subr.mxu0 0.0
    %463 = vmatpush1.msra.mxu0 %v221
    %464 = vmatprep.subr.mxu0 0.0
    %465 = vmatpush2.msra.mxu0 %v252
    %466 = vmatprep.subr.mxu0 0.0
    %467 = vmatpush2.msra.mxu0 %v251
    %468 = vmatprep.subr.mxu0 0.0
    %469 = vmatpush2.msra.mxu0 %v250
    %470 = vmatprep.subr.mxu0 0.0
    %471 = vmatpush2.msra.mxu0 %v249
    %472 = vmatprep.subr.mxu0 0.0
    %473 = vmatpush2.msra.mxu0 %v248
    %474 = vmatprep.subr.mxu0 0.0
    %475 = vmatpush2.msra.mxu0 %v247
    %476 = vmatprep.subr.mxu0 0.0
    %477 = vmatpush2.msra.mxu0 %v246
    %478 = vmatprep.subr.mxu0 0.0
    %479 = vmatpush2.msra.mxu0 %v245
    %480 = vmatprep.subr.mxu0 0.0
    %481 = vmatpush2.msra.mxu0 %v244
    %482 = vmatprep.subr.mxu0 0.0
    %483 = vmatpush2.msra.mxu0 %v243
    %484 = vmatprep.subr.mxu0 0.0
    %485 = vmatpush2.msra.mxu0 %v242
    %486 = vmatprep.subr.mxu0 0.0
    %487 = vmatpush2.msra.mxu0 %v241
    %488 = vmatprep.subr.mxu0 0.0
    %489 = vmatpush2.msra.mxu0 %v240
    %490 = vmatprep.subr.mxu0 0.0
    %491 = vmatpush2.msra.mxu0 %v239
    %492 = vmatprep.subr.mxu0 0.0
    %493 = vmatpush2.msra.mxu0 %v238
    %494 = vmatprep.subr.mxu0 0.0
    %495 = vmatpush2.msra.mxu0 %v237
    %496 = vmatprep.mubr.f32.mxu0 %v154
    %497 = vmatmul.mubr.f32.gmra.mxu0 %v153
    %v498 = vpop.f32.mrf.mxu0
    %v499 = vadd.f32 %v429, %v498
    %v500 = vpop.f32.mrf.mxu0
    %501 = vdwg.mxu0
    %502 = vmatprep.subr.mxu0 0.0
    %503 = vmatpush1.msra.mxu0 %v268
    %504 = vmatprep.subr.mxu0 0.0
    %505 = vmatpush1.msra.mxu0 %v267
    %506 = vmatprep.subr.mxu0 0.0
    %507 = vmatpush1.msra.mxu0 %v266
    %508 = vmatprep.subr.mxu0 0.0
    %509 = vmatpush1.msra.mxu0 %v265
    %510 = vmatprep.subr.mxu0 0.0
    %511 = vmatpush1.msra.mxu0 %v264
    %512 = vmatprep.subr.mxu0 0.0
    %513 = vmatpush1.msra.mxu0 %v263
    %514 = vmatprep.subr.mxu0 0.0
    %515 = vmatpush1.msra.mxu0 %v262
    %516 = vmatprep.subr.mxu0 0.0
    %517 = vmatpush1.msra.mxu0 %v261
    %518 = vmatprep.subr.mxu0 0.0
    %519 = vmatpush1.msra.mxu0 %v260
    %520 = vmatprep.subr.mxu0 0.0
    %521 = vmatpush1.msra.mxu0 %v259
    %522 = vmatprep.subr.mxu0 0.0
    %523 = vmatpush1.msra.mxu0 %v258
    %524 = vmatprep.subr.mxu0 0.0
    %525 = vmatpush1.msra.mxu0 %v257
    %526 = vmatprep.subr.mxu0 0.0
    %527 = vmatpush1.msra.mxu0 %v256
    %528 = vmatprep.subr.mxu0 0.0
    %529 = vmatpush1.msra.mxu0 %v255
    %530 = vmatprep.subr.mxu0 0.0
    %531 = vmatpush1.msra.mxu0 %v254
    %532 = vmatprep.subr.mxu0 0.0
    %533 = vmatpush1.msra.mxu0 %v253
    %534 = vmatprep.subr.mxu0 0.0
    %535 = vmatpush2.msra.mxu0 %v284
    %536 = vmatprep.subr.mxu0 0.0
    %537 = vmatpush2.msra.mxu0 %v283
    %538 = vmatprep.subr.mxu0 0.0
    %539 = vmatpush2.msra.mxu0 %v282
    %540 = vmatprep.subr.mxu0 0.0
    %541 = vmatpush2.msra.mxu0 %v281
    %542 = vmatprep.subr.mxu0 0.0
    %543 = vmatpush2.msra.mxu0 %v280
    %544 = vmatprep.subr.mxu0 0.0
    %545 = vmatpush2.msra.mxu0 %v279
    %546 = vmatprep.subr.mxu0 0.0
    %547 = vmatpush2.msra.mxu0 %v278
    %548 = vmatprep.subr.mxu0 0.0
    %549 = vmatpush2.msra.mxu0 %v277
    %550 = vmatprep.subr.mxu0 0.0
    %551 = vmatpush2.msra.mxu0 %v276
    %552 = vmatprep.subr.mxu0 0.0
    %553 = vmatpush2.msra.mxu0 %v275
    %554 = vmatprep.subr.mxu0 0.0
    %555 = vmatpush2.msra.mxu0 %v274
    %556 = vmatprep.subr.mxu0 0.0
    %557 = vmatpush2.msra.mxu0 %v273
    %558 = vmatprep.subr.mxu0 0.0
    %559 = vmatpush2.msra.mxu0 %v272
    %560 = vmatprep.subr.mxu0 0.0
    %561 = vmatpush2.msra.mxu0 %v271
    %562 = vmatprep.subr.mxu0 0.0
    %563 = vmatpush2.msra.mxu0 %v270
    %564 = vmatprep.subr.mxu0 0.0
    %565 = vmatpush2.msra.mxu0 %v269
    %566 = vmatprep.mubr.f32.mxu0 %v156
    %567 = vmatmul.mubr.f32.gmra.mxu0 %v155
    %v568 = vpop.f32.mrf.mxu0
    %v569 = vadd.f32 %v499, %v568
    %v570 = vpop.f32.mrf.mxu0
    %571 = vdwg.mxu0
    %v572 = vmax.f32 %v569, 0.0
    %v573 = vld [vmem:[#allocation10] sm:$0xff]
    %v574 = vld [vmem:[#allocation10 + $0x8] sm:$0xff]
    %v575 = vld [vmem:[#allocation10 + $0x10] sm:$0xff]
    %v576 = vld [vmem:[#allocation10 + $0x18] sm:$0xff]
    %v577 = vld [vmem:[#allocation10 + $0x20] sm:$0xff]
    %v578 = vld [vmem:[#allocation10 + $0x28] sm:$0xff]
    %v579 = vld [vmem:[#allocation10 + $0x30] sm:$0xff]
    %v580 = vld [vmem:[#allocation10 + $0x38] sm:$0xff]
    %v581 = vld [vmem:[#allocation11] sm:$0x1]
    %v583 = vlaneseq
    %v584 = vshrl.u32 %v583, 7
    %v585 = vsub.s32 0, %v584
    %v586 = vrot.slane %v581, %v585
    %vm588 = vcmask 523264
    %v590 = vsel %vm588, %v572, 0
    %592 = vmatprep.subr.mxu0 0.0
    %593 = vmatpush1.msra.mxu0 0.0
    %594 = vmatprep.subr.mxu0 0.0
    %595 = vmatpush1.msra.mxu0 0.0
    %596 = vmatprep.subr.mxu0 0.0
    %597 = vmatpush1.msra.mxu0 0.0
    %598 = vmatprep.subr.mxu0 0.0
    %599 = vmatpush1.msra.mxu0 0.0
    %600 = vmatprep.subr.mxu0 0.0
    %601 = vmatpush1.msra.mxu0 0.0
    %602 = vmatprep.subr.mxu0 0.0
    %603 = vmatpush1.msra.mxu0 0.0
    %604 = vmatprep.subr.mxu0 0.0
    %605 = vmatpush1.msra.mxu0 0.0
    %606 = vmatprep.subr.mxu0 0.0
    %607 = vmatpush1.msra.mxu0 0.0
    %608 = vmatprep.subr.mxu0 0.0
    %609 = vmatpush1.msra.mxu0 %v580
    %610 = vmatprep.subr.mxu0 0.0
    %611 = vmatpush1.msra.mxu0 %v579
    %612 = vmatprep.subr.mxu0 0.0
    %613 = vmatpush1.msra.mxu0 %v578
    %614 = vmatprep.subr.mxu0 0.0
    %615 = vmatpush1.msra.mxu0 %v577
    %616 = vmatprep.subr.mxu0 0.0
    %617 = vmatpush1.msra.mxu0 %v576
    %618 = vmatprep.subr.mxu0 0.0
    %619 = vmatpush1.msra.mxu0 %v575
    %620 = vmatprep.subr.mxu0 0.0
    %621 = vmatpush1.msra.mxu0 %v574
    %622 = vmatprep.subr.mxu0 0.0
    %623 = vmatpush1.msra.mxu0 %v573
    %624 = vmatprep.subr.mxu0 0.0
    %625 = vmatpush2.msra.mxu0 0.0
    %626 = vmatprep.subr.mxu0 0.0
    %627 = vmatpush2.msra.mxu0 0.0
    %628 = vmatprep.subr.mxu0 0.0
    %629 = vmatpush2.msra.mxu0 0.0
    %630 = vmatprep.subr.mxu0 0.0
    %631 = vmatpush2.msra.mxu0 0.0
    %632 = vmatprep.subr.mxu0 0.0
    %633 = vmatpush2.msra.mxu0 0.0
    %634 = vmatprep.subr.mxu0 0.0
    %635 = vmatpush2.msra.mxu0 0.0
    %636 = vmatprep.subr.mxu0 0.0
    %637 = vmatpush2.msra.mxu0 0.0
    %638 = vmatprep.subr.mxu0 0.0
    %639 = vmatpush2.msra.mxu0 0.0
    %640 = vmatprep.subr.mxu0 0.0
    %641 = vmatpush2.msra.mxu0 0.0
    %642 = vmatprep.subr.mxu0 0.0
    %643 = vmatpush2.msra.mxu0 0.0
    %644 = vmatprep.subr.mxu0 0.0
    %645 = vmatpush2.msra.mxu0 0.0
    %646 = vmatprep.subr.mxu0 0.0
    %647 = vmatpush2.msra.mxu0 0.0
    %648 = vmatprep.subr.mxu0 0.0
    %649 = vmatpush2.msra.mxu0 0.0
    %650 = vmatprep.subr.mxu0 0.0
    %651 = vmatpush2.msra.mxu0 0.0
    %652 = vmatprep.subr.mxu0 0.0
    %653 = vmatpush2.msra.mxu0 0.0
    %654 = vmatprep.subr.mxu0 0.0
    %655 = vmatpush2.msra.mxu0 0.0
    %656 = vmatprep.mubr.f32.mxu0 0.0
    %657 = vmatmul.mubr.f32.gmra.mxu0 %v590
    %v658 = vpop.f32.mrf.mxu0
    %v659 = vadd.f32 %v586, %v658
    %v660 = vpop.f32.mrf.mxu0
    %661 = vdwg.mxu0
    %v662 = vld [vmem:[%s5] sm:$0xff]
    %v663 = vld [vmem:[%s5 + $0x8] sm:$0xff]
    %v664 = vld [vmem:[%s5 + $0x10] sm:$0xff]
    %v665 = vld [vmem:[%s5 + $0x18] sm:$0xff]
    %v666 = vld [vmem:[%s5 + $0x20] sm:$0xff]
    %v667 = vld [vmem:[%s5 + $0x28] sm:$0xff]
    %v668 = vld [vmem:[%s5 + $0x30] sm:$0xff]
    %v669 = vld [vmem:[%s5 + $0x38] sm:$0xff]
    %v670 = vld [vmem:[%s5 + $0x40] sm:$0xff]
    %v671 = vld [vmem:[%s5 + $0x48] sm:$0xff]
    %v672 = vld [vmem:[%s5 + $0x50] sm:$0xff]
    %v673 = vld [vmem:[%s5 + $0x58] sm:$0xff]
    %v674 = vld [vmem:[%s5 + $0x60] sm:$0xff]
    %v675 = vld [vmem:[%s5 + $0x68] sm:$0xff]
    %v676 = vld [vmem:[%s5 + $0x70] sm:$0xff]
    %v677 = vld [vmem:[%s5 + $0x78] sm:$0xff]
    %v678 = vld [vmem:[#allocation13] sm:$0x1]
    %v680 = vlaneseq
    %v681 = vshrl.u32 %v680, 7
    %v682 = vsub.s32 0, %v681
    %v683 = vrot.slane %v678, %v682
    %685 = vmatprep.subr.mxu0 0.0
    %686 = vmatpush1.msra.mxu0 %v677
    %687 = vmatprep.subr.mxu0 0.0
    %688 = vmatpush1.msra.mxu0 %v676
    %689 = vmatprep.subr.mxu0 0.0
    %690 = vmatpush1.msra.mxu0 %v675
    %691 = vmatprep.subr.mxu0 0.0
    %692 = vmatpush1.msra.mxu0 %v674
    %693 = vmatprep.subr.mxu0 0.0
    %694 = vmatpush1.msra.mxu0 %v673
    %695 = vmatprep.subr.mxu0 0.0
    %696 = vmatpush1.msra.mxu0 %v672
    %697 = vmatprep.subr.mxu0 0.0
    %698 = vmatpush1.msra.mxu0 %v671
    %699 = vmatprep.subr.mxu0 0.0
    %700 = vmatpush1.msra.mxu0 %v670
    %701 = vmatprep.subr.mxu0 0.0
    %702 = vmatpush1.msra.mxu0 %v669
    %703 = vmatprep.subr.mxu0 0.0
    %704 = vmatpush1.msra.mxu0 %v668
    %705 = vmatprep.subr.mxu0 0.0
    %706 = vmatpush1.msra.mxu0 %v667
    %707 = vmatprep.subr.mxu0 0.0
    %708 = vmatpush1.msra.mxu0 %v666
    %709 = vmatprep.subr.mxu0 0.0
    %710 = vmatpush1.msra.mxu0 %v665
    %711 = vmatprep.subr.mxu0 0.0
    %712 = vmatpush1.msra.mxu0 %v664
    %713 = vmatprep.subr.mxu0 0.0
    %714 = vmatpush1.msra.mxu0 %v663
    %715 = vmatprep.subr.mxu0 0.0
    %716 = vmatpush1.msra.mxu0 %v662
    %717 = vmatprep.subr.mxu0 0.0
    %718 = vmatpush2.msra.mxu0 0.0
    %719 = vmatprep.subr.mxu0 0.0
    %720 = vmatpush2.msra.mxu0 0.0
    %721 = vmatprep.subr.mxu0 0.0
    %722 = vmatpush2.msra.mxu0 0.0
    %723 = vmatprep.subr.mxu0 0.0
    %724 = vmatpush2.msra.mxu0 0.0
    %725 = vmatprep.subr.mxu0 0.0
    %726 = vmatpush2.msra.mxu0 0.0
    %727 = vmatprep.subr.mxu0 0.0
    %728 = vmatpush2.msra.mxu0 0.0
    %729 = vmatprep.subr.mxu0 0.0
    %730 = vmatpush2.msra.mxu0 0.0
    %731 = vmatprep.subr.mxu0 0.0
    %732 = vmatpush2.msra.mxu0 0.0
    %733 = vmatprep.subr.mxu0 0.0
    %734 = vmatpush2.msra.mxu0 0.0
    %735 = vmatprep.subr.mxu0 0.0
    %736 = vmatpush2.msra.mxu0 0.0
    %737 = vmatprep.subr.mxu0 0.0
    %738 = vmatpush2.msra.mxu0 0.0
    %739 = vmatprep.subr.mxu0 0.0
    %740 = vmatpush2.msra.mxu0 0.0
    %741 = vmatprep.subr.mxu0 0.0
    %742 = vmatpush2.msra.mxu0 0.0
    %743 = vmatprep.subr.mxu0 0.0
    %744 = vmatpush2.msra.mxu0 0.0
    %745 = vmatprep.subr.mxu0 0.0
    %746 = vmatpush2.msra.mxu0 0.0
    %747 = vmatprep.subr.mxu0 0.0
    %748 = vmatpush2.msra.mxu0 0.0
    %749 = vmatprep.mubr.f32.mxu0 0.0
    %750 = vmatmul.mubr.f32.gmra.mxu0 %v659
    %v751 = vpop.f32.mrf.mxu0
    %v752 = vadd.f32 %v683, %v751
    %v753 = vpop.f32.mrf.mxu0
    %754 = vdwg.mxu0
    %vm755 = vcmask 64512
    %756 = vst.msk [vmem:[#allocation19] sm:$0xff] %vm755, %v752
    %v757 = vsel %vm755, %v752, -inf
    %758 = vmax.xlane.f32.xlu0 %v757
    %v759 = vpop.xlane.xlu0 %758
    %v760 = vsub.f32 %v752, %v759
    %v761 = vmul.f32 %v760, 1.442695
    %v762 = vpow.pop %v761
    %v763 = vsel %vm755, %v762, 0.0
    %764 = vadd.xlane.f32.xlu0 %v763
    %v765 = vpop.xlane.xlu0 %764
    %v766 = vrcp.pop %v765
    %v767 = vmul.f32 %v762, %v766
    %769 = vset.pattern.permute.xlu0 0
    %770 = vperm.xlu0 %769, %v767
    %v771 = vpop.permute.xlu0 %770
    %v773 = vmul.f32 %v771, %v659
    %v774 = vpack.c.bf16 %v773, %v773
    %775 = vst [vmem:[#allocation2] sm:$0xf] %v774
    %776 = vset.pattern.permute.xlu0 1
    %777 = vperm.xlu0 %776, %v767
    %v778 = vpop.permute.xlu0 %777
    %v780 = vmul.f32 %v778, %v659
    %v781 = vpack.c.bf16 %v780, %v780
    %782 = vst [vmem:[#allocation2 + $0x4] sm:$0xf] %v781
    %783 = vset.pattern.permute.xlu0 2
    %784 = vperm.xlu0 %783, %v767
    %v785 = vpop.permute.xlu0 %784
    %v787 = vmul.f32 %v785, %v659
    %v788 = vpack.c.bf16 %v787, %v787
    %789 = vst [vmem:[#allocation2 + $0x8] sm:$0xf] %v788
    %790 = vset.pattern.permute.xlu0 3
    %791 = vperm.xlu0 %790, %v767
    %v792 = vpop.permute.xlu0 %791
    %v794 = vmul.f32 %v792, %v659
    %v795 = vpack.c.bf16 %v794, %v794
    %796 = vst [vmem:[#allocation2 + $0xc] sm:$0xf] %v795
    %797 = vset.pattern.permute.xlu0 4
    %798 = vperm.xlu0 %797, %v767
    %v799 = vpop.permute.xlu0 %798
    %v801 = vmul.f32 %v799, %v659
    %v802 = vpack.c.bf16 %v801, %v801
    %803 = vst [vmem:[#allocation2 + $0x10] sm:$0xf] %v802
    %804 = vset.pattern.permute.xlu0 5
    %805 = vperm.xlu0 %804, %v767
    %v806 = vpop.permute.xlu0 %805
    %v808 = vmul.f32 %v806, %v659
    %v809 = vpack.c.bf16 %v808, %v808
    %810 = vst [vmem:[#allocation2 + $0x14] sm:$0xf] %v809
    %811 = vset.pattern.permute.xlu0 6
    %812 = vperm.xlu0 %811, %v767
    %v813 = vpop.permute.xlu0 %812
    %v815 = vmul.f32 %v813, %v659
    %v816 = vpack.c.bf16 %v815, %v815
    %817 = vst [vmem:[#allocation2 + $0x18] sm:$0xf] %v816
    %818 = vset.pattern.permute.xlu0 7
    %819 = vperm.xlu0 %818, %v767
    %v820 = vpop.permute.xlu0 %819
    %v822 = vmul.f32 %v820, %v659
    %v823 = vpack.c.bf16 %v822, %v822
    %824 = vst [vmem:[#allocation2 + $0x1c] sm:$0xf] %v823
    %s825 = smul.u32 4, 32
    %s826 = smul.u32 %s825, 8
    %s827 = sshll.u32 %s826, 4
    %828 = dma.done [#allocation4], %s827
    %s829 = scalar_lea.hbm %s11, 16384
    %s830 = scalar_lea.vmem [#allocation3], 1024
    %s831 = scalar_lea.sflag [#allocation4], 1
    // Predicated region
    $region82: #{tpu_custom_call.1} parent=1 // pred_check
      _
    $region83: #{tpu_custom_call.1} parent=1 // pred_check_branch
      %833 = sbr.rel target = $region85
    $region84: #{tpu_custom_call.1} parent=1 // pred_region
      %834 = sst [smem:[#allocation22]] [#allocation25]
      %835 = sst [smem:[#allocation23]] [#allocation24]
    $region85: #{tpu_custom_call.1} parent=1 // pred_fallthru
      _
    %837 = shalt.err (0)
    %s839 = sshll.u32 %s830, 4
    %s840 = int_to_ptr.vmem [resolvable:$true] %s839
    %842 = dma.hbm_to_vmem [thread:$0]  %s829, 16384, %s840, %s831
    %v843 = vld [vmem:[#allocation2] sm:$0xff]
    %v844 = vld [vmem:[#allocation3] sm:$0xff]
    %v845 = vld [vmem:[#allocation3 + $0x8] sm:$0xff]
    %v846 = vld [vmem:[#allocation3 + $0x10] sm:$0xff]
    %v847 = vld [vmem:[#allocation3 + $0x18] sm:$0xff]
    %v848 = vld [vmem:[#allocation3 + $0x20] sm:$0xff]
    %v849 = vld [vmem:[#allocation3 + $0x28] sm:$0xff]
    %v850 = vld [vmem:[#allocation3 + $0x30] sm:$0xff]
    %v851 = vld [vmem:[#allocation3 + $0x38] sm:$0xff]
    %v852 = vld [vmem:[#allocation3 + $0x40] sm:$0xff]
    %v853 = vld [vmem:[#allocation3 + $0x48] sm:$0xff]
    %v854 = vld [vmem:[#allocation3 + $0x50] sm:$0xff]
    %v855 = vld [vmem:[#allocation3 + $0x58] sm:$0xff]
    %v856 = vld [vmem:[#allocation3 + $0x60] sm:$0xff]
    %v857 = vld [vmem:[#allocation3 + $0x68] sm:$0xff]
    %v858 = vld [vmem:[#allocation3 + $0x70] sm:$0xff]
    %v859 = vld [vmem:[#allocation3 + $0x78] sm:$0xff]
    %v860 = vld [vmem:[#allocation3 + $0x80] sm:$0xff]
    %v861 = vld [vmem:[#allocation3 + $0x88] sm:$0xff]
    %v862 = vld [vmem:[#allocation3 + $0x90] sm:$0xff]
    %v863 = vld [vmem:[#allocation3 + $0x98] sm:$0xff]
    %v864 = vld [vmem:[#allocation3 + $0xa0] sm:$0xff]
    %v865 = vld [vmem:[#allocation3 + $0xa8] sm:$0xff]
    %v866 = vld [vmem:[#allocation3 + $0xb0] sm:$0xff]
    %v867 = vld [vmem:[#allocation3 + $0xb8] sm:$0xff]
    %v868 = vld [vmem:[#allocation3 + $0xc0] sm:$0xff]
    %v869 = vld [vmem:[#allocation3 + $0xc8] sm:$0xff]
    %v870 = vld [vmem:[#allocation3 + $0xd0] sm:$0xff]
    %v871 = vld [vmem:[#allocation3 + $0xd8] sm:$0xff]
    %v872 = vld [vmem:[#allocation3 + $0xe0] sm:$0xff]
    %v873 = vld [vmem:[#allocation3 + $0xe8] sm:$0xff]
    %v874 = vld [vmem:[#allocation3 + $0xf0] sm:$0xff]
    %v875 = vld [vmem:[#allocation3 + $0xf8] sm:$0xff]
    %v876 = vld [vmem:[#allocation3 + $0x100] sm:$0xff]
    %v877 = vld [vmem:[#allocation3 + $0x108] sm:$0xff]
    %v878 = vld [vmem:[#allocation3 + $0x110] sm:$0xff]
    %v879 = vld [vmem:[#allocation3 + $0x118] sm:$0xff]
    %v880 = vld [vmem:[#allocation3 + $0x120] sm:$0xff]
    %v881 = vld [vmem:[#allocation3 + $0x128] sm:$0xff]
    %v882 = vld [vmem:[#allocation3 + $0x130] sm:$0xff]
    %v883 = vld [vmem:[#allocation3 + $0x138] sm:$0xff]
    %v884 = vld [vmem:[#allocation3 + $0x140] sm:$0xff]
    %v885 = vld [vmem:[#allocation3 + $0x148] sm:$0xff]
    %v886 = vld [vmem:[#allocation3 + $0x150] sm:$0xff]
    %v887 = vld [vmem:[#allocation3 + $0x158] sm:$0xff]
    %v888 = vld [vmem:[#allocation3 + $0x160] sm:$0xff]
    %v889 = vld [vmem:[#allocation3 + $0x168] sm:$0xff]
    %v890 = vld [vmem:[#allocation3 + $0x170] sm:$0xff]
    %v891 = vld [vmem:[#allocation3 + $0x178] sm:$0xff]
    %v892 = vld [vmem:[#allocation3 + $0x180] sm:$0xff]
    %v893 = vld [vmem:[#allocation3 + $0x188] sm:$0xff]
    %v894 = vld [vmem:[#allocation3 + $0x190] sm:$0xff]
    %v895 = vld [vmem:[#allocation3 + $0x198] sm:$0xff]
    %v896 = vld [vmem:[#allocation3 + $0x1a0] sm:$0xff]
    %v897 = vld [vmem:[#allocation3 + $0x1a8] sm:$0xff]
    %v898 = vld [vmem:[#allocation3 + $0x1b0] sm:$0xff]
    %v899 = vld [vmem:[#allocation3 + $0x1b8] sm:$0xff]
    %v900 = vld [vmem:[#allocation3 + $0x1c0] sm:$0xff]
    %v901 = vld [vmem:[#allocation3 + $0x1c8] sm:$0xff]
    %v902 = vld [vmem:[#allocation3 + $0x1d0] sm:$0xff]
    %v903 = vld [vmem:[#allocation3 + $0x1d8] sm:$0xff]
    %v904 = vld [vmem:[#allocation3 + $0x1e0] sm:$0xff]
    %v905 = vld [vmem:[#allocation3 + $0x1e8] sm:$0xff]
    %v906 = vld [vmem:[#allocation3 + $0x1f0] sm:$0xff]
    %v907 = vld [vmem:[#allocation3 + $0x1f8] sm:$0xff]
    %v908 = vld [vmem:[#allocation3 + $0x200] sm:$0xff]
    %v909 = vld [vmem:[#allocation3 + $0x208] sm:$0xff]
    %v910 = vld [vmem:[#allocation3 + $0x210] sm:$0xff]
    %v911 = vld [vmem:[#allocation3 + $0x218] sm:$0xff]
    %v912 = vld [vmem:[#allocation3 + $0x220] sm:$0xff]
    %v913 = vld [vmem:[#allocation3 + $0x228] sm:$0xff]
    %v914 = vld [vmem:[#allocation3 + $0x230] sm:$0xff]
    %v915 = vld [vmem:[#allocation3 + $0x238] sm:$0xff]
    %v916 = vld [vmem:[#allocation3 + $0x240] sm:$0xff]
    %v917 = vld [vmem:[#allocation3 + $0x248] sm:$0xff]
    %v918 = vld [vmem:[#allocation3 + $0x250] sm:$0xff]
    %v919 = vld [vmem:[#allocation3 + $0x258] sm:$0xff]
    %v920 = vld [vmem:[#allocation3 + $0x260] sm:$0xff]
    %v921 = vld [vmem:[#allocation3 + $0x268] sm:$0xff]
    %v922 = vld [vmem:[#allocation3 + $0x270] sm:$0xff]
    %v923 = vld [vmem:[#allocation3 + $0x278] sm:$0xff]
    %v924 = vld [vmem:[#allocation3 + $0x280] sm:$0xff]
    %v925 = vld [vmem:[#allocation3 + $0x288] sm:$0xff]
    %v926 = vld [vmem:[#allocation3 + $0x290] sm:$0xff]
    %v927 = vld [vmem:[#allocation3 + $0x298] sm:$0xff]
    %v928 = vld [vmem:[#allocation3 + $0x2a0] sm:$0xff]
    %v929 = vld [vmem:[#allocation3 + $0x2a8] sm:$0xff]
    %v930 = vld [vmem:[#allocation3 + $0x2b0] sm:$0xff]
    %v931 = vld [vmem:[#allocation3 + $0x2b8] sm:$0xff]
    %v932 = vld [vmem:[#allocation3 + $0x2c0] sm:$0xff]
    %v933 = vld [vmem:[#allocation3 + $0x2c8] sm:$0xff]
    %v934 = vld [vmem:[#allocation3 + $0x2d0] sm:$0xff]
    %v935 = vld [vmem:[#allocation3 + $0x2d8] sm:$0xff]
    %v936 = vld [vmem:[#allocation3 + $0x2e0] sm:$0xff]
    %v937 = vld [vmem:[#allocation3 + $0x2e8] sm:$0xff]
    %v938 = vld [vmem:[#allocation3 + $0x2f0] sm:$0xff]
    %v939 = vld [vmem:[#allocation3 + $0x2f8] sm:$0xff]
    %v940 = vld [vmem:[#allocation3 + $0x300] sm:$0xff]
    %v941 = vld [vmem:[#allocation3 + $0x308] sm:$0xff]
    %v942 = vld [vmem:[#allocation3 + $0x310] sm:$0xff]
    %v943 = vld [vmem:[#allocation3 + $0x318] sm:$0xff]
    %v944 = vld [vmem:[#allocation3 + $0x320] sm:$0xff]
    %v945 = vld [vmem:[#allocation3 + $0x328] sm:$0xff]
    %v946 = vld [vmem:[#allocation3 + $0x330] sm:$0xff]
    %v947 = vld [vmem:[#allocation3 + $0x338] sm:$0xff]
    %v948 = vld [vmem:[#allocation3 + $0x340] sm:$0xff]
    %v949 = vld [vmem:[#allocation3 + $0x348] sm:$0xff]
    %v950 = vld [vmem:[#allocation3 + $0x350] sm:$0xff]
    %v951 = vld [vmem:[#allocation3 + $0x358] sm:$0xff]
    %v952 = vld [vmem:[#allocation3 + $0x360] sm:$0xff]
    %v953 = vld [vmem:[#allocation3 + $0x368] sm:$0xff]
    %v954 = vld [vmem:[#allocation3 + $0x370] sm:$0xff]
    %v955 = vld [vmem:[#allocation3 + $0x378] sm:$0xff]
    %v956 = vld [vmem:[#allocation3 + $0x380] sm:$0xff]
    %v957 = vld [vmem:[#allocation3 + $0x388] sm:$0xff]
    %v958 = vld [vmem:[#allocation3 + $0x390] sm:$0xff]
    %v959 = vld [vmem:[#allocation3 + $0x398] sm:$0xff]
    %v960 = vld [vmem:[#allocation3 + $0x3a0] sm:$0xff]
    %v961 = vld [vmem:[#allocation3 + $0x3a8] sm:$0xff]
    %v962 = vld [vmem:[#allocation3 + $0x3b0] sm:$0xff]
    %v963 = vld [vmem:[#allocation3 + $0x3b8] sm:$0xff]
    %v964 = vld [vmem:[#allocation3 + $0x3c0] sm:$0xff]
    %v965 = vld [vmem:[#allocation3 + $0x3c8] sm:$0xff]
    %v966 = vld [vmem:[#allocation3 + $0x3d0] sm:$0xff]
    %v967 = vld [vmem:[#allocation3 + $0x3d8] sm:$0xff]
    %v968 = vld [vmem:[#allocation3 + $0x3e0] sm:$0xff]
    %v969 = vld [vmem:[#allocation3 + $0x3e8] sm:$0xff]
    %v970 = vld [vmem:[#allocation3 + $0x3f0] sm:$0xff]
    %v971 = vld [vmem:[#allocation3 + $0x3f8] sm:$0xff]
    %s972 = sshll.u32 %s826, 4
    %973 = dma.done %s831, %s972
    %s974 = scalar_lea.hbm %s11, 32768
    // Predicated region
    $region86: #{tpu_custom_call.1} parent=1 // pred_check
      _
    $region87: #{tpu_custom_call.1} parent=1 // pred_check_branch
      %976 = sbr.rel target = $region89
    $region88: #{tpu_custom_call.1} parent=1 // pred_region
      %977 = sst [smem:[#allocation22]] [#allocation27]
      %978 = sst [smem:[#allocation23]] [#allocation26]
    $region89: #{tpu_custom_call.1} parent=1 // pred_fallthru
      _
    %980 = shalt.err (0)
    %s982 = sshll.u32 [#allocation3], 4
    %s983 = int_to_ptr.vmem [resolvable:$true] %s982
    %985 = dma.hbm_to_vmem [thread:$0]  %s974, 16384, %s983, [#allocation4]
    %v986 = vld [vmem:[#allocation2 + $0x8] sm:$0xff]
    %v987 = vld [vmem:[%s830] sm:$0xff]
    %v988 = vld [vmem:[%s830 + $0x8] sm:$0xff]
    %v989 = vld [vmem:[%s830 + $0x10] sm:$0xff]
    %v990 = vld [vmem:[%s830 + $0x18] sm:$0xff]
    %v991 = vld [vmem:[%s830 + $0x20] sm:$0xff]
    %v992 = vld [vmem:[%s830 + $0x28] sm:$0xff]
    %v993 = vld [vmem:[%s830 + $0x30] sm:$0xff]
    %v994 = vld [vmem:[%s830 + $0x38] sm:$0xff]
    %v995 = vld [vmem:[%s830 + $0x40] sm:$0xff]
    %v996 = vld [vmem:[%s830 + $0x48] sm:$0xff]
    %v997 = vld [vmem:[%s830 + $0x50] sm:$0xff]
    %v998 = vld [vmem:[%s830 + $0x58] sm:$0xff]
    %v999 = vld [vmem:[%s830 + $0x60] sm:$0xff]
    %v1000 = vld [vmem:[%s830 + $0x68] sm:$0xff]
    %v1001 = vld [vmem:[%s830 + $0x70] sm:$0xff]
    %v1002 = vld [vmem:[%s830 + $0x78] sm:$0xff]
    %v1003 = vld [vmem:[%s830 + $0x80] sm:$0xff]
    %v1004 = vld [vmem:[%s830 + $0x88] sm:$0xff]
    %v1005 = vld [vmem:[%s830 + $0x90] sm:$0xff]
    %v1006 = vld [vmem:[%s830 + $0x98] sm:$0xff]
    %v1007 = vld [vmem:[%s830 + $0xa0] sm:$0xff]
    %v1008 = vld [vmem:[%s830 + $0xa8] sm:$0xff]
    %v1009 = vld [vmem:[%s830 + $0xb0] sm:$0xff]
    %v1010 = vld [vmem:[%s830 + $0xb8] sm:$0xff]
    %v1011 = vld [vmem:[%s830 + $0xc0] sm:$0xff]
    %v1012 = vld [vmem:[%s830 + $0xc8] sm:$0xff]
    %v1013 = vld [vmem:[%s830 + $0xd0] sm:$0xff]
    %v1014 = vld [vmem:[%s830 + $0xd8] sm:$0xff]
    %v1015 = vld [vmem:[%s830 + $0xe0] sm:$0xff]
    %v1016 = vld [vmem:[%s830 + $0xe8] sm:$0xff]
    %v1017 = vld [vmem:[%s830 + $0xf0] sm:$0xff]
    %v1018 = vld [vmem:[%s830 + $0xf8] sm:$0xff]
    %v1019 = vld [vmem:[%s830 + $0x100] sm:$0xff]
    %v1020 = vld [vmem:[%s830 + $0x108] sm:$0xff]
    %v1021 = vld [vmem:[%s830 + $0x110] sm:$0xff]
    %v1022 = vld [vmem:[%s830 + $0x118] sm:$0xff]
    %v1023 = vld [vmem:[%s830 + $0x120] sm:$0xff]
    %v1024 = vld [vmem:[%s830 + $0x128] sm:$0xff]
    %v1025 = vld [vmem:[%s830 + $0x130] sm:$0xff]
    %v1026 = vld [vmem:[%s830 + $0x138] sm:$0xff]
    %v1027 = vld [vmem:[%s830 + $0x140] sm:$0xff]
    %v1028 = vld [vmem:[%s830 + $0x148] sm:$0xff]
    %v1029 = vld [vmem:[%s830 + $0x150] sm:$0xff]
    %v1030 = vld [vmem:[%s830 + $0x158] sm:$0xff]
    %v1031 = vld [vmem:[%s830 + $0x160] sm:$0xff]
    %v1032 = vld [vmem:[%s830 + $0x168] sm:$0xff]
    %v1033 = vld [vmem:[%s830 + $0x170] sm:$0xff]
    %v1034 = vld [vmem:[%s830 + $0x178] sm:$0xff]
    %v1035 = vld [vmem:[%s830 + $0x180] sm:$0xff]
    %v1036 = vld [vmem:[%s830 + $0x188] sm:$0xff]
    %v1037 = vld [vmem:[%s830 + $0x190] sm:$0xff]
    %v1038 = vld [vmem:[%s830 + $0x198] sm:$0xff]
    %v1039 = vld [vmem:[%s830 + $0x1a0] sm:$0xff]
    %v1040 = vld [vmem:[%s830 + $0x1a8] sm:$0xff]
    %v1041 = vld [vmem:[%s830 + $0x1b0] sm:$0xff]
    %v1042 = vld [vmem:[%s830 + $0x1b8] sm:$0xff]
    %v1043 = vld [vmem:[%s830 + $0x1c0] sm:$0xff]
    %v1044 = vld [vmem:[%s830 + $0x1c8] sm:$0xff]
    %v1045 = vld [vmem:[%s830 + $0x1d0] sm:$0xff]
    %v1046 = vld [vmem:[%s830 + $0x1d8] sm:$0xff]
    %v1047 = vld [vmem:[%s830 + $0x1e0] sm:$0xff]
    %v1048 = vld [vmem:[%s830 + $0x1e8] sm:$0xff]
    %v1049 = vld [vmem:[%s830 + $0x1f0] sm:$0xff]
    %v1050 = vld [vmem:[%s830 + $0x1f8] sm:$0xff]
    %v1051 = vld [vmem:[%s830 + $0x200] sm:$0xff]
    %v1052 = vld [vmem:[%s830 + $0x208] sm:$0xff]
    %v1053 = vld [vmem:[%s830 + $0x210] sm:$0xff]
    %v1054 = vld [vmem:[%s830 + $0x218] sm:$0xff]
    %v1055 = vld [vmem:[%s830 + $0x220] sm:$0xff]
    %v1056 = vld [vmem:[%s830 + $0x228] sm:$0xff]
    %v1057 = vld [vmem:[%s830 + $0x230] sm:$0xff]
    %v1058 = vld [vmem:[%s830 + $0x238] sm:$0xff]
    %v1059 = vld [vmem:[%s830 + $0x240] sm:$0xff]
    %v1060 = vld [vmem:[%s830 + $0x248] sm:$0xff]
    %v1061 = vld [vmem:[%s830 + $0x250] sm:$0xff]
    %v1062 = vld [vmem:[%s830 + $0x258] sm:$0xff]
    %v1063 = vld [vmem:[%s830 + $0x260] sm:$0xff]
    %v1064 = vld [vmem:[%s830 + $0x268] sm:$0xff]
    %v1065 = vld [vmem:[%s830 + $0x270] sm:$0xff]
    %v1066 = vld [vmem:[%s830 + $0x278] sm:$0xff]
    %v1067 = vld [vmem:[%s830 + $0x280] sm:$0xff]
    %v1068 = vld [vmem:[%s830 + $0x288] sm:$0xff]
    %v1069 = vld [vmem:[%s830 + $0x290] sm:$0xff]
    %v1070 = vld [vmem:[%s830 + $0x298] sm:$0xff]
    %v1071 = vld [vmem:[%s830 + $0x2a0] sm:$0xff]
    %v1072 = vld [vmem:[%s830 + $0x2a8] sm:$0xff]
    %v1073 = vld [vmem:[%s830 + $0x2b0] sm:$0xff]
    %v1074 = vld [vmem:[%s830 + $0x2b8] sm:$0xff]
    %v1075 = vld [vmem:[%s830 + $0x2c0] sm:$0xff]
    %v1076 = vld [vmem:[%s830 + $0x2c8] sm:$0xff]
    %v1077 = vld [vmem:[%s830 + $0x2d0] sm:$0xff]
    %v1078 = vld [vmem:[%s830 + $0x2d8] sm:$0xff]
    %v1079 = vld [vmem:[%s830 + $0x2e0] sm:$0xff]
    %v1080 = vld [vmem:[%s830 + $0x2e8] sm:$0xff]
    %v1081 = vld [vmem:[%s830 + $0x2f0] sm:$0xff]
    %v1082 = vld [vmem:[%s830 + $0x2f8] sm:$0xff]
    %v1083 = vld [vmem:[%s830 + $0x300] sm:$0xff]
    %v1084 = vld [vmem:[%s830 + $0x308] sm:$0xff]
    %v1085 = vld [vmem:[%s830 + $0x310] sm:$0xff]
    %v1086 = vld [vmem:[%s830 + $0x318] sm:$0xff]
    %v1087 = vld [vmem:[%s830 + $0x320] sm:$0xff]
    %v1088 = vld [vmem:[%s830 + $0x328] sm:$0xff]
    %v1089 = vld [vmem:[%s830 + $0x330] sm:$0xff]
    %v1090 = vld [vmem:[%s830 + $0x338] sm:$0xff]
    %v1091 = vld [vmem:[%s830 + $0x340] sm:$0xff]
    %v1092 = vld [vmem:[%s830 + $0x348] sm:$0xff]
    %v1093 = vld [vmem:[%s830 + $0x350] sm:$0xff]
    %v1094 = vld [vmem:[%s830 + $0x358] sm:$0xff]
    %v1095 = vld [vmem:[%s830 + $0x360] sm:$0xff]
    %v1096 = vld [vmem:[%s830 + $0x368] sm:$0xff]
    %v1097 = vld [vmem:[%s830 + $0x370] sm:$0xff]
    %v1098 = vld [vmem:[%s830 + $0x378] sm:$0xff]
    %v1099 = vld [vmem:[%s830 + $0x380] sm:$0xff]
    %v1100 = vld [vmem:[%s830 + $0x388] sm:$0xff]
    %v1101 = vld [vmem:[%s830 + $0x390] sm:$0xff]
    %v1102 = vld [vmem:[%s830 + $0x398] sm:$0xff]
    %v1103 = vld [vmem:[%s830 + $0x3a0] sm:$0xff]
    %v1104 = vld [vmem:[%s830 + $0x3a8] sm:$0xff]
    %v1105 = vld [vmem:[%s830 + $0x3b0] sm:$0xff]
    %v1106 = vld [vmem:[%s830 + $0x3b8] sm:$0xff]
    %v1107 = vld [vmem:[%s830 + $0x3c0] sm:$0xff]
    %v1108 = vld [vmem:[%s830 + $0x3c8] sm:$0xff]
    %v1109 = vld [vmem:[%s830 + $0x3d0] sm:$0xff]
    %v1110 = vld [vmem:[%s830 + $0x3d8] sm:$0xff]
    %v1111 = vld [vmem:[%s830 + $0x3e0] sm:$0xff]
    %v1112 = vld [vmem:[%s830 + $0x3e8] sm:$0xff]
    %v1113 = vld [vmem:[%s830 + $0x3f0] sm:$0xff]
    %v1114 = vld [vmem:[%s830 + $0x3f8] sm:$0xff]
    %v1116 = vunpack.c.l.b16 %v986
    %v1117 = vunpack.c.h.b16 %v986
    %v1118 = vpack.c.b16 %v1116, %v1116
    %v1119 = vpack.c.b16 %v1117, %v1117
    %v1250 = vunpack.c.l.b16 %v987
    %v1251 = vunpack.c.h.b16 %v987
    %v1252 = vunpack.c.l.b16 %v988
    %v1253 = vunpack.c.h.b16 %v988
    %v1254 = vunpack.c.l.b16 %v989
    %v1255 = vunpack.c.h.b16 %v989
    %v1256 = vunpack.c.l.b16 %v990
    %v1257 = vunpack.c.h.b16 %v990
    %v1258 = vunpack.c.l.b16 %v991
    %v1259 = vunpack.c.h.b16 %v991
    %v1260 = vunpack.c.l.b16 %v992
    %v1261 = vunpack.c.h.b16 %v992
    %v1262 = vunpack.c.l.b16 %v993
    %v1263 = vunpack.c.h.b16 %v993
    %v1264 = vunpack.c.l.b16 %v994
    %v1265 = vunpack.c.h.b16 %v994
    %v1266 = vunpack.c.l.b16 %v995
    %v1267 = vunpack.c.h.b16 %v995
    %v1268 = vunpack.c.l.b16 %v996
    %v1269 = vunpack.c.h.b16 %v996
    %v1270 = vunpack.c.l.b16 %v997
    %v1271 = vunpack.c.h.b16 %v997
    %v1272 = vunpack.c.l.b16 %v998
    %v1273 = vunpack.c.h.b16 %v998
    %v1274 = vunpack.c.l.b16 %v999
    %v1275 = vunpack.c.h.b16 %v999
    %v1276 = vunpack.c.l.b16 %v1000
    %v1277 = vunpack.c.h.b16 %v1000
    %v1278 = vunpack.c.l.b16 %v1001
    %v1279 = vunpack.c.h.b16 %v1001
    %v1280 = vunpack.c.l.b16 %v1002
    %v1281 = vunpack.c.h.b16 %v1002
    %v1282 = vunpack.c.l.b16 %v1003
    %v1283 = vunpack.c.h.b16 %v1003
    %v1284 = vunpack.c.l.b16 %v1004
    %v1285 = vunpack.c.h.b16 %v1004
    %v1286 = vunpack.c.l.b16 %v1005
    %v1287 = vunpack.c.h.b16 %v1005
    %v1288 = vunpack.c.l.b16 %v1006
    %v1289 = vunpack.c.h.b16 %v1006
    %v1290 = vunpack.c.l.b16 %v1007
    %v1291 = vunpack.c.h.b16 %v1007
    %v1292 = vunpack.c.l.b16 %v1008
    %v1293 = vunpack.c.h.b16 %v1008
    %v1294 = vunpack.c.l.b16 %v1009
    %v1295 = vunpack.c.h.b16 %v1009
    %v1296 = vunpack.c.l.b16 %v1010
    %v1297 = vunpack.c.h.b16 %v1010
    %v1298 = vunpack.c.l.b16 %v1011
    %v1299 = vunpack.c.h.b16 %v1011
    %v1300 = vunpack.c.l.b16 %v1012
    %v1301 = vunpack.c.h.b16 %v1012
    %v1302 = vunpack.c.l.b16 %v1013
    %v1303 = vunpack.c.h.b16 %v1013
    %v1304 = vunpack.c.l.b16 %v1014
    %v1305 = vunpack.c.h.b16 %v1014
    %v1306 = vunpack.c.l.b16 %v1015
    %v1307 = vunpack.c.h.b16 %v1015
    %v1308 = vunpack.c.l.b16 %v1016
    %v1309 = vunpack.c.h.b16 %v1016
    %v1310 = vunpack.c.l.b16 %v1017
    %v1311 = vunpack.c.h.b16 %v1017
    %v1312 = vunpack.c.l.b16 %v1018
    %v1313 = vunpack.c.h.b16 %v1018
    %v1314 = vunpack.c.l.b16 %v1019
    %v1315 = vunpack.c.h.b16 %v1019
    %v1316 = vunpack.c.l.b16 %v1020
    %v1317 = vunpack.c.h.b16 %v1020
    %v1318 = vunpack.c.l.b16 %v1021
    %v1319 = vunpack.c.h.b16 %v1021
    %v1320 = vunpack.c.l.b16 %v1022
    %v1321 = vunpack.c.h.b16 %v1022
    %v1322 = vunpack.c.l.b16 %v1023
    %v1323 = vunpack.c.h.b16 %v1023
    %v1324 = vunpack.c.l.b16 %v1024
    %v1325 = vunpack.c.h.b16 %v1024
    %v1326 = vunpack.c.l.b16 %v1025
    %v1327 = vunpack.c.h.b16 %v1025
    %v1328 = vunpack.c.l.b16 %v1026
    %v1329 = vunpack.c.h.b16 %v1026
    %v1330 = vunpack.c.l.b16 %v1027
    %v1331 = vunpack.c.h.b16 %v1027
    %v1332 = vunpack.c.l.b16 %v1028
    %v1333 = vunpack.c.h.b16 %v1028
    %v1334 = vunpack.c.l.b16 %v1029
    %v1335 = vunpack.c.h.b16 %v1029
    %v1336 = vunpack.c.l.b16 %v1030
    %v1337 = vunpack.c.h.b16 %v1030
    %v1338 = vunpack.c.l.b16 %v1031
    %v1339 = vunpack.c.h.b16 %v1031
    %v1340 = vunpack.c.l.b16 %v1032
    %v1341 = vunpack.c.h.b16 %v1032
    %v1342 = vunpack.c.l.b16 %v1033
    %v1343 = vunpack.c.h.b16 %v1033
    %v1344 = vunpack.c.l.b16 %v1034
    %v1345 = vunpack.c.h.b16 %v1034
    %v1346 = vunpack.c.l.b16 %v1035
    %v1347 = vunpack.c.h.b16 %v1035
    %v1348 = vunpack.c.l.b16 %v1036
    %v1349 = vunpack.c.h.b16 %v1036
    %v1350 = vunpack.c.l.b16 %v1037
    %v1351 = vunpack.c.h.b16 %v1037
    %v1352 = vunpack.c.l.b16 %v1038
    %v1353 = vunpack.c.h.b16 %v1038
    %v1354 = vunpack.c.l.b16 %v1039
    %v1355 = vunpack.c.h.b16 %v1039
    %v1356 = vunpack.c.l.b16 %v1040
    %v1357 = vunpack.c.h.b16 %v1040
    %v1358 = vunpack.c.l.b16 %v1041
    %v1359 = vunpack.c.h.b16 %v1041
    %v1360 = vunpack.c.l.b16 %v1042
    %v1361 = vunpack.c.h.b16 %v1042
    %v1362 = vunpack.c.l.b16 %v1043
    %v1363 = vunpack.c.h.b16 %v1043
    %v1364 = vunpack.c.l.b16 %v1044
    %v1365 = vunpack.c.h.b16 %v1044
    %v1366 = vunpack.c.l.b16 %v1045
    %v1367 = vunpack.c.h.b16 %v1045
    %v1368 = vunpack.c.l.b16 %v1046
    %v1369 = vunpack.c.h.b16 %v1046
    %v1370 = vunpack.c.l.b16 %v1047
    %v1371 = vunpack.c.h.b16 %v1047
    %v1372 = vunpack.c.l.b16 %v1048
    %v1373 = vunpack.c.h.b16 %v1048
    %v1374 = vunpack.c.l.b16 %v1049
    %v1375 = vunpack.c.h.b16 %v1049
    %v1376 = vunpack.c.l.b16 %v1050
    %v1377 = vunpack.c.h.b16 %v1050
    %v1378 = vunpack.c.l.b16 %v1051
    %v1379 = vunpack.c.h.b16 %v1051
    %v1380 = vunpack.c.l.b16 %v1052
    %v1381 = vunpack.c.h.b16 %v1052
    %v1382 = vunpack.c.l.b16 %v1053
    %v1383 = vunpack.c.h.b16 %v1053
    %v1384 = vunpack.c.l.b16 %v1054
    %v1385 = vunpack.c.h.b16 %v1054
    %v1386 = vunpack.c.l.b16 %v1055
    %v1387 = vunpack.c.h.b16 %v1055
    %v1388 = vunpack.c.l.b16 %v1056
    %v1389 = vunpack.c.h.b16 %v1056
    %v1390 = vunpack.c.l.b16 %v1057
    %v1391 = vunpack.c.h.b16 %v1057
    %v1392 = vunpack.c.l.b16 %v1058
    %v1393 = vunpack.c.h.b16 %v1058
    %v1394 = vunpack.c.l.b16 %v1059
    %v1395 = vunpack.c.h.b16 %v1059
    %v1396 = vunpack.c.l.b16 %v1060
    %v1397 = vunpack.c.h.b16 %v1060
    %v1398 = vunpack.c.l.b16 %v1061
    %v1399 = vunpack.c.h.b16 %v1061
    %v1400 = vunpack.c.l.b16 %v1062
    %v1401 = vunpack.c.h.b16 %v1062
    %v1402 = vunpack.c.l.b16 %v1063
    %v1403 = vunpack.c.h.b16 %v1063
    %v1404 = vunpack.c.l.b16 %v1064
    %v1405 = vunpack.c.h.b16 %v1064
    %v1406 = vunpack.c.l.b16 %v1065
    %v1407 = vunpack.c.h.b16 %v1065
    %v1408 = vunpack.c.l.b16 %v1066
    %v1409 = vunpack.c.h.b16 %v1066
    %v1410 = vunpack.c.l.b16 %v1067
    %v1411 = vunpack.c.h.b16 %v1067
    %v1412 = vunpack.c.l.b16 %v1068
    %v1413 = vunpack.c.h.b16 %v1068
    %v1414 = vunpack.c.l.b16 %v1069
    %v1415 = vunpack.c.h.b16 %v1069
    %v1416 = vunpack.c.l.b16 %v1070
    %v1417 = vunpack.c.h.b16 %v1070
    %v1418 = vunpack.c.l.b16 %v1071
    %v1419 = vunpack.c.h.b16 %v1071
    %v1420 = vunpack.c.l.b16 %v1072
    %v1421 = vunpack.c.h.b16 %v1072
    %v1422 = vunpack.c.l.b16 %v1073
    %v1423 = vunpack.c.h.b16 %v1073
    %v1424 = vunpack.c.l.b16 %v1074
    %v1425 = vunpack.c.h.b16 %v1074
    %v1426 = vunpack.c.l.b16 %v1075
    %v1427 = vunpack.c.h.b16 %v1075
    %v1428 = vunpack.c.l.b16 %v1076
    %v1429 = vunpack.c.h.b16 %v1076
    %v1430 = vunpack.c.l.b16 %v1077
    %v1431 = vunpack.c.h.b16 %v1077
    %v1432 = vunpack.c.l.b16 %v1078
    %v1433 = vunpack.c.h.b16 %v1078
    %v1434 = vunpack.c.l.b16 %v1079
    %v1435 = vunpack.c.h.b16 %v1079
    %v1436 = vunpack.c.l.b16 %v1080
    %v1437 = vunpack.c.h.b16 %v1080
    %v1438 = vunpack.c.l.b16 %v1081
    %v1439 = vunpack.c.h.b16 %v1081
    %v1440 = vunpack.c.l.b16 %v1082
    %v1441 = vunpack.c.h.b16 %v1082
    %v1442 = vunpack.c.l.b16 %v1083
    %v1443 = vunpack.c.h.b16 %v1083
    %v1444 = vunpack.c.l.b16 %v1084
    %v1445 = vunpack.c.h.b16 %v1084
    %v1446 = vunpack.c.l.b16 %v1085
    %v1447 = vunpack.c.h.b16 %v1085
    %v1448 = vunpack.c.l.b16 %v1086
    %v1449 = vunpack.c.h.b16 %v1086
    %v1450 = vunpack.c.l.b16 %v1087
    %v1451 = vunpack.c.h.b16 %v1087
    %v1452 = vunpack.c.l.b16 %v1088
    %v1453 = vunpack.c.h.b16 %v1088
    %v1454 = vunpack.c.l.b16 %v1089
    %v1455 = vunpack.c.h.b16 %v1089
    %v1456 = vunpack.c.l.b16 %v1090
    %v1457 = vunpack.c.h.b16 %v1090
    %v1458 = vunpack.c.l.b16 %v1091
    %v1459 = vunpack.c.h.b16 %v1091
    %v1460 = vunpack.c.l.b16 %v1092
    %v1461 = vunpack.c.h.b16 %v1092
    %v1462 = vunpack.c.l.b16 %v1093
    %v1463 = vunpack.c.h.b16 %v1093
    %v1464 = vunpack.c.l.b16 %v1094
    %v1465 = vunpack.c.h.b16 %v1094
    %v1466 = vunpack.c.l.b16 %v1095
    %v1467 = vunpack.c.h.b16 %v1095
    %v1468 = vunpack.c.l.b16 %v1096
    %v1469 = vunpack.c.h.b16 %v1096
    %v1470 = vunpack.c.l.b16 %v1097
    %v1471 = vunpack.c.h.b16 %v1097
    %v1472 = vunpack.c.l.b16 %v1098
    %v1473 = vunpack.c.h.b16 %v1098
    %v1474 = vunpack.c.l.b16 %v1099
    %v1475 = vunpack.c.h.b16 %v1099
    %v1476 = vunpack.c.l.b16 %v1100
    %v1477 = vunpack.c.h.b16 %v1100
    %v1478 = vunpack.c.l.b16 %v1101
    %v1479 = vunpack.c.h.b16 %v1101
    %v1480 = vunpack.c.l.b16 %v1102
    %v1481 = vunpack.c.h.b16 %v1102
    %v1482 = vunpack.c.l.b16 %v1103
    %v1483 = vunpack.c.h.b16 %v1103
    %v1484 = vunpack.c.l.b16 %v1104
    %v1485 = vunpack.c.h.b16 %v1104
    %v1486 = vunpack.c.l.b16 %v1105
    %v1487 = vunpack.c.h.b16 %v1105
    %v1488 = vunpack.c.l.b16 %v1106
    %v1489 = vunpack.c.h.b16 %v1106
    %v1490 = vunpack.c.l.b16 %v1107
    %v1491 = vunpack.c.h.b16 %v1107
    %v1492 = vunpack.c.l.b16 %v1108
    %v1493 = vunpack.c.h.b16 %v1108
    %v1494 = vunpack.c.l.b16 %v1109
    %v1495 = vunpack.c.h.b16 %v1109
    %v1496 = vunpack.c.l.b16 %v1110
    %v1497 = vunpack.c.h.b16 %v1110
    %v1498 = vunpack.c.l.b16 %v1111
    %v1499 = vunpack.c.h.b16 %v1111
    %v1500 = vunpack.c.l.b16 %v1112
    %v1501 = vunpack.c.h.b16 %v1112
    %v1502 = vunpack.c.l.b16 %v1113
    %v1503 = vunpack.c.h.b16 %v1113
    %v1504 = vunpack.c.l.b16 %v1114
    %v1505 = vunpack.c.h.b16 %v1114
    %v1506 = vpack.c.b16 %v1258, %v1250
    %v1507 = vpack.c.b16 %v1259, %v1251
    %v1508 = vpack.c.b16 %v1260, %v1252
    %v1509 = vpack.c.b16 %v1261, %v1253
    %v1510 = vpack.c.b16 %v1262, %v1254
    %v1511 = vpack.c.b16 %v1263, %v1255
    %v1512 = vpack.c.b16 %v1264, %v1256
    %v1513 = vpack.c.b16 %v1265, %v1257
    %v1514 = vpack.c.b16 %v1274, %v1266
    %v1515 = vpack.c.b16 %v1275, %v1267
    %v1516 = vpack.c.b16 %v1276, %v1268
    %v1517 = vpack.c.b16 %v1277, %v1269
    %v1518 = vpack.c.b16 %v1278, %v1270
    %v1519 = vpack.c.b16 %v1279, %v1271
    %v1520 = vpack.c.b16 %v1280, %v1272
    %v1521 = vpack.c.b16 %v1281, %v1273
    %v1522 = vpack.c.b16 %v1290, %v1282
    %v1523 = vpack.c.b16 %v1291, %v1283
    %v1524 = vpack.c.b16 %v1292, %v1284
    %v1525 = vpack.c.b16 %v1293, %v1285
    %v1526 = vpack.c.b16 %v1294, %v1286
    %v1527 = vpack.c.b16 %v1295, %v1287
    %v1528 = vpack.c.b16 %v1296, %v1288
    %v1529 = vpack.c.b16 %v1297, %v1289
    %v1530 = vpack.c.b16 %v1306, %v1298
    %v1531 = vpack.c.b16 %v1307, %v1299
    %v1532 = vpack.c.b16 %v1308, %v1300
    %v1533 = vpack.c.b16 %v1309, %v1301
    %v1534 = vpack.c.b16 %v1310, %v1302
    %v1535 = vpack.c.b16 %v1311, %v1303
    %v1536 = vpack.c.b16 %v1312, %v1304
    %v1537 = vpack.c.b16 %v1313, %v1305
    %v1538 = vpack.c.b16 %v1322, %v1314
    %v1539 = vpack.c.b16 %v1323, %v1315
    %v1540 = vpack.c.b16 %v1324, %v1316
    %v1541 = vpack.c.b16 %v1325, %v1317
    %v1542 = vpack.c.b16 %v1326, %v1318
    %v1543 = vpack.c.b16 %v1327, %v1319
    %v1544 = vpack.c.b16 %v1328, %v1320
    %v1545 = vpack.c.b16 %v1329, %v1321
    %v1546 = vpack.c.b16 %v1338, %v1330
    %v1547 = vpack.c.b16 %v1339, %v1331
    %v1548 = vpack.c.b16 %v1340, %v1332
    %v1549 = vpack.c.b16 %v1341, %v1333
    %v1550 = vpack.c.b16 %v1342, %v1334
    %v1551 = vpack.c.b16 %v1343, %v1335
    %v1552 = vpack.c.b16 %v1344, %v1336
    %v1553 = vpack.c.b16 %v1345, %v1337
    %v1554 = vpack.c.b16 %v1354, %v1346
    %v1555 = vpack.c.b16 %v1355, %v1347
    %v1556 = vpack.c.b16 %v1356, %v1348
    %v1557 = vpack.c.b16 %v1357, %v1349
    %v1558 = vpack.c.b16 %v1358, %v1350
    %v1559 = vpack.c.b16 %v1359, %v1351
    %v1560 = vpack.c.b16 %v1360, %v1352
    %v1561 = vpack.c.b16 %v1361, %v1353
    %v1562 = vpack.c.b16 %v1370, %v1362
    %v1563 = vpack.c.b16 %v1371, %v1363
    %v1564 = vpack.c.b16 %v1372, %v1364
    %v1565 = vpack.c.b16 %v1373, %v1365
    %v1566 = vpack.c.b16 %v1374, %v1366
    %v1567 = vpack.c.b16 %v1375, %v1367
    %v1568 = vpack.c.b16 %v1376, %v1368
    %v1569 = vpack.c.b16 %v1377, %v1369
    %v1570 = vpack.c.b16 %v1386, %v1378
    %v1571 = vpack.c.b16 %v1387, %v1379
    %v1572 = vpack.c.b16 %v1388, %v1380
    %v1573 = vpack.c.b16 %v1389, %v1381
    %v1574 = vpack.c.b16 %v1390, %v1382
    %v1575 = vpack.c.b16 %v1391, %v1383
    %v1576 = vpack.c.b16 %v1392, %v1384
    %v1577 = vpack.c.b16 %v1393, %v1385
    %v1578 = vpack.c.b16 %v1402, %v1394
    %v1579 = vpack.c.b16 %v1403, %v1395
    %v1580 = vpack.c.b16 %v1404, %v1396
    %v1581 = vpack.c.b16 %v1405, %v1397
    %v1582 = vpack.c.b16 %v1406, %v1398
    %v1583 = vpack.c.b16 %v1407, %v1399
    %v1584 = vpack.c.b16 %v1408, %v1400
    %v1585 = vpack.c.b16 %v1409, %v1401
    %v1586 = vpack.c.b16 %v1418, %v1410
    %v1587 = vpack.c.b16 %v1419, %v1411
    %v1588 = vpack.c.b16 %v1420, %v1412
    %v1589 = vpack.c.b16 %v1421, %v1413
    %v1590 = vpack.c.b16 %v1422, %v1414
    %v1591 = vpack.c.b16 %v1423, %v1415
    %v1592 = vpack.c.b16 %v1424, %v1416
    %v1593 = vpack.c.b16 %v1425, %v1417
    %v1594 = vpack.c.b16 %v1434, %v1426
    %v1595 = vpack.c.b16 %v1435, %v1427
    %v1596 = vpack.c.b16 %v1436, %v1428
    %v1597 = vpack.c.b16 %v1437, %v1429
    %v1598 = vpack.c.b16 %v1438, %v1430
    %v1599 = vpack.c.b16 %v1439, %v1431
    %v1600 = vpack.c.b16 %v1440, %v1432
    %v1601 = vpack.c.b16 %v1441, %v1433
    %v1602 = vpack.c.b16 %v1450, %v1442
    %v1603 = vpack.c.b16 %v1451, %v1443
    %v1604 = vpack.c.b16 %v1452, %v1444
    %v1605 = vpack.c.b16 %v1453, %v1445
    %v1606 = vpack.c.b16 %v1454, %v1446
    %v1607 = vpack.c.b16 %v1455, %v1447
    %v1608 = vpack.c.b16 %v1456, %v1448
    %v1609 = vpack.c.b16 %v1457, %v1449
    %v1610 = vpack.c.b16 %v1466, %v1458
    %v1611 = vpack.c.b16 %v1467, %v1459
    %v1612 = vpack.c.b16 %v1468, %v1460
    %v1613 = vpack.c.b16 %v1469, %v1461
    %v1614 = vpack.c.b16 %v1470, %v1462
    %v1615 = vpack.c.b16 %v1471, %v1463
    %v1616 = vpack.c.b16 %v1472, %v1464
    %v1617 = vpack.c.b16 %v1473, %v1465
    %v1618 = vpack.c.b16 %v1482, %v1474
    %v1619 = vpack.c.b16 %v1483, %v1475
    %v1620 = vpack.c.b16 %v1484, %v1476
    %v1621 = vpack.c.b16 %v1485, %v1477
    %v1622 = vpack.c.b16 %v1486, %v1478
    %v1623 = vpack.c.b16 %v1487, %v1479
    %v1624 = vpack.c.b16 %v1488, %v1480
    %v1625 = vpack.c.b16 %v1489, %v1481
    %v1626 = vpack.c.b16 %v1498, %v1490
    %v1627 = vpack.c.b16 %v1499, %v1491
    %v1628 = vpack.c.b16 %v1500, %v1492
    %v1629 = vpack.c.b16 %v1501, %v1493
    %v1630 = vpack.c.b16 %v1502, %v1494
    %v1631 = vpack.c.b16 %v1503, %v1495
    %v1632 = vpack.c.b16 %v1504, %v1496
    %v1633 = vpack.c.b16 %v1505, %v1497
    %1762 = vmatprep.subr.bf16.mxu0 %v1563
    %1763 = vmatpush1.bf16.msra.mxu0 %v1562
    %1764 = vmatprep.subr.bf16.mxu0 %v1555
    %1765 = vmatpush1.bf16.msra.mxu0 %v1554
    %1766 = vmatprep.subr.bf16.mxu0 %v1547
    %1767 = vmatpush1.bf16.msra.mxu0 %v1546
    %1768 = vmatprep.subr.bf16.mxu0 %v1539
    %1769 = vmatpush1.bf16.msra.mxu0 %v1538
    %1770 = vmatprep.subr.bf16.mxu0 %v1531
    %1771 = vmatpush1.bf16.msra.mxu0 %v1530
    %1772 = vmatprep.subr.bf16.mxu0 %v1523
    %1773 = vmatpush1.bf16.msra.mxu0 %v1522
    %1774 = vmatprep.subr.bf16.mxu0 %v1515
    %1775 = vmatpush1.bf16.msra.mxu0 %v1514
    %1776 = vmatprep.subr.bf16.mxu0 %v1507
    %1777 = vmatpush1.bf16.msra.mxu0 %v1506
    %1778 = vmatprep.subr.bf16.mxu0 %v1627
    %1779 = vmatpush2.bf16.msra.mxu0 %v1626
    %1780 = vmatprep.subr.bf16.mxu0 %v1619
    %1781 = vmatpush2.bf16.msra.mxu0 %v1618
    %1782 = vmatprep.subr.bf16.mxu0 %v1611
    %1783 = vmatpush2.bf16.msra.mxu0 %v1610
    %1784 = vmatprep.subr.bf16.mxu0 %v1603
    %1785 = vmatpush2.bf16.msra.mxu0 %v1602
    %1786 = vmatprep.subr.bf16.mxu0 %v1595
    %1787 = vmatpush2.bf16.msra.mxu0 %v1594
    %1788 = vmatprep.subr.bf16.mxu0 %v1587
    %1789 = vmatpush2.bf16.msra.mxu0 %v1586
    %1790 = vmatprep.subr.bf16.mxu0 %v1579
    %1791 = vmatpush2.bf16.msra.mxu0 %v1578
    %1792 = vmatprep.subr.bf16.mxu0 %v1571
    %1793 = vmatpush2.bf16.msra.mxu0 %v1570
    %1794 = vmatprep.mubr.bf16.mxu0 %v1119
    %1795 = vmatmul.mubr.bf16.gmra.mxu0 %v1118
    %v1796 = vpop.f32.mrf.mxu0
    %v1797 = vadd.f32 0.0, %v1796
    %v1798 = vpop.f32.mrf.mxu0
    %v1799 = vadd.f32 0.0, %v1798
    %v1800 = vpop.f32.mrf.mxu0
    %v1801 = vpop.f32.mrf.mxu0
    %1802 = vdwg.mxu0
    %1803 = vmatprep.subr.bf16.mxu0 %v1565
    %1804 = vmatpush1.bf16.msra.mxu0 %v1564
    %1805 = vmatprep.subr.bf16.mxu0 %v1557
    %1806 = vmatpush1.bf16.msra.mxu0 %v1556
    %1807 = vmatprep.subr.bf16.mxu0 %v1549
    %1808 = vmatpush1.bf16.msra.mxu0 %v1548
    %1809 = vmatprep.subr.bf16.mxu0 %v1541
    %1810 = vmatpush1.bf16.msra.mxu0 %v1540
    %1811 = vmatprep.subr.bf16.mxu0 %v1533
    %1812 = vmatpush1.bf16.msra.mxu0 %v1532
    %1813 = vmatprep.subr.bf16.mxu0 %v1525
    %1814 = vmatpush1.bf16.msra.mxu0 %v1524
    %1815 = vmatprep.subr.bf16.mxu0 %v1517
    %1816 = vmatpush1.bf16.msra.mxu0 %v1516
    %1817 = vmatprep.subr.bf16.mxu0 %v1509
    %1818 = vmatpush1.bf16.msra.mxu0 %v1508
    %1819 = vmatprep.subr.bf16.mxu0 %v1629
    %1820 = vmatpush2.bf16.msra.mxu0 %v1628
    %1821 = vmatprep.subr.bf16.mxu0 %v1621
    %1822 = vmatpush2.bf16.msra.mxu0 %v1620
    %1823 = vmatprep.subr.bf16.mxu0 %v1613
    %1824 = vmatpush2.bf16.msra.mxu0 %v1612
    %1825 = vmatprep.subr.bf16.mxu0 %v1605
    %1826 = vmatpush2.bf16.msra.mxu0 %v1604
    %1827 = vmatprep.subr.bf16.mxu0 %v1597
    %1828 = vmatpush2.bf16.msra.mxu0 %v1596
    %1829 = vmatprep.subr.bf16.mxu0 %v1589
    %1830 = vmatpush2.bf16.msra.mxu0 %v1588
    %1831 = vmatprep.subr.bf16.mxu0 %v1581
    %1832 = vmatpush2.bf16.msra.mxu0 %v1580
    %1833 = vmatprep.subr.bf16.mxu0 %v1573
    %1834 = vmatpush2.bf16.msra.mxu0 %v1572
    %1835 = vmatprep.mubr.bf16.mxu0 %v1119
    %1836 = vmatmul.mubr.bf16.gmra.mxu0 %v1118
    %v1837 = vpop.f32.mrf.mxu0
    %v1838 = vadd.f32 0.0, %v1837
    %v1839 = vpop.f32.mrf.mxu0
    %v1840 = vadd.f32 0.0, %v1839
    %v1841 = vpop.f32.mrf.mxu0
    %v1842 = vpop.f32.mrf.mxu0
    %1843 = vdwg.mxu0
    %1844 = vmatprep.subr.bf16.mxu0 %v1567
    %1845 = vmatpush1.bf16.msra.mxu0 %v1566
    %1846 = vmatprep.subr.bf16.mxu0 %v1559
    %1847 = vmatpush1.bf16.msra.mxu0 %v1558
    %1848 = vmatprep.subr.bf16.mxu0 %v1551
    %1849 = vmatpush1.bf16.msra.mxu0 %v1550
    %1850 = vmatprep.subr.bf16.mxu0 %v1543
    %1851 = vmatpush1.bf16.msra.mxu0 %v1542
    %1852 = vmatprep.subr.bf16.mxu0 %v1535
    %1853 = vmatpush1.bf16.msra.mxu0 %v1534
    %1854 = vmatprep.subr.bf16.mxu0 %v1527
    %1855 = vmatpush1.bf16.msra.mxu0 %v1526
    %1856 = vmatprep.subr.bf16.mxu0 %v1519
    %1857 = vmatpush1.bf16.msra.mxu0 %v1518
    %1858 = vmatprep.subr.bf16.mxu0 %v1511
    %1859 = vmatpush1.bf16.msra.mxu0 %v1510
    %1860 = vmatprep.subr.bf16.mxu0 %v1631
    %1861 = vmatpush2.bf16.msra.mxu0 %v1630
    %1862 = vmatprep.subr.bf16.mxu0 %v1623
    %1863 = vmatpush2.bf16.msra.mxu0 %v1622
    %1864 = vmatprep.subr.bf16.mxu0 %v1615
    %1865 = vmatpush2.bf16.msra.mxu0 %v1614
    %1866 = vmatprep.subr.bf16.mxu0 %v1607
    %1867 = vmatpush2.bf16.msra.mxu0 %v1606
    %1868 = vmatprep.subr.bf16.mxu0 %v1599
    %1869 = vmatpush2.bf16.msra.mxu0 %v1598
    %1870 = vmatprep.subr.bf16.mxu0 %v1591
    %1871 = vmatpush2.bf16.msra.mxu0 %v1590
    %1872 = vmatprep.subr.bf16.mxu0 %v1583
    %1873 = vmatpush2.bf16.msra.mxu0 %v1582
    %1874 = vmatprep.subr.bf16.mxu0 %v1575
    %1875 = vmatpush2.bf16.msra.mxu0 %v1574
    %1876 = vmatprep.mubr.bf16.mxu0 %v1119
    %1877 = vmatmul.mubr.bf16.gmra.mxu0 %v1118
    %v1878 = vpop.f32.mrf.mxu0
    %v1879 = vadd.f32 0.0, %v1878
    %v1880 = vpop.f32.mrf.mxu0
    %v1881 = vadd.f32 0.0, %v1880
    %v1882 = vpop.f32.mrf.mxu0
    %v1883 = vpop.f32.mrf.mxu0
    %1884 = vdwg.mxu0
    %1885 = vmatprep.subr.bf16.mxu0 %v1569
    %1886 = vmatpush1.bf16.msra.mxu0 %v1568
    %1887 = vmatprep.subr.bf16.mxu0 %v1561
    %1888 = vmatpush1.bf16.msra.mxu0 %v1560
    %1889 = vmatprep.subr.bf16.mxu0 %v1553
    %1890 = vmatpush1.bf16.msra.mxu0 %v1552
    %1891 = vmatprep.subr.bf16.mxu0 %v1545
    %1892 = vmatpush1.bf16.msra.mxu0 %v1544
    %1893 = vmatprep.subr.bf16.mxu0 %v1537
    %1894 = vmatpush1.bf16.msra.mxu0 %v1536
    %1895 = vmatprep.subr.bf16.mxu0 %v1529
    %1896 = vmatpush1.bf16.msra.mxu0 %v1528
    %1897 = vmatprep.subr.bf16.mxu0 %v1521
    %1898 = vmatpush1.bf16.msra.mxu0 %v1520
    %1899 = vmatprep.subr.bf16.mxu0 %v1513
    %1900 = vmatpush1.bf16.msra.mxu0 %v1512
    %1901 = vmatprep.subr.bf16.mxu0 %v1633
    %1902 = vmatpush2.bf16.msra.mxu0 %v1632
    %1903 = vmatprep.subr.bf16.mxu0 %v1625
    %1904 = vmatpush2.bf16.msra.mxu0 %v1624
    %1905 = vmatprep.subr.bf16.mxu0 %v1617
    %1906 = vmatpush2.bf16.msra.mxu0 %v1616
    %1907 = vmatprep.subr.bf16.mxu0 %v1609
    %1908 = vmatpush2.bf16.msra.mxu0 %v1608
    %1909 = vmatprep.subr.bf16.mxu0 %v1601
    %1910 = vmatpush2.bf16.msra.mxu0 %v1600
    %1911 = vmatprep.subr.bf16.mxu0 %v1593
    %1912 = vmatpush2.bf16.msra.mxu0 %v1592
    %1913 = vmatprep.subr.bf16.mxu0 %v1585
    %1914 = vmatpush2.bf16.msra.mxu0 %v1584
    %1915 = vmatprep.subr.bf16.mxu0 %v1577
    %1916 = vmatpush2.bf16.msra.mxu0 %v1576
    %1917 = vmatprep.mubr.bf16.mxu0 %v1119
    %1918 = vmatmul.mubr.bf16.gmra.mxu0 %v1118
    %v1919 = vpop.f32.mrf.mxu0
    %v1920 = vadd.f32 0.0, %v1919
    %v1921 = vpop.f32.mrf.mxu0
    %v1922 = vadd.f32 0.0, %v1921
    %v1923 = vpop.f32.mrf.mxu0
    %v1924 = vpop.f32.mrf.mxu0
    %1925 = vdwg.mxu0
    %v1927 = vunpack.c.l.b16 %v843
    %v1928 = vunpack.c.h.b16 %v843
    %v1929 = vpack.c.b16 %v1927, %v1927
    %v1930 = vpack.c.b16 %v1928, %v1928
    %v2061 = vunpack.c.l.b16 %v844
    %v2062 = vunpack.c.h.b16 %v844
    %v2063 = vunpack.c.l.b16 %v845
    %v2064 = vunpack.c.h.b16 %v845
    %v2065 = vunpack.c.l.b16 %v846
    %v2066 = vunpack.c.h.b16 %v846
    %v2067 = vunpack.c.l.b16 %v847
    %v2068 = vunpack.c.h.b16 %v847
    %v2069 = vunpack.c.l.b16 %v848
    %v2070 = vunpack.c.h.b16 %v848
    %v2071 = vunpack.c.l.b16 %v849
    %v2072 = vunpack.c.h.b16 %v849
    %v2073 = vunpack.c.l.b16 %v850
    %v2074 = vunpack.c.h.b16 %v850
    %v2075 = vunpack.c.l.b16 %v851
    %v2076 = vunpack.c.h.b16 %v851
    %v2077 = vunpack.c.l.b16 %v852
    %v2078 = vunpack.c.h.b16 %v852
    %v2079 = vunpack.c.l.b16 %v853
    %v2080 = vunpack.c.h.b16 %v853
    %v2081 = vunpack.c.l.b16 %v854
    %v2082 = vunpack.c.h.b16 %v854
    %v2083 = vunpack.c.l.b16 %v855
    %v2084 = vunpack.c.h.b16 %v855
    %v2085 = vunpack.c.l.b16 %v856
    %v2086 = vunpack.c.h.b16 %v856
    %v2087 = vunpack.c.l.b16 %v857
    %v2088 = vunpack.c.h.b16 %v857
    %v2089 = vunpack.c.l.b16 %v858
    %v2090 = vunpack.c.h.b16 %v858
    %v2091 = vunpack.c.l.b16 %v859
    %v2092 = vunpack.c.h.b16 %v859
    %v2093 = vunpack.c.l.b16 %v860
    %v2094 = vunpack.c.h.b16 %v860
    %v2095 = vunpack.c.l.b16 %v861
    %v2096 = vunpack.c.h.b16 %v861
    %v2097 = vunpack.c.l.b16 %v862
    %v2098 = vunpack.c.h.b16 %v862
    %v2099 = vunpack.c.l.b16 %v863
    %v2100 = vunpack.c.h.b16 %v863
    %v2101 = vunpack.c.l.b16 %v864
    %v2102 = vunpack.c.h.b16 %v864
    %v2103 = vunpack.c.l.b16 %v865
    %v2104 = vunpack.c.h.b16 %v865
    %v2105 = vunpack.c.l.b16 %v866
    %v2106 = vunpack.c.h.b16 %v866
    %v2107 = vunpack.c.l.b16 %v867
    %v2108 = vunpack.c.h.b16 %v867
    %v2109 = vunpack.c.l.b16 %v868
    %v2110 = vunpack.c.h.b16 %v868
    %v2111 = vunpack.c.l.b16 %v869
    %v2112 = vunpack.c.h.b16 %v869
    %v2113 = vunpack.c.l.b16 %v870
    %v2114 = vunpack.c.h.b16 %v870
    %v2115 = vunpack.c.l.b16 %v871
    %v2116 = vunpack.c.h.b16 %v871
    %v2117 = vunpack.c.l.b16 %v872
    %v2118 = vunpack.c.h.b16 %v872
    %v2119 = vunpack.c.l.b16 %v873
    %v2120 = vunpack.c.h.b16 %v873
    %v2121 = vunpack.c.l.b16 %v874
    %v2122 = vunpack.c.h.b16 %v874
    %v2123 = vunpack.c.l.b16 %v875
    %v2124 = vunpack.c.h.b16 %v875
    %v2125 = vunpack.c.l.b16 %v876
    %v2126 = vunpack.c.h.b16 %v876
    %v2127 = vunpack.c.l.b16 %v877
    %v2128 = vunpack.c.h.b16 %v877
    %v2129 = vunpack.c.l.b16 %v878
    %v2130 = vunpack.c.h.b16 %v878
    %v2131 = vunpack.c.l.b16 %v879
    %v2132 = vunpack.c.h.b16 %v879
    %v2133 = vunpack.c.l.b16 %v880
    %v2134 = vunpack.c.h.b16 %v880
    %v2135 = vunpack.c.l.b16 %v881
    %v2136 = vunpack.c.h.b16 %v881
    %v2137 = vunpack.c.l.b16 %v882
    %v2138 = vunpack.c.h.b16 %v882
    %v2139 = vunpack.c.l.b16 %v883
    %v2140 = vunpack.c.h.b16 %v883
    %v2141 = vunpack.c.l.b16 %v884
    %v2142 = vunpack.c.h.b16 %v884
    %v2143 = vunpack.c.l.b16 %v885
    %v2144 = vunpack.c.h.b16 %v885
    %v2145 = vunpack.c.l.b16 %v886
    %v2146 = vunpack.c.h.b16 %v886
    %v2147 = vunpack.c.l.b16 %v887
    %v2148 = vunpack.c.h.b16 %v887
    %v2149 = vunpack.c.l.b16 %v888
    %v2150 = vunpack.c.h.b16 %v888
    %v2151 = vunpack.c.l.b16 %v889
    %v2152 = vunpack.c.h.b16 %v889
    %v2153 = vunpack.c.l.b16 %v890
    %v2154 = vunpack.c.h.b16 %v890
    %v2155 = vunpack.c.l.b16 %v891
    %v2156 = vunpack.c.h.b16 %v891
    %v2157 = vunpack.c.l.b16 %v892
    %v2158 = vunpack.c.h.b16 %v892
    %v2159 = vunpack.c.l.b16 %v893
    %v2160 = vunpack.c.h.b16 %v893
    %v2161 = vunpack.c.l.b16 %v894
    %v2162 = vunpack.c.h.b16 %v894
    %v2163 = vunpack.c.l.b16 %v895
    %v2164 = vunpack.c.h.b16 %v895
    %v2165 = vunpack.c.l.b16 %v896
    %v2166 = vunpack.c.h.b16 %v896
    %v2167 = vunpack.c.l.b16 %v897
    %v2168 = vunpack.c.h.b16 %v897
    %v2169 = vunpack.c.l.b16 %v898
    %v2170 = vunpack.c.h.b16 %v898
    %v2171 = vunpack.c.l.b16 %v899
    %v2172 = vunpack.c.h.b16 %v899
    %v2173 = vunpack.c.l.b16 %v900
    %v2174 = vunpack.c.h.b16 %v900
    %v2175 = vunpack.c.l.b16 %v901
    %v2176 = vunpack.c.h.b16 %v901
    %v2177 = vunpack.c.l.b16 %v902
    %v2178 = vunpack.c.h.b16 %v902
    %v2179 = vunpack.c.l.b16 %v903
    %v2180 = vunpack.c.h.b16 %v903
    %v2181 = vunpack.c.l.b16 %v904
    %v2182 = vunpack.c.h.b16 %v904
    %v2183 = vunpack.c.l.b16 %v905
    %v2184 = vunpack.c.h.b16 %v905
    %v2185 = vunpack.c.l.b16 %v906
    %v2186 = vunpack.c.h.b16 %v906
    %v2187 = vunpack.c.l.b16 %v907
    %v2188 = vunpack.c.h.b16 %v907
    %v2189 = vunpack.c.l.b16 %v908
    %v2190 = vunpack.c.h.b16 %v908
    %v2191 = vunpack.c.l.b16 %v909
    %v2192 = vunpack.c.h.b16 %v909
    %v2193 = vunpack.c.l.b16 %v910
    %v2194 = vunpack.c.h.b16 %v910
    %v2195 = vunpack.c.l.b16 %v911
    %v2196 = vunpack.c.h.b16 %v911
    %v2197 = vunpack.c.l.b16 %v912
    %v2198 = vunpack.c.h.b16 %v912
    %v2199 = vunpack.c.l.b16 %v913
    %v2200 = vunpack.c.h.b16 %v913
    %v2201 = vunpack.c.l.b16 %v914
    %v2202 = vunpack.c.h.b16 %v914
    %v2203 = vunpack.c.l.b16 %v915
    %v2204 = vunpack.c.h.b16 %v915
    %v2205 = vunpack.c.l.b16 %v916
    %v2206 = vunpack.c.h.b16 %v916
    %v2207 = vunpack.c.l.b16 %v917
    %v2208 = vunpack.c.h.b16 %v917
    %v2209 = vunpack.c.l.b16 %v918
    %v2210 = vunpack.c.h.b16 %v918
    %v2211 = vunpack.c.l.b16 %v919
    %v2212 = vunpack.c.h.b16 %v919
    %v2213 = vunpack.c.l.b16 %v920
    %v2214 = vunpack.c.h.b16 %v920
    %v2215 = vunpack.c.l.b16 %v921
    %v2216 = vunpack.c.h.b16 %v921
    %v2217 = vunpack.c.l.b16 %v922
    %v2218 = vunpack.c.h.b16 %v922
    %v2219 = vunpack.c.l.b16 %v923
    %v2220 = vunpack.c.h.b16 %v923
    %v2221 = vunpack.c.l.b16 %v924
    %v2222 = vunpack.c.h.b16 %v924
    %v2223 = vunpack.c.l.b16 %v925
    %v2224 = vunpack.c.h.b16 %v925
    %v2225 = vunpack.c.l.b16 %v926
    %v2226 = vunpack.c.h.b16 %v926
    %v2227 = vunpack.c.l.b16 %v927
    %v2228 = vunpack.c.h.b16 %v927
    %v2229 = vunpack.c.l.b16 %v928
    %v2230 = vunpack.c.h.b16 %v928
    %v2231 = vunpack.c.l.b16 %v929
    %v2232 = vunpack.c.h.b16 %v929
    %v2233 = vunpack.c.l.b16 %v930
    %v2234 = vunpack.c.h.b16 %v930
    %v2235 = vunpack.c.l.b16 %v931
    %v2236 = vunpack.c.h.b16 %v931
    %v2237 = vunpack.c.l.b16 %v932
    %v2238 = vunpack.c.h.b16 %v932
    %v2239 = vunpack.c.l.b16 %v933
    %v2240 = vunpack.c.h.b16 %v933
    %v2241 = vunpack.c.l.b16 %v934
    %v2242 = vunpack.c.h.b16 %v934
    %v2243 = vunpack.c.l.b16 %v935
    %v2244 = vunpack.c.h.b16 %v935
    %v2245 = vunpack.c.l.b16 %v936
    %v2246 = vunpack.c.h.b16 %v936
    %v2247 = vunpack.c.l.b16 %v937
    %v2248 = vunpack.c.h.b16 %v937
    %v2249 = vunpack.c.l.b16 %v938
    %v2250 = vunpack.c.h.b16 %v938
    %v2251 = vunpack.c.l.b16 %v939
    %v2252 = vunpack.c.h.b16 %v939
    %v2253 = vunpack.c.l.b16 %v940
    %v2254 = vunpack.c.h.b16 %v940
    %v2255 = vunpack.c.l.b16 %v941
    %v2256 = vunpack.c.h.b16 %v941
    %v2257 = vunpack.c.l.b16 %v942
    %v2258 = vunpack.c.h.b16 %v942
    %v2259 = vunpack.c.l.b16 %v943
    %v2260 = vunpack.c.h.b16 %v943
    %v2261 = vunpack.c.l.b16 %v944
    %v2262 = vunpack.c.h.b16 %v944
    %v2263 = vunpack.c.l.b16 %v945
    %v2264 = vunpack.c.h.b16 %v945
    %v2265 = vunpack.c.l.b16 %v946
    %v2266 = vunpack.c.h.b16 %v946
    %v2267 = vunpack.c.l.b16 %v947
    %v2268 = vunpack.c.h.b16 %v947
    %v2269 = vunpack.c.l.b16 %v948
    %v2270 = vunpack.c.h.b16 %v948
    %v2271 = vunpack.c.l.b16 %v949
    %v2272 = vunpack.c.h.b16 %v949
    %v2273 = vunpack.c.l.b16 %v950
    %v2274 = vunpack.c.h.b16 %v950
    %v2275 = vunpack.c.l.b16 %v951
    %v2276 = vunpack.c.h.b16 %v951
    %v2277 = vunpack.c.l.b16 %v952
    %v2278 = vunpack.c.h.b16 %v952
    %v2279 = vunpack.c.l.b16 %v953
    %v2280 = vunpack.c.h.b16 %v953
    %v2281 = vunpack.c.l.b16 %v954
    %v2282 = vunpack.c.h.b16 %v954
    %v2283 = vunpack.c.l.b16 %v955
    %v2284 = vunpack.c.h.b16 %v955
    %v2285 = vunpack.c.l.b16 %v956
    %v2286 = vunpack.c.h.b16 %v956
    %v2287 = vunpack.c.l.b16 %v957
    %v2288 = vunpack.c.h.b16 %v957
    %v2289 = vunpack.c.l.b16 %v958
    %v2290 = vunpack.c.h.b16 %v958
    %v2291 = vunpack.c.l.b16 %v959
    %v2292 = vunpack.c.h.b16 %v959
    %v2293 = vunpack.c.l.b16 %v960
    %v2294 = vunpack.c.h.b16 %v960
    %v2295 = vunpack.c.l.b16 %v961
    %v2296 = vunpack.c.h.b16 %v961
    %v2297 = vunpack.c.l.b16 %v962
    %v2298 = vunpack.c.h.b16 %v962
    %v2299 = vunpack.c.l.b16 %v963
    %v2300 = vunpack.c.h.b16 %v963
    %v2301 = vunpack.c.l.b16 %v964
    %v2302 = vunpack.c.h.b16 %v964
    %v2303 = vunpack.c.l.b16 %v965
    %v2304 = vunpack.c.h.b16 %v965
    %v2305 = vunpack.c.l.b16 %v966
    %v2306 = vunpack.c.h.b16 %v966
    %v2307 = vunpack.c.l.b16 %v967
    %v2308 = vunpack.c.h.b16 %v967
    %v2309 = vunpack.c.l.b16 %v968
    %v2310 = vunpack.c.h.b16 %v968
    %v2311 = vunpack.c.l.b16 %v969
    %v2312 = vunpack.c.h.b16 %v969
    %v2313 = vunpack.c.l.b16 %v970
    %v2314 = vunpack.c.h.b16 %v970
    %v2315 = vunpack.c.l.b16 %v971
    %v2316 = vunpack.c.h.b16 %v971
    %v2317 = vpack.c.b16 %v2069, %v2061
    %v2318 = vpack.c.b16 %v2070, %v2062
    %v2319 = vpack.c.b16 %v2071, %v2063
    %v2320 = vpack.c.b16 %v2072, %v2064
    %v2321 = vpack.c.b16 %v2073, %v2065
    %v2322 = vpack.c.b16 %v2074, %v2066
    %v2323 = vpack.c.b16 %v2075, %v2067
    %v2324 = vpack.c.b16 %v2076, %v2068
    %v2325 = vpack.c.b16 %v2085, %v2077
    %v2326 = vpack.c.b16 %v2086, %v2078
    %v2327 = vpack.c.b16 %v2087, %v2079
    %v2328 = vpack.c.b16 %v2088, %v2080
    %v2329 = vpack.c.b16 %v2089, %v2081
    %v2330 = vpack.c.b16 %v2090, %v2082
    %v2331 = vpack.c.b16 %v2091, %v2083
    %v2332 = vpack.c.b16 %v2092, %v2084
    %v2333 = vpack.c.b16 %v2101, %v2093
    %v2334 = vpack.c.b16 %v2102, %v2094
    %v2335 = vpack.c.b16 %v2103, %v2095
    %v2336 = vpack.c.b16 %v2104, %v2096
    %v2337 = vpack.c.b16 %v2105, %v2097
    %v2338 = vpack.c.b16 %v2106, %v2098
    %v2339 = vpack.c.b16 %v2107, %v2099
    %v2340 = vpack.c.b16 %v2108, %v2100
    %v2341 = vpack.c.b16 %v2117, %v2109
    %v2342 = vpack.c.b16 %v2118, %v2110
    %v2343 = vpack.c.b16 %v2119, %v2111
    %v2344 = vpack.c.b16 %v2120, %v2112
    %v2345 = vpack.c.b16 %v2121, %v2113
    %v2346 = vpack.c.b16 %v2122, %v2114
    %v2347 = vpack.c.b16 %v2123, %v2115
    %v2348 = vpack.c.b16 %v2124, %v2116
    %v2349 = vpack.c.b16 %v2133, %v2125
    %v2350 = vpack.c.b16 %v2134, %v2126
    %v2351 = vpack.c.b16 %v2135, %v2127
    %v2352 = vpack.c.b16 %v2136, %v2128
    %v2353 = vpack.c.b16 %v2137, %v2129
    %v2354 = vpack.c.b16 %v2138, %v2130
    %v2355 = vpack.c.b16 %v2139, %v2131
    %v2356 = vpack.c.b16 %v2140, %v2132
    %v2357 = vpack.c.b16 %v2149, %v2141
    %v2358 = vpack.c.b16 %v2150, %v2142
    %v2359 = vpack.c.b16 %v2151, %v2143
    %v2360 = vpack.c.b16 %v2152, %v2144
    %v2361 = vpack.c.b16 %v2153, %v2145
    %v2362 = vpack.c.b16 %v2154, %v2146
    %v2363 = vpack.c.b16 %v2155, %v2147
    %v2364 = vpack.c.b16 %v2156, %v2148
    %v2365 = vpack.c.b16 %v2165, %v2157
    %v2366 = vpack.c.b16 %v2166, %v2158
    %v2367 = vpack.c.b16 %v2167, %v2159
    %v2368 = vpack.c.b16 %v2168, %v2160
    %v2369 = vpack.c.b16 %v2169, %v2161
    %v2370 = vpack.c.b16 %v2170, %v2162
    %v2371 = vpack.c.b16 %v2171, %v2163
    %v2372 = vpack.c.b16 %v2172, %v2164
    %v2373 = vpack.c.b16 %v2181, %v2173
    %v2374 = vpack.c.b16 %v2182, %v2174
    %v2375 = vpack.c.b16 %v2183, %v2175
    %v2376 = vpack.c.b16 %v2184, %v2176
    %v2377 = vpack.c.b16 %v2185, %v2177
    %v2378 = vpack.c.b16 %v2186, %v2178
    %v2379 = vpack.c.b16 %v2187, %v2179
    %v2380 = vpack.c.b16 %v2188, %v2180
    %v2381 = vpack.c.b16 %v2197, %v2189
    %v2382 = vpack.c.b16 %v2198, %v2190
    %v2383 = vpack.c.b16 %v2199, %v2191
    %v2384 = vpack.c.b16 %v2200, %v2192
    %v2385 = vpack.c.b16 %v2201, %v2193
    %v2386 = vpack.c.b16 %v2202, %v2194
    %v2387 = vpack.c.b16 %v2203, %v2195
    %v2388 = vpack.c.b16 %v2204, %v2196
    %v2389 = vpack.c.b16 %v2213, %v2205
    %v2390 = vpack.c.b16 %v2214, %v2206
    %v2391 = vpack.c.b16 %v2215, %v2207
    %v2392 = vpack.c.b16 %v2216, %v2208
    %v2393 = vpack.c.b16 %v2217, %v2209
    %v2394 = vpack.c.b16 %v2218, %v2210
    %v2395 = vpack.c.b16 %v2219, %v2211
    %v2396 = vpack.c.b16 %v2220, %v2212
    %v2397 = vpack.c.b16 %v2229, %v2221
    %v2398 = vpack.c.b16 %v2230, %v2222
    %v2399 = vpack.c.b16 %v2231, %v2223
    %v2400 = vpack.c.b16 %v2232, %v2224
    %v2401 = vpack.c.b16 %v2233, %v2225
    %v2402 = vpack.c.b16 %v2234, %v2226
    %v2403 = vpack.c.b16 %v2235, %v2227
    %v2404 = vpack.c.b16 %v2236, %v2228
    %v2405 = vpack.c.b16 %v2245, %v2237
    %v2406 = vpack.c.b16 %v2246, %v2238
    %v2407 = vpack.c.b16 %v2247, %v2239
    %v2408 = vpack.c.b16 %v2248, %v2240
    %v2409 = vpack.c.b16 %v2249, %v2241
    %v2410 = vpack.c.b16 %v2250, %v2242
    %v2411 = vpack.c.b16 %v2251, %v2243
    %v2412 = vpack.c.b16 %v2252, %v2244
    %v2413 = vpack.c.b16 %v2261, %v2253
    %v2414 = vpack.c.b16 %v2262, %v2254
    %v2415 = vpack.c.b16 %v2263, %v2255
    %v2416 = vpack.c.b16 %v2264, %v2256
    %v2417 = vpack.c.b16 %v2265, %v2257
    %v2418 = vpack.c.b16 %v2266, %v2258
    %v2419 = vpack.c.b16 %v2267, %v2259
    %v2420 = vpack.c.b16 %v2268, %v2260
    %v2421 = vpack.c.b16 %v2277, %v2269
    %v2422 = vpack.c.b16 %v2278, %v2270
    %v2423 = vpack.c.b16 %v2279, %v2271
    %v2424 = vpack.c.b16 %v2280, %v2272
    %v2425 = vpack.c.b16 %v2281, %v2273
    %v2426 = vpack.c.b16 %v2282, %v2274
    %v2427 = vpack.c.b16 %v2283, %v2275
    %v2428 = vpack.c.b16 %v2284, %v2276
    %v2429 = vpack.c.b16 %v2293, %v2285
    %v2430 = vpack.c.b16 %v2294, %v2286
    %v2431 = vpack.c.b16 %v2295, %v2287
    %v2432 = vpack.c.b16 %v2296, %v2288
    %v2433 = vpack.c.b16 %v2297, %v2289
    %v2434 = vpack.c.b16 %v2298, %v2290
    %v2435 = vpack.c.b16 %v2299, %v2291
    %v2436 = vpack.c.b16 %v2300, %v2292
    %v2437 = vpack.c.b16 %v2309, %v2301
    %v2438 = vpack.c.b16 %v2310, %v2302
    %v2439 = vpack.c.b16 %v2311, %v2303
    %v2440 = vpack.c.b16 %v2312, %v2304
    %v2441 = vpack.c.b16 %v2313, %v2305
    %v2442 = vpack.c.b16 %v2314, %v2306
    %v2443 = vpack.c.b16 %v2315, %v2307
    %v2444 = vpack.c.b16 %v2316, %v2308
    %2573 = vmatprep.subr.bf16.mxu0 %v2374
    %2574 = vmatpush1.bf16.msra.mxu0 %v2373
    %2575 = vmatprep.subr.bf16.mxu0 %v2366
    %2576 = vmatpush1.bf16.msra.mxu0 %v2365
    %2577 = vmatprep.subr.bf16.mxu0 %v2358
    %2578 = vmatpush1.bf16.msra.mxu0 %v2357
    %2579 = vmatprep.subr.bf16.mxu0 %v2350
    %2580 = vmatpush1.bf16.msra.mxu0 %v2349
    %2581 = vmatprep.subr.bf16.mxu0 %v2342
    %2582 = vmatpush1.bf16.msra.mxu0 %v2341
    %2583 = vmatprep.subr.bf16.mxu0 %v2334
    %2584 = vmatpush1.bf16.msra.mxu0 %v2333
    %2585 = vmatprep.subr.bf16.mxu0 %v2326
    %2586 = vmatpush1.bf16.msra.mxu0 %v2325
    %2587 = vmatprep.subr.bf16.mxu0 %v2318
    %2588 = vmatpush1.bf16.msra.mxu0 %v2317
    %2589 = vmatprep.subr.bf16.mxu0 %v2438
    %2590 = vmatpush2.bf16.msra.mxu0 %v2437
    %2591 = vmatprep.subr.bf16.mxu0 %v2430
    %2592 = vmatpush2.bf16.msra.mxu0 %v2429
    %2593 = vmatprep.subr.bf16.mxu0 %v2422
    %2594 = vmatpush2.bf16.msra.mxu0 %v2421
    %2595 = vmatprep.subr.bf16.mxu0 %v2414
    %2596 = vmatpush2.bf16.msra.mxu0 %v2413
    %2597 = vmatprep.subr.bf16.mxu0 %v2406
    %2598 = vmatpush2.bf16.msra.mxu0 %v2405
    %2599 = vmatprep.subr.bf16.mxu0 %v2398
    %2600 = vmatpush2.bf16.msra.mxu0 %v2397
    %2601 = vmatprep.subr.bf16.mxu0 %v2390
    %2602 = vmatpush2.bf16.msra.mxu0 %v2389
    %2603 = vmatprep.subr.bf16.mxu0 %v2382
    %2604 = vmatpush2.bf16.msra.mxu0 %v2381
    %2605 = vmatprep.mubr.bf16.mxu0 %v1930
    %2606 = vmatmul.mubr.bf16.gmra.mxu0 %v1929
    %v2607 = vpop.f32.mrf.mxu0
    %v2608 = vadd.f32 %v1797, %v2607
    %v2609 = vpop.f32.mrf.mxu0
    %v2610 = vadd.f32 %v1799, %v2609
    %v2611 = vpop.f32.mrf.mxu0
    %v2612 = vpop.f32.mrf.mxu0
    %2613 = vdwg.mxu0
    %2614 = vmatprep.subr.bf16.mxu0 %v2376
    %2615 = vmatpush1.bf16.msra.mxu0 %v2375
    %2616 = vmatprep.subr.bf16.mxu0 %v2368
    %2617 = vmatpush1.bf16.msra.mxu0 %v2367
    %2618 = vmatprep.subr.bf16.mxu0 %v2360
    %2619 = vmatpush1.bf16.msra.mxu0 %v2359
    %2620 = vmatprep.subr.bf16.mxu0 %v2352
    %2621 = vmatpush1.bf16.msra.mxu0 %v2351
    %2622 = vmatprep.subr.bf16.mxu0 %v2344
    %2623 = vmatpush1.bf16.msra.mxu0 %v2343
    %2624 = vmatprep.subr.bf16.mxu0 %v2336
    %2625 = vmatpush1.bf16.msra.mxu0 %v2335
    %2626 = vmatprep.subr.bf16.mxu0 %v2328
    %2627 = vmatpush1.bf16.msra.mxu0 %v2327
    %2628 = vmatprep.subr.bf16.mxu0 %v2320
    %2629 = vmatpush1.bf16.msra.mxu0 %v2319
    %2630 = vmatprep.subr.bf16.mxu0 %v2440
    %2631 = vmatpush2.bf16.msra.mxu0 %v2439
    %2632 = vmatprep.subr.bf16.mxu0 %v2432
    %2633 = vmatpush2.bf16.msra.mxu0 %v2431
    %2634 = vmatprep.subr.bf16.mxu0 %v2424
    %2635 = vmatpush2.bf16.msra.mxu0 %v2423
    %2636 = vmatprep.subr.bf16.mxu0 %v2416
    %2637 = vmatpush2.bf16.msra.mxu0 %v2415
    %2638 = vmatprep.subr.bf16.mxu0 %v2408
    %2639 = vmatpush2.bf16.msra.mxu0 %v2407
    %2640 = vmatprep.subr.bf16.mxu0 %v2400
    %2641 = vmatpush2.bf16.msra.mxu0 %v2399
    %2642 = vmatprep.subr.bf16.mxu0 %v2392
    %2643 = vmatpush2.bf16.msra.mxu0 %v2391
    %2644 = vmatprep.subr.bf16.mxu0 %v2384
    %2645 = vmatpush2.bf16.msra.mxu0 %v2383
    %2646 = vmatprep.mubr.bf16.mxu0 %v1930
    %2647 = vmatmul.mubr.bf16.gmra.mxu0 %v1929
    %v2648 = vpop.f32.mrf.mxu0
    %v2649 = vadd.f32 %v1838, %v2648
    %v2650 = vpop.f32.mrf.mxu0
    %v2651 = vadd.f32 %v1840, %v2650
    %v2652 = vpop.f32.mrf.mxu0
    %v2653 = vpop.f32.mrf.mxu0
    %2654 = vdwg.mxu0
    %2655 = vmatprep.subr.bf16.mxu0 %v2378
    %2656 = vmatpush1.bf16.msra.mxu0 %v2377
    %2657 = vmatprep.subr.bf16.mxu0 %v2370
    %2658 = vmatpush1.bf16.msra.mxu0 %v2369
    %2659 = vmatprep.subr.bf16.mxu0 %v2362
    %2660 = vmatpush1.bf16.msra.mxu0 %v2361
    %2661 = vmatprep.subr.bf16.mxu0 %v2354
    %2662 = vmatpush1.bf16.msra.mxu0 %v2353
    %2663 = vmatprep.subr.bf16.mxu0 %v2346
    %2664 = vmatpush1.bf16.msra.mxu0 %v2345
    %2665 = vmatprep.subr.bf16.mxu0 %v2338
    %2666 = vmatpush1.bf16.msra.mxu0 %v2337
    %2667 = vmatprep.subr.bf16.mxu0 %v2330
    %2668 = vmatpush1.bf16.msra.mxu0 %v2329
    %2669 = vmatprep.subr.bf16.mxu0 %v2322
    %2670 = vmatpush1.bf16.msra.mxu0 %v2321
    %2671 = vmatprep.subr.bf16.mxu0 %v2442
    %2672 = vmatpush2.bf16.msra.mxu0 %v2441
    %2673 = vmatprep.subr.bf16.mxu0 %v2434
    %2674 = vmatpush2.bf16.msra.mxu0 %v2433
    %2675 = vmatprep.subr.bf16.mxu0 %v2426
    %2676 = vmatpush2.bf16.msra.mxu0 %v2425
    %2677 = vmatprep.subr.bf16.mxu0 %v2418
    %2678 = vmatpush2.bf16.msra.mxu0 %v2417
    %2679 = vmatprep.subr.bf16.mxu0 %v2410
    %2680 = vmatpush2.bf16.msra.mxu0 %v2409
    %2681 = vmatprep.subr.bf16.mxu0 %v2402
    %2682 = vmatpush2.bf16.msra.mxu0 %v2401
    %2683 = vmatprep.subr.bf16.mxu0 %v2394
    %2684 = vmatpush2.bf16.msra.mxu0 %v2393
    %2685 = vmatprep.subr.bf16.mxu0 %v2386
    %2686 = vmatpush2.bf16.msra.mxu0 %v2385
    %2687 = vmatprep.mubr.bf16.mxu0 %v1930
    %2688 = vmatmul.mubr.bf16.gmra.mxu0 %v1929
    %v2689 = vpop.f32.mrf.mxu0
    %v2690 = vadd.f32 %v1879, %v2689
    %v2691 = vpop.f32.mrf.mxu0
    %v2692 = vadd.f32 %v1881, %v2691
    %v2693 = vpop.f32.mrf.mxu0
    %v2694 = vpop.f32.mrf.mxu0
    %2695 = vdwg.mxu0
    %2696 = vmatprep.subr.bf16.mxu0 %v2380
    %2697 = vmatpush1.bf16.msra.mxu0 %v2379
    %2698 = vmatprep.subr.bf16.mxu0 %v2372
    %2699 = vmatpush1.bf16.msra.mxu0 %v2371
    %2700 = vmatprep.subr.bf16.mxu0 %v2364
    %2701 = vmatpush1.bf16.msra.mxu0 %v2363
    %2702 = vmatprep.subr.bf16.mxu0 %v2356
    %2703 = vmatpush1.bf16.msra.mxu0 %v2355
    %2704 = vmatprep.subr.bf16.mxu0 %v2348
    %2705 = vmatpush1.bf16.msra.mxu0 %v2347
    %2706 = vmatprep.subr.bf16.mxu0 %v2340
    %2707 = vmatpush1.bf16.msra.mxu0 %v2339
    %2708 = vmatprep.subr.bf16.mxu0 %v2332
    %2709 = vmatpush1.bf16.msra.mxu0 %v2331
    %2710 = vmatprep.subr.bf16.mxu0 %v2324
    %2711 = vmatpush1.bf16.msra.mxu0 %v2323
    %2712 = vmatprep.subr.bf16.mxu0 %v2444
    %2713 = vmatpush2.bf16.msra.mxu0 %v2443
    %2714 = vmatprep.subr.bf16.mxu0 %v2436
    %2715 = vmatpush2.bf16.msra.mxu0 %v2435
    %2716 = vmatprep.subr.bf16.mxu0 %v2428
    %2717 = vmatpush2.bf16.msra.mxu0 %v2427
    %2718 = vmatprep.subr.bf16.mxu0 %v2420
    %2719 = vmatpush2.bf16.msra.mxu0 %v2419
    %2720 = vmatprep.subr.bf16.mxu0 %v2412
    %2721 = vmatpush2.bf16.msra.mxu0 %v2411
    %2722 = vmatprep.subr.bf16.mxu0 %v2404
    %2723 = vmatpush2.bf16.msra.mxu0 %v2403
    %2724 = vmatprep.subr.bf16.mxu0 %v2396
    %2725 = vmatpush2.bf16.msra.mxu0 %v2395
    %2726 = vmatprep.subr.bf16.mxu0 %v2388
    %2727 = vmatpush2.bf16.msra.mxu0 %v2387
    %2728 = vmatprep.mubr.bf16.mxu0 %v1930
    %2729 = vmatmul.mubr.bf16.gmra.mxu0 %v1929
    %v2730 = vpop.f32.mrf.mxu0
    %v2731 = vadd.f32 %v1920, %v2730
    %v2732 = vpop.f32.mrf.mxu0
    %v2733 = vadd.f32 %v1922, %v2732
    %v2734 = vpop.f32.mrf.mxu0
    %v2735 = vpop.f32.mrf.mxu0
    %2736 = vdwg.mxu0
    %s2737 = sshll.u32 %s826, 4
    %2738 = dma.done [#allocation4], %s2737
    %s2739 = scalar_lea.hbm %s11, 49152
    // Predicated region
    $region90: #{tpu_custom_call.1} parent=1 // pred_check
      _
    $region91: #{tpu_custom_call.1} parent=1 // pred_check_branch
      %2741 = sbr.rel target = $region93
    $region92: #{tpu_custom_call.1} parent=1 // pred_region
      %2742 = sst [smem:[#allocation22]] [#allocation29]
      %2743 = sst [smem:[#allocation23]] [#allocation28]
    $region93: #{tpu_custom_call.1} parent=1 // pred_fallthru
      _
    %2745 = shalt.err (0)
    %s2747 = sshll.u32 %s830, 4
    %s2748 = int_to_ptr.vmem [resolvable:$true] %s2747
    %2750 = dma.hbm_to_vmem [thread:$0]  %s2739, 16384, %s2748, %s831
    %v2751 = vld [vmem:[#allocation2 + $0x10] sm:$0xff]
    %v2752 = vld [vmem:[#allocation3] sm:$0xff]
    %v2753 = vld [vmem:[#allocation3 + $0x8] sm:$0xff]
    %v2754 = vld [vmem:[#allocation3 + $0x10] sm:$0xff]
    %v2755 = vld [vmem:[#allocation3 + $0x18] sm:$0xff]
    %v2756 = vld [vmem:[#allocation3 + $0x20] sm:$0xff]
    %v2757 = vld [vmem:[#allocation3 + $0x28] sm:$0xff]
    %v2758 = vld [vmem:[#allocation3 + $0x30] sm:$0xff]
    %v2759 = vld [vmem:[#allocation3 + $0x38] sm:$0xff]
    %v2760 = vld [vmem:[#allocation3 + $0x40] sm:$0xff]
    %v2761 = vld [vmem:[#allocation3 + $0x48] sm:$0xff]
    %v2762 = vld [vmem:[#allocation3 + $0x50] sm:$0xff]
    %v2763 = vld [vmem:[#allocation3 + $0x58] sm:$0xff]
    %v2764 = vld [vmem:[#allocation3 + $0x60] sm:$0xff]
    %v2765 = vld [vmem:[#allocation3 + $0x68] sm:$0xff]
    %v2766 = vld [vmem:[#allocation3 + $0x70] sm:$0xff]
    %v2767 = vld [vmem:[#allocation3 + $0x78] sm:$0xff]
    %v2768 = vld [vmem:[#allocation3 + $0x80] sm:$0xff]
    %v2769 = vld [vmem:[#allocation3 + $0x88] sm:$0xff]
    %v2770 = vld [vmem:[#allocation3 + $0x90] sm:$0xff]
    %v2771 = vld [vmem:[#allocation3 + $0x98] sm:$0xff]
    %v2772 = vld [vmem:[#allocation3 + $0xa0] sm:$0xff]
    %v2773 = vld [vmem:[#allocation3 + $0xa8] sm:$0xff]
    %v2774 = vld [vmem:[#allocation3 + $0xb0] sm:$0xff]
    %v2775 = vld [vmem:[#allocation3 + $0xb8] sm:$0xff]
    %v2776 = vld [vmem:[#allocation3 + $0xc0] sm:$0xff]
    %v2777 = vld [vmem:[#allocation3 + $0xc8] sm:$0xff]
    %v2778 = vld [vmem:[#allocation3 + $0xd0] sm:$0xff]
    %v2779 = vld [vmem:[#allocation3 + $0xd8] sm:$0xff]
    %v2780 = vld [vmem:[#allocation3 + $0xe0] sm:$0xff]
    %v2781 = vld [vmem:[#allocation3 + $0xe8] sm:$0xff]
    %v2782 = vld [vmem:[#allocation3 + $0xf0] sm:$0xff]
    %v2783 = vld [vmem:[#allocation3 + $0xf8] sm:$0xff]
    %v2784 = vld [vmem:[#allocation3 + $0x100] sm:$0xff]
    %v2785 = vld [vmem:[#allocation3 + $0x108] sm:$0xff]
    %v2786 = vld [vmem:[#allocation3 + $0x110] sm:$0xff]
    %v2787 = vld [vmem:[#allocation3 + $0x118] sm:$0xff]
    %v2788 = vld [vmem:[#allocation3 + $0x120] sm:$0xff]
    %v2789 = vld [vmem:[#allocation3 + $0x128] sm:$0xff]
    %v2790 = vld [vmem:[#allocation3 + $0x130] sm:$0xff]
    %v2791 = vld [vmem:[#allocation3 + $0x138] sm:$0xff]
    %v2792 = vld [vmem:[#allocation3 + $0x140] sm:$0xff]
    %v2793 = vld [vmem:[#allocation3 + $0x148] sm:$0xff]
    %v2794 = vld [vmem:[#allocation3 + $0x150] sm:$0xff]
    %v2795 = vld [vmem:[#allocation3 + $0x158] sm:$0xff]
    %v2796 = vld [vmem:[#allocation3 + $0x160] sm:$0xff]
    %v2797 = vld [vmem:[#allocation3 + $0x168] sm:$0xff]
    %v2798 = vld [vmem:[#allocation3 + $0x170] sm:$0xff]
    %v2799 = vld [vmem:[#allocation3 + $0x178] sm:$0xff]
    %v2800 = vld [vmem:[#allocation3 + $0x180] sm:$0xff]
    %v2801 = vld [vmem:[#allocation3 + $0x188] sm:$0xff]
    %v2802 = vld [vmem:[#allocation3 + $0x190] sm:$0xff]
    %v2803 = vld [vmem:[#allocation3 + $0x198] sm:$0xff]
    %v2804 = vld [vmem:[#allocation3 + $0x1a0] sm:$0xff]
    %v2805 = vld [vmem:[#allocation3 + $0x1a8] sm:$0xff]
    %v2806 = vld [vmem:[#allocation3 + $0x1b0] sm:$0xff]
    %v2807 = vld [vmem:[#allocation3 + $0x1b8] sm:$0xff]
    %v2808 = vld [vmem:[#allocation3 + $0x1c0] sm:$0xff]
    %v2809 = vld [vmem:[#allocation3 + $0x1c8] sm:$0xff]
    %v2810 = vld [vmem:[#allocation3 + $0x1d0] sm:$0xff]
    %v2811 = vld [vmem:[#allocation3 + $0x1d8] sm:$0xff]
    %v2812 = vld [vmem:[#allocation3 + $0x1e0] sm:$0xff]
    %v2813 = vld [vmem:[#allocation3 + $0x1e8] sm:$0xff]
    %v2814 = vld [vmem:[#allocation3 + $0x1f0] sm:$0xff]
    %v2815 = vld [vmem:[#allocation3 + $0x1f8] sm:$0xff]
    %v2816 = vld [vmem:[#allocation3 + $0x200] sm:$0xff]
    %v2817 = vld [vmem:[#allocation3 + $0x208] sm:$0xff]
    %v2818 = vld [vmem:[#allocation3 + $0x210] sm:$0xff]
    %v2819 = vld [vmem:[#allocation3 + $0x218] sm:$0xff]
    %v2820 = vld [vmem:[#allocation3 + $0x220] sm:$0xff]
    %v2821 = vld [vmem:[#allocation3 + $0x228] sm:$0xff]
    %v2822 = vld [vmem:[#allocation3 + $0x230] sm:$0xff]
    %v2823 = vld [vmem:[#allocation3 + $0x238] sm:$0xff]
    %v2824 = vld [vmem:[#allocation3 + $0x240] sm:$0xff]
    %v2825 = vld [vmem:[#allocation3 + $0x248] sm:$0xff]
    %v2826 = vld [vmem:[#allocation3 + $0x250] sm:$0xff]
    %v2827 = vld [vmem:[#allocation3 + $0x258] sm:$0xff]
    %v2828 = vld [vmem:[#allocation3 + $0x260] sm:$0xff]
    %v2829 = vld [vmem:[#allocation3 + $0x268] sm:$0xff]
    %v2830 = vld [vmem:[#allocation3 + $0x270] sm:$0xff]
    %v2831 = vld [vmem:[#allocation3 + $0x278] sm:$0xff]
    %v2832 = vld [vmem:[#allocation3 + $0x280] sm:$0xff]
    %v2833 = vld [vmem:[#allocation3 + $0x288] sm:$0xff]
    %v2834 = vld [vmem:[#allocation3 + $0x290] sm:$0xff]
    %v2835 = vld [vmem:[#allocation3 + $0x298] sm:$0xff]
    %v2836 = vld [vmem:[#allocation3 + $0x2a0] sm:$0xff]
    %v2837 = vld [vmem:[#allocation3 + $0x2a8] sm:$0xff]
    %v2838 = vld [vmem:[#allocation3 + $0x2b0] sm:$0xff]
    %v2839 = vld [vmem:[#allocation3 + $0x2b8] sm:$0xff]
    %v2840 = vld [vmem:[#allocation3 + $0x2c0] sm:$0xff]
    %v2841 = vld [vmem:[#allocation3 + $0x2c8] sm:$0xff]
    %v2842 = vld [vmem:[#allocation3 + $0x2d0] sm:$0xff]
    %v2843 = vld [vmem:[#allocation3 + $0x2d8] sm:$0xff]
    %v2844 = vld [vmem:[#allocation3 + $0x2e0] sm:$0xff]
    %v2845 = vld [vmem:[#allocation3 + $0x2e8] sm:$0xff]
    %v2846 = vld [vmem:[#allocation3 + $0x2f0] sm:$0xff]
    %v2847 = vld [vmem:[#allocation3 + $0x2f8] sm:$0xff]
    %v2848 = vld [vmem:[#allocation3 + $0x300] sm:$0xff]
    %v2849 = vld [vmem:[#allocation3 + $0x308] sm:$0xff]
    %v2850 = vld [vmem:[#allocation3 + $0x310] sm:$0xff]
    %v2851 = vld [vmem:[#allocation3 + $0x318] sm:$0xff]
    %v2852 = vld [vmem:[#allocation3 + $0x320] sm:$0xff]
    %v2853 = vld [vmem:[#allocation3 + $0x328] sm:$0xff]
    %v2854 = vld [vmem:[#allocation3 + $0x330] sm:$0xff]
    %v2855 = vld [vmem:[#allocation3 + $0x338] sm:$0xff]
    %v2856 = vld [vmem:[#allocation3 + $0x340] sm:$0xff]
    %v2857 = vld [vmem:[#allocation3 + $0x348] sm:$0xff]
    %v2858 = vld [vmem:[#allocation3 + $0x350] sm:$0xff]
    %v2859 = vld [vmem:[#allocation3 + $0x358] sm:$0xff]
    %v2860 = vld [vmem:[#allocation3 + $0x360] sm:$0xff]
    %v2861 = vld [vmem:[#allocation3 + $0x368] sm:$0xff]
    %v2862 = vld [vmem:[#allocation3 + $0x370] sm:$0xff]
    %v2863 = vld [vmem:[#allocation3 + $0x378] sm:$0xff]
    %v2864 = vld [vmem:[#allocation3 + $0x380] sm:$0xff]
    %v2865 = vld [vmem:[#allocation3 + $0x388] sm:$0xff]
    %v2866 = vld [vmem:[#allocation3 + $0x390] sm:$0xff]
    %v2867 = vld [vmem:[#allocation3 + $0x398] sm:$0xff]
    %v2868 = vld [vmem:[#allocation3 + $0x3a0] sm:$0xff]
    %v2869 = vld [vmem:[#allocation3 + $0x3a8] sm:$0xff]
    %v2870 = vld [vmem:[#allocation3 + $0x3b0] sm:$0xff]
    %v2871 = vld [vmem:[#allocation3 + $0x3b8] sm:$0xff]
    %v2872 = vld [vmem:[#allocation3 + $0x3c0] sm:$0xff]
    %v2873 = vld [vmem:[#allocation3 + $0x3c8] sm:$0xff]
    %v2874 = vld [vmem:[#allocation3 + $0x3d0] sm:$0xff]
    %v2875 = vld [vmem:[#allocation3 + $0x3d8] sm:$0xff]
    %v2876 = vld [vmem:[#allocation3 + $0x3e0] sm:$0xff]
    %v2877 = vld [vmem:[#allocation3 + $0x3e8] sm:$0xff]
    %v2878 = vld [vmem:[#allocation3 + $0x3f0] sm:$0xff]
    %v2879 = vld [vmem:[#allocation3 + $0x3f8] sm:$0xff]
    %v2881 = vunpack.c.l.b16 %v2751
    %v2882 = vunpack.c.h.b16 %v2751
    %v2883 = vpack.c.b16 %v2881, %v2881
    %v2884 = vpack.c.b16 %v2882, %v2882
    %v3015 = vunpack.c.l.b16 %v2752
    %v3016 = vunpack.c.h.b16 %v2752
    %v3017 = vunpack.c.l.b16 %v2753
    %v3018 = vunpack.c.h.b16 %v2753
    %v3019 = vunpack.c.l.b16 %v2754
    %v3020 = vunpack.c.h.b16 %v2754
    %v3021 = vunpack.c.l.b16 %v2755
    %v3022 = vunpack.c.h.b16 %v2755
    %v3023 = vunpack.c.l.b16 %v2756
    %v3024 = vunpack.c.h.b16 %v2756
    %v3025 = vunpack.c.l.b16 %v2757
    %v3026 = vunpack.c.h.b16 %v2757
    %v3027 = vunpack.c.l.b16 %v2758
    %v3028 = vunpack.c.h.b16 %v2758
    %v3029 = vunpack.c.l.b16 %v2759
    %v3030 = vunpack.c.h.b16 %v2759
    %v3031 = vunpack.c.l.b16 %v2760
    %v3032 = vunpack.c.h.b16 %v2760
    %v3033 = vunpack.c.l.b16 %v2761
    %v3034 = vunpack.c.h.b16 %v2761
    %v3035 = vunpack.c.l.b16 %v2762
    %v3036 = vunpack.c.h.b16 %v2762
    %v3037 = vunpack.c.l.b16 %v2763
    %v3038 = vunpack.c.h.b16 %v2763
    %v3039 = vunpack.c.l.b16 %v2764
    %v3040 = vunpack.c.h.b16 %v2764
    %v3041 = vunpack.c.l.b16 %v2765
    %v3042 = vunpack.c.h.b16 %v2765
    %v3043 = vunpack.c.l.b16 %v2766
    %v3044 = vunpack.c.h.b16 %v2766
    %v3045 = vunpack.c.l.b16 %v2767
    %v3046 = vunpack.c.h.b16 %v2767
    %v3047 = vunpack.c.l.b16 %v2768
    %v3048 = vunpack.c.h.b16 %v2768
    %v3049 = vunpack.c.l.b16 %v2769
    %v3050 = vunpack.c.h.b16 %v2769
    %v3051 = vunpack.c.l.b16 %v2770
    %v3052 = vunpack.c.h.b16 %v2770
    %v3053 = vunpack.c.l.b16 %v2771
    %v3054 = vunpack.c.h.b16 %v2771
    %v3055 = vunpack.c.l.b16 %v2772
    %v3056 = vunpack.c.h.b16 %v2772
    %v3057 = vunpack.c.l.b16 %v2773
    %v3058 = vunpack.c.h.b16 %v2773
    %v3059 = vunpack.c.l.b16 %v2774
    %v3060 = vunpack.c.h.b16 %v2774
    %v3061 = vunpack.c.l.b16 %v2775
    %v3062 = vunpack.c.h.b16 %v2775
    %v3063 = vunpack.c.l.b16 %v2776
    %v3064 = vunpack.c.h.b16 %v2776
    %v3065 = vunpack.c.l.b16 %v2777
    %v3066 = vunpack.c.h.b16 %v2777
    %v3067 = vunpack.c.l.b16 %v2778
    %v3068 = vunpack.c.h.b16 %v2778
    %v3069 = vunpack.c.l.b16 %v2779
    %v3070 = vunpack.c.h.b16 %v2779
    %v3071 = vunpack.c.l.b16 %v2780
    %v3072 = vunpack.c.h.b16 %v2780
    %v3073 = vunpack.c.l.b16 %v2781
    %v3074 = vunpack.c.h.b16 %v2781
    %v3075 = vunpack.c.l.b16 %v2782
    %v3076 = vunpack.c.h.b16 %v2782
    %v3077 = vunpack.c.l.b16 %v2783
    %v3078 = vunpack.c.h.b16 %v2783
    %v3079 = vunpack.c.l.b16 %v2784
    %v3080 = vunpack.c.h.b16 %v2784
    %v3081 = vunpack.c.l.b16 %v2785
    %v3082 = vunpack.c.h.b16 %v2785
    %v3083 = vunpack.c.l.b16 %v2786
    %v3084 = vunpack.c.h.b16 %v2786
    %v3085 = vunpack.c.l.b16 %v2787
    %v3086 = vunpack.c.h.b16 %v2787
    %v3087 = vunpack.c.l.b16 %v2788
    %v3088 = vunpack.c.h.b16 %v2788
    %v3089 = vunpack.c.l.b16 %v2789
    %v3090 = vunpack.c.h.b16 %v2789
    %v3091 = vunpack.c.l.b16 %v2790
    %v3092 = vunpack.c.h.b16 %v2790
    %v3093 = vunpack.c.l.b16 %v2791
    %v3094 = vunpack.c.h.b16 %v2791
    %v3095 = vunpack.c.l.b16 %v2792
    %v3096 = vunpack.c.h.b16 %v2792
    %v3097 = vunpack.c.l.b16 %v2793
    %v3098 = vunpack.c.h.b16 %v2793
    %v3099 = vunpack.c.l.b16 %v2794
    %v3100 = vunpack.c.h.b16 %v2794
    %v3101 = vunpack.c.l.b16 %v2795
    %v3102 = vunpack.c.h.b16 %v2795
    %v3103 = vunpack.c.l.b16 %v2796
    %v3104 = vunpack.c.h.b16 %v2796
    %v3105 = vunpack.c.l.b16 %v2797
    %v3106 = vunpack.c.h.b16 %v2797
    %v3107 = vunpack.c.l.b16 %v2798
    %v3108 = vunpack.c.h.b16 %v2798
    %v3109 = vunpack.c.l.b16 %v2799
    %v3110 = vunpack.c.h.b16 %v2799
    %v3111 = vunpack.c.l.b16 %v2800
    %v3112 = vunpack.c.h.b16 %v2800
    %v3113 = vunpack.c.l.b16 %v2801
    %v3114 = vunpack.c.h.b16 %v2801
    %v3115 = vunpack.c.l.b16 %v2802
    %v3116 = vunpack.c.h.b16 %v2802
    %v3117 = vunpack.c.l.b16 %v2803
    %v3118 = vunpack.c.h.b16 %v2803
    %v3119 = vunpack.c.l.b16 %v2804
    %v3120 = vunpack.c.h.b16 %v2804
    %v3121 = vunpack.c.l.b16 %v2805
    %v3122 = vunpack.c.h.b16 %v2805
    %v3123 = vunpack.c.l.b16 %v2806
    %v3124 = vunpack.c.h.b16 %v2806
    %v3125 = vunpack.c.l.b16 %v2807
    %v3126 = vunpack.c.h.b16 %v2807
    %v3127 = vunpack.c.l.b16 %v2808
    %v3128 = vunpack.c.h.b16 %v2808
    %v3129 = vunpack.c.l.b16 %v2809
    %v3130 = vunpack.c.h.b16 %v2809
    %v3131 = vunpack.c.l.b16 %v2810
    %v3132 = vunpack.c.h.b16 %v2810
    %v3133 = vunpack.c.l.b16 %v2811
    %v3134 = vunpack.c.h.b16 %v2811
    %v3135 = vunpack.c.l.b16 %v2812
    %v3136 = vunpack.c.h.b16 %v2812
    %v3137 = vunpack.c.l.b16 %v2813
    %v3138 = vunpack.c.h.b16 %v2813
    %v3139 = vunpack.c.l.b16 %v2814
    %v3140 = vunpack.c.h.b16 %v2814
    %v3141 = vunpack.c.l.b16 %v2815
    %v3142 = vunpack.c.h.b16 %v2815
    %v3143 = vunpack.c.l.b16 %v2816
    %v3144 = vunpack.c.h.b16 %v2816
    %v3145 = vunpack.c.l.b16 %v2817
    %v3146 = vunpack.c.h.b16 %v2817
    %v3147 = vunpack.c.l.b16 %v2818
    %v3148 = vunpack.c.h.b16 %v2818
    %v3149 = vunpack.c.l.b16 %v2819
    %v3150 = vunpack.c.h.b16 %v2819
    %v3151 = vunpack.c.l.b16 %v2820
    %v3152 = vunpack.c.h.b16 %v2820
    %v3153 = vunpack.c.l.b16 %v2821
    %v3154 = vunpack.c.h.b16 %v2821
    %v3155 = vunpack.c.l.b16 %v2822
    %v3156 = vunpack.c.h.b16 %v2822
    %v3157 = vunpack.c.l.b16 %v2823
    %v3158 = vunpack.c.h.b16 %v2823
    %v3159 = vunpack.c.l.b16 %v2824
    %v3160 = vunpack.c.h.b16 %v2824
    %v3161 = vunpack.c.l.b16 %v2825
    %v3162 = vunpack.c.h.b16 %v2825
    %v3163 = vunpack.c.l.b16 %v2826
    %v3164 = vunpack.c.h.b16 %v2826
    %v3165 = vunpack.c.l.b16 %v2827
    %v3166 = vunpack.c.h.b16 %v2827
    %v3167 = vunpack.c.l.b16 %v2828
    %v3168 = vunpack.c.h.b16 %v2828
    %v3169 = vunpack.c.l.b16 %v2829
    %v3170 = vunpack.c.h.b16 %v2829
    %v3171 = vunpack.c.l.b16 %v2830
    %v3172 = vunpack.c.h.b16 %v2830
    %v3173 = vunpack.c.l.b16 %v2831
    %v3174 = vunpack.c.h.b16 %v2831
    %v3175 = vunpack.c.l.b16 %v2832
    %v3176 = vunpack.c.h.b16 %v2832
    %v3177 = vunpack.c.l.b16 %v2833
    %v3178 = vunpack.c.h.b16 %v2833
    %v3179 = vunpack.c.l.b16 %v2834
    %v3180 = vunpack.c.h.b16 %v2834
    %v3181 = vunpack.c.l.b16 %v2835
    %v3182 = vunpack.c.h.b16 %v2835
    %v3183 = vunpack.c.l.b16 %v2836
    %v3184 = vunpack.c.h.b16 %v2836
    %v3185 = vunpack.c.l.b16 %v2837
    %v3186 = vunpack.c.h.b16 %v2837
    %v3187 = vunpack.c.l.b16 %v2838
    %v3188 = vunpack.c.h.b16 %v2838
    %v3189 = vunpack.c.l.b16 %v2839
    %v3190 = vunpack.c.h.b16 %v2839
    %v3191 = vunpack.c.l.b16 %v2840
    %v3192 = vunpack.c.h.b16 %v2840
    %v3193 = vunpack.c.l.b16 %v2841
    %v3194 = vunpack.c.h.b16 %v2841
    %v3195 = vunpack.c.l.b16 %v2842
    %v3196 = vunpack.c.h.b16 %v2842
    %v3197 = vunpack.c.l.b16 %v2843
    %v3198 = vunpack.c.h.b16 %v2843
    %v3199 = vunpack.c.l.b16 %v2844
    %v3200 = vunpack.c.h.b16 %v2844
    %v3201 = vunpack.c.l.b16 %v2845
    %v3202 = vunpack.c.h.b16 %v2845
    %v3203 = vunpack.c.l.b16 %v2846
    %v3204 = vunpack.c.h.b16 %v2846
    %v3205 = vunpack.c.l.b16 %v2847
    %v3206 = vunpack.c.h.b16 %v2847
    %v3207 = vunpack.c.l.b16 %v2848
    %v3208 = vunpack.c.h.b16 %v2848
    %v3209 = vunpack.c.l.b16 %v2849
    %v3210 = vunpack.c.h.b16 %v2849
    %v3211 = vunpack.c.l.b16 %v2850
    %v3212 = vunpack.c.h.b16 %v2850
    %v3213 = vunpack.c.l.b16 %v2851
    %v3214 = vunpack.c.h.b16 %v2851
    %v3215 = vunpack.c.l.b16 %v2852
    %v3216 = vunpack.c.h.b16 %v2852
    %v3217 = vunpack.c.l.b16 %v2853
    %v3218 = vunpack.c.h.b16 %v2853
    %v3219 = vunpack.c.l.b16 %v2854
    %v3220 = vunpack.c.h.b16 %v2854
    %v3221 = vunpack.c.l.b16 %v2855
    %v3222 = vunpack.c.h.b16 %v2855
    %v3223 = vunpack.c.l.b16 %v2856
    %v3224 = vunpack.c.h.b16 %v2856
    %v3225 = vunpack.c.l.b16 %v2857
    %v3226 = vunpack.c.h.b16 %v2857
    %v3227 = vunpack.c.l.b16 %v2858
    %v3228 = vunpack.c.h.b16 %v2858
    %v3229 = vunpack.c.l.b16 %v2859
    %v3230 = vunpack.c.h.b16 %v2859
    %v3231 = vunpack.c.l.b16 %v2860
    %v3232 = vunpack.c.h.b16 %v2860
    %v3233 = vunpack.c.l.b16 %v2861
    %v3234 = vunpack.c.h.b16 %v2861
    %v3235 = vunpack.c.l.b16 %v2862
    %v3236 = vunpack.c.h.b16 %v2862
    %v3237 = vunpack.c.l.b16 %v2863
    %v3238 = vunpack.c.h.b16 %v2863
    %v3239 = vunpack.c.l.b16 %v2864
    %v3240 = vunpack.c.h.b16 %v2864
    %v3241 = vunpack.c.l.b16 %v2865
    %v3242 = vunpack.c.h.b16 %v2865
    %v3243 = vunpack.c.l.b16 %v2866
    %v3244 = vunpack.c.h.b16 %v2866
    %v3245 = vunpack.c.l.b16 %v2867
    %v3246 = vunpack.c.h.b16 %v2867
    %v3247 = vunpack.c.l.b16 %v2868
    %v3248 = vunpack.c.h.b16 %v2868
    %v3249 = vunpack.c.l.b16 %v2869
    %v3250 = vunpack.c.h.b16 %v2869
    %v3251 = vunpack.c.l.b16 %v2870
    %v3252 = vunpack.c.h.b16 %v2870
    %v3253 = vunpack.c.l.b16 %v2871
    %v3254 = vunpack.c.h.b16 %v2871
    %v3255 = vunpack.c.l.b16 %v2872
    %v3256 = vunpack.c.h.b16 %v2872
    %v3257 = vunpack.c.l.b16 %v2873
    %v3258 = vunpack.c.h.b16 %v2873
    %v3259 = vunpack.c.l.b16 %v2874
    %v3260 = vunpack.c.h.b16 %v2874
    %v3261 = vunpack.c.l.b16 %v2875
    %v3262 = vunpack.c.h.b16 %v2875
    %v3263 = vunpack.c.l.b16 %v2876
    %v3264 = vunpack.c.h.b16 %v2876
    %v3265 = vunpack.c.l.b16 %v2877
    %v3266 = vunpack.c.h.b16 %v2877
    %v3267 = vunpack.c.l.b16 %v2878
    %v3268 = vunpack.c.h.b16 %v2878
    %v3269 = vunpack.c.l.b16 %v2879
    %v3270 = vunpack.c.h.b16 %v2879
    %v3271 = vpack.c.b16 %v3023, %v3015
    %v3272 = vpack.c.b16 %v3024, %v3016
    %v3273 = vpack.c.b16 %v3025, %v3017
    %v3274 = vpack.c.b16 %v3026, %v3018
    %v3275 = vpack.c.b16 %v3027, %v3019
    %v3276 = vpack.c.b16 %v3028, %v3020
    %v3277 = vpack.c.b16 %v3029, %v3021
    %v3278 = vpack.c.b16 %v3030, %v3022
    %v3279 = vpack.c.b16 %v3039, %v3031
    %v3280 = vpack.c.b16 %v3040, %v3032
    %v3281 = vpack.c.b16 %v3041, %v3033
    %v3282 = vpack.c.b16 %v3042, %v3034
    %v3283 = vpack.c.b16 %v3043, %v3035
    %v3284 = vpack.c.b16 %v3044, %v3036
    %v3285 = vpack.c.b16 %v3045, %v3037
    %v3286 = vpack.c.b16 %v3046, %v3038
    %v3287 = vpack.c.b16 %v3055, %v3047
    %v3288 = vpack.c.b16 %v3056, %v3048
    %v3289 = vpack.c.b16 %v3057, %v3049
    %v3290 = vpack.c.b16 %v3058, %v3050
    %v3291 = vpack.c.b16 %v3059, %v3051
    %v3292 = vpack.c.b16 %v3060, %v3052
    %v3293 = vpack.c.b16 %v3061, %v3053
    %v3294 = vpack.c.b16 %v3062, %v3054
    %v3295 = vpack.c.b16 %v3071, %v3063
    %v3296 = vpack.c.b16 %v3072, %v3064
    %v3297 = vpack.c.b16 %v3073, %v3065
    %v3298 = vpack.c.b16 %v3074, %v3066
    %v3299 = vpack.c.b16 %v3075, %v3067
    %v3300 = vpack.c.b16 %v3076, %v3068
    %v3301 = vpack.c.b16 %v3077, %v3069
    %v3302 = vpack.c.b16 %v3078, %v3070
    %v3303 = vpack.c.b16 %v3087, %v3079
    %v3304 = vpack.c.b16 %v3088, %v3080
    %v3305 = vpack.c.b16 %v3089, %v3081
    %v3306 = vpack.c.b16 %v3090, %v3082
    %v3307 = vpack.c.b16 %v3091, %v3083
    %v3308 = vpack.c.b16 %v3092, %v3084
    %v3309 = vpack.c.b16 %v3093, %v3085
    %v3310 = vpack.c.b16 %v3094, %v3086
    %v3311 = vpack.c.b16 %v3103, %v3095
    %v3312 = vpack.c.b16 %v3104, %v3096
    %v3313 = vpack.c.b16 %v3105, %v3097
    %v3314 = vpack.c.b16 %v3106, %v3098
    %v3315 = vpack.c.b16 %v3107, %v3099
    %v3316 = vpack.c.b16 %v3108, %v3100
    %v3317 = vpack.c.b16 %v3109, %v3101
    %v3318 = vpack.c.b16 %v3110, %v3102
    %v3319 = vpack.c.b16 %v3119, %v3111
    %v3320 = vpack.c.b16 %v3120, %v3112
    %v3321 = vpack.c.b16 %v3121, %v3113
    %v3322 = vpack.c.b16 %v3122, %v3114
    %v3323 = vpack.c.b16 %v3123, %v3115
    %v3324 = vpack.c.b16 %v3124, %v3116
    %v3325 = vpack.c.b16 %v3125, %v3117
    %v3326 = vpack.c.b16 %v3126, %v3118
    %v3327 = vpack.c.b16 %v3135, %v3127
    %v3328 = vpack.c.b16 %v3136, %v3128
    %v3329 = vpack.c.b16 %v3137, %v3129
    %v3330 = vpack.c.b16 %v3138, %v3130
    %v3331 = vpack.c.b16 %v3139, %v3131
    %v3332 = vpack.c.b16 %v3140, %v3132
    %v3333 = vpack.c.b16 %v3141, %v3133
    %v3334 = vpack.c.b16 %v3142, %v3134
    %v3335 = vpack.c.b16 %v3151, %v3143
    %v3336 = vpack.c.b16 %v3152, %v3144
    %v3337 = vpack.c.b16 %v3153, %v3145
    %v3338 = vpack.c.b16 %v3154, %v3146
    %v3339 = vpack.c.b16 %v3155, %v3147
    %v3340 = vpack.c.b16 %v3156, %v3148
    %v3341 = vpack.c.b16 %v3157, %v3149
    %v3342 = vpack.c.b16 %v3158, %v3150
    %v3343 = vpack.c.b16 %v3167, %v3159
    %v3344 = vpack.c.b16 %v3168, %v3160
    %v3345 = vpack.c.b16 %v3169, %v3161
    %v3346 = vpack.c.b16 %v3170, %v3162
    %v3347 = vpack.c.b16 %v3171, %v3163
    %v3348 = vpack.c.b16 %v3172, %v3164
    %v3349 = vpack.c.b16 %v3173, %v3165
    %v3350 = vpack.c.b16 %v3174, %v3166
    %v3351 = vpack.c.b16 %v3183, %v3175
    %v3352 = vpack.c.b16 %v3184, %v3176
    %v3353 = vpack.c.b16 %v3185, %v3177
    %v3354 = vpack.c.b16 %v3186, %v3178
    %v3355 = vpack.c.b16 %v3187, %v3179
    %v3356 = vpack.c.b16 %v3188, %v3180
    %v3357 = vpack.c.b16 %v3189, %v3181
    %v3358 = vpack.c.b16 %v3190, %v3182
    %v3359 = vpack.c.b16 %v3199, %v3191
    %v3360 = vpack.c.b16 %v3200, %v3192
    %v3361 = vpack.c.b16 %v3201, %v3193
    %v3362 = vpack.c.b16 %v3202, %v3194
    %v3363 = vpack.c.b16 %v3203, %v3195
    %v3364 = vpack.c.b16 %v3204, %v3196
    %v3365 = vpack.c.b16 %v3205, %v3197
    %v3366 = vpack.c.b16 %v3206, %v3198
    %v3367 = vpack.c.b16 %v3215, %v3207
    %v3368 = vpack.c.b16 %v3216, %v3208
    %v3369 = vpack.c.b16 %v3217, %v3209
    %v3370 = vpack.c.b16 %v3218, %v3210
    %v3371 = vpack.c.b16 %v3219, %v3211
    %v3372 = vpack.c.b16 %v3220, %v3212
    %v3373 = vpack.c.b16 %v3221, %v3213
    %v3374 = vpack.c.b16 %v3222, %v3214
    %v3375 = vpack.c.b16 %v3231, %v3223
    %v3376 = vpack.c.b16 %v3232, %v3224
    %v3377 = vpack.c.b16 %v3233, %v3225
    %v3378 = vpack.c.b16 %v3234, %v3226
    %v3379 = vpack.c.b16 %v3235, %v3227
    %v3380 = vpack.c.b16 %v3236, %v3228
    %v3381 = vpack.c.b16 %v3237, %v3229
    %v3382 = vpack.c.b16 %v3238, %v3230
    %v3383 = vpack.c.b16 %v3247, %v3239
    %v3384 = vpack.c.b16 %v3248, %v3240
    %v3385 = vpack.c.b16 %v3249, %v3241
    %v3386 = vpack.c.b16 %v3250, %v3242
    %v3387 = vpack.c.b16 %v3251, %v3243
    %v3388 = vpack.c.b16 %v3252, %v3244
    %v3389 = vpack.c.b16 %v3253, %v3245
    %v3390 = vpack.c.b16 %v3254, %v3246
    %v3391 = vpack.c.b16 %v3263, %v3255
    %v3392 = vpack.c.b16 %v3264, %v3256
    %v3393 = vpack.c.b16 %v3265, %v3257
    %v3394 = vpack.c.b16 %v3266, %v3258
    %v3395 = vpack.c.b16 %v3267, %v3259
    %v3396 = vpack.c.b16 %v3268, %v3260
    %v3397 = vpack.c.b16 %v3269, %v3261
    %v3398 = vpack.c.b16 %v3270, %v3262
    %3527 = vmatprep.subr.bf16.mxu0 %v3328
    %3528 = vmatpush1.bf16.msra.mxu0 %v3327
    %3529 = vmatprep.subr.bf16.mxu0 %v3320
    %3530 = vmatpush1.bf16.msra.mxu0 %v3319
    %3531 = vmatprep.subr.bf16.mxu0 %v3312
    %3532 = vmatpush1.bf16.msra.mxu0 %v3311
    %3533 = vmatprep.subr.bf16.mxu0 %v3304
    %3534 = vmatpush1.bf16.msra.mxu0 %v3303
    %3535 = vmatprep.subr.bf16.mxu0 %v3296
    %3536 = vmatpush1.bf16.msra.mxu0 %v3295
    %3537 = vmatprep.subr.bf16.mxu0 %v3288
    %3538 = vmatpush1.bf16.msra.mxu0 %v3287
    %3539 = vmatprep.subr.bf16.mxu0 %v3280
    %3540 = vmatpush1.bf16.msra.mxu0 %v3279
    %3541 = vmatprep.subr.bf16.mxu0 %v3272
    %3542 = vmatpush1.bf16.msra.mxu0 %v3271
    %3543 = vmatprep.subr.bf16.mxu0 %v3392
    %3544 = vmatpush2.bf16.msra.mxu0 %v3391
    %3545 = vmatprep.subr.bf16.mxu0 %v3384
    %3546 = vmatpush2.bf16.msra.mxu0 %v3383
    %3547 = vmatprep.subr.bf16.mxu0 %v3376
    %3548 = vmatpush2.bf16.msra.mxu0 %v3375
    %3549 = vmatprep.subr.bf16.mxu0 %v3368
    %3550 = vmatpush2.bf16.msra.mxu0 %v3367
    %3551 = vmatprep.subr.bf16.mxu0 %v3360
    %3552 = vmatpush2.bf16.msra.mxu0 %v3359
    %3553 = vmatprep.subr.bf16.mxu0 %v3352
    %3554 = vmatpush2.bf16.msra.mxu0 %v3351
    %3555 = vmatprep.subr.bf16.mxu0 %v3344
    %3556 = vmatpush2.bf16.msra.mxu0 %v3343
    %3557 = vmatprep.subr.bf16.mxu0 %v3336
    %3558 = vmatpush2.bf16.msra.mxu0 %v3335
    %3559 = vmatprep.mubr.bf16.mxu0 %v2884
    %3560 = vmatmul.mubr.bf16.gmra.mxu0 %v2883
    %v3561 = vpop.f32.mrf.mxu0
    %v3562 = vadd.f32 0.0, %v3561
    %v3563 = vpop.f32.mrf.mxu0
    %v3564 = vadd.f32 0.0, %v3563
    %v3565 = vpop.f32.mrf.mxu0
    %v3566 = vpop.f32.mrf.mxu0
    %3567 = vdwg.mxu0
    %3568 = vmatprep.subr.bf16.mxu0 %v3330
    %3569 = vmatpush1.bf16.msra.mxu0 %v3329
    %3570 = vmatprep.subr.bf16.mxu0 %v3322
    %3571 = vmatpush1.bf16.msra.mxu0 %v3321
    %3572 = vmatprep.subr.bf16.mxu0 %v3314
    %3573 = vmatpush1.bf16.msra.mxu0 %v3313
    %3574 = vmatprep.subr.bf16.mxu0 %v3306
    %3575 = vmatpush1.bf16.msra.mxu0 %v3305
    %3576 = vmatprep.subr.bf16.mxu0 %v3298
    %3577 = vmatpush1.bf16.msra.mxu0 %v3297
    %3578 = vmatprep.subr.bf16.mxu0 %v3290
    %3579 = vmatpush1.bf16.msra.mxu0 %v3289
    %3580 = vmatprep.subr.bf16.mxu0 %v3282
    %3581 = vmatpush1.bf16.msra.mxu0 %v3281
    %3582 = vmatprep.subr.bf16.mxu0 %v3274
    %3583 = vmatpush1.bf16.msra.mxu0 %v3273
    %3584 = vmatprep.subr.bf16.mxu0 %v3394
    %3585 = vmatpush2.bf16.msra.mxu0 %v3393
    %3586 = vmatprep.subr.bf16.mxu0 %v3386
    %3587 = vmatpush2.bf16.msra.mxu0 %v3385
    %3588 = vmatprep.subr.bf16.mxu0 %v3378
    %3589 = vmatpush2.bf16.msra.mxu0 %v3377
    %3590 = vmatprep.subr.bf16.mxu0 %v3370
    %3591 = vmatpush2.bf16.msra.mxu0 %v3369
    %3592 = vmatprep.subr.bf16.mxu0 %v3362
    %3593 = vmatpush2.bf16.msra.mxu0 %v3361
    %3594 = vmatprep.subr.bf16.mxu0 %v3354
    %3595 = vmatpush2.bf16.msra.mxu0 %v3353
    %3596 = vmatprep.subr.bf16.mxu0 %v3346
    %3597 = vmatpush2.bf16.msra.mxu0 %v3345
    %3598 = vmatprep.subr.bf16.mxu0 %v3338
    %3599 = vmatpush2.bf16.msra.mxu0 %v3337
    %3600 = vmatprep.mubr.bf16.mxu0 %v2884
    %3601 = vmatmul.mubr.bf16.gmra.mxu0 %v2883
    %v3602 = vpop.f32.mrf.mxu0
    %v3603 = vadd.f32 0.0, %v3602
    %v3604 = vpop.f32.mrf.mxu0
    %v3605 = vadd.f32 0.0, %v3604
    %v3606 = vpop.f32.mrf.mxu0
    %v3607 = vpop.f32.mrf.mxu0
    %3608 = vdwg.mxu0
    %3609 = vmatprep.subr.bf16.mxu0 %v3332
    %3610 = vmatpush1.bf16.msra.mxu0 %v3331
    %3611 = vmatprep.subr.bf16.mxu0 %v3324
    %3612 = vmatpush1.bf16.msra.mxu0 %v3323
    %3613 = vmatprep.subr.bf16.mxu0 %v3316
    %3614 = vmatpush1.bf16.msra.mxu0 %v3315
    %3615 = vmatprep.subr.bf16.mxu0 %v3308
    %3616 = vmatpush1.bf16.msra.mxu0 %v3307
    %3617 = vmatprep.subr.bf16.mxu0 %v3300
    %3618 = vmatpush1.bf16.msra.mxu0 %v3299
    %3619 = vmatprep.subr.bf16.mxu0 %v3292
    %3620 = vmatpush1.bf16.msra.mxu0 %v3291
    %3621 = vmatprep.subr.bf16.mxu0 %v3284
    %3622 = vmatpush1.bf16.msra.mxu0 %v3283
    %3623 = vmatprep.subr.bf16.mxu0 %v3276
    %3624 = vmatpush1.bf16.msra.mxu0 %v3275
    %3625 = vmatprep.subr.bf16.mxu0 %v3396
    %3626 = vmatpush2.bf16.msra.mxu0 %v3395
    %3627 = vmatprep.subr.bf16.mxu0 %v3388
    %3628 = vmatpush2.bf16.msra.mxu0 %v3387
    %3629 = vmatprep.subr.bf16.mxu0 %v3380
    %3630 = vmatpush2.bf16.msra.mxu0 %v3379
    %3631 = vmatprep.subr.bf16.mxu0 %v3372
    %3632 = vmatpush2.bf16.msra.mxu0 %v3371
    %3633 = vmatprep.subr.bf16.mxu0 %v3364
    %3634 = vmatpush2.bf16.msra.mxu0 %v3363
    %3635 = vmatprep.subr.bf16.mxu0 %v3356
    %3636 = vmatpush2.bf16.msra.mxu0 %v3355
    %3637 = vmatprep.subr.bf16.mxu0 %v3348
    %3638 = vmatpush2.bf16.msra.mxu0 %v3347
    %3639 = vmatprep.subr.bf16.mxu0 %v3340
    %3640 = vmatpush2.bf16.msra.mxu0 %v3339
    %3641 = vmatprep.mubr.bf16.mxu0 %v2884
    %3642 = vmatmul.mubr.bf16.gmra.mxu0 %v2883
    %v3643 = vpop.f32.mrf.mxu0
    %v3644 = vadd.f32 0.0, %v3643
    %v3645 = vpop.f32.mrf.mxu0
    %v3646 = vadd.f32 0.0, %v3645
    %v3647 = vpop.f32.mrf.mxu0
    %v3648 = vpop.f32.mrf.mxu0
    %3649 = vdwg.mxu0
    %3650 = vmatprep.subr.bf16.mxu0 %v3334
    %3651 = vmatpush1.bf16.msra.mxu0 %v3333
    %3652 = vmatprep.subr.bf16.mxu0 %v3326
    %3653 = vmatpush1.bf16.msra.mxu0 %v3325
    %3654 = vmatprep.subr.bf16.mxu0 %v3318
    %3655 = vmatpush1.bf16.msra.mxu0 %v3317
    %3656 = vmatprep.subr.bf16.mxu0 %v3310
    %3657 = vmatpush1.bf16.msra.mxu0 %v3309
    %3658 = vmatprep.subr.bf16.mxu0 %v3302
    %3659 = vmatpush1.bf16.msra.mxu0 %v3301
    %3660 = vmatprep.subr.bf16.mxu0 %v3294
    %3661 = vmatpush1.bf16.msra.mxu0 %v3293
    %3662 = vmatprep.subr.bf16.mxu0 %v3286
    %3663 = vmatpush1.bf16.msra.mxu0 %v3285
    %3664 = vmatprep.subr.bf16.mxu0 %v3278
    %3665 = vmatpush1.bf16.msra.mxu0 %v3277
    %3666 = vmatprep.subr.bf16.mxu0 %v3398
    %3667 = vmatpush2.bf16.msra.mxu0 %v3397
    %3668 = vmatprep.subr.bf16.mxu0 %v3390
    %3669 = vmatpush2.bf16.msra.mxu0 %v3389
    %3670 = vmatprep.subr.bf16.mxu0 %v3382
    %3671 = vmatpush2.bf16.msra.mxu0 %v3381
    %3672 = vmatprep.subr.bf16.mxu0 %v3374
    %3673 = vmatpush2.bf16.msra.mxu0 %v3373
    %3674 = vmatprep.subr.bf16.mxu0 %v3366
    %3675 = vmatpush2.bf16.msra.mxu0 %v3365
    %3676 = vmatprep.subr.bf16.mxu0 %v3358
    %3677 = vmatpush2.bf16.msra.mxu0 %v3357
    %3678 = vmatprep.subr.bf16.mxu0 %v3350
    %3679 = vmatpush2.bf16.msra.mxu0 %v3349
    %3680 = vmatprep.subr.bf16.mxu0 %v3342
    %3681 = vmatpush2.bf16.msra.mxu0 %v3341
    %3682 = vmatprep.mubr.bf16.mxu0 %v2884
    %3683 = vmatmul.mubr.bf16.gmra.mxu0 %v2883
    %v3684 = vpop.f32.mrf.mxu0
    %v3685 = vadd.f32 0.0, %v3684
    %v3686 = vpop.f32.mrf.mxu0
    %v3687 = vadd.f32 0.0, %v3686
    %v3688 = vpop.f32.mrf.mxu0
    %v3689 = vpop.f32.mrf.mxu0
    %3690 = vdwg.mxu0
    %v3691 = vadd.f32 %v2608, %v3562
    %v3692 = vadd.f32 %v2610, %v3564
    %v3693 = vadd.f32 %v2649, %v3603
    %v3694 = vadd.f32 %v2651, %v3605
    %v3695 = vadd.f32 %v2690, %v3644
    %v3696 = vadd.f32 %v2692, %v3646
    %v3697 = vadd.f32 %v2731, %v3685
    %v3698 = vadd.f32 %v2733, %v3687
    %s3699 = sshll.u32 %s826, 4
    %3700 = dma.done %s831, %s3699
    // Predicated region
    $region94: #{tpu_custom_call.1} parent=1 // pred_check
      _
    $region95: #{tpu_custom_call.1} parent=1 // pred_check_branch
      %3702 = sbr.rel target = $region97
    $region96: #{tpu_custom_call.1} parent=1 // pred_region
      %3703 = sst [smem:[#allocation22]] [#allocation31]
      %3704 = sst [smem:[#allocation23]] [#allocation30]
    $region97: #{tpu_custom_call.1} parent=1 // pred_fallthru
      _
    %3706 = shalt.err (0)
    %s3708 = sshll.u32 [#allocation3], 4
    %s3709 = int_to_ptr.vmem [resolvable:$true] %s3708
    %3711 = dma.hbm_to_vmem [thread:$0]  %s12, 16384, %s3709, [#allocation4]
    %v3712 = vld [vmem:[#allocation2 + $0x18] sm:$0xff]
    %v3713 = vld [vmem:[%s830] sm:$0xff]
    %v3714 = vld [vmem:[%s830 + $0x8] sm:$0xff]
    %v3715 = vld [vmem:[%s830 + $0x10] sm:$0xff]
    %v3716 = vld [vmem:[%s830 + $0x18] sm:$0xff]
    %v3717 = vld [vmem:[%s830 + $0x20] sm:$0xff]
    %v3718 = vld [vmem:[%s830 + $0x28] sm:$0xff]
    %v3719 = vld [vmem:[%s830 + $0x30] sm:$0xff]
    %v3720 = vld [vmem:[%s830 + $0x38] sm:$0xff]
    %v3721 = vld [vmem:[%s830 + $0x40] sm:$0xff]
    %v3722 = vld [vmem:[%s830 + $0x48] sm:$0xff]
    %v3723 = vld [vmem:[%s830 + $0x50] sm:$0xff]
    %v3724 = vld [vmem:[%s830 + $0x58] sm:$0xff]
    %v3725 = vld [vmem:[%s830 + $0x60] sm:$0xff]
    %v3726 = vld [vmem:[%s830 + $0x68] sm:$0xff]
    %v3727 = vld [vmem:[%s830 + $0x70] sm:$0xff]
    %v3728 = vld [vmem:[%s830 + $0x78] sm:$0xff]
    %v3729 = vld [vmem:[%s830 + $0x80] sm:$0xff]
    %v3730 = vld [vmem:[%s830 + $0x88] sm:$0xff]
    %v3731 = vld [vmem:[%s830 + $0x90] sm:$0xff]
    %v3732 = vld [vmem:[%s830 + $0x98] sm:$0xff]
    %v3733 = vld [vmem:[%s830 + $0xa0] sm:$0xff]
    %v3734 = vld [vmem:[%s830 + $0xa8] sm:$0xff]
    %v3735 = vld [vmem:[%s830 + $0xb0] sm:$0xff]
    %v3736 = vld [vmem:[%s830 + $0xb8] sm:$0xff]
    %v3737 = vld [vmem:[%s830 + $0xc0] sm:$0xff]
    %v3738 = vld [vmem:[%s830 + $0xc8] sm:$0xff]
    %v3739 = vld [vmem:[%s830 + $0xd0] sm:$0xff]
    %v3740 = vld [vmem:[%s830 + $0xd8] sm:$0xff]
    %v3741 = vld [vmem:[%s830 + $0xe0] sm:$0xff]
    %v3742 = vld [vmem:[%s830 + $0xe8] sm:$0xff]
    %v3743 = vld [vmem:[%s830 + $0xf0] sm:$0xff]
    %v3744 = vld [vmem:[%s830 + $0xf8] sm:$0xff]
    %v3745 = vld [vmem:[%s830 + $0x100] sm:$0xff]
    %v3746 = vld [vmem:[%s830 + $0x108] sm:$0xff]
    %v3747 = vld [vmem:[%s830 + $0x110] sm:$0xff]
    %v3748 = vld [vmem:[%s830 + $0x118] sm:$0xff]
    %v3749 = vld [vmem:[%s830 + $0x120] sm:$0xff]
    %v3750 = vld [vmem:[%s830 + $0x128] sm:$0xff]
    %v3751 = vld [vmem:[%s830 + $0x130] sm:$0xff]
    %v3752 = vld [vmem:[%s830 + $0x138] sm:$0xff]
    %v3753 = vld [vmem:[%s830 + $0x140] sm:$0xff]
    %v3754 = vld [vmem:[%s830 + $0x148] sm:$0xff]
    %v3755 = vld [vmem:[%s830 + $0x150] sm:$0xff]
    %v3756 = vld [vmem:[%s830 + $0x158] sm:$0xff]
    %v3757 = vld [vmem:[%s830 + $0x160] sm:$0xff]
    %v3758 = vld [vmem:[%s830 + $0x168] sm:$0xff]
    %v3759 = vld [vmem:[%s830 + $0x170] sm:$0xff]
    %v3760 = vld [vmem:[%s830 + $0x178] sm:$0xff]
    %v3761 = vld [vmem:[%s830 + $0x180] sm:$0xff]
    %v3762 = vld [vmem:[%s830 + $0x188] sm:$0xff]
    %v3763 = vld [vmem:[%s830 + $0x190] sm:$0xff]
    %v3764 = vld [vmem:[%s830 + $0x198] sm:$0xff]
    %v3765 = vld [vmem:[%s830 + $0x1a0] sm:$0xff]
    %v3766 = vld [vmem:[%s830 + $0x1a8] sm:$0xff]
    %v3767 = vld [vmem:[%s830 + $0x1b0] sm:$0xff]
    %v3768 = vld [vmem:[%s830 + $0x1b8] sm:$0xff]
    %v3769 = vld [vmem:[%s830 + $0x1c0] sm:$0xff]
    %v3770 = vld [vmem:[%s830 + $0x1c8] sm:$0xff]
    %v3771 = vld [vmem:[%s830 + $0x1d0] sm:$0xff]
    %v3772 = vld [vmem:[%s830 + $0x1d8] sm:$0xff]
    %v3773 = vld [vmem:[%s830 + $0x1e0] sm:$0xff]
    %v3774 = vld [vmem:[%s830 + $0x1e8] sm:$0xff]
    %v3775 = vld [vmem:[%s830 + $0x1f0] sm:$0xff]
    %v3776 = vld [vmem:[%s830 + $0x1f8] sm:$0xff]
    %v3777 = vld [vmem:[%s830 + $0x200] sm:$0xff]
    %v3778 = vld [vmem:[%s830 + $0x208] sm:$0xff]
    %v3779 = vld [vmem:[%s830 + $0x210] sm:$0xff]
    %v3780 = vld [vmem:[%s830 + $0x218] sm:$0xff]
    %v3781 = vld [vmem:[%s830 + $0x220] sm:$0xff]
    %v3782 = vld [vmem:[%s830 + $0x228] sm:$0xff]
    %v3783 = vld [vmem:[%s830 + $0x230] sm:$0xff]
    %v3784 = vld [vmem:[%s830 + $0x238] sm:$0xff]
    %v3785 = vld [vmem:[%s830 + $0x240] sm:$0xff]
    %v3786 = vld [vmem:[%s830 + $0x248] sm:$0xff]
    %v3787 = vld [vmem:[%s830 + $0x250] sm:$0xff]
    %v3788 = vld [vmem:[%s830 + $0x258] sm:$0xff]
    %v3789 = vld [vmem:[%s830 + $0x260] sm:$0xff]
    %v3790 = vld [vmem:[%s830 + $0x268] sm:$0xff]
    %v3791 = vld [vmem:[%s830 + $0x270] sm:$0xff]
    %v3792 = vld [vmem:[%s830 + $0x278] sm:$0xff]
    %v3793 = vld [vmem:[%s830 + $0x280] sm:$0xff]
    %v3794 = vld [vmem:[%s830 + $0x288] sm:$0xff]
    %v3795 = vld [vmem:[%s830 + $0x290] sm:$0xff]
    %v3796 = vld [vmem:[%s830 + $0x298] sm:$0xff]
    %v3797 = vld [vmem:[%s830 + $0x2a0] sm:$0xff]
    %v3798 = vld [vmem:[%s830 + $0x2a8] sm:$0xff]
    %v3799 = vld [vmem:[%s830 + $0x2b0] sm:$0xff]
    %v3800 = vld [vmem:[%s830 + $0x2b8] sm:$0xff]
    %v3801 = vld [vmem:[%s830 + $0x2c0] sm:$0xff]
    %v3802 = vld [vmem:[%s830 + $0x2c8] sm:$0xff]
    %v3803 = vld [vmem:[%s830 + $0x2d0] sm:$0xff]
    %v3804 = vld [vmem:[%s830 + $0x2d8] sm:$0xff]
    %v3805 = vld [vmem:[%s830 + $0x2e0] sm:$0xff]
    %v3806 = vld [vmem:[%s830 + $0x2e8] sm:$0xff]
    %v3807 = vld [vmem:[%s830 + $0x2f0] sm:$0xff]
    %v3808 = vld [vmem:[%s830 + $0x2f8] sm:$0xff]
    %v3809 = vld [vmem:[%s830 + $0x300] sm:$0xff]
    %v3810 = vld [vmem:[%s830 + $0x308] sm:$0xff]
    %v3811 = vld [vmem:[%s830 + $0x310] sm:$0xff]
    %v3812 = vld [vmem:[%s830 + $0x318] sm:$0xff]
    %v3813 = vld [vmem:[%s830 + $0x320] sm:$0xff]
    %v3814 = vld [vmem:[%s830 + $0x328] sm:$0xff]
    %v3815 = vld [vmem:[%s830 + $0x330] sm:$0xff]
    %v3816 = vld [vmem:[%s830 + $0x338] sm:$0xff]
    %v3817 = vld [vmem:[%s830 + $0x340] sm:$0xff]
    %v3818 = vld [vmem:[%s830 + $0x348] sm:$0xff]
    %v3819 = vld [vmem:[%s830 + $0x350] sm:$0xff]
    %v3820 = vld [vmem:[%s830 + $0x358] sm:$0xff]
    %v3821 = vld [vmem:[%s830 + $0x360] sm:$0xff]
    %v3822 = vld [vmem:[%s830 + $0x368] sm:$0xff]
    %v3823 = vld [vmem:[%s830 + $0x370] sm:$0xff]
    %v3824 = vld [vmem:[%s830 + $0x378] sm:$0xff]
    %v3825 = vld [vmem:[%s830 + $0x380] sm:$0xff]
    %v3826 = vld [vmem:[%s830 + $0x388] sm:$0xff]
    %v3827 = vld [vmem:[%s830 + $0x390] sm:$0xff]
    %v3828 = vld [vmem:[%s830 + $0x398] sm:$0xff]
    %v3829 = vld [vmem:[%s830 + $0x3a0] sm:$0xff]
    %v3830 = vld [vmem:[%s830 + $0x3a8] sm:$0xff]
    %v3831 = vld [vmem:[%s830 + $0x3b0] sm:$0xff]
    %v3832 = vld [vmem:[%s830 + $0x3b8] sm:$0xff]
    %v3833 = vld [vmem:[%s830 + $0x3c0] sm:$0xff]
    %v3834 = vld [vmem:[%s830 + $0x3c8] sm:$0xff]
    %v3835 = vld [vmem:[%s830 + $0x3d0] sm:$0xff]
    %v3836 = vld [vmem:[%s830 + $0x3d8] sm:$0xff]
    %v3837 = vld [vmem:[%s830 + $0x3e0] sm:$0xff]
    %v3838 = vld [vmem:[%s830 + $0x3e8] sm:$0xff]
    %v3839 = vld [vmem:[%s830 + $0x3f0] sm:$0xff]
    %v3840 = vld [vmem:[%s830 + $0x3f8] sm:$0xff]
    %v3842 = vunpack.c.l.b16 %v3712
    %v3843 = vunpack.c.h.b16 %v3712
    %v3844 = vpack.c.b16 %v3842, %v3842
    %v3845 = vpack.c.b16 %v3843, %v3843
    %v3976 = vunpack.c.l.b16 %v3713
    %v3977 = vunpack.c.h.b16 %v3713
    %v3978 = vunpack.c.l.b16 %v3714
    %v3979 = vunpack.c.h.b16 %v3714
    %v3980 = vunpack.c.l.b16 %v3715
    %v3981 = vunpack.c.h.b16 %v3715
    %v3982 = vunpack.c.l.b16 %v3716
    %v3983 = vunpack.c.h.b16 %v3716
    %v3984 = vunpack.c.l.b16 %v3717
    %v3985 = vunpack.c.h.b16 %v3717
    %v3986 = vunpack.c.l.b16 %v3718
    %v3987 = vunpack.c.h.b16 %v3718
    %v3988 = vunpack.c.l.b16 %v3719
    %v3989 = vunpack.c.h.b16 %v3719
    %v3990 = vunpack.c.l.b16 %v3720
    %v3991 = vunpack.c.h.b16 %v3720
    %v3992 = vunpack.c.l.b16 %v3721
    %v3993 = vunpack.c.h.b16 %v3721
    %v3994 = vunpack.c.l.b16 %v3722
    %v3995 = vunpack.c.h.b16 %v3722
    %v3996 = vunpack.c.l.b16 %v3723
    %v3997 = vunpack.c.h.b16 %v3723
    %v3998 = vunpack.c.l.b16 %v3724
    %v3999 = vunpack.c.h.b16 %v3724
    %v4000 = vunpack.c.l.b16 %v3725
    %v4001 = vunpack.c.h.b16 %v3725
    %v4002 = vunpack.c.l.b16 %v3726
    %v4003 = vunpack.c.h.b16 %v3726
    %v4004 = vunpack.c.l.b16 %v3727
    %v4005 = vunpack.c.h.b16 %v3727
    %v4006 = vunpack.c.l.b16 %v3728
    %v4007 = vunpack.c.h.b16 %v3728
    %v4008 = vunpack.c.l.b16 %v3729
    %v4009 = vunpack.c.h.b16 %v3729
    %v4010 = vunpack.c.l.b16 %v3730
    %v4011 = vunpack.c.h.b16 %v3730
    %v4012 = vunpack.c.l.b16 %v3731
    %v4013 = vunpack.c.h.b16 %v3731
    %v4014 = vunpack.c.l.b16 %v3732
    %v4015 = vunpack.c.h.b16 %v3732
    %v4016 = vunpack.c.l.b16 %v3733
    %v4017 = vunpack.c.h.b16 %v3733
    %v4018 = vunpack.c.l.b16 %v3734
    %v4019 = vunpack.c.h.b16 %v3734
    %v4020 = vunpack.c.l.b16 %v3735
    %v4021 = vunpack.c.h.b16 %v3735
    %v4022 = vunpack.c.l.b16 %v3736
    %v4023 = vunpack.c.h.b16 %v3736
    %v4024 = vunpack.c.l.b16 %v3737
    %v4025 = vunpack.c.h.b16 %v3737
    %v4026 = vunpack.c.l.b16 %v3738
    %v4027 = vunpack.c.h.b16 %v3738
    %v4028 = vunpack.c.l.b16 %v3739
    %v4029 = vunpack.c.h.b16 %v3739
    %v4030 = vunpack.c.l.b16 %v3740
    %v4031 = vunpack.c.h.b16 %v3740
    %v4032 = vunpack.c.l.b16 %v3741
    %v4033 = vunpack.c.h.b16 %v3741
    %v4034 = vunpack.c.l.b16 %v3742
    %v4035 = vunpack.c.h.b16 %v3742
    %v4036 = vunpack.c.l.b16 %v3743
    %v4037 = vunpack.c.h.b16 %v3743
    %v4038 = vunpack.c.l.b16 %v3744
    %v4039 = vunpack.c.h.b16 %v3744
    %v4040 = vunpack.c.l.b16 %v3745
    %v4041 = vunpack.c.h.b16 %v3745
    %v4042 = vunpack.c.l.b16 %v3746
    %v4043 = vunpack.c.h.b16 %v3746
    %v4044 = vunpack.c.l.b16 %v3747
    %v4045 = vunpack.c.h.b16 %v3747
    %v4046 = vunpack.c.l.b16 %v3748
    %v4047 = vunpack.c.h.b16 %v3748
    %v4048 = vunpack.c.l.b16 %v3749
    %v4049 = vunpack.c.h.b16 %v3749
    %v4050 = vunpack.c.l.b16 %v3750
    %v4051 = vunpack.c.h.b16 %v3750
    %v4052 = vunpack.c.l.b16 %v3751
    %v4053 = vunpack.c.h.b16 %v3751
    %v4054 = vunpack.c.l.b16 %v3752
    %v4055 = vunpack.c.h.b16 %v3752
    %v4056 = vunpack.c.l.b16 %v3753
    %v4057 = vunpack.c.h.b16 %v3753
    %v4058 = vunpack.c.l.b16 %v3754
    %v4059 = vunpack.c.h.b16 %v3754
    %v4060 = vunpack.c.l.b16 %v3755
    %v4061 = vunpack.c.h.b16 %v3755
    %v4062 = vunpack.c.l.b16 %v3756
    %v4063 = vunpack.c.h.b16 %v3756
    %v4064 = vunpack.c.l.b16 %v3757
    %v4065 = vunpack.c.h.b16 %v3757
    %v4066 = vunpack.c.l.b16 %v3758
    %v4067 = vunpack.c.h.b16 %v3758
    %v4068 = vunpack.c.l.b16 %v3759
    %v4069 = vunpack.c.h.b16 %v3759
    %v4070 = vunpack.c.l.b16 %v3760
    %v4071 = vunpack.c.h.b16 %v3760
    %v4072 = vunpack.c.l.b16 %v3761
    %v4073 = vunpack.c.h.b16 %v3761
    %v4074 = vunpack.c.l.b16 %v3762
    %v4075 = vunpack.c.h.b16 %v3762
    %v4076 = vunpack.c.l.b16 %v3763
    %v4077 = vunpack.c.h.b16 %v3763
    %v4078 = vunpack.c.l.b16 %v3764
    %v4079 = vunpack.c.h.b16 %v3764
    %v4080 = vunpack.c.l.b16 %v3765
    %v4081 = vunpack.c.h.b16 %v3765
    %v4082 = vunpack.c.l.b16 %v3766
    %v4083 = vunpack.c.h.b16 %v3766
    %v4084 = vunpack.c.l.b16 %v3767
    %v4085 = vunpack.c.h.b16 %v3767
    %v4086 = vunpack.c.l.b16 %v3768
    %v4087 = vunpack.c.h.b16 %v3768
    %v4088 = vunpack.c.l.b16 %v3769
    %v4089 = vunpack.c.h.b16 %v3769
    %v4090 = vunpack.c.l.b16 %v3770
    %v4091 = vunpack.c.h.b16 %v3770
    %v4092 = vunpack.c.l.b16 %v3771
    %v4093 = vunpack.c.h.b16 %v3771
    %v4094 = vunpack.c.l.b16 %v3772
    %v4095 = vunpack.c.h.b16 %v3772
    %v4096 = vunpack.c.l.b16 %v3773
    %v4097 = vunpack.c.h.b16 %v3773
    %v4098 = vunpack.c.l.b16 %v3774
    %v4099 = vunpack.c.h.b16 %v3774
    %v4100 = vunpack.c.l.b16 %v3775
    %v4101 = vunpack.c.h.b16 %v3775
    %v4102 = vunpack.c.l.b16 %v3776
    %v4103 = vunpack.c.h.b16 %v3776
    %v4104 = vunpack.c.l.b16 %v3777
    %v4105 = vunpack.c.h.b16 %v3777
    %v4106 = vunpack.c.l.b16 %v3778
    %v4107 = vunpack.c.h.b16 %v3778
    %v4108 = vunpack.c.l.b16 %v3779
    %v4109 = vunpack.c.h.b16 %v3779
    %v4110 = vunpack.c.l.b16 %v3780
    %v4111 = vunpack.c.h.b16 %v3780
    %v4112 = vunpack.c.l.b16 %v3781
    %v4113 = vunpack.c.h.b16 %v3781
    %v4114 = vunpack.c.l.b16 %v3782
    %v4115 = vunpack.c.h.b16 %v3782
    %v4116 = vunpack.c.l.b16 %v3783
    %v4117 = vunpack.c.h.b16 %v3783
    %v4118 = vunpack.c.l.b16 %v3784
    %v4119 = vunpack.c.h.b16 %v3784
    %v4120 = vunpack.c.l.b16 %v3785
    %v4121 = vunpack.c.h.b16 %v3785
    %v4122 = vunpack.c.l.b16 %v3786
    %v4123 = vunpack.c.h.b16 %v3786
    %v4124 = vunpack.c.l.b16 %v3787
    %v4125 = vunpack.c.h.b16 %v3787
    %v4126 = vunpack.c.l.b16 %v3788
    %v4127 = vunpack.c.h.b16 %v3788
    %v4128 = vunpack.c.l.b16 %v3789
    %v4129 = vunpack.c.h.b16 %v3789
    %v4130 = vunpack.c.l.b16 %v3790
    %v4131 = vunpack.c.h.b16 %v3790
    %v4132 = vunpack.c.l.b16 %v3791
    %v4133 = vunpack.c.h.b16 %v3791
    %v4134 = vunpack.c.l.b16 %v3792
    %v4135 = vunpack.c.h.b16 %v3792
    %v4136 = vunpack.c.l.b16 %v3793
    %v4137 = vunpack.c.h.b16 %v3793
    %v4138 = vunpack.c.l.b16 %v3794
    %v4139 = vunpack.c.h.b16 %v3794
    %v4140 = vunpack.c.l.b16 %v3795
    %v4141 = vunpack.c.h.b16 %v3795
    %v4142 = vunpack.c.l.b16 %v3796
    %v4143 = vunpack.c.h.b16 %v3796
    %v4144 = vunpack.c.l.b16 %v3797
    %v4145 = vunpack.c.h.b16 %v3797
    %v4146 = vunpack.c.l.b16 %v3798
    %v4147 = vunpack.c.h.b16 %v3798
    %v4148 = vunpack.c.l.b16 %v3799
    %v4149 = vunpack.c.h.b16 %v3799
    %v4150 = vunpack.c.l.b16 %v3800
    %v4151 = vunpack.c.h.b16 %v3800
    %v4152 = vunpack.c.l.b16 %v3801
    %v4153 = vunpack.c.h.b16 %v3801
    %v4154 = vunpack.c.l.b16 %v3802
    %v4155 = vunpack.c.h.b16 %v3802
    %v4156 = vunpack.c.l.b16 %v3803
    %v4157 = vunpack.c.h.b16 %v3803
    %v4158 = vunpack.c.l.b16 %v3804
    %v4159 = vunpack.c.h.b16 %v3804
    %v4160 = vunpack.c.l.b16 %v3805
    %v4161 = vunpack.c.h.b16 %v3805
    %v4162 = vunpack.c.l.b16 %v3806
    %v4163 = vunpack.c.h.b16 %v3806
    %v4164 = vunpack.c.l.b16 %v3807
    %v4165 = vunpack.c.h.b16 %v3807
    %v4166 = vunpack.c.l.b16 %v3808
    %v4167 = vunpack.c.h.b16 %v3808
    %v4168 = vunpack.c.l.b16 %v3809
    %v4169 = vunpack.c.h.b16 %v3809
    %v4170 = vunpack.c.l.b16 %v3810
    %v4171 = vunpack.c.h.b16 %v3810
    %v4172 = vunpack.c.l.b16 %v3811
    %v4173 = vunpack.c.h.b16 %v3811
    %v4174 = vunpack.c.l.b16 %v3812
    %v4175 = vunpack.c.h.b16 %v3812
    %v4176 = vunpack.c.l.b16 %v3813
    %v4177 = vunpack.c.h.b16 %v3813
    %v4178 = vunpack.c.l.b16 %v3814
    %v4179 = vunpack.c.h.b16 %v3814
    %v4180 = vunpack.c.l.b16 %v3815
    %v4181 = vunpack.c.h.b16 %v3815
    %v4182 = vunpack.c.l.b16 %v3816
    %v4183 = vunpack.c.h.b16 %v3816
    %v4184 = vunpack.c.l.b16 %v3817
    %v4185 = vunpack.c.h.b16 %v3817
    %v4186 = vunpack.c.l.b16 %v3818
    %v4187 = vunpack.c.h.b16 %v3818
    %v4188 = vunpack.c.l.b16 %v3819
    %v4189 = vunpack.c.h.b16 %v3819
    %v4190 = vunpack.c.l.b16 %v3820
    %v4191 = vunpack.c.h.b16 %v3820
    %v4192 = vunpack.c.l.b16 %v3821
    %v4193 = vunpack.c.h.b16 %v3821
    %v4194 = vunpack.c.l.b16 %v3822
    %v4195 = vunpack.c.h.b16 %v3822
    %v4196 = vunpack.c.l.b16 %v3823
    %v4197 = vunpack.c.h.b16 %v3823
    %v4198 = vunpack.c.l.b16 %v3824
    %v4199 = vunpack.c.h.b16 %v3824
    %v4200 = vunpack.c.l.b16 %v3825
    %v4201 = vunpack.c.h.b16 %v3825
    %v4202 = vunpack.c.l.b16 %v3826
    %v4203 = vunpack.c.h.b16 %v3826
    %v4204 = vunpack.c.l.b16 %v3827
    %v4205 = vunpack.c.h.b16 %v3827
    %v4206 = vunpack.c.l.b16 %v3828
    %v4207 = vunpack.c.h.b16 %v3828
    %v4208 = vunpack.c.l.b16 %v3829
    %v4209 = vunpack.c.h.b16 %v3829
    %v4210 = vunpack.c.l.b16 %v3830
    %v4211 = vunpack.c.h.b16 %v3830
    %v4212 = vunpack.c.l.b16 %v3831
    %v4213 = vunpack.c.h.b16 %v3831
    %v4214 = vunpack.c.l.b16 %v3832
    %v4215 = vunpack.c.h.b16 %v3832
    %v4216 = vunpack.c.l.b16 %v3833
    %v4217 = vunpack.c.h.b16 %v3833
    %v4218 = vunpack.c.l.b16 %v3834
    %v4219 = vunpack.c.h.b16 %v3834
    %v4220 = vunpack.c.l.b16 %v3835
    %v4221 = vunpack.c.h.b16 %v3835
    %v4222 = vunpack.c.l.b16 %v3836
    %v4223 = vunpack.c.h.b16 %v3836
    %v4224 = vunpack.c.l.b16 %v3837
    %v4225 = vunpack.c.h.b16 %v3837
    %v4226 = vunpack.c.l.b16 %v3838
    %v4227 = vunpack.c.h.b16 %v3838
    %v4228 = vunpack.c.l.b16 %v3839
    %v4229 = vunpack.c.h.b16 %v3839
    %v4230 = vunpack.c.l.b16 %v3840
    %v4231 = vunpack.c.h.b16 %v3840
    %v4232 = vpack.c.b16 %v3984, %v3976
    %v4233 = vpack.c.b16 %v3985, %v3977
    %v4234 = vpack.c.b16 %v3986, %v3978
    %v4235 = vpack.c.b16 %v3987, %v3979
    %v4236 = vpack.c.b16 %v3988, %v3980
    %v4237 = vpack.c.b16 %v3989, %v3981
    %v4238 = vpack.c.b16 %v3990, %v3982
    %v4239 = vpack.c.b16 %v3991, %v3983
    %v4240 = vpack.c.b16 %v4000, %v3992
    %v4241 = vpack.c.b16 %v4001, %v3993
    %v4242 = vpack.c.b16 %v4002, %v3994
    %v4243 = vpack.c.b16 %v4003, %v3995
    %v4244 = vpack.c.b16 %v4004, %v3996
    %v4245 = vpack.c.b16 %v4005, %v3997
    %v4246 = vpack.c.b16 %v4006, %v3998
    %v4247 = vpack.c.b16 %v4007, %v3999
    %v4248 = vpack.c.b16 %v4016, %v4008
    %v4249 = vpack.c.b16 %v4017, %v4009
    %v4250 = vpack.c.b16 %v4018, %v4010
    %v4251 = vpack.c.b16 %v4019, %v4011
    %v4252 = vpack.c.b16 %v4020, %v4012
    %v4253 = vpack.c.b16 %v4021, %v4013
    %v4254 = vpack.c.b16 %v4022, %v4014
    %v4255 = vpack.c.b16 %v4023, %v4015
    %v4256 = vpack.c.b16 %v4032, %v4024
    %v4257 = vpack.c.b16 %v4033, %v4025
    %v4258 = vpack.c.b16 %v4034, %v4026
    %v4259 = vpack.c.b16 %v4035, %v4027
    %v4260 = vpack.c.b16 %v4036, %v4028
    %v4261 = vpack.c.b16 %v4037, %v4029
    %v4262 = vpack.c.b16 %v4038, %v4030
    %v4263 = vpack.c.b16 %v4039, %v4031
    %v4264 = vpack.c.b16 %v4048, %v4040
    %v4265 = vpack.c.b16 %v4049, %v4041
    %v4266 = vpack.c.b16 %v4050, %v4042
    %v4267 = vpack.c.b16 %v4051, %v4043
    %v4268 = vpack.c.b16 %v4052, %v4044
    %v4269 = vpack.c.b16 %v4053, %v4045
    %v4270 = vpack.c.b16 %v4054, %v4046
    %v4271 = vpack.c.b16 %v4055, %v4047
    %v4272 = vpack.c.b16 %v4064, %v4056
    %v4273 = vpack.c.b16 %v4065, %v4057
    %v4274 = vpack.c.b16 %v4066, %v4058
    %v4275 = vpack.c.b16 %v4067, %v4059
    %v4276 = vpack.c.b16 %v4068, %v4060
    %v4277 = vpack.c.b16 %v4069, %v4061
    %v4278 = vpack.c.b16 %v4070, %v4062
    %v4279 = vpack.c.b16 %v4071, %v4063
    %v4280 = vpack.c.b16 %v4080, %v4072
    %v4281 = vpack.c.b16 %v4081, %v4073
    %v4282 = vpack.c.b16 %v4082, %v4074
    %v4283 = vpack.c.b16 %v4083, %v4075
    %v4284 = vpack.c.b16 %v4084, %v4076
    %v4285 = vpack.c.b16 %v4085, %v4077
    %v4286 = vpack.c.b16 %v4086, %v4078
    %v4287 = vpack.c.b16 %v4087, %v4079
    %v4288 = vpack.c.b16 %v4096, %v4088
    %v4289 = vpack.c.b16 %v4097, %v4089
    %v4290 = vpack.c.b16 %v4098, %v4090
    %v4291 = vpack.c.b16 %v4099, %v4091
    %v4292 = vpack.c.b16 %v4100, %v4092
    %v4293 = vpack.c.b16 %v4101, %v4093
    %v4294 = vpack.c.b16 %v4102, %v4094
    %v4295 = vpack.c.b16 %v4103, %v4095
    %v4296 = vpack.c.b16 %v4112, %v4104
    %v4297 = vpack.c.b16 %v4113, %v4105
    %v4298 = vpack.c.b16 %v4114, %v4106
    %v4299 = vpack.c.b16 %v4115, %v4107
    %v4300 = vpack.c.b16 %v4116, %v4108
    %v4301 = vpack.c.b16 %v4117, %v4109
    %v4302 = vpack.c.b16 %v4118, %v4110
    %v4303 = vpack.c.b16 %v4119, %v4111
    %v4304 = vpack.c.b16 %v4128, %v4120
    %v4305 = vpack.c.b16 %v4129, %v4121
    %v4306 = vpack.c.b16 %v4130, %v4122
    %v4307 = vpack.c.b16 %v4131, %v4123
    %v4308 = vpack.c.b16 %v4132, %v4124
    %v4309 = vpack.c.b16 %v4133, %v4125
    %v4310 = vpack.c.b16 %v4134, %v4126
    %v4311 = vpack.c.b16 %v4135, %v4127
    %v4312 = vpack.c.b16 %v4144, %v4136
    %v4313 = vpack.c.b16 %v4145, %v4137
    %v4314 = vpack.c.b16 %v4146, %v4138
    %v4315 = vpack.c.b16 %v4147, %v4139
    %v4316 = vpack.c.b16 %v4148, %v4140
    %v4317 = vpack.c.b16 %v4149, %v4141
    %v4318 = vpack.c.b16 %v4150, %v4142
    %v4319 = vpack.c.b16 %v4151, %v4143
    %v4320 = vpack.c.b16 %v4160, %v4152
    %v4321 = vpack.c.b16 %v4161, %v4153
    %v4322 = vpack.c.b16 %v4162, %v4154
    %v4323 = vpack.c.b16 %v4163, %v4155
    %v4324 = vpack.c.b16 %v4164, %v4156
    %v4325 = vpack.c.b16 %v4165, %v4157
    %v4326 = vpack.c.b16 %v4166, %v4158
    %v4327 = vpack.c.b16 %v4167, %v4159
    %v4328 = vpack.c.b16 %v4176, %v4168
    %v4329 = vpack.c.b16 %v4177, %v4169
    %v4330 = vpack.c.b16 %v4178, %v4170
    %v4331 = vpack.c.b16 %v4179, %v4171
    %v4332 = vpack.c.b16 %v4180, %v4172
    %v4333 = vpack.c.b16 %v4181, %v4173
    %v4334 = vpack.c.b16 %v4182, %v4174
    %v4335 = vpack.c.b16 %v4183, %v4175
    %v4336 = vpack.c.b16 %v4192, %v4184
    %v4337 = vpack.c.b16 %v4193, %v4185
    %v4338 = vpack.c.b16 %v4194, %v4186
    %v4339 = vpack.c.b16 %v4195, %v4187
    %v4340 = vpack.c.b16 %v4196, %v4188
    %v4341 = vpack.c.b16 %v4197, %v4189
    %v4342 = vpack.c.b16 %v4198, %v4190
    %v4343 = vpack.c.b16 %v4199, %v4191
    %v4344 = vpack.c.b16 %v4208, %v4200
    %v4345 = vpack.c.b16 %v4209, %v4201
    %v4346 = vpack.c.b16 %v4210, %v4202
    %v4347 = vpack.c.b16 %v4211, %v4203
    %v4348 = vpack.c.b16 %v4212, %v4204
    %v4349 = vpack.c.b16 %v4213, %v4205
    %v4350 = vpack.c.b16 %v4214, %v4206
    %v4351 = vpack.c.b16 %v4215, %v4207
    %v4352 = vpack.c.b16 %v4224, %v4216
    %v4353 = vpack.c.b16 %v4225, %v4217
    %v4354 = vpack.c.b16 %v4226, %v4218
    %v4355 = vpack.c.b16 %v4227, %v4219
    %v4356 = vpack.c.b16 %v4228, %v4220
    %v4357 = vpack.c.b16 %v4229, %v4221
    %v4358 = vpack.c.b16 %v4230, %v4222
    %v4359 = vpack.c.b16 %v4231, %v4223
    %4488 = vmatprep.subr.bf16.mxu0 %v4289
    %4489 = vmatpush1.bf16.msra.mxu0 %v4288
    %4490 = vmatprep.subr.bf16.mxu0 %v4281
    %4491 = vmatpush1.bf16.msra.mxu0 %v4280
    %4492 = vmatprep.subr.bf16.mxu0 %v4273
    %4493 = vmatpush1.bf16.msra.mxu0 %v4272
    %4494 = vmatprep.subr.bf16.mxu0 %v4265
    %4495 = vmatpush1.bf16.msra.mxu0 %v4264
    %4496 = vmatprep.subr.bf16.mxu0 %v4257
    %4497 = vmatpush1.bf16.msra.mxu0 %v4256
    %4498 = vmatprep.subr.bf16.mxu0 %v4249
    %4499 = vmatpush1.bf16.msra.mxu0 %v4248
    %4500 = vmatprep.subr.bf16.mxu0 %v4241
    %4501 = vmatpush1.bf16.msra.mxu0 %v4240
    %4502 = vmatprep.subr.bf16.mxu0 %v4233
    %4503 = vmatpush1.bf16.msra.mxu0 %v4232
    %4504 = vmatprep.subr.bf16.mxu0 %v4353
    %4505 = vmatpush2.bf16.msra.mxu0 %v4352
    %4506 = vmatprep.subr.bf16.mxu0 %v4345
    %4507 = vmatpush2.bf16.msra.mxu0 %v4344
    %4508 = vmatprep.subr.bf16.mxu0 %v4337
    %4509 = vmatpush2.bf16.msra.mxu0 %v4336
    %4510 = vmatprep.subr.bf16.mxu0 %v4329
    %4511 = vmatpush2.bf16.msra.mxu0 %v4328
    %4512 = vmatprep.subr.bf16.mxu0 %v4321
    %4513 = vmatpush2.bf16.msra.mxu0 %v4320
    %4514 = vmatprep.subr.bf16.mxu0 %v4313
    %4515 = vmatpush2.bf16.msra.mxu0 %v4312
    %4516 = vmatprep.subr.bf16.mxu0 %v4305
    %4517 = vmatpush2.bf16.msra.mxu0 %v4304
    %4518 = vmatprep.subr.bf16.mxu0 %v4297
    %4519 = vmatpush2.bf16.msra.mxu0 %v4296
    %4520 = vmatprep.mubr.bf16.mxu0 %v3845
    %4521 = vmatmul.mubr.bf16.gmra.mxu0 %v3844
    %v4522 = vpop.f32.mrf.mxu0
    %v4523 = vadd.f32 0.0, %v4522
    %v4524 = vpop.f32.mrf.mxu0
    %v4525 = vadd.f32 0.0, %v4524
    %v4526 = vpop.f32.mrf.mxu0
    %v4527 = vpop.f32.mrf.mxu0
    %4528 = vdwg.mxu0
    %4529 = vmatprep.subr.bf16.mxu0 %v4291
    %4530 = vmatpush1.bf16.msra.mxu0 %v4290
    %4531 = vmatprep.subr.bf16.mxu0 %v4283
    %4532 = vmatpush1.bf16.msra.mxu0 %v4282
    %4533 = vmatprep.subr.bf16.mxu0 %v4275
    %4534 = vmatpush1.bf16.msra.mxu0 %v4274
    %4535 = vmatprep.subr.bf16.mxu0 %v4267
    %4536 = vmatpush1.bf16.msra.mxu0 %v4266
    %4537 = vmatprep.subr.bf16.mxu0 %v4259
    %4538 = vmatpush1.bf16.msra.mxu0 %v4258
    %4539 = vmatprep.subr.bf16.mxu0 %v4251
    %4540 = vmatpush1.bf16.msra.mxu0 %v4250
    %4541 = vmatprep.subr.bf16.mxu0 %v4243
    %4542 = vmatpush1.bf16.msra.mxu0 %v4242
    %4543 = vmatprep.subr.bf16.mxu0 %v4235
    %4544 = vmatpush1.bf16.msra.mxu0 %v4234
    %4545 = vmatprep.subr.bf16.mxu0 %v4355
    %4546 = vmatpush2.bf16.msra.mxu0 %v4354
    %4547 = vmatprep.subr.bf16.mxu0 %v4347
    %4548 = vmatpush2.bf16.msra.mxu0 %v4346
    %4549 = vmatprep.subr.bf16.mxu0 %v4339
    %4550 = vmatpush2.bf16.msra.mxu0 %v4338
    %4551 = vmatprep.subr.bf16.mxu0 %v4331
    %4552 = vmatpush2.bf16.msra.mxu0 %v4330
    %4553 = vmatprep.subr.bf16.mxu0 %v4323
    %4554 = vmatpush2.bf16.msra.mxu0 %v4322
    %4555 = vmatprep.subr.bf16.mxu0 %v4315
    %4556 = vmatpush2.bf16.msra.mxu0 %v4314
    %4557 = vmatprep.subr.bf16.mxu0 %v4307
    %4558 = vmatpush2.bf16.msra.mxu0 %v4306
    %4559 = vmatprep.subr.bf16.mxu0 %v4299
    %4560 = vmatpush2.bf16.msra.mxu0 %v4298
    %4561 = vmatprep.mubr.bf16.mxu0 %v3845
    %4562 = vmatmul.mubr.bf16.gmra.mxu0 %v3844
    %v4563 = vpop.f32.mrf.mxu0
    %v4564 = vadd.f32 0.0, %v4563
    %v4565 = vpop.f32.mrf.mxu0
    %v4566 = vadd.f32 0.0, %v4565
    %v4567 = vpop.f32.mrf.mxu0
    %v4568 = vpop.f32.mrf.mxu0
    %4569 = vdwg.mxu0
    %4570 = vmatprep.subr.bf16.mxu0 %v4293
    %4571 = vmatpush1.bf16.msra.mxu0 %v4292
    %4572 = vmatprep.subr.bf16.mxu0 %v4285
    %4573 = vmatpush1.bf16.msra.mxu0 %v4284
    %4574 = vmatprep.subr.bf16.mxu0 %v4277
    %4575 = vmatpush1.bf16.msra.mxu0 %v4276
    %4576 = vmatprep.subr.bf16.mxu0 %v4269
    %4577 = vmatpush1.bf16.msra.mxu0 %v4268
    %4578 = vmatprep.subr.bf16.mxu0 %v4261
    %4579 = vmatpush1.bf16.msra.mxu0 %v4260
    %4580 = vmatprep.subr.bf16.mxu0 %v4253
    %4581 = vmatpush1.bf16.msra.mxu0 %v4252
    %4582 = vmatprep.subr.bf16.mxu0 %v4245
    %4583 = vmatpush1.bf16.msra.mxu0 %v4244
    %4584 = vmatprep.subr.bf16.mxu0 %v4237
    %4585 = vmatpush1.bf16.msra.mxu0 %v4236
    %4586 = vmatprep.subr.bf16.mxu0 %v4357
    %4587 = vmatpush2.bf16.msra.mxu0 %v4356
    %4588 = vmatprep.subr.bf16.mxu0 %v4349
    %4589 = vmatpush2.bf16.msra.mxu0 %v4348
    %4590 = vmatprep.subr.bf16.mxu0 %v4341
    %4591 = vmatpush2.bf16.msra.mxu0 %v4340
    %4592 = vmatprep.subr.bf16.mxu0 %v4333
    %4593 = vmatpush2.bf16.msra.mxu0 %v4332
    %4594 = vmatprep.subr.bf16.mxu0 %v4325
    %4595 = vmatpush2.bf16.msra.mxu0 %v4324
    %4596 = vmatprep.subr.bf16.mxu0 %v4317
    %4597 = vmatpush2.bf16.msra.mxu0 %v4316
    %4598 = vmatprep.subr.bf16.mxu0 %v4309
    %4599 = vmatpush2.bf16.msra.mxu0 %v4308
    %4600 = vmatprep.subr.bf16.mxu0 %v4301
    %4601 = vmatpush2.bf16.msra.mxu0 %v4300
    %4602 = vmatprep.mubr.bf16.mxu0 %v3845
    %4603 = vmatmul.mubr.bf16.gmra.mxu0 %v3844
    %v4604 = vpop.f32.mrf.mxu0
    %v4605 = vadd.f32 0.0, %v4604
    %v4606 = vpop.f32.mrf.mxu0
    %v4607 = vadd.f32 0.0, %v4606
    %v4608 = vpop.f32.mrf.mxu0
    %v4609 = vpop.f32.mrf.mxu0
    %4610 = vdwg.mxu0
    %4611 = vmatprep.subr.bf16.mxu0 %v4295
    %4612 = vmatpush1.bf16.msra.mxu0 %v4294
    %4613 = vmatprep.subr.bf16.mxu0 %v4287
    %4614 = vmatpush1.bf16.msra.mxu0 %v4286
    %4615 = vmatprep.subr.bf16.mxu0 %v4279
    %4616 = vmatpush1.bf16.msra.mxu0 %v4278
    %4617 = vmatprep.subr.bf16.mxu0 %v4271
    %4618 = vmatpush1.bf16.msra.mxu0 %v4270
    %4619 = vmatprep.subr.bf16.mxu0 %v4263
    %4620 = vmatpush1.bf16.msra.mxu0 %v4262
    %4621 = vmatprep.subr.bf16.mxu0 %v4255
    %4622 = vmatpush1.bf16.msra.mxu0 %v4254
    %4623 = vmatprep.subr.bf16.mxu0 %v4247
    %4624 = vmatpush1.bf16.msra.mxu0 %v4246
    %4625 = vmatprep.subr.bf16.mxu0 %v4239
    %4626 = vmatpush1.bf16.msra.mxu0 %v4238
    %4627 = vmatprep.subr.bf16.mxu0 %v4359
    %4628 = vmatpush2.bf16.msra.mxu0 %v4358
    %4629 = vmatprep.subr.bf16.mxu0 %v4351
    %4630 = vmatpush2.bf16.msra.mxu0 %v4350
    %4631 = vmatprep.subr.bf16.mxu0 %v4343
    %4632 = vmatpush2.bf16.msra.mxu0 %v4342
    %4633 = vmatprep.subr.bf16.mxu0 %v4335
    %4634 = vmatpush2.bf16.msra.mxu0 %v4334
    %4635 = vmatprep.subr.bf16.mxu0 %v4327
    %4636 = vmatpush2.bf16.msra.mxu0 %v4326
    %4637 = vmatprep.subr.bf16.mxu0 %v4319
    %4638 = vmatpush2.bf16.msra.mxu0 %v4318
    %4639 = vmatprep.subr.bf16.mxu0 %v4311
    %4640 = vmatpush2.bf16.msra.mxu0 %v4310
    %4641 = vmatprep.subr.bf16.mxu0 %v4303
    %4642 = vmatpush2.bf16.msra.mxu0 %v4302
    %4643 = vmatprep.mubr.bf16.mxu0 %v3845
    %4644 = vmatmul.mubr.bf16.gmra.mxu0 %v3844
    %v4645 = vpop.f32.mrf.mxu0
    %v4646 = vadd.f32 0.0, %v4645
    %v4647 = vpop.f32.mrf.mxu0
    %v4648 = vadd.f32 0.0, %v4647
    %v4649 = vpop.f32.mrf.mxu0
    %v4650 = vpop.f32.mrf.mxu0
    %4651 = vdwg.mxu0
    %v4652 = vadd.f32 %v3691, %v4523
    %v4653 = vadd.f32 %v3692, %v4525
    %v4654 = vadd.f32 %v3693, %v4564
    %v4655 = vadd.f32 %v3694, %v4566
    %v4656 = vadd.f32 %v3695, %v4605
    %v4657 = vadd.f32 %v3696, %v4607
    %v4658 = vadd.f32 %v3697, %v4646
    %v4659 = vadd.f32 %v3698, %v4648
    %v4660 = vld [vmem:[#allocation14] sm:$0xff]
    %v4662 = vlaneseq
    %v4663 = vshrl.u32 %v4662, 7
    %v4664 = vsub.s32 0, %v4663
    %v4665 = vrot.slane %v4660, %v4664
    %v4666 = vlaneseq
    %v4667 = vshrl.u32 %v4666, 7
    %v4668 = vsub.s32 1, %v4667
    %v4669 = vrot.slane %v4660, %v4668
    %v4670 = vlaneseq
    %v4671 = vshrl.u32 %v4670, 7
    %v4672 = vsub.s32 2, %v4671
    %v4673 = vrot.slane %v4660, %v4672
    %v4674 = vlaneseq
    %v4675 = vshrl.u32 %v4674, 7
    %v4676 = vsub.s32 3, %v4675
    %v4677 = vrot.slane %v4660, %v4676
    %v4678 = vlaneseq
    %v4679 = vshrl.u32 %v4678, 7
    %v4680 = vsub.s32 4, %v4679
    %v4681 = vrot.slane %v4660, %v4680
    %v4682 = vlaneseq
    %v4683 = vshrl.u32 %v4682, 7
    %v4684 = vsub.s32 5, %v4683
    %v4685 = vrot.slane %v4660, %v4684
    %v4686 = vlaneseq
    %v4687 = vshrl.u32 %v4686, 7
    %v4688 = vsub.s32 6, %v4687
    %v4689 = vrot.slane %v4660, %v4688
    %v4690 = vlaneseq
    %v4691 = vshrl.u32 %v4690, 7
    %v4692 = vsub.s32 7, %v4691
    %v4693 = vrot.slane %v4660, %v4692
    %v4702 = vadd.f32 %v4652, %v4665
    %v4703 = vadd.f32 %v4653, %v4669
    %v4704 = vadd.f32 %v4654, %v4673
    %v4705 = vadd.f32 %v4655, %v4677
    %v4706 = vadd.f32 %v4656, %v4681
    %v4707 = vadd.f32 %v4657, %v4685
    %v4708 = vadd.f32 %v4658, %v4689
    %v4709 = vadd.f32 %v4659, %v4693
    %v4710 = vmax.f32 %v4702, 0.0
    %v4711 = vmax.f32 %v4703, 0.0
    %v4712 = vmax.f32 %v4704, 0.0
    %v4713 = vmax.f32 %v4705, 0.0
    %v4714 = vmax.f32 %v4706, 0.0
    %v4715 = vmax.f32 %v4707, 0.0
    %v4716 = vmax.f32 %v4708, 0.0
    %v4717 = vmax.f32 %v4709, 0.0
    %v4718 = vpack.c.bf16 %v4710, %v4710
    %v4719 = vpack.c.bf16 %v4711, %v4711
    %v4720 = vpack.c.bf16 %v4712, %v4712
    %v4721 = vpack.c.bf16 %v4713, %v4713
    %v4722 = vpack.c.bf16 %v4714, %v4714
    %v4723 = vpack.c.bf16 %v4715, %v4715
    %v4724 = vpack.c.bf16 %v4716, %v4716
    %v4725 = vpack.c.bf16 %v4717, %v4717
    %s4726 = sshll.u32 %s826, 4
    %4727 = dma.done [#allocation4], %s4726
    %s4728 = scalar_lea.hbm %s12, 16384
    // Predicated region
    $region98: #{tpu_custom_call.1} parent=1 // pred_check
      _
    $region99: #{tpu_custom_call.1} parent=1 // pred_check_branch
      %4730 = sbr.rel target = $region101
    $region100: #{tpu_custom_call.1} parent=1 // pred_region
      %4731 = sst [smem:[#allocation22]] [#allocation33]
      %4732 = sst [smem:[#allocation23]] [#allocation32]
    $region101: #{tpu_custom_call.1} parent=1 // pred_fallthru
      _
    %4734 = shalt.err (0)
    %s4736 = sshll.u32 %s830, 4
    %s4737 = int_to_ptr.vmem [resolvable:$true] %s4736
    %4739 = dma.hbm_to_vmem [thread:$0]  %s4728, 16384, %s4737, %s831
    %v4740 = vld [vmem:[#allocation3] sm:$0xff]
    %v4741 = vld [vmem:[#allocation3 + $0x8] sm:$0xff]
    %v4742 = vld [vmem:[#allocation3 + $0x10] sm:$0xff]
    %v4743 = vld [vmem:[#allocation3 + $0x18] sm:$0xff]
    %v4744 = vld [vmem:[#allocation3 + $0x20] sm:$0xff]
    %v4745 = vld [vmem:[#allocation3 + $0x28] sm:$0xff]
    %v4746 = vld [vmem:[#allocation3 + $0x30] sm:$0xff]
    %v4747 = vld [vmem:[#allocation3 + $0x38] sm:$0xff]
    %v4748 = vld [vmem:[#allocation3 + $0x40] sm:$0xff]
    %v4749 = vld [vmem:[#allocation3 + $0x48] sm:$0xff]
    %v4750 = vld [vmem:[#allocation3 + $0x50] sm:$0xff]
    %v4751 = vld [vmem:[#allocation3 + $0x58] sm:$0xff]
    %v4752 = vld [vmem:[#allocation3 + $0x60] sm:$0xff]
    %v4753 = vld [vmem:[#allocation3 + $0x68] sm:$0xff]
    %v4754 = vld [vmem:[#allocation3 + $0x70] sm:$0xff]
    %v4755 = vld [vmem:[#allocation3 + $0x78] sm:$0xff]
    %v4756 = vld [vmem:[#allocation3 + $0x80] sm:$0xff]
    %v4757 = vld [vmem:[#allocation3 + $0x88] sm:$0xff]
    %v4758 = vld [vmem:[#allocation3 + $0x90] sm:$0xff]
    %v4759 = vld [vmem:[#allocation3 + $0x98] sm:$0xff]
    %v4760 = vld [vmem:[#allocation3 + $0xa0] sm:$0xff]
    %v4761 = vld [vmem:[#allocation3 + $0xa8] sm:$0xff]
    %v4762 = vld [vmem:[#allocation3 + $0xb0] sm:$0xff]
    %v4763 = vld [vmem:[#allocation3 + $0xb8] sm:$0xff]
    %v4764 = vld [vmem:[#allocation3 + $0xc0] sm:$0xff]
    %v4765 = vld [vmem:[#allocation3 + $0xc8] sm:$0xff]
    %v4766 = vld [vmem:[#allocation3 + $0xd0] sm:$0xff]
    %v4767 = vld [vmem:[#allocation3 + $0xd8] sm:$0xff]
    %v4768 = vld [vmem:[#allocation3 + $0xe0] sm:$0xff]
    %v4769 = vld [vmem:[#allocation3 + $0xe8] sm:$0xff]
    %v4770 = vld [vmem:[#allocation3 + $0xf0] sm:$0xff]
    %v4771 = vld [vmem:[#allocation3 + $0xf8] sm:$0xff]
    %v4772 = vld [vmem:[#allocation3 + $0x100] sm:$0xff]
    %v4773 = vld [vmem:[#allocation3 + $0x108] sm:$0xff]
    %v4774 = vld [vmem:[#allocation3 + $0x110] sm:$0xff]
    %v4775 = vld [vmem:[#allocation3 + $0x118] sm:$0xff]
    %v4776 = vld [vmem:[#allocation3 + $0x120] sm:$0xff]
    %v4777 = vld [vmem:[#allocation3 + $0x128] sm:$0xff]
    %v4778 = vld [vmem:[#allocation3 + $0x130] sm:$0xff]
    %v4779 = vld [vmem:[#allocation3 + $0x138] sm:$0xff]
    %v4780 = vld [vmem:[#allocation3 + $0x140] sm:$0xff]
    %v4781 = vld [vmem:[#allocation3 + $0x148] sm:$0xff]
    %v4782 = vld [vmem:[#allocation3 + $0x150] sm:$0xff]
    %v4783 = vld [vmem:[#allocation3 + $0x158] sm:$0xff]
    %v4784 = vld [vmem:[#allocation3 + $0x160] sm:$0xff]
    %v4785 = vld [vmem:[#allocation3 + $0x168] sm:$0xff]
    %v4786 = vld [vmem:[#allocation3 + $0x170] sm:$0xff]
    %v4787 = vld [vmem:[#allocation3 + $0x178] sm:$0xff]
    %v4788 = vld [vmem:[#allocation3 + $0x180] sm:$0xff]
    %v4789 = vld [vmem:[#allocation3 + $0x188] sm:$0xff]
    %v4790 = vld [vmem:[#allocation3 + $0x190] sm:$0xff]
    %v4791 = vld [vmem:[#allocation3 + $0x198] sm:$0xff]
    %v4792 = vld [vmem:[#allocation3 + $0x1a0] sm:$0xff]
    %v4793 = vld [vmem:[#allocation3 + $0x1a8] sm:$0xff]
    %v4794 = vld [vmem:[#allocation3 + $0x1b0] sm:$0xff]
    %v4795 = vld [vmem:[#allocation3 + $0x1b8] sm:$0xff]
    %v4796 = vld [vmem:[#allocation3 + $0x1c0] sm:$0xff]
    %v4797 = vld [vmem:[#allocation3 + $0x1c8] sm:$0xff]
    %v4798 = vld [vmem:[#allocation3 + $0x1d0] sm:$0xff]
    %v4799 = vld [vmem:[#allocation3 + $0x1d8] sm:$0xff]
    %v4800 = vld [vmem:[#allocation3 + $0x1e0] sm:$0xff]
    %v4801 = vld [vmem:[#allocation3 + $0x1e8] sm:$0xff]
    %v4802 = vld [vmem:[#allocation3 + $0x1f0] sm:$0xff]
    %v4803 = vld [vmem:[#allocation3 + $0x1f8] sm:$0xff]
    %v4804 = vld [vmem:[#allocation3 + $0x200] sm:$0xff]
    %v4805 = vld [vmem:[#allocation3 + $0x208] sm:$0xff]
    %v4806 = vld [vmem:[#allocation3 + $0x210] sm:$0xff]
    %v4807 = vld [vmem:[#allocation3 + $0x218] sm:$0xff]
    %v4808 = vld [vmem:[#allocation3 + $0x220] sm:$0xff]
    %v4809 = vld [vmem:[#allocation3 + $0x228] sm:$0xff]
    %v4810 = vld [vmem:[#allocation3 + $0x230] sm:$0xff]
    %v4811 = vld [vmem:[#allocation3 + $0x238] sm:$0xff]
    %v4812 = vld [vmem:[#allocation3 + $0x240] sm:$0xff]
    %v4813 = vld [vmem:[#allocation3 + $0x248] sm:$0xff]
    %v4814 = vld [vmem:[#allocation3 + $0x250] sm:$0xff]
    %v4815 = vld [vmem:[#allocation3 + $0x258] sm:$0xff]
    %v4816 = vld [vmem:[#allocation3 + $0x260] sm:$0xff]
    %v4817 = vld [vmem:[#allocation3 + $0x268] sm:$0xff]
    %v4818 = vld [vmem:[#allocation3 + $0x270] sm:$0xff]
    %v4819 = vld [vmem:[#allocation3 + $0x278] sm:$0xff]
    %v4820 = vld [vmem:[#allocation3 + $0x280] sm:$0xff]
    %v4821 = vld [vmem:[#allocation3 + $0x288] sm:$0xff]
    %v4822 = vld [vmem:[#allocation3 + $0x290] sm:$0xff]
    %v4823 = vld [vmem:[#allocation3 + $0x298] sm:$0xff]
    %v4824 = vld [vmem:[#allocation3 + $0x2a0] sm:$0xff]
    %v4825 = vld [vmem:[#allocation3 + $0x2a8] sm:$0xff]
    %v4826 = vld [vmem:[#allocation3 + $0x2b0] sm:$0xff]
    %v4827 = vld [vmem:[#allocation3 + $0x2b8] sm:$0xff]
    %v4828 = vld [vmem:[#allocation3 + $0x2c0] sm:$0xff]
    %v4829 = vld [vmem:[#allocation3 + $0x2c8] sm:$0xff]
    %v4830 = vld [vmem:[#allocation3 + $0x2d0] sm:$0xff]
    %v4831 = vld [vmem:[#allocation3 + $0x2d8] sm:$0xff]
    %v4832 = vld [vmem:[#allocation3 + $0x2e0] sm:$0xff]
    %v4833 = vld [vmem:[#allocation3 + $0x2e8] sm:$0xff]
    %v4834 = vld [vmem:[#allocation3 + $0x2f0] sm:$0xff]
    %v4835 = vld [vmem:[#allocation3 + $0x2f8] sm:$0xff]
    %v4836 = vld [vmem:[#allocation3 + $0x300] sm:$0xff]
    %v4837 = vld [vmem:[#allocation3 + $0x308] sm:$0xff]
    %v4838 = vld [vmem:[#allocation3 + $0x310] sm:$0xff]
    %v4839 = vld [vmem:[#allocation3 + $0x318] sm:$0xff]
    %v4840 = vld [vmem:[#allocation3 + $0x320] sm:$0xff]
    %v4841 = vld [vmem:[#allocation3 + $0x328] sm:$0xff]
    %v4842 = vld [vmem:[#allocation3 + $0x330] sm:$0xff]
    %v4843 = vld [vmem:[#allocation3 + $0x338] sm:$0xff]
    %v4844 = vld [vmem:[#allocation3 + $0x340] sm:$0xff]
    %v4845 = vld [vmem:[#allocation3 + $0x348] sm:$0xff]
    %v4846 = vld [vmem:[#allocation3 + $0x350] sm:$0xff]
    %v4847 = vld [vmem:[#allocation3 + $0x358] sm:$0xff]
    %v4848 = vld [vmem:[#allocation3 + $0x360] sm:$0xff]
    %v4849 = vld [vmem:[#allocation3 + $0x368] sm:$0xff]
    %v4850 = vld [vmem:[#allocation3 + $0x370] sm:$0xff]
    %v4851 = vld [vmem:[#allocation3 + $0x378] sm:$0xff]
    %v4852 = vld [vmem:[#allocation3 + $0x380] sm:$0xff]
    %v4853 = vld [vmem:[#allocation3 + $0x388] sm:$0xff]
    %v4854 = vld [vmem:[#allocation3 + $0x390] sm:$0xff]
    %v4855 = vld [vmem:[#allocation3 + $0x398] sm:$0xff]
    %v4856 = vld [vmem:[#allocation3 + $0x3a0] sm:$0xff]
    %v4857 = vld [vmem:[#allocation3 + $0x3a8] sm:$0xff]
    %v4858 = vld [vmem:[#allocation3 + $0x3b0] sm:$0xff]
    %v4859 = vld [vmem:[#allocation3 + $0x3b8] sm:$0xff]
    %v4860 = vld [vmem:[#allocation3 + $0x3c0] sm:$0xff]
    %v4861 = vld [vmem:[#allocation3 + $0x3c8] sm:$0xff]
    %v4862 = vld [vmem:[#allocation3 + $0x3d0] sm:$0xff]
    %v4863 = vld [vmem:[#allocation3 + $0x3d8] sm:$0xff]
    %v4864 = vld [vmem:[#allocation3 + $0x3e0] sm:$0xff]
    %v4865 = vld [vmem:[#allocation3 + $0x3e8] sm:$0xff]
    %v4866 = vld [vmem:[#allocation3 + $0x3f0] sm:$0xff]
    %v4867 = vld [vmem:[#allocation3 + $0x3f8] sm:$0xff]
    %s4868 = sshll.u32 %s826, 4
    %4869 = dma.done %s831, %s4868
    %s4870 = scalar_lea.hbm %s12, 32768
    // Predicated region
    $region102: #{tpu_custom_call.1} parent=1 // pred_check
      _
    $region103: #{tpu_custom_call.1} parent=1 // pred_check_branch
      %4872 = sbr.rel target = $region105
    $region104: #{tpu_custom_call.1} parent=1 // pred_region
      %4873 = sst [smem:[#allocation22]] [#allocation35]
      %4874 = sst [smem:[#allocation23]] [#allocation34]
    $region105: #{tpu_custom_call.1} parent=1 // pred_fallthru
      _
    %4876 = shalt.err (0)
    %s4878 = sshll.u32 [#allocation3], 4
    %s4879 = int_to_ptr.vmem [resolvable:$true] %s4878
    %4881 = dma.hbm_to_vmem [thread:$0]  %s4870, 16384, %s4879, [#allocation4]
    %v4882 = vld [vmem:[%s830] sm:$0xff]
    %v4883 = vld [vmem:[%s830 + $0x8] sm:$0xff]
    %v4884 = vld [vmem:[%s830 + $0x10] sm:$0xff]
    %v4885 = vld [vmem:[%s830 + $0x18] sm:$0xff]
    %v4886 = vld [vmem:[%s830 + $0x20] sm:$0xff]
    %v4887 = vld [vmem:[%s830 + $0x28] sm:$0xff]
    %v4888 = vld [vmem:[%s830 + $0x30] sm:$0xff]
    %v4889 = vld [vmem:[%s830 + $0x38] sm:$0xff]
    %v4890 = vld [vmem:[%s830 + $0x40] sm:$0xff]
    %v4891 = vld [vmem:[%s830 + $0x48] sm:$0xff]
    %v4892 = vld [vmem:[%s830 + $0x50] sm:$0xff]
    %v4893 = vld [vmem:[%s830 + $0x58] sm:$0xff]
    %v4894 = vld [vmem:[%s830 + $0x60] sm:$0xff]
    %v4895 = vld [vmem:[%s830 + $0x68] sm:$0xff]
    %v4896 = vld [vmem:[%s830 + $0x70] sm:$0xff]
    %v4897 = vld [vmem:[%s830 + $0x78] sm:$0xff]
    %v4898 = vld [vmem:[%s830 + $0x80] sm:$0xff]
    %v4899 = vld [vmem:[%s830 + $0x88] sm:$0xff]
    %v4900 = vld [vmem:[%s830 + $0x90] sm:$0xff]
    %v4901 = vld [vmem:[%s830 + $0x98] sm:$0xff]
    %v4902 = vld [vmem:[%s830 + $0xa0] sm:$0xff]
    %v4903 = vld [vmem:[%s830 + $0xa8] sm:$0xff]
    %v4904 = vld [vmem:[%s830 + $0xb0] sm:$0xff]
    %v4905 = vld [vmem:[%s830 + $0xb8] sm:$0xff]
    %v4906 = vld [vmem:[%s830 + $0xc0] sm:$0xff]
    %v4907 = vld [vmem:[%s830 + $0xc8] sm:$0xff]
    %v4908 = vld [vmem:[%s830 + $0xd0] sm:$0xff]
    %v4909 = vld [vmem:[%s830 + $0xd8] sm:$0xff]
    %v4910 = vld [vmem:[%s830 + $0xe0] sm:$0xff]
    %v4911 = vld [vmem:[%s830 + $0xe8] sm:$0xff]
    %v4912 = vld [vmem:[%s830 + $0xf0] sm:$0xff]
    %v4913 = vld [vmem:[%s830 + $0xf8] sm:$0xff]
    %v4914 = vld [vmem:[%s830 + $0x100] sm:$0xff]
    %v4915 = vld [vmem:[%s830 + $0x108] sm:$0xff]
    %v4916 = vld [vmem:[%s830 + $0x110] sm:$0xff]
    %v4917 = vld [vmem:[%s830 + $0x118] sm:$0xff]
    %v4918 = vld [vmem:[%s830 + $0x120] sm:$0xff]
    %v4919 = vld [vmem:[%s830 + $0x128] sm:$0xff]
    %v4920 = vld [vmem:[%s830 + $0x130] sm:$0xff]
    %v4921 = vld [vmem:[%s830 + $0x138] sm:$0xff]
    %v4922 = vld [vmem:[%s830 + $0x140] sm:$0xff]
    %v4923 = vld [vmem:[%s830 + $0x148] sm:$0xff]
    %v4924 = vld [vmem:[%s830 + $0x150] sm:$0xff]
    %v4925 = vld [vmem:[%s830 + $0x158] sm:$0xff]
    %v4926 = vld [vmem:[%s830 + $0x160] sm:$0xff]
    %v4927 = vld [vmem:[%s830 + $0x168] sm:$0xff]
    %v4928 = vld [vmem:[%s830 + $0x170] sm:$0xff]
    %v4929 = vld [vmem:[%s830 + $0x178] sm:$0xff]
    %v4930 = vld [vmem:[%s830 + $0x180] sm:$0xff]
    %v4931 = vld [vmem:[%s830 + $0x188] sm:$0xff]
    %v4932 = vld [vmem:[%s830 + $0x190] sm:$0xff]
    %v4933 = vld [vmem:[%s830 + $0x198] sm:$0xff]
    %v4934 = vld [vmem:[%s830 + $0x1a0] sm:$0xff]
    %v4935 = vld [vmem:[%s830 + $0x1a8] sm:$0xff]
    %v4936 = vld [vmem:[%s830 + $0x1b0] sm:$0xff]
    %v4937 = vld [vmem:[%s830 + $0x1b8] sm:$0xff]
    %v4938 = vld [vmem:[%s830 + $0x1c0] sm:$0xff]
    %v4939 = vld [vmem:[%s830 + $0x1c8] sm:$0xff]
    %v4940 = vld [vmem:[%s830 + $0x1d0] sm:$0xff]
    %v4941 = vld [vmem:[%s830 + $0x1d8] sm:$0xff]
    %v4942 = vld [vmem:[%s830 + $0x1e0] sm:$0xff]
    %v4943 = vld [vmem:[%s830 + $0x1e8] sm:$0xff]
    %v4944 = vld [vmem:[%s830 + $0x1f0] sm:$0xff]
    %v4945 = vld [vmem:[%s830 + $0x1f8] sm:$0xff]
    %v4946 = vld [vmem:[%s830 + $0x200] sm:$0xff]
    %v4947 = vld [vmem:[%s830 + $0x208] sm:$0xff]
    %v4948 = vld [vmem:[%s830 + $0x210] sm:$0xff]
    %v4949 = vld [vmem:[%s830 + $0x218] sm:$0xff]
    %v4950 = vld [vmem:[%s830 + $0x220] sm:$0xff]
    %v4951 = vld [vmem:[%s830 + $0x228] sm:$0xff]
    %v4952 = vld [vmem:[%s830 + $0x230] sm:$0xff]
    %v4953 = vld [vmem:[%s830 + $0x238] sm:$0xff]
    %v4954 = vld [vmem:[%s830 + $0x240] sm:$0xff]
    %v4955 = vld [vmem:[%s830 + $0x248] sm:$0xff]
    %v4956 = vld [vmem:[%s830 + $0x250] sm:$0xff]
    %v4957 = vld [vmem:[%s830 + $0x258] sm:$0xff]
    %v4958 = vld [vmem:[%s830 + $0x260] sm:$0xff]
    %v4959 = vld [vmem:[%s830 + $0x268] sm:$0xff]
    %v4960 = vld [vmem:[%s830 + $0x270] sm:$0xff]
    %v4961 = vld [vmem:[%s830 + $0x278] sm:$0xff]
    %v4962 = vld [vmem:[%s830 + $0x280] sm:$0xff]
    %v4963 = vld [vmem:[%s830 + $0x288] sm:$0xff]
    %v4964 = vld [vmem:[%s830 + $0x290] sm:$0xff]
    %v4965 = vld [vmem:[%s830 + $0x298] sm:$0xff]
    %v4966 = vld [vmem:[%s830 + $0x2a0] sm:$0xff]
    %v4967 = vld [vmem:[%s830 + $0x2a8] sm:$0xff]
    %v4968 = vld [vmem:[%s830 + $0x2b0] sm:$0xff]
    %v4969 = vld [vmem:[%s830 + $0x2b8] sm:$0xff]
    %v4970 = vld [vmem:[%s830 + $0x2c0] sm:$0xff]
    %v4971 = vld [vmem:[%s830 + $0x2c8] sm:$0xff]
    %v4972 = vld [vmem:[%s830 + $0x2d0] sm:$0xff]
    %v4973 = vld [vmem:[%s830 + $0x2d8] sm:$0xff]
    %v4974 = vld [vmem:[%s830 + $0x2e0] sm:$0xff]
    %v4975 = vld [vmem:[%s830 + $0x2e8] sm:$0xff]
    %v4976 = vld [vmem:[%s830 + $0x2f0] sm:$0xff]
    %v4977 = vld [vmem:[%s830 + $0x2f8] sm:$0xff]
    %v4978 = vld [vmem:[%s830 + $0x300] sm:$0xff]
    %v4979 = vld [vmem:[%s830 + $0x308] sm:$0xff]
    %v4980 = vld [vmem:[%s830 + $0x310] sm:$0xff]
    %v4981 = vld [vmem:[%s830 + $0x318] sm:$0xff]
    %v4982 = vld [vmem:[%s830 + $0x320] sm:$0xff]
    %v4983 = vld [vmem:[%s830 + $0x328] sm:$0xff]
    %v4984 = vld [vmem:[%s830 + $0x330] sm:$0xff]
    %v4985 = vld [vmem:[%s830 + $0x338] sm:$0xff]
    %v4986 = vld [vmem:[%s830 + $0x340] sm:$0xff]
    %v4987 = vld [vmem:[%s830 + $0x348] sm:$0xff]
    %v4988 = vld [vmem:[%s830 + $0x350] sm:$0xff]
    %v4989 = vld [vmem:[%s830 + $0x358] sm:$0xff]
    %v4990 = vld [vmem:[%s830 + $0x360] sm:$0xff]
    %v4991 = vld [vmem:[%s830 + $0x368] sm:$0xff]
    %v4992 = vld [vmem:[%s830 + $0x370] sm:$0xff]
    %v4993 = vld [vmem:[%s830 + $0x378] sm:$0xff]
    %v4994 = vld [vmem:[%s830 + $0x380] sm:$0xff]
    %v4995 = vld [vmem:[%s830 + $0x388] sm:$0xff]
    %v4996 = vld [vmem:[%s830 + $0x390] sm:$0xff]
    %v4997 = vld [vmem:[%s830 + $0x398] sm:$0xff]
    %v4998 = vld [vmem:[%s830 + $0x3a0] sm:$0xff]
    %v4999 = vld [vmem:[%s830 + $0x3a8] sm:$0xff]
    %v5000 = vld [vmem:[%s830 + $0x3b0] sm:$0xff]
    %v5001 = vld [vmem:[%s830 + $0x3b8] sm:$0xff]
    %v5002 = vld [vmem:[%s830 + $0x3c0] sm:$0xff]
    %v5003 = vld [vmem:[%s830 + $0x3c8] sm:$0xff]
    %v5004 = vld [vmem:[%s830 + $0x3d0] sm:$0xff]
    %v5005 = vld [vmem:[%s830 + $0x3d8] sm:$0xff]
    %v5006 = vld [vmem:[%s830 + $0x3e0] sm:$0xff]
    %v5007 = vld [vmem:[%s830 + $0x3e8] sm:$0xff]
    %v5008 = vld [vmem:[%s830 + $0x3f0] sm:$0xff]
    %v5009 = vld [vmem:[%s830 + $0x3f8] sm:$0xff]
    %v5138 = vunpack.c.l.b16 %v4882
    %v5139 = vunpack.c.h.b16 %v4882
    %v5140 = vunpack.c.l.b16 %v4883
    %v5141 = vunpack.c.h.b16 %v4883
    %v5142 = vunpack.c.l.b16 %v4884
    %v5143 = vunpack.c.h.b16 %v4884
    %v5144 = vunpack.c.l.b16 %v4885
    %v5145 = vunpack.c.h.b16 %v4885
    %v5146 = vunpack.c.l.b16 %v4886
    %v5147 = vunpack.c.h.b16 %v4886
    %v5148 = vunpack.c.l.b16 %v4887
    %v5149 = vunpack.c.h.b16 %v4887
    %v5150 = vunpack.c.l.b16 %v4888
    %v5151 = vunpack.c.h.b16 %v4888
    %v5152 = vunpack.c.l.b16 %v4889
    %v5153 = vunpack.c.h.b16 %v4889
    %v5154 = vunpack.c.l.b16 %v4890
    %v5155 = vunpack.c.h.b16 %v4890
    %v5156 = vunpack.c.l.b16 %v4891
    %v5157 = vunpack.c.h.b16 %v4891
    %v5158 = vunpack.c.l.b16 %v4892
    %v5159 = vunpack.c.h.b16 %v4892
    %v5160 = vunpack.c.l.b16 %v4893
    %v5161 = vunpack.c.h.b16 %v4893
    %v5162 = vunpack.c.l.b16 %v4894
    %v5163 = vunpack.c.h.b16 %v4894
    %v5164 = vunpack.c.l.b16 %v4895
    %v5165 = vunpack.c.h.b16 %v4895
    %v5166 = vunpack.c.l.b16 %v4896
    %v5167 = vunpack.c.h.b16 %v4896
    %v5168 = vunpack.c.l.b16 %v4897
    %v5169 = vunpack.c.h.b16 %v4897
    %v5170 = vunpack.c.l.b16 %v4898
    %v5171 = vunpack.c.h.b16 %v4898
    %v5172 = vunpack.c.l.b16 %v4899
    %v5173 = vunpack.c.h.b16 %v4899
    %v5174 = vunpack.c.l.b16 %v4900
    %v5175 = vunpack.c.h.b16 %v4900
    %v5176 = vunpack.c.l.b16 %v4901
    %v5177 = vunpack.c.h.b16 %v4901
    %v5178 = vunpack.c.l.b16 %v4902
    %v5179 = vunpack.c.h.b16 %v4902
    %v5180 = vunpack.c.l.b16 %v4903
    %v5181 = vunpack.c.h.b16 %v4903
    %v5182 = vunpack.c.l.b16 %v4904
    %v5183 = vunpack.c.h.b16 %v4904
    %v5184 = vunpack.c.l.b16 %v4905
    %v5185 = vunpack.c.h.b16 %v4905
    %v5186 = vunpack.c.l.b16 %v4906
    %v5187 = vunpack.c.h.b16 %v4906
    %v5188 = vunpack.c.l.b16 %v4907
    %v5189 = vunpack.c.h.b16 %v4907
    %v5190 = vunpack.c.l.b16 %v4908
    %v5191 = vunpack.c.h.b16 %v4908
    %v5192 = vunpack.c.l.b16 %v4909
    %v5193 = vunpack.c.h.b16 %v4909
    %v5194 = vunpack.c.l.b16 %v4910
    %v5195 = vunpack.c.h.b16 %v4910
    %v5196 = vunpack.c.l.b16 %v4911
    %v5197 = vunpack.c.h.b16 %v4911
    %v5198 = vunpack.c.l.b16 %v4912
    %v5199 = vunpack.c.h.b16 %v4912
    %v5200 = vunpack.c.l.b16 %v4913
    %v5201 = vunpack.c.h.b16 %v4913
    %v5202 = vunpack.c.l.b16 %v4914
    %v5203 = vunpack.c.h.b16 %v4914
    %v5204 = vunpack.c.l.b16 %v4915
    %v5205 = vunpack.c.h.b16 %v4915
    %v5206 = vunpack.c.l.b16 %v4916
    %v5207 = vunpack.c.h.b16 %v4916
    %v5208 = vunpack.c.l.b16 %v4917
    %v5209 = vunpack.c.h.b16 %v4917
    %v5210 = vunpack.c.l.b16 %v4918
    %v5211 = vunpack.c.h.b16 %v4918
    %v5212 = vunpack.c.l.b16 %v4919
    %v5213 = vunpack.c.h.b16 %v4919
    %v5214 = vunpack.c.l.b16 %v4920
    %v5215 = vunpack.c.h.b16 %v4920
    %v5216 = vunpack.c.l.b16 %v4921
    %v5217 = vunpack.c.h.b16 %v4921
    %v5218 = vunpack.c.l.b16 %v4922
    %v5219 = vunpack.c.h.b16 %v4922
    %v5220 = vunpack.c.l.b16 %v4923
    %v5221 = vunpack.c.h.b16 %v4923
    %v5222 = vunpack.c.l.b16 %v4924
    %v5223 = vunpack.c.h.b16 %v4924
    %v5224 = vunpack.c.l.b16 %v4925
    %v5225 = vunpack.c.h.b16 %v4925
    %v5226 = vunpack.c.l.b16 %v4926
    %v5227 = vunpack.c.h.b16 %v4926
    %v5228 = vunpack.c.l.b16 %v4927
    %v5229 = vunpack.c.h.b16 %v4927
    %v5230 = vunpack.c.l.b16 %v4928
    %v5231 = vunpack.c.h.b16 %v4928
    %v5232 = vunpack.c.l.b16 %v4929
    %v5233 = vunpack.c.h.b16 %v4929
    %v5234 = vunpack.c.l.b16 %v4930
    %v5235 = vunpack.c.h.b16 %v4930
    %v5236 = vunpack.c.l.b16 %v4931
    %v5237 = vunpack.c.h.b16 %v4931
    %v5238 = vunpack.c.l.b16 %v4932
    %v5239 = vunpack.c.h.b16 %v4932
    %v5240 = vunpack.c.l.b16 %v4933
    %v5241 = vunpack.c.h.b16 %v4933
    %v5242 = vunpack.c.l.b16 %v4934
    %v5243 = vunpack.c.h.b16 %v4934
    %v5244 = vunpack.c.l.b16 %v4935
    %v5245 = vunpack.c.h.b16 %v4935
    %v5246 = vunpack.c.l.b16 %v4936
    %v5247 = vunpack.c.h.b16 %v4936
    %v5248 = vunpack.c.l.b16 %v4937
    %v5249 = vunpack.c.h.b16 %v4937
    %v5250 = vunpack.c.l.b16 %v4938
    %v5251 = vunpack.c.h.b16 %v4938
    %v5252 = vunpack.c.l.b16 %v4939
    %v5253 = vunpack.c.h.b16 %v4939
    %v5254 = vunpack.c.l.b16 %v4940
    %v5255 = vunpack.c.h.b16 %v4940
    %v5256 = vunpack.c.l.b16 %v4941
    %v5257 = vunpack.c.h.b16 %v4941
    %v5258 = vunpack.c.l.b16 %v4942
    %v5259 = vunpack.c.h.b16 %v4942
    %v5260 = vunpack.c.l.b16 %v4943
    %v5261 = vunpack.c.h.b16 %v4943
    %v5262 = vunpack.c.l.b16 %v4944
    %v5263 = vunpack.c.h.b16 %v4944
    %v5264 = vunpack.c.l.b16 %v4945
    %v5265 = vunpack.c.h.b16 %v4945
    %v5266 = vunpack.c.l.b16 %v4946
    %v5267 = vunpack.c.h.b16 %v4946
    %v5268 = vunpack.c.l.b16 %v4947
    %v5269 = vunpack.c.h.b16 %v4947
    %v5270 = vunpack.c.l.b16 %v4948
    %v5271 = vunpack.c.h.b16 %v4948
    %v5272 = vunpack.c.l.b16 %v4949
    %v5273 = vunpack.c.h.b16 %v4949
    %v5274 = vunpack.c.l.b16 %v4950
    %v5275 = vunpack.c.h.b16 %v4950
    %v5276 = vunpack.c.l.b16 %v4951
    %v5277 = vunpack.c.h.b16 %v4951
    %v5278 = vunpack.c.l.b16 %v4952
    %v5279 = vunpack.c.h.b16 %v4952
    %v5280 = vunpack.c.l.b16 %v4953
    %v5281 = vunpack.c.h.b16 %v4953
    %v5282 = vunpack.c.l.b16 %v4954
    %v5283 = vunpack.c.h.b16 %v4954
    %v5284 = vunpack.c.l.b16 %v4955
    %v5285 = vunpack.c.h.b16 %v4955
    %v5286 = vunpack.c.l.b16 %v4956
    %v5287 = vunpack.c.h.b16 %v4956
    %v5288 = vunpack.c.l.b16 %v4957
    %v5289 = vunpack.c.h.b16 %v4957
    %v5290 = vunpack.c.l.b16 %v4958
    %v5291 = vunpack.c.h.b16 %v4958
    %v5292 = vunpack.c.l.b16 %v4959
    %v5293 = vunpack.c.h.b16 %v4959
    %v5294 = vunpack.c.l.b16 %v4960
    %v5295 = vunpack.c.h.b16 %v4960
    %v5296 = vunpack.c.l.b16 %v4961
    %v5297 = vunpack.c.h.b16 %v4961
    %v5298 = vunpack.c.l.b16 %v4962
    %v5299 = vunpack.c.h.b16 %v4962
    %v5300 = vunpack.c.l.b16 %v4963
    %v5301 = vunpack.c.h.b16 %v4963
    %v5302 = vunpack.c.l.b16 %v4964
    %v5303 = vunpack.c.h.b16 %v4964
    %v5304 = vunpack.c.l.b16 %v4965
    %v5305 = vunpack.c.h.b16 %v4965
    %v5306 = vunpack.c.l.b16 %v4966
    %v5307 = vunpack.c.h.b16 %v4966
    %v5308 = vunpack.c.l.b16 %v4967
    %v5309 = vunpack.c.h.b16 %v4967
    %v5310 = vunpack.c.l.b16 %v4968
    %v5311 = vunpack.c.h.b16 %v4968
    %v5312 = vunpack.c.l.b16 %v4969
    %v5313 = vunpack.c.h.b16 %v4969
    %v5314 = vunpack.c.l.b16 %v4970
    %v5315 = vunpack.c.h.b16 %v4970
    %v5316 = vunpack.c.l.b16 %v4971
    %v5317 = vunpack.c.h.b16 %v4971
    %v5318 = vunpack.c.l.b16 %v4972
    %v5319 = vunpack.c.h.b16 %v4972
    %v5320 = vunpack.c.l.b16 %v4973
    %v5321 = vunpack.c.h.b16 %v4973
    %v5322 = vunpack.c.l.b16 %v4974
    %v5323 = vunpack.c.h.b16 %v4974
    %v5324 = vunpack.c.l.b16 %v4975
    %v5325 = vunpack.c.h.b16 %v4975
    %v5326 = vunpack.c.l.b16 %v4976
    %v5327 = vunpack.c.h.b16 %v4976
    %v5328 = vunpack.c.l.b16 %v4977
    %v5329 = vunpack.c.h.b16 %v4977
    %v5330 = vunpack.c.l.b16 %v4978
    %v5331 = vunpack.c.h.b16 %v4978
    %v5332 = vunpack.c.l.b16 %v4979
    %v5333 = vunpack.c.h.b16 %v4979
    %v5334 = vunpack.c.l.b16 %v4980
    %v5335 = vunpack.c.h.b16 %v4980
    %v5336 = vunpack.c.l.b16 %v4981
    %v5337 = vunpack.c.h.b16 %v4981
    %v5338 = vunpack.c.l.b16 %v4982
    %v5339 = vunpack.c.h.b16 %v4982
    %v5340 = vunpack.c.l.b16 %v4983
    %v5341 = vunpack.c.h.b16 %v4983
    %v5342 = vunpack.c.l.b16 %v4984
    %v5343 = vunpack.c.h.b16 %v4984
    %v5344 = vunpack.c.l.b16 %v4985
    %v5345 = vunpack.c.h.b16 %v4985
    %v5346 = vunpack.c.l.b16 %v4986
    %v5347 = vunpack.c.h.b16 %v4986
    %v5348 = vunpack.c.l.b16 %v4987
    %v5349 = vunpack.c.h.b16 %v4987
    %v5350 = vunpack.c.l.b16 %v4988
    %v5351 = vunpack.c.h.b16 %v4988
    %v5352 = vunpack.c.l.b16 %v4989
    %v5353 = vunpack.c.h.b16 %v4989
    %v5354 = vunpack.c.l.b16 %v4990
    %v5355 = vunpack.c.h.b16 %v4990
    %v5356 = vunpack.c.l.b16 %v4991
    %v5357 = vunpack.c.h.b16 %v4991
    %v5358 = vunpack.c.l.b16 %v4992
    %v5359 = vunpack.c.h.b16 %v4992
    %v5360 = vunpack.c.l.b16 %v4993
    %v5361 = vunpack.c.h.b16 %v4993
    %v5362 = vunpack.c.l.b16 %v4994
    %v5363 = vunpack.c.h.b16 %v4994
    %v5364 = vunpack.c.l.b16 %v4995
    %v5365 = vunpack.c.h.b16 %v4995
    %v5366 = vunpack.c.l.b16 %v4996
    %v5367 = vunpack.c.h.b16 %v4996
    %v5368 = vunpack.c.l.b16 %v4997
    %v5369 = vunpack.c.h.b16 %v4997
    %v5370 = vunpack.c.l.b16 %v4998
    %v5371 = vunpack.c.h.b16 %v4998
    %v5372 = vunpack.c.l.b16 %v4999
    %v5373 = vunpack.c.h.b16 %v4999
    %v5374 = vunpack.c.l.b16 %v5000
    %v5375 = vunpack.c.h.b16 %v5000
    %v5376 = vunpack.c.l.b16 %v5001
    %v5377 = vunpack.c.h.b16 %v5001
    %v5378 = vunpack.c.l.b16 %v5002
    %v5379 = vunpack.c.h.b16 %v5002
    %v5380 = vunpack.c.l.b16 %v5003
    %v5381 = vunpack.c.h.b16 %v5003
    %v5382 = vunpack.c.l.b16 %v5004
    %v5383 = vunpack.c.h.b16 %v5004
    %v5384 = vunpack.c.l.b16 %v5005
    %v5385 = vunpack.c.h.b16 %v5005
    %v5386 = vunpack.c.l.b16 %v5006
    %v5387 = vunpack.c.h.b16 %v5006
    %v5388 = vunpack.c.l.b16 %v5007
    %v5389 = vunpack.c.h.b16 %v5007
    %v5390 = vunpack.c.l.b16 %v5008
    %v5391 = vunpack.c.h.b16 %v5008
    %v5392 = vunpack.c.l.b16 %v5009
    %v5393 = vunpack.c.h.b16 %v5009
    %v5394 = vpack.c.b16 %v5146, %v5138
    %v5395 = vpack.c.b16 %v5147, %v5139
    %v5396 = vpack.c.b16 %v5148, %v5140
    %v5397 = vpack.c.b16 %v5149, %v5141
    %v5398 = vpack.c.b16 %v5150, %v5142
    %v5399 = vpack.c.b16 %v5151, %v5143
    %v5400 = vpack.c.b16 %v5152, %v5144
    %v5401 = vpack.c.b16 %v5153, %v5145
    %v5402 = vpack.c.b16 %v5162, %v5154
    %v5403 = vpack.c.b16 %v5163, %v5155
    %v5404 = vpack.c.b16 %v5164, %v5156
    %v5405 = vpack.c.b16 %v5165, %v5157
    %v5406 = vpack.c.b16 %v5166, %v5158
    %v5407 = vpack.c.b16 %v5167, %v5159
    %v5408 = vpack.c.b16 %v5168, %v5160
    %v5409 = vpack.c.b16 %v5169, %v5161
    %v5410 = vpack.c.b16 %v5178, %v5170
    %v5411 = vpack.c.b16 %v5179, %v5171
    %v5412 = vpack.c.b16 %v5180, %v5172
    %v5413 = vpack.c.b16 %v5181, %v5173
    %v5414 = vpack.c.b16 %v5182, %v5174
    %v5415 = vpack.c.b16 %v5183, %v5175
    %v5416 = vpack.c.b16 %v5184, %v5176
    %v5417 = vpack.c.b16 %v5185, %v5177
    %v5418 = vpack.c.b16 %v5194, %v5186
    %v5419 = vpack.c.b16 %v5195, %v5187
    %v5420 = vpack.c.b16 %v5196, %v5188
    %v5421 = vpack.c.b16 %v5197, %v5189
    %v5422 = vpack.c.b16 %v5198, %v5190
    %v5423 = vpack.c.b16 %v5199, %v5191
    %v5424 = vpack.c.b16 %v5200, %v5192
    %v5425 = vpack.c.b16 %v5201, %v5193
    %v5426 = vpack.c.b16 %v5210, %v5202
    %v5427 = vpack.c.b16 %v5211, %v5203
    %v5428 = vpack.c.b16 %v5212, %v5204
    %v5429 = vpack.c.b16 %v5213, %v5205
    %v5430 = vpack.c.b16 %v5214, %v5206
    %v5431 = vpack.c.b16 %v5215, %v5207
    %v5432 = vpack.c.b16 %v5216, %v5208
    %v5433 = vpack.c.b16 %v5217, %v5209
    %v5434 = vpack.c.b16 %v5226, %v5218
    %v5435 = vpack.c.b16 %v5227, %v5219
    %v5436 = vpack.c.b16 %v5228, %v5220
    %v5437 = vpack.c.b16 %v5229, %v5221
    %v5438 = vpack.c.b16 %v5230, %v5222
    %v5439 = vpack.c.b16 %v5231, %v5223
    %v5440 = vpack.c.b16 %v5232, %v5224
    %v5441 = vpack.c.b16 %v5233, %v5225
    %v5442 = vpack.c.b16 %v5242, %v5234
    %v5443 = vpack.c.b16 %v5243, %v5235
    %v5444 = vpack.c.b16 %v5244, %v5236
    %v5445 = vpack.c.b16 %v5245, %v5237
    %v5446 = vpack.c.b16 %v5246, %v5238
    %v5447 = vpack.c.b16 %v5247, %v5239
    %v5448 = vpack.c.b16 %v5248, %v5240
    %v5449 = vpack.c.b16 %v5249, %v5241
    %v5450 = vpack.c.b16 %v5258, %v5250
    %v5451 = vpack.c.b16 %v5259, %v5251
    %v5452 = vpack.c.b16 %v5260, %v5252
    %v5453 = vpack.c.b16 %v5261, %v5253
    %v5454 = vpack.c.b16 %v5262, %v5254
    %v5455 = vpack.c.b16 %v5263, %v5255
    %v5456 = vpack.c.b16 %v5264, %v5256
    %v5457 = vpack.c.b16 %v5265, %v5257
    %v5458 = vpack.c.b16 %v5274, %v5266
    %v5459 = vpack.c.b16 %v5275, %v5267
    %v5460 = vpack.c.b16 %v5276, %v5268
    %v5461 = vpack.c.b16 %v5277, %v5269
    %v5462 = vpack.c.b16 %v5278, %v5270
    %v5463 = vpack.c.b16 %v5279, %v5271
    %v5464 = vpack.c.b16 %v5280, %v5272
    %v5465 = vpack.c.b16 %v5281, %v5273
    %v5466 = vpack.c.b16 %v5290, %v5282
    %v5467 = vpack.c.b16 %v5291, %v5283
    %v5468 = vpack.c.b16 %v5292, %v5284
    %v5469 = vpack.c.b16 %v5293, %v5285
    %v5470 = vpack.c.b16 %v5294, %v5286
    %v5471 = vpack.c.b16 %v5295, %v5287
    %v5472 = vpack.c.b16 %v5296, %v5288
    %v5473 = vpack.c.b16 %v5297, %v5289
    %v5474 = vpack.c.b16 %v5306, %v5298
    %v5475 = vpack.c.b16 %v5307, %v5299
    %v5476 = vpack.c.b16 %v5308, %v5300
    %v5477 = vpack.c.b16 %v5309, %v5301
    %v5478 = vpack.c.b16 %v5310, %v5302
    %v5479 = vpack.c.b16 %v5311, %v5303
    %v5480 = vpack.c.b16 %v5312, %v5304
    %v5481 = vpack.c.b16 %v5313, %v5305
    %v5482 = vpack.c.b16 %v5322, %v5314
    %v5483 = vpack.c.b16 %v5323, %v5315
    %v5484 = vpack.c.b16 %v5324, %v5316
    %v5485 = vpack.c.b16 %v5325, %v5317
    %v5486 = vpack.c.b16 %v5326, %v5318
    %v5487 = vpack.c.b16 %v5327, %v5319
    %v5488 = vpack.c.b16 %v5328, %v5320
    %v5489 = vpack.c.b16 %v5329, %v5321
    %v5490 = vpack.c.b16 %v5338, %v5330
    %v5491 = vpack.c.b16 %v5339, %v5331
    %v5492 = vpack.c.b16 %v5340, %v5332
    %v5493 = vpack.c.b16 %v5341, %v5333
    %v5494 = vpack.c.b16 %v5342, %v5334
    %v5495 = vpack.c.b16 %v5343, %v5335
    %v5496 = vpack.c.b16 %v5344, %v5336
    %v5497 = vpack.c.b16 %v5345, %v5337
    %v5498 = vpack.c.b16 %v5354, %v5346
    %v5499 = vpack.c.b16 %v5355, %v5347
    %v5500 = vpack.c.b16 %v5356, %v5348
    %v5501 = vpack.c.b16 %v5357, %v5349
    %v5502 = vpack.c.b16 %v5358, %v5350
    %v5503 = vpack.c.b16 %v5359, %v5351
    %v5504 = vpack.c.b16 %v5360, %v5352
    %v5505 = vpack.c.b16 %v5361, %v5353
    %v5506 = vpack.c.b16 %v5370, %v5362
    %v5507 = vpack.c.b16 %v5371, %v5363
    %v5508 = vpack.c.b16 %v5372, %v5364
    %v5509 = vpack.c.b16 %v5373, %v5365
    %v5510 = vpack.c.b16 %v5374, %v5366
    %v5511 = vpack.c.b16 %v5375, %v5367
    %v5512 = vpack.c.b16 %v5376, %v5368
    %v5513 = vpack.c.b16 %v5377, %v5369
    %v5514 = vpack.c.b16 %v5386, %v5378
    %v5515 = vpack.c.b16 %v5387, %v5379
    %v5516 = vpack.c.b16 %v5388, %v5380
    %v5517 = vpack.c.b16 %v5389, %v5381
    %v5518 = vpack.c.b16 %v5390, %v5382
    %v5519 = vpack.c.b16 %v5391, %v5383
    %v5520 = vpack.c.b16 %v5392, %v5384
    %v5521 = vpack.c.b16 %v5393, %v5385
    %5650 = vmatprep.subr.bf16.mxu0 %v5451
    %5651 = vmatpush1.bf16.msra.mxu0 %v5450
    %5652 = vmatprep.subr.bf16.mxu0 %v5443
    %5653 = vmatpush1.bf16.msra.mxu0 %v5442
    %5654 = vmatprep.subr.bf16.mxu0 %v5435
    %5655 = vmatpush1.bf16.msra.mxu0 %v5434
    %5656 = vmatprep.subr.bf16.mxu0 %v5427
    %5657 = vmatpush1.bf16.msra.mxu0 %v5426
    %5658 = vmatprep.subr.bf16.mxu0 %v5419
    %5659 = vmatpush1.bf16.msra.mxu0 %v5418
    %5660 = vmatprep.subr.bf16.mxu0 %v5411
    %5661 = vmatpush1.bf16.msra.mxu0 %v5410
    %5662 = vmatprep.subr.bf16.mxu0 %v5403
    %5663 = vmatpush1.bf16.msra.mxu0 %v5402
    %5664 = vmatprep.subr.bf16.mxu0 %v5395
    %5665 = vmatpush1.bf16.msra.mxu0 %v5394
    %5666 = vmatprep.subr.bf16.mxu0 %v5515
    %5667 = vmatpush2.bf16.msra.mxu0 %v5514
    %5668 = vmatprep.subr.bf16.mxu0 %v5507
    %5669 = vmatpush2.bf16.msra.mxu0 %v5506
    %5670 = vmatprep.subr.bf16.mxu0 %v5499
    %5671 = vmatpush2.bf16.msra.mxu0 %v5498
    %5672 = vmatprep.subr.bf16.mxu0 %v5491
    %5673 = vmatpush2.bf16.msra.mxu0 %v5490
    %5674 = vmatprep.subr.bf16.mxu0 %v5483
    %5675 = vmatpush2.bf16.msra.mxu0 %v5482
    %5676 = vmatprep.subr.bf16.mxu0 %v5475
    %5677 = vmatpush2.bf16.msra.mxu0 %v5474
    %5678 = vmatprep.subr.bf16.mxu0 %v5467
    %5679 = vmatpush2.bf16.msra.mxu0 %v5466
    %5680 = vmatprep.subr.bf16.mxu0 %v5459
    %5681 = vmatpush2.bf16.msra.mxu0 %v5458
    %5682 = vmatprep.mubr.bf16.mxu0 %v4721
    %5683 = vmatmul.mubr.bf16.gmra.mxu0 %v4720
    %v5684 = vpop.f32.mrf.mxu0
    %v5685 = vadd.f32 0.0, %v5684
    %v5686 = vpop.f32.mrf.mxu0
    %v5687 = vadd.f32 0.0, %v5686
    %v5688 = vpop.f32.mrf.mxu0
    %v5689 = vpop.f32.mrf.mxu0
    %5690 = vdwg.mxu0
    %5691 = vmatprep.subr.bf16.mxu0 %v5453
    %5692 = vmatpush1.bf16.msra.mxu0 %v5452
    %5693 = vmatprep.subr.bf16.mxu0 %v5445
    %5694 = vmatpush1.bf16.msra.mxu0 %v5444
    %5695 = vmatprep.subr.bf16.mxu0 %v5437
    %5696 = vmatpush1.bf16.msra.mxu0 %v5436
    %5697 = vmatprep.subr.bf16.mxu0 %v5429
    %5698 = vmatpush1.bf16.msra.mxu0 %v5428
    %5699 = vmatprep.subr.bf16.mxu0 %v5421
    %5700 = vmatpush1.bf16.msra.mxu0 %v5420
    %5701 = vmatprep.subr.bf16.mxu0 %v5413
    %5702 = vmatpush1.bf16.msra.mxu0 %v5412
    %5703 = vmatprep.subr.bf16.mxu0 %v5405
    %5704 = vmatpush1.bf16.msra.mxu0 %v5404
    %5705 = vmatprep.subr.bf16.mxu0 %v5397
    %5706 = vmatpush1.bf16.msra.mxu0 %v5396
    %5707 = vmatprep.subr.bf16.mxu0 %v5517
    %5708 = vmatpush2.bf16.msra.mxu0 %v5516
    %5709 = vmatprep.subr.bf16.mxu0 %v5509
    %5710 = vmatpush2.bf16.msra.mxu0 %v5508
    %5711 = vmatprep.subr.bf16.mxu0 %v5501
    %5712 = vmatpush2.bf16.msra.mxu0 %v5500
    %5713 = vmatprep.subr.bf16.mxu0 %v5493
    %5714 = vmatpush2.bf16.msra.mxu0 %v5492
    %5715 = vmatprep.subr.bf16.mxu0 %v5485
    %5716 = vmatpush2.bf16.msra.mxu0 %v5484
    %5717 = vmatprep.subr.bf16.mxu0 %v5477
    %5718 = vmatpush2.bf16.msra.mxu0 %v5476
    %5719 = vmatprep.subr.bf16.mxu0 %v5469
    %5720 = vmatpush2.bf16.msra.mxu0 %v5468
    %5721 = vmatprep.subr.bf16.mxu0 %v5461
    %5722 = vmatpush2.bf16.msra.mxu0 %v5460
    %5723 = vmatprep.mubr.bf16.mxu0 %v4721
    %5724 = vmatmul.mubr.bf16.gmra.mxu0 %v4720
    %v5725 = vpop.f32.mrf.mxu0
    %v5726 = vadd.f32 0.0, %v5725
    %v5727 = vpop.f32.mrf.mxu0
    %v5728 = vadd.f32 0.0, %v5727
    %v5729 = vpop.f32.mrf.mxu0
    %v5730 = vpop.f32.mrf.mxu0
    %5731 = vdwg.mxu0
    %5732 = vmatprep.subr.bf16.mxu0 %v5455
    %5733 = vmatpush1.bf16.msra.mxu0 %v5454
    %5734 = vmatprep.subr.bf16.mxu0 %v5447
    %5735 = vmatpush1.bf16.msra.mxu0 %v5446
    %5736 = vmatprep.subr.bf16.mxu0 %v5439
    %5737 = vmatpush1.bf16.msra.mxu0 %v5438
    %5738 = vmatprep.subr.bf16.mxu0 %v5431
    %5739 = vmatpush1.bf16.msra.mxu0 %v5430
    %5740 = vmatprep.subr.bf16.mxu0 %v5423
    %5741 = vmatpush1.bf16.msra.mxu0 %v5422
    %5742 = vmatprep.subr.bf16.mxu0 %v5415
    %5743 = vmatpush1.bf16.msra.mxu0 %v5414
    %5744 = vmatprep.subr.bf16.mxu0 %v5407
    %5745 = vmatpush1.bf16.msra.mxu0 %v5406
    %5746 = vmatprep.subr.bf16.mxu0 %v5399
    %5747 = vmatpush1.bf16.msra.mxu0 %v5398
    %5748 = vmatprep.subr.bf16.mxu0 %v5519
    %5749 = vmatpush2.bf16.msra.mxu0 %v5518
    %5750 = vmatprep.subr.bf16.mxu0 %v5511
    %5751 = vmatpush2.bf16.msra.mxu0 %v5510
    %5752 = vmatprep.subr.bf16.mxu0 %v5503
    %5753 = vmatpush2.bf16.msra.mxu0 %v5502
    %5754 = vmatprep.subr.bf16.mxu0 %v5495
    %5755 = vmatpush2.bf16.msra.mxu0 %v5494
    %5756 = vmatprep.subr.bf16.mxu0 %v5487
    %5757 = vmatpush2.bf16.msra.mxu0 %v5486
    %5758 = vmatprep.subr.bf16.mxu0 %v5479
    %5759 = vmatpush2.bf16.msra.mxu0 %v5478
    %5760 = vmatprep.subr.bf16.mxu0 %v5471
    %5761 = vmatpush2.bf16.msra.mxu0 %v5470
    %5762 = vmatprep.subr.bf16.mxu0 %v5463
    %5763 = vmatpush2.bf16.msra.mxu0 %v5462
    %5764 = vmatprep.mubr.bf16.mxu0 %v4721
    %5765 = vmatmul.mubr.bf16.gmra.mxu0 %v4720
    %v5766 = vpop.f32.mrf.mxu0
    %v5767 = vadd.f32 0.0, %v5766
    %v5768 = vpop.f32.mrf.mxu0
    %v5769 = vadd.f32 0.0, %v5768
    %v5770 = vpop.f32.mrf.mxu0
    %v5771 = vpop.f32.mrf.mxu0
    %5772 = vdwg.mxu0
    %5773 = vmatprep.subr.bf16.mxu0 %v5457
    %5774 = vmatpush1.bf16.msra.mxu0 %v5456
    %5775 = vmatprep.subr.bf16.mxu0 %v5449
    %5776 = vmatpush1.bf16.msra.mxu0 %v5448
    %5777 = vmatprep.subr.bf16.mxu0 %v5441
    %5778 = vmatpush1.bf16.msra.mxu0 %v5440
    %5779 = vmatprep.subr.bf16.mxu0 %v5433
    %5780 = vmatpush1.bf16.msra.mxu0 %v5432
    %5781 = vmatprep.subr.bf16.mxu0 %v5425
    %5782 = vmatpush1.bf16.msra.mxu0 %v5424
    %5783 = vmatprep.subr.bf16.mxu0 %v5417
    %5784 = vmatpush1.bf16.msra.mxu0 %v5416
    %5785 = vmatprep.subr.bf16.mxu0 %v5409
    %5786 = vmatpush1.bf16.msra.mxu0 %v5408
    %5787 = vmatprep.subr.bf16.mxu0 %v5401
    %5788 = vmatpush1.bf16.msra.mxu0 %v5400
    %5789 = vmatprep.subr.bf16.mxu0 %v5521
    %5790 = vmatpush2.bf16.msra.mxu0 %v5520
    %5791 = vmatprep.subr.bf16.mxu0 %v5513
    %5792 = vmatpush2.bf16.msra.mxu0 %v5512
    %5793 = vmatprep.subr.bf16.mxu0 %v5505
    %5794 = vmatpush2.bf16.msra.mxu0 %v5504
    %5795 = vmatprep.subr.bf16.mxu0 %v5497
    %5796 = vmatpush2.bf16.msra.mxu0 %v5496
    %5797 = vmatprep.subr.bf16.mxu0 %v5489
    %5798 = vmatpush2.bf16.msra.mxu0 %v5488
    %5799 = vmatprep.subr.bf16.mxu0 %v5481
    %5800 = vmatpush2.bf16.msra.mxu0 %v5480
    %5801 = vmatprep.subr.bf16.mxu0 %v5473
    %5802 = vmatpush2.bf16.msra.mxu0 %v5472
    %5803 = vmatprep.subr.bf16.mxu0 %v5465
    %5804 = vmatpush2.bf16.msra.mxu0 %v5464
    %5805 = vmatprep.mubr.bf16.mxu0 %v4721
    %5806 = vmatmul.mubr.bf16.gmra.mxu0 %v4720
    %v5807 = vpop.f32.mrf.mxu0
    %v5808 = vadd.f32 0.0, %v5807
    %v5809 = vpop.f32.mrf.mxu0
    %v5810 = vadd.f32 0.0, %v5809
    %v5811 = vpop.f32.mrf.mxu0
    %v5812 = vpop.f32.mrf.mxu0
    %5813 = vdwg.mxu0
    %v5942 = vunpack.c.l.b16 %v4740
    %v5943 = vunpack.c.h.b16 %v4740
    %v5944 = vunpack.c.l.b16 %v4741
    %v5945 = vunpack.c.h.b16 %v4741
    %v5946 = vunpack.c.l.b16 %v4742
    %v5947 = vunpack.c.h.b16 %v4742
    %v5948 = vunpack.c.l.b16 %v4743
    %v5949 = vunpack.c.h.b16 %v4743
    %v5950 = vunpack.c.l.b16 %v4744
    %v5951 = vunpack.c.h.b16 %v4744
    %v5952 = vunpack.c.l.b16 %v4745
    %v5953 = vunpack.c.h.b16 %v4745
    %v5954 = vunpack.c.l.b16 %v4746
    %v5955 = vunpack.c.h.b16 %v4746
    %v5956 = vunpack.c.l.b16 %v4747
    %v5957 = vunpack.c.h.b16 %v4747
    %v5958 = vunpack.c.l.b16 %v4748
    %v5959 = vunpack.c.h.b16 %v4748
    %v5960 = vunpack.c.l.b16 %v4749
    %v5961 = vunpack.c.h.b16 %v4749
    %v5962 = vunpack.c.l.b16 %v4750
    %v5963 = vunpack.c.h.b16 %v4750
    %v5964 = vunpack.c.l.b16 %v4751
    %v5965 = vunpack.c.h.b16 %v4751
    %v5966 = vunpack.c.l.b16 %v4752
    %v5967 = vunpack.c.h.b16 %v4752
    %v5968 = vunpack.c.l.b16 %v4753
    %v5969 = vunpack.c.h.b16 %v4753
    %v5970 = vunpack.c.l.b16 %v4754
    %v5971 = vunpack.c.h.b16 %v4754
    %v5972 = vunpack.c.l.b16 %v4755
    %v5973 = vunpack.c.h.b16 %v4755
    %v5974 = vunpack.c.l.b16 %v4756
    %v5975 = vunpack.c.h.b16 %v4756
    %v5976 = vunpack.c.l.b16 %v4757
    %v5977 = vunpack.c.h.b16 %v4757
    %v5978 = vunpack.c.l.b16 %v4758
    %v5979 = vunpack.c.h.b16 %v4758
    %v5980 = vunpack.c.l.b16 %v4759
    %v5981 = vunpack.c.h.b16 %v4759
    %v5982 = vunpack.c.l.b16 %v4760
    %v5983 = vunpack.c.h.b16 %v4760
    %v5984 = vunpack.c.l.b16 %v4761
    %v5985 = vunpack.c.h.b16 %v4761
    %v5986 = vunpack.c.l.b16 %v4762
    %v5987 = vunpack.c.h.b16 %v4762
    %v5988 = vunpack.c.l.b16 %v4763
    %v5989 = vunpack.c.h.b16 %v4763
    %v5990 = vunpack.c.l.b16 %v4764
    %v5991 = vunpack.c.h.b16 %v4764
    %v5992 = vunpack.c.l.b16 %v4765
    %v5993 = vunpack.c.h.b16 %v4765
    %v5994 = vunpack.c.l.b16 %v4766
    %v5995 = vunpack.c.h.b16 %v4766
    %v5996 = vunpack.c.l.b16 %v4767
    %v5997 = vunpack.c.h.b16 %v4767
    %v5998 = vunpack.c.l.b16 %v4768
    %v5999 = vunpack.c.h.b16 %v4768
    %v6000 = vunpack.c.l.b16 %v4769
    %v6001 = vunpack.c.h.b16 %v4769
    %v6002 = vunpack.c.l.b16 %v4770
    %v6003 = vunpack.c.h.b16 %v4770
    %v6004 = vunpack.c.l.b16 %v4771
    %v6005 = vunpack.c.h.b16 %v4771
    %v6006 = vunpack.c.l.b16 %v4772
    %v6007 = vunpack.c.h.b16 %v4772
    %v6008 = vunpack.c.l.b16 %v4773
    %v6009 = vunpack.c.h.b16 %v4773
    %v6010 = vunpack.c.l.b16 %v4774
    %v6011 = vunpack.c.h.b16 %v4774
    %v6012 = vunpack.c.l.b16 %v4775
    %v6013 = vunpack.c.h.b16 %v4775
    %v6014 = vunpack.c.l.b16 %v4776
    %v6015 = vunpack.c.h.b16 %v4776
    %v6016 = vunpack.c.l.b16 %v4777
    %v6017 = vunpack.c.h.b16 %v4777
    %v6018 = vunpack.c.l.b16 %v4778
    %v6019 = vunpack.c.h.b16 %v4778
    %v6020 = vunpack.c.l.b16 %v4779
    %v6021 = vunpack.c.h.b16 %v4779
    %v6022 = vunpack.c.l.b16 %v4780
    %v6023 = vunpack.c.h.b16 %v4780
    %v6024 = vunpack.c.l.b16 %v4781
    %v6025 = vunpack.c.h.b16 %v4781
    %v6026 = vunpack.c.l.b16 %v4782
    %v6027 = vunpack.c.h.b16 %v4782
    %v6028 = vunpack.c.l.b16 %v4783
    %v6029 = vunpack.c.h.b16 %v4783
    %v6030 = vunpack.c.l.b16 %v4784
    %v6031 = vunpack.c.h.b16 %v4784
    %v6032 = vunpack.c.l.b16 %v4785
    %v6033 = vunpack.c.h.b16 %v4785
    %v6034 = vunpack.c.l.b16 %v4786
    %v6035 = vunpack.c.h.b16 %v4786
    %v6036 = vunpack.c.l.b16 %v4787
    %v6037 = vunpack.c.h.b16 %v4787
    %v6038 = vunpack.c.l.b16 %v4788
    %v6039 = vunpack.c.h.b16 %v4788
    %v6040 = vunpack.c.l.b16 %v4789
    %v6041 = vunpack.c.h.b16 %v4789
    %v6042 = vunpack.c.l.b16 %v4790
    %v6043 = vunpack.c.h.b16 %v4790
    %v6044 = vunpack.c.l.b16 %v4791
    %v6045 = vunpack.c.h.b16 %v4791
    %v6046 = vunpack.c.l.b16 %v4792
    %v6047 = vunpack.c.h.b16 %v4792
    %v6048 = vunpack.c.l.b16 %v4793
    %v6049 = vunpack.c.h.b16 %v4793
    %v6050 = vunpack.c.l.b16 %v4794
    %v6051 = vunpack.c.h.b16 %v4794
    %v6052 = vunpack.c.l.b16 %v4795
    %v6053 = vunpack.c.h.b16 %v4795
    %v6054 = vunpack.c.l.b16 %v4796
    %v6055 = vunpack.c.h.b16 %v4796
    %v6056 = vunpack.c.l.b16 %v4797
    %v6057 = vunpack.c.h.b16 %v4797
    %v6058 = vunpack.c.l.b16 %v4798
    %v6059 = vunpack.c.h.b16 %v4798
    %v6060 = vunpack.c.l.b16 %v4799
    %v6061 = vunpack.c.h.b16 %v4799
    %v6062 = vunpack.c.l.b16 %v4800
    %v6063 = vunpack.c.h.b16 %v4800
    %v6064 = vunpack.c.l.b16 %v4801
    %v6065 = vunpack.c.h.b16 %v4801
    %v6066 = vunpack.c.l.b16 %v4802
    %v6067 = vunpack.c.h.b16 %v4802
    %v6068 = vunpack.c.l.b16 %v4803
    %v6069 = vunpack.c.h.b16 %v4803
    %v6070 = vunpack.c.l.b16 %v4804
    %v6071 = vunpack.c.h.b16 %v4804
    %v6072 = vunpack.c.l.b16 %v4805
    %v6073 = vunpack.c.h.b16 %v4805
    %v6074 = vunpack.c.l.b16 %v4806
    %v6075 = vunpack.c.h.b16 %v4806
    %v6076 = vunpack.c.l.b16 %v4807
    %v6077 = vunpack.c.h.b16 %v4807
    %v6078 = vunpack.c.l.b16 %v4808
    %v6079 = vunpack.c.h.b16 %v4808
    %v6080 = vunpack.c.l.b16 %v4809
    %v6081 = vunpack.c.h.b16 %v4809
    %v6082 = vunpack.c.l.b16 %v4810
    %v6083 = vunpack.c.h.b16 %v4810
    %v6084 = vunpack.c.l.b16 %v4811
    %v6085 = vunpack.c.h.b16 %v4811
    %v6086 = vunpack.c.l.b16 %v4812
    %v6087 = vunpack.c.h.b16 %v4812
    %v6088 = vunpack.c.l.b16 %v4813
    %v6089 = vunpack.c.h.b16 %v4813
    %v6090 = vunpack.c.l.b16 %v4814
    %v6091 = vunpack.c.h.b16 %v4814
    %v6092 = vunpack.c.l.b16 %v4815
    %v6093 = vunpack.c.h.b16 %v4815
    %v6094 = vunpack.c.l.b16 %v4816
    %v6095 = vunpack.c.h.b16 %v4816
    %v6096 = vunpack.c.l.b16 %v4817
    %v6097 = vunpack.c.h.b16 %v4817
    %v6098 = vunpack.c.l.b16 %v4818
    %v6099 = vunpack.c.h.b16 %v4818
    %v6100 = vunpack.c.l.b16 %v4819
    %v6101 = vunpack.c.h.b16 %v4819
    %v6102 = vunpack.c.l.b16 %v4820
    %v6103 = vunpack.c.h.b16 %v4820
    %v6104 = vunpack.c.l.b16 %v4821
    %v6105 = vunpack.c.h.b16 %v4821
    %v6106 = vunpack.c.l.b16 %v4822
    %v6107 = vunpack.c.h.b16 %v4822
    %v6108 = vunpack.c.l.b16 %v4823
    %v6109 = vunpack.c.h.b16 %v4823
    %v6110 = vunpack.c.l.b16 %v4824
    %v6111 = vunpack.c.h.b16 %v4824
    %v6112 = vunpack.c.l.b16 %v4825
    %v6113 = vunpack.c.h.b16 %v4825
    %v6114 = vunpack.c.l.b16 %v4826
    %v6115 = vunpack.c.h.b16 %v4826
    %v6116 = vunpack.c.l.b16 %v4827
    %v6117 = vunpack.c.h.b16 %v4827
    %v6118 = vunpack.c.l.b16 %v4828
    %v6119 = vunpack.c.h.b16 %v4828
    %v6120 = vunpack.c.l.b16 %v4829
    %v6121 = vunpack.c.h.b16 %v4829
    %v6122 = vunpack.c.l.b16 %v4830
    %v6123 = vunpack.c.h.b16 %v4830
    %v6124 = vunpack.c.l.b16 %v4831
    %v6125 = vunpack.c.h.b16 %v4831
    %v6126 = vunpack.c.l.b16 %v4832
    %v6127 = vunpack.c.h.b16 %v4832
    %v6128 = vunpack.c.l.b16 %v4833
    %v6129 = vunpack.c.h.b16 %v4833
    %v6130 = vunpack.c.l.b16 %v4834
    %v6131 = vunpack.c.h.b16 %v4834
    %v6132 = vunpack.c.l.b16 %v4835
    %v6133 = vunpack.c.h.b16 %v4835
    %v6134 = vunpack.c.l.b16 %v4836
    %v6135 = vunpack.c.h.b16 %v4836
    %v6136 = vunpack.c.l.b16 %v4837
    %v6137 = vunpack.c.h.b16 %v4837
    %v6138 = vunpack.c.l.b16 %v4838
    %v6139 = vunpack.c.h.b16 %v4838
    %v6140 = vunpack.c.l.b16 %v4839
    %v6141 = vunpack.c.h.b16 %v4839
    %v6142 = vunpack.c.l.b16 %v4840
    %v6143 = vunpack.c.h.b16 %v4840
    %v6144 = vunpack.c.l.b16 %v4841
    %v6145 = vunpack.c.h.b16 %v4841
    %v6146 = vunpack.c.l.b16 %v4842
    %v6147 = vunpack.c.h.b16 %v4842
    %v6148 = vunpack.c.l.b16 %v4843
    %v6149 = vunpack.c.h.b16 %v4843
    %v6150 = vunpack.c.l.b16 %v4844
    %v6151 = vunpack.c.h.b16 %v4844
    %v6152 = vunpack.c.l.b16 %v4845
    %v6153 = vunpack.c.h.b16 %v4845
    %v6154 = vunpack.c.l.b16 %v4846
    %v6155 = vunpack.c.h.b16 %v4846
    %v6156 = vunpack.c.l.b16 %v4847
    %v6157 = vunpack.c.h.b16 %v4847
    %v6158 = vunpack.c.l.b16 %v4848
    %v6159 = vunpack.c.h.b16 %v4848
    %v6160 = vunpack.c.l.b16 %v4849
    %v6161 = vunpack.c.h.b16 %v4849
    %v6162 = vunpack.c.l.b16 %v4850
    %v6163 = vunpack.c.h.b16 %v4850
    %v6164 = vunpack.c.l.b16 %v4851
    %v6165 = vunpack.c.h.b16 %v4851
    %v6166 = vunpack.c.l.b16 %v4852
    %v6167 = vunpack.c.h.b16 %v4852
    %v6168 = vunpack.c.l.b16 %v4853
    %v6169 = vunpack.c.h.b16 %v4853
    %v6170 = vunpack.c.l.b16 %v4854
    %v6171 = vunpack.c.h.b16 %v4854
    %v6172 = vunpack.c.l.b16 %v4855
    %v6173 = vunpack.c.h.b16 %v4855
    %v6174 = vunpack.c.l.b16 %v4856
    %v6175 = vunpack.c.h.b16 %v4856
    %v6176 = vunpack.c.l.b16 %v4857
    %v6177 = vunpack.c.h.b16 %v4857
    %v6178 = vunpack.c.l.b16 %v4858
    %v6179 = vunpack.c.h.b16 %v4858
    %v6180 = vunpack.c.l.b16 %v4859
    %v6181 = vunpack.c.h.b16 %v4859
    %v6182 = vunpack.c.l.b16 %v4860
    %v6183 = vunpack.c.h.b16 %v4860
    %v6184 = vunpack.c.l.b16 %v4861
    %v6185 = vunpack.c.h.b16 %v4861
    %v6186 = vunpack.c.l.b16 %v4862
    %v6187 = vunpack.c.h.b16 %v4862
    %v6188 = vunpack.c.l.b16 %v4863
    %v6189 = vunpack.c.h.b16 %v4863
    %v6190 = vunpack.c.l.b16 %v4864
    %v6191 = vunpack.c.h.b16 %v4864
    %v6192 = vunpack.c.l.b16 %v4865
    %v6193 = vunpack.c.h.b16 %v4865
    %v6194 = vunpack.c.l.b16 %v4866
    %v6195 = vunpack.c.h.b16 %v4866
    %v6196 = vunpack.c.l.b16 %v4867
    %v6197 = vunpack.c.h.b16 %v4867
    %v6198 = vpack.c.b16 %v5950, %v5942
    %v6199 = vpack.c.b16 %v5951, %v5943
    %v6200 = vpack.c.b16 %v5952, %v5944
    %v6201 = vpack.c.b16 %v5953, %v5945
    %v6202 = vpack.c.b16 %v5954, %v5946
    %v6203 = vpack.c.b16 %v5955, %v5947
    %v6204 = vpack.c.b16 %v5956, %v5948
    %v6205 = vpack.c.b16 %v5957, %v5949
    %v6206 = vpack.c.b16 %v5966, %v5958
    %v6207 = vpack.c.b16 %v5967, %v5959
    %v6208 = vpack.c.b16 %v5968, %v5960
    %v6209 = vpack.c.b16 %v5969, %v5961
    %v6210 = vpack.c.b16 %v5970, %v5962
    %v6211 = vpack.c.b16 %v5971, %v5963
    %v6212 = vpack.c.b16 %v5972, %v5964
    %v6213 = vpack.c.b16 %v5973, %v5965
    %v6214 = vpack.c.b16 %v5982, %v5974
    %v6215 = vpack.c.b16 %v5983, %v5975
    %v6216 = vpack.c.b16 %v5984, %v5976
    %v6217 = vpack.c.b16 %v5985, %v5977
    %v6218 = vpack.c.b16 %v5986, %v5978
    %v6219 = vpack.c.b16 %v5987, %v5979
    %v6220 = vpack.c.b16 %v5988, %v5980
    %v6221 = vpack.c.b16 %v5989, %v5981
    %v6222 = vpack.c.b16 %v5998, %v5990
    %v6223 = vpack.c.b16 %v5999, %v5991
    %v6224 = vpack.c.b16 %v6000, %v5992
    %v6225 = vpack.c.b16 %v6001, %v5993
    %v6226 = vpack.c.b16 %v6002, %v5994
    %v6227 = vpack.c.b16 %v6003, %v5995
    %v6228 = vpack.c.b16 %v6004, %v5996
    %v6229 = vpack.c.b16 %v6005, %v5997
    %v6230 = vpack.c.b16 %v6014, %v6006
    %v6231 = vpack.c.b16 %v6015, %v6007
    %v6232 = vpack.c.b16 %v6016, %v6008
    %v6233 = vpack.c.b16 %v6017, %v6009
    %v6234 = vpack.c.b16 %v6018, %v6010
    %v6235 = vpack.c.b16 %v6019, %v6011
    %v6236 = vpack.c.b16 %v6020, %v6012
    %v6237 = vpack.c.b16 %v6021, %v6013
    %v6238 = vpack.c.b16 %v6030, %v6022
    %v6239 = vpack.c.b16 %v6031, %v6023
    %v6240 = vpack.c.b16 %v6032, %v6024
    %v6241 = vpack.c.b16 %v6033, %v6025
    %v6242 = vpack.c.b16 %v6034, %v6026
    %v6243 = vpack.c.b16 %v6035, %v6027
    %v6244 = vpack.c.b16 %v6036, %v6028
    %v6245 = vpack.c.b16 %v6037, %v6029
    %v6246 = vpack.c.b16 %v6046, %v6038
    %v6247 = vpack.c.b16 %v6047, %v6039
    %v6248 = vpack.c.b16 %v6048, %v6040
    %v6249 = vpack.c.b16 %v6049, %v6041
    %v6250 = vpack.c.b16 %v6050, %v6042
    %v6251 = vpack.c.b16 %v6051, %v6043
    %v6252 = vpack.c.b16 %v6052, %v6044
    %v6253 = vpack.c.b16 %v6053, %v6045
    %v6254 = vpack.c.b16 %v6062, %v6054
    %v6255 = vpack.c.b16 %v6063, %v6055
    %v6256 = vpack.c.b16 %v6064, %v6056
    %v6257 = vpack.c.b16 %v6065, %v6057
    %v6258 = vpack.c.b16 %v6066, %v6058
    %v6259 = vpack.c.b16 %v6067, %v6059
    %v6260 = vpack.c.b16 %v6068, %v6060
    %v6261 = vpack.c.b16 %v6069, %v6061
    %v6262 = vpack.c.b16 %v6078, %v6070
    %v6263 = vpack.c.b16 %v6079, %v6071
    %v6264 = vpack.c.b16 %v6080, %v6072
    %v6265 = vpack.c.b16 %v6081, %v6073
    %v6266 = vpack.c.b16 %v6082, %v6074
    %v6267 = vpack.c.b16 %v6083, %v6075
    %v6268 = vpack.c.b16 %v6084, %v6076
    %v6269 = vpack.c.b16 %v6085, %v6077
    %v6270 = vpack.c.b16 %v6094, %v6086
    %v6271 = vpack.c.b16 %v6095, %v6087
    %v6272 = vpack.c.b16 %v6096, %v6088
    %v6273 = vpack.c.b16 %v6097, %v6089
    %v6274 = vpack.c.b16 %v6098, %v6090
    %v6275 = vpack.c.b16 %v6099, %v6091
    %v6276 = vpack.c.b16 %v6100, %v6092
    %v6277 = vpack.c.b16 %v6101, %v6093
    %v6278 = vpack.c.b16 %v6110, %v6102
    %v6279 = vpack.c.b16 %v6111, %v6103
    %v6280 = vpack.c.b16 %v6112, %v6104
    %v6281 = vpack.c.b16 %v6113, %v6105
    %v6282 = vpack.c.b16 %v6114, %v6106
    %v6283 = vpack.c.b16 %v6115, %v6107
    %v6284 = vpack.c.b16 %v6116, %v6108
    %v6285 = vpack.c.b16 %v6117, %v6109
    %v6286 = vpack.c.b16 %v6126, %v6118
    %v6287 = vpack.c.b16 %v6127, %v6119
    %v6288 = vpack.c.b16 %v6128, %v6120
    %v6289 = vpack.c.b16 %v6129, %v6121
    %v6290 = vpack.c.b16 %v6130, %v6122
    %v6291 = vpack.c.b16 %v6131, %v6123
    %v6292 = vpack.c.b16 %v6132, %v6124
    %v6293 = vpack.c.b16 %v6133, %v6125
    %v6294 = vpack.c.b16 %v6142, %v6134
    %v6295 = vpack.c.b16 %v6143, %v6135
    %v6296 = vpack.c.b16 %v6144, %v6136
    %v6297 = vpack.c.b16 %v6145, %v6137
    %v6298 = vpack.c.b16 %v6146, %v6138
    %v6299 = vpack.c.b16 %v6147, %v6139
    %v6300 = vpack.c.b16 %v6148, %v6140
    %v6301 = vpack.c.b16 %v6149, %v6141
    %v6302 = vpack.c.b16 %v6158, %v6150
    %v6303 = vpack.c.b16 %v6159, %v6151
    %v6304 = vpack.c.b16 %v6160, %v6152
    %v6305 = vpack.c.b16 %v6161, %v6153
    %v6306 = vpack.c.b16 %v6162, %v6154
    %v6307 = vpack.c.b16 %v6163, %v6155
    %v6308 = vpack.c.b16 %v6164, %v6156
    %v6309 = vpack.c.b16 %v6165, %v6157
    %v6310 = vpack.c.b16 %v6174, %v6166
    %v6311 = vpack.c.b16 %v6175, %v6167
    %v6312 = vpack.c.b16 %v6176, %v6168
    %v6313 = vpack.c.b16 %v6177, %v6169
    %v6314 = vpack.c.b16 %v6178, %v6170
    %v6315 = vpack.c.b16 %v6179, %v6171
    %v6316 = vpack.c.b16 %v6180, %v6172
    %v6317 = vpack.c.b16 %v6181, %v6173
    %v6318 = vpack.c.b16 %v6190, %v6182
    %v6319 = vpack.c.b16 %v6191, %v6183
    %v6320 = vpack.c.b16 %v6192, %v6184
    %v6321 = vpack.c.b16 %v6193, %v6185
    %v6322 = vpack.c.b16 %v6194, %v6186
    %v6323 = vpack.c.b16 %v6195, %v6187
    %v6324 = vpack.c.b16 %v6196, %v6188
    %v6325 = vpack.c.b16 %v6197, %v6189
    %6454 = vmatprep.subr.bf16.mxu0 %v6255
    %6455 = vmatpush1.bf16.msra.mxu0 %v6254
    %6456 = vmatprep.subr.bf16.mxu0 %v6247
    %6457 = vmatpush1.bf16.msra.mxu0 %v6246
    %6458 = vmatprep.subr.bf16.mxu0 %v6239
    %6459 = vmatpush1.bf16.msra.mxu0 %v6238
    %6460 = vmatprep.subr.bf16.mxu0 %v6231
    %6461 = vmatpush1.bf16.msra.mxu0 %v6230
    %6462 = vmatprep.subr.bf16.mxu0 %v6223
    %6463 = vmatpush1.bf16.msra.mxu0 %v6222
    %6464 = vmatprep.subr.bf16.mxu0 %v6215
    %6465 = vmatpush1.bf16.msra.mxu0 %v6214
    %6466 = vmatprep.subr.bf16.mxu0 %v6207
    %6467 = vmatpush1.bf16.msra.mxu0 %v6206
    %6468 = vmatprep.subr.bf16.mxu0 %v6199
    %6469 = vmatpush1.bf16.msra.mxu0 %v6198
    %6470 = vmatprep.subr.bf16.mxu0 %v6319
    %6471 = vmatpush2.bf16.msra.mxu0 %v6318
    %6472 = vmatprep.subr.bf16.mxu0 %v6311
    %6473 = vmatpush2.bf16.msra.mxu0 %v6310
    %6474 = vmatprep.subr.bf16.mxu0 %v6303
    %6475 = vmatpush2.bf16.msra.mxu0 %v6302
    %6476 = vmatprep.subr.bf16.mxu0 %v6295
    %6477 = vmatpush2.bf16.msra.mxu0 %v6294
    %6478 = vmatprep.subr.bf16.mxu0 %v6287
    %6479 = vmatpush2.bf16.msra.mxu0 %v6286
    %6480 = vmatprep.subr.bf16.mxu0 %v6279
    %6481 = vmatpush2.bf16.msra.mxu0 %v6278
    %6482 = vmatprep.subr.bf16.mxu0 %v6271
    %6483 = vmatpush2.bf16.msra.mxu0 %v6270
    %6484 = vmatprep.subr.bf16.mxu0 %v6263
    %6485 = vmatpush2.bf16.msra.mxu0 %v6262
    %6486 = vmatprep.mubr.bf16.mxu0 %v4719
    %6487 = vmatmul.mubr.bf16.gmra.mxu0 %v4718
    %v6488 = vpop.f32.mrf.mxu0
    %v6489 = vadd.f32 %v5685, %v6488
    %v6490 = vpop.f32.mrf.mxu0
    %v6491 = vadd.f32 %v5687, %v6490
    %v6492 = vpop.f32.mrf.mxu0
    %v6493 = vpop.f32.mrf.mxu0
    %6494 = vdwg.mxu0
    %6495 = vmatprep.subr.bf16.mxu0 %v6257
    %6496 = vmatpush1.bf16.msra.mxu0 %v6256
    %6497 = vmatprep.subr.bf16.mxu0 %v6249
    %6498 = vmatpush1.bf16.msra.mxu0 %v6248
    %6499 = vmatprep.subr.bf16.mxu0 %v6241
    %6500 = vmatpush1.bf16.msra.mxu0 %v6240
    %6501 = vmatprep.subr.bf16.mxu0 %v6233
    %6502 = vmatpush1.bf16.msra.mxu0 %v6232
    %6503 = vmatprep.subr.bf16.mxu0 %v6225
    %6504 = vmatpush1.bf16.msra.mxu0 %v6224
    %6505 = vmatprep.subr.bf16.mxu0 %v6217
    %6506 = vmatpush1.bf16.msra.mxu0 %v6216
    %6507 = vmatprep.subr.bf16.mxu0 %v6209
    %6508 = vmatpush1.bf16.msra.mxu0 %v6208
    %6509 = vmatprep.subr.bf16.mxu0 %v6201
    %6510 = vmatpush1.bf16.msra.mxu0 %v6200
    %6511 = vmatprep.subr.bf16.mxu0 %v6321
    %6512 = vmatpush2.bf16.msra.mxu0 %v6320
    %6513 = vmatprep.subr.bf16.mxu0 %v6313
    %6514 = vmatpush2.bf16.msra.mxu0 %v6312
    %6515 = vmatprep.subr.bf16.mxu0 %v6305
    %6516 = vmatpush2.bf16.msra.mxu0 %v6304
    %6517 = vmatprep.subr.bf16.mxu0 %v6297
    %6518 = vmatpush2.bf16.msra.mxu0 %v6296
    %6519 = vmatprep.subr.bf16.mxu0 %v6289
    %6520 = vmatpush2.bf16.msra.mxu0 %v6288
    %6521 = vmatprep.subr.bf16.mxu0 %v6281
    %6522 = vmatpush2.bf16.msra.mxu0 %v6280
    %6523 = vmatprep.subr.bf16.mxu0 %v6273
    %6524 = vmatpush2.bf16.msra.mxu0 %v6272
    %6525 = vmatprep.subr.bf16.mxu0 %v6265
    %6526 = vmatpush2.bf16.msra.mxu0 %v6264
    %6527 = vmatprep.mubr.bf16.mxu0 %v4719
    %6528 = vmatmul.mubr.bf16.gmra.mxu0 %v4718
    %v6529 = vpop.f32.mrf.mxu0
    %v6530 = vadd.f32 %v5726, %v6529
    %v6531 = vpop.f32.mrf.mxu0
    %v6532 = vadd.f32 %v5728, %v6531
    %v6533 = vpop.f32.mrf.mxu0
    %v6534 = vpop.f32.mrf.mxu0
    %6535 = vdwg.mxu0
    %6536 = vmatprep.subr.bf16.mxu0 %v6259
    %6537 = vmatpush1.bf16.msra.mxu0 %v6258
    %6538 = vmatprep.subr.bf16.mxu0 %v6251
    %6539 = vmatpush1.bf16.msra.mxu0 %v6250
    %6540 = vmatprep.subr.bf16.mxu0 %v6243
    %6541 = vmatpush1.bf16.msra.mxu0 %v6242
    %6542 = vmatprep.subr.bf16.mxu0 %v6235
    %6543 = vmatpush1.bf16.msra.mxu0 %v6234
    %6544 = vmatprep.subr.bf16.mxu0 %v6227
    %6545 = vmatpush1.bf16.msra.mxu0 %v6226
    %6546 = vmatprep.subr.bf16.mxu0 %v6219
    %6547 = vmatpush1.bf16.msra.mxu0 %v6218
    %6548 = vmatprep.subr.bf16.mxu0 %v6211
    %6549 = vmatpush1.bf16.msra.mxu0 %v6210
    %6550 = vmatprep.subr.bf16.mxu0 %v6203
    %6551 = vmatpush1.bf16.msra.mxu0 %v6202
    %6552 = vmatprep.subr.bf16.mxu0 %v6323
    %6553 = vmatpush2.bf16.msra.mxu0 %v6322
    %6554 = vmatprep.subr.bf16.mxu0 %v6315
    %6555 = vmatpush2.bf16.msra.mxu0 %v6314
    %6556 = vmatprep.subr.bf16.mxu0 %v6307
    %6557 = vmatpush2.bf16.msra.mxu0 %v6306
    %6558 = vmatprep.subr.bf16.mxu0 %v6299
    %6559 = vmatpush2.bf16.msra.mxu0 %v6298
    %6560 = vmatprep.subr.bf16.mxu0 %v6291
    %6561 = vmatpush2.bf16.msra.mxu0 %v6290
    %6562 = vmatprep.subr.bf16.mxu0 %v6283
    %6563 = vmatpush2.bf16.msra.mxu0 %v6282
    %6564 = vmatprep.subr.bf16.mxu0 %v6275
    %6565 = vmatpush2.bf16.msra.mxu0 %v6274
    %6566 = vmatprep.subr.bf16.mxu0 %v6267
    %6567 = vmatpush2.bf16.msra.mxu0 %v6266
    %6568 = vmatprep.mubr.bf16.mxu0 %v4719
    %6569 = vmatmul.mubr.bf16.gmra.mxu0 %v4718
    %v6570 = vpop.f32.mrf.mxu0
    %v6571 = vadd.f32 %v5767, %v6570
    %v6572 = vpop.f32.mrf.mxu0
    %v6573 = vadd.f32 %v5769, %v6572
    %v6574 = vpop.f32.mrf.mxu0
    %v6575 = vpop.f32.mrf.mxu0
    %6576 = vdwg.mxu0
    %6577 = vmatprep.subr.bf16.mxu0 %v6261
    %6578 = vmatpush1.bf16.msra.mxu0 %v6260
    %6579 = vmatprep.subr.bf16.mxu0 %v6253
    %6580 = vmatpush1.bf16.msra.mxu0 %v6252
    %6581 = vmatprep.subr.bf16.mxu0 %v6245
    %6582 = vmatpush1.bf16.msra.mxu0 %v6244
    %6583 = vmatprep.subr.bf16.mxu0 %v6237
    %6584 = vmatpush1.bf16.msra.mxu0 %v6236
    %6585 = vmatprep.subr.bf16.mxu0 %v6229
    %6586 = vmatpush1.bf16.msra.mxu0 %v6228
    %6587 = vmatprep.subr.bf16.mxu0 %v6221
    %6588 = vmatpush1.bf16.msra.mxu0 %v6220
    %6589 = vmatprep.subr.bf16.mxu0 %v6213
    %6590 = vmatpush1.bf16.msra.mxu0 %v6212
    %6591 = vmatprep.subr.bf16.mxu0 %v6205
    %6592 = vmatpush1.bf16.msra.mxu0 %v6204
    %6593 = vmatprep.subr.bf16.mxu0 %v6325
    %6594 = vmatpush2.bf16.msra.mxu0 %v6324
    %6595 = vmatprep.subr.bf16.mxu0 %v6317
    %6596 = vmatpush2.bf16.msra.mxu0 %v6316
    %6597 = vmatprep.subr.bf16.mxu0 %v6309
    %6598 = vmatpush2.bf16.msra.mxu0 %v6308
    %6599 = vmatprep.subr.bf16.mxu0 %v6301
    %6600 = vmatpush2.bf16.msra.mxu0 %v6300
    %6601 = vmatprep.subr.bf16.mxu0 %v6293
    %6602 = vmatpush2.bf16.msra.mxu0 %v6292
    %6603 = vmatprep.subr.bf16.mxu0 %v6285
    %6604 = vmatpush2.bf16.msra.mxu0 %v6284
    %6605 = vmatprep.subr.bf16.mxu0 %v6277
    %6606 = vmatpush2.bf16.msra.mxu0 %v6276
    %6607 = vmatprep.subr.bf16.mxu0 %v6269
    %6608 = vmatpush2.bf16.msra.mxu0 %v6268
    %6609 = vmatprep.mubr.bf16.mxu0 %v4719
    %6610 = vmatmul.mubr.bf16.gmra.mxu0 %v4718
    %v6611 = vpop.f32.mrf.mxu0
    %v6612 = vadd.f32 %v5808, %v6611
    %v6613 = vpop.f32.mrf.mxu0
    %v6614 = vadd.f32 %v5810, %v6613
    %v6615 = vpop.f32.mrf.mxu0
    %v6616 = vpop.f32.mrf.mxu0
    %6617 = vdwg.mxu0
    %s6618 = sshll.u32 %s826, 4
    %6619 = dma.done [#allocation4], %s6618
    %s6620 = scalar_lea.hbm %s12, 49152
    // Predicated region
    $region106: #{tpu_custom_call.1} parent=1 // pred_check
      _
    $region107: #{tpu_custom_call.1} parent=1 // pred_check_branch
      %6622 = sbr.rel target = $region109
    $region108: #{tpu_custom_call.1} parent=1 // pred_region
      %6623 = sst [smem:[#allocation22]] [#allocation37]
      %6624 = sst [smem:[#allocation23]] [#allocation36]
    $region109: #{tpu_custom_call.1} parent=1 // pred_fallthru
      _
    %6626 = shalt.err (0)
    %s6628 = sshll.u32 %s830, 4
    %s6629 = int_to_ptr.vmem [resolvable:$true] %s6628
    %6631 = dma.hbm_to_vmem [thread:$0]  %s6620, 16384, %s6629, %s831
    %v6632 = vld [vmem:[#allocation3] sm:$0xff]
    %v6633 = vld [vmem:[#allocation3 + $0x8] sm:$0xff]
    %v6634 = vld [vmem:[#allocation3 + $0x10] sm:$0xff]
    %v6635 = vld [vmem:[#allocation3 + $0x18] sm:$0xff]
    %v6636 = vld [vmem:[#allocation3 + $0x20] sm:$0xff]
    %v6637 = vld [vmem:[#allocation3 + $0x28] sm:$0xff]
    %v6638 = vld [vmem:[#allocation3 + $0x30] sm:$0xff]
    %v6639 = vld [vmem:[#allocation3 + $0x38] sm:$0xff]
    %v6640 = vld [vmem:[#allocation3 + $0x40] sm:$0xff]
    %v6641 = vld [vmem:[#allocation3 + $0x48] sm:$0xff]
    %v6642 = vld [vmem:[#allocation3 + $0x50] sm:$0xff]
    %v6643 = vld [vmem:[#allocation3 + $0x58] sm:$0xff]
    %v6644 = vld [vmem:[#allocation3 + $0x60] sm:$0xff]
    %v6645 = vld [vmem:[#allocation3 + $0x68] sm:$0xff]
    %v6646 = vld [vmem:[#allocation3 + $0x70] sm:$0xff]
    %v6647 = vld [vmem:[#allocation3 + $0x78] sm:$0xff]
    %v6648 = vld [vmem:[#allocation3 + $0x80] sm:$0xff]
    %v6649 = vld [vmem:[#allocation3 + $0x88] sm:$0xff]
    %v6650 = vld [vmem:[#allocation3 + $0x90] sm:$0xff]
    %v6651 = vld [vmem:[#allocation3 + $0x98] sm:$0xff]
    %v6652 = vld [vmem:[#allocation3 + $0xa0] sm:$0xff]
    %v6653 = vld [vmem:[#allocation3 + $0xa8] sm:$0xff]
    %v6654 = vld [vmem:[#allocation3 + $0xb0] sm:$0xff]
    %v6655 = vld [vmem:[#allocation3 + $0xb8] sm:$0xff]
    %v6656 = vld [vmem:[#allocation3 + $0xc0] sm:$0xff]
    %v6657 = vld [vmem:[#allocation3 + $0xc8] sm:$0xff]
    %v6658 = vld [vmem:[#allocation3 + $0xd0] sm:$0xff]
    %v6659 = vld [vmem:[#allocation3 + $0xd8] sm:$0xff]
    %v6660 = vld [vmem:[#allocation3 + $0xe0] sm:$0xff]
    %v6661 = vld [vmem:[#allocation3 + $0xe8] sm:$0xff]
    %v6662 = vld [vmem:[#allocation3 + $0xf0] sm:$0xff]
    %v6663 = vld [vmem:[#allocation3 + $0xf8] sm:$0xff]
    %v6664 = vld [vmem:[#allocation3 + $0x100] sm:$0xff]
    %v6665 = vld [vmem:[#allocation3 + $0x108] sm:$0xff]
    %v6666 = vld [vmem:[#allocation3 + $0x110] sm:$0xff]
    %v6667 = vld [vmem:[#allocation3 + $0x118] sm:$0xff]
    %v6668 = vld [vmem:[#allocation3 + $0x120] sm:$0xff]
    %v6669 = vld [vmem:[#allocation3 + $0x128] sm:$0xff]
    %v6670 = vld [vmem:[#allocation3 + $0x130] sm:$0xff]
    %v6671 = vld [vmem:[#allocation3 + $0x138] sm:$0xff]
    %v6672 = vld [vmem:[#allocation3 + $0x140] sm:$0xff]
    %v6673 = vld [vmem:[#allocation3 + $0x148] sm:$0xff]
    %v6674 = vld [vmem:[#allocation3 + $0x150] sm:$0xff]
    %v6675 = vld [vmem:[#allocation3 + $0x158] sm:$0xff]
    %v6676 = vld [vmem:[#allocation3 + $0x160] sm:$0xff]
    %v6677 = vld [vmem:[#allocation3 + $0x168] sm:$0xff]
    %v6678 = vld [vmem:[#allocation3 + $0x170] sm:$0xff]
    %v6679 = vld [vmem:[#allocation3 + $0x178] sm:$0xff]
    %v6680 = vld [vmem:[#allocation3 + $0x180] sm:$0xff]
    %v6681 = vld [vmem:[#allocation3 + $0x188] sm:$0xff]
    %v6682 = vld [vmem:[#allocation3 + $0x190] sm:$0xff]
    %v6683 = vld [vmem:[#allocation3 + $0x198] sm:$0xff]
    %v6684 = vld [vmem:[#allocation3 + $0x1a0] sm:$0xff]
    %v6685 = vld [vmem:[#allocation3 + $0x1a8] sm:$0xff]
    %v6686 = vld [vmem:[#allocation3 + $0x1b0] sm:$0xff]
    %v6687 = vld [vmem:[#allocation3 + $0x1b8] sm:$0xff]
    %v6688 = vld [vmem:[#allocation3 + $0x1c0] sm:$0xff]
    %v6689 = vld [vmem:[#allocation3 + $0x1c8] sm:$0xff]
    %v6690 = vld [vmem:[#allocation3 + $0x1d0] sm:$0xff]
    %v6691 = vld [vmem:[#allocation3 + $0x1d8] sm:$0xff]
    %v6692 = vld [vmem:[#allocation3 + $0x1e0] sm:$0xff]
    %v6693 = vld [vmem:[#allocation3 + $0x1e8] sm:$0xff]
    %v6694 = vld [vmem:[#allocation3 + $0x1f0] sm:$0xff]
    %v6695 = vld [vmem:[#allocation3 + $0x1f8] sm:$0xff]
    %v6696 = vld [vmem:[#allocation3 + $0x200] sm:$0xff]
    %v6697 = vld [vmem:[#allocation3 + $0x208] sm:$0xff]
    %v6698 = vld [vmem:[#allocation3 + $0x210] sm:$0xff]
    %v6699 = vld [vmem:[#allocation3 + $0x218] sm:$0xff]
    %v6700 = vld [vmem:[#allocation3 + $0x220] sm:$0xff]
    %v6701 = vld [vmem:[#allocation3 + $0x228] sm:$0xff]
    %v6702 = vld [vmem:[#allocation3 + $0x230] sm:$0xff]
    %v6703 = vld [vmem:[#allocation3 + $0x238] sm:$0xff]
    %v6704 = vld [vmem:[#allocation3 + $0x240] sm:$0xff]
    %v6705 = vld [vmem:[#allocation3 + $0x248] sm:$0xff]
    %v6706 = vld [vmem:[#allocation3 + $0x250] sm:$0xff]
    %v6707 = vld [vmem:[#allocation3 + $0x258] sm:$0xff]
    %v6708 = vld [vmem:[#allocation3 + $0x260] sm:$0xff]
    %v6709 = vld [vmem:[#allocation3 + $0x268] sm:$0xff]
    %v6710 = vld [vmem:[#allocation3 + $0x270] sm:$0xff]
    %v6711 = vld [vmem:[#allocation3 + $0x278] sm:$0xff]
    %v6712 = vld [vmem:[#allocation3 + $0x280] sm:$0xff]
    %v6713 = vld [vmem:[#allocation3 + $0x288] sm:$0xff]
    %v6714 = vld [vmem:[#allocation3 + $0x290] sm:$0xff]
    %v6715 = vld [vmem:[#allocation3 + $0x298] sm:$0xff]
    %v6716 = vld [vmem:[#allocation3 + $0x2a0] sm:$0xff]
    %v6717 = vld [vmem:[#allocation3 + $0x2a8] sm:$0xff]
    %v6718 = vld [vmem:[#allocation3 + $0x2b0] sm:$0xff]
    %v6719 = vld [vmem:[#allocation3 + $0x2b8] sm:$0xff]
    %v6720 = vld [vmem:[#allocation3 + $0x2c0] sm:$0xff]
    %v6721 = vld [vmem:[#allocation3 + $0x2c8] sm:$0xff]
    %v6722 = vld [vmem:[#allocation3 + $0x2d0] sm:$0xff]
    %v6723 = vld [vmem:[#allocation3 + $0x2d8] sm:$0xff]
    %v6724 = vld [vmem:[#allocation3 + $0x2e0] sm:$0xff]
    %v6725 = vld [vmem:[#allocation3 + $0x2e8] sm:$0xff]
    %v6726 = vld [vmem:[#allocation3 + $0x2f0] sm:$0xff]
    %v6727 = vld [vmem:[#allocation3 + $0x2f8] sm:$0xff]
    %v6728 = vld [vmem:[#allocation3 + $0x300] sm:$0xff]
    %v6729 = vld [vmem:[#allocation3 + $0x308] sm:$0xff]
    %v6730 = vld [vmem:[#allocation3 + $0x310] sm:$0xff]
    %v6731 = vld [vmem:[#allocation3 + $0x318] sm:$0xff]
    %v6732 = vld [vmem:[#allocation3 + $0x320] sm:$0xff]
    %v6733 = vld [vmem:[#allocation3 + $0x328] sm:$0xff]
    %v6734 = vld [vmem:[#allocation3 + $0x330] sm:$0xff]
    %v6735 = vld [vmem:[#allocation3 + $0x338] sm:$0xff]
    %v6736 = vld [vmem:[#allocation3 + $0x340] sm:$0xff]
    %v6737 = vld [vmem:[#allocation3 + $0x348] sm:$0xff]
    %v6738 = vld [vmem:[#allocation3 + $0x350] sm:$0xff]
    %v6739 = vld [vmem:[#allocation3 + $0x358] sm:$0xff]
    %v6740 = vld [vmem:[#allocation3 + $0x360] sm:$0xff]
    %v6741 = vld [vmem:[#allocation3 + $0x368] sm:$0xff]
    %v6742 = vld [vmem:[#allocation3 + $0x370] sm:$0xff]
    %v6743 = vld [vmem:[#allocation3 + $0x378] sm:$0xff]
    %v6744 = vld [vmem:[#allocation3 + $0x380] sm:$0xff]
    %v6745 = vld [vmem:[#allocation3 + $0x388] sm:$0xff]
    %v6746 = vld [vmem:[#allocation3 + $0x390] sm:$0xff]
    %v6747 = vld [vmem:[#allocation3 + $0x398] sm:$0xff]
    %v6748 = vld [vmem:[#allocation3 + $0x3a0] sm:$0xff]
    %v6749 = vld [vmem:[#allocation3 + $0x3a8] sm:$0xff]
    %v6750 = vld [vmem:[#allocation3 + $0x3b0] sm:$0xff]
    %v6751 = vld [vmem:[#allocation3 + $0x3b8] sm:$0xff]
    %v6752 = vld [vmem:[#allocation3 + $0x3c0] sm:$0xff]
    %v6753 = vld [vmem:[#allocation3 + $0x3c8] sm:$0xff]
    %v6754 = vld [vmem:[#allocation3 + $0x3d0] sm:$0xff]
    %v6755 = vld [vmem:[#allocation3 + $0x3d8] sm:$0xff]
    %v6756 = vld [vmem:[#allocation3 + $0x3e0] sm:$0xff]
    %v6757 = vld [vmem:[#allocation3 + $0x3e8] sm:$0xff]
    %v6758 = vld [vmem:[#allocation3 + $0x3f0] sm:$0xff]
    %v6759 = vld [vmem:[#allocation3 + $0x3f8] sm:$0xff]
    %v6888 = vunpack.c.l.b16 %v6632
    %v6889 = vunpack.c.h.b16 %v6632
    %v6890 = vunpack.c.l.b16 %v6633
    %v6891 = vunpack.c.h.b16 %v6633
    %v6892 = vunpack.c.l.b16 %v6634
    %v6893 = vunpack.c.h.b16 %v6634
    %v6894 = vunpack.c.l.b16 %v6635
    %v6895 = vunpack.c.h.b16 %v6635
    %v6896 = vunpack.c.l.b16 %v6636
    %v6897 = vunpack.c.h.b16 %v6636
    %v6898 = vunpack.c.l.b16 %v6637
    %v6899 = vunpack.c.h.b16 %v6637
    %v6900 = vunpack.c.l.b16 %v6638
    %v6901 = vunpack.c.h.b16 %v6638
    %v6902 = vunpack.c.l.b16 %v6639
    %v6903 = vunpack.c.h.b16 %v6639
    %v6904 = vunpack.c.l.b16 %v6640
    %v6905 = vunpack.c.h.b16 %v6640
    %v6906 = vunpack.c.l.b16 %v6641
    %v6907 = vunpack.c.h.b16 %v6641
    %v6908 = vunpack.c.l.b16 %v6642
    %v6909 = vunpack.c.h.b16 %v6642
    %v6910 = vunpack.c.l.b16 %v6643
    %v6911 = vunpack.c.h.b16 %v6643
    %v6912 = vunpack.c.l.b16 %v6644
    %v6913 = vunpack.c.h.b16 %v6644
    %v6914 = vunpack.c.l.b16 %v6645
    %v6915 = vunpack.c.h.b16 %v6645
    %v6916 = vunpack.c.l.b16 %v6646
    %v6917 = vunpack.c.h.b16 %v6646
    %v6918 = vunpack.c.l.b16 %v6647
    %v6919 = vunpack.c.h.b16 %v6647
    %v6920 = vunpack.c.l.b16 %v6648
    %v6921 = vunpack.c.h.b16 %v6648
    %v6922 = vunpack.c.l.b16 %v6649
    %v6923 = vunpack.c.h.b16 %v6649
    %v6924 = vunpack.c.l.b16 %v6650
    %v6925 = vunpack.c.h.b16 %v6650
    %v6926 = vunpack.c.l.b16 %v6651
    %v6927 = vunpack.c.h.b16 %v6651
    %v6928 = vunpack.c.l.b16 %v6652
    %v6929 = vunpack.c.h.b16 %v6652
    %v6930 = vunpack.c.l.b16 %v6653
    %v6931 = vunpack.c.h.b16 %v6653
    %v6932 = vunpack.c.l.b16 %v6654
    %v6933 = vunpack.c.h.b16 %v6654
    %v6934 = vunpack.c.l.b16 %v6655
    %v6935 = vunpack.c.h.b16 %v6655
    %v6936 = vunpack.c.l.b16 %v6656
    %v6937 = vunpack.c.h.b16 %v6656
    %v6938 = vunpack.c.l.b16 %v6657
    %v6939 = vunpack.c.h.b16 %v6657
    %v6940 = vunpack.c.l.b16 %v6658
    %v6941 = vunpack.c.h.b16 %v6658
    %v6942 = vunpack.c.l.b16 %v6659
    %v6943 = vunpack.c.h.b16 %v6659
    %v6944 = vunpack.c.l.b16 %v6660
    %v6945 = vunpack.c.h.b16 %v6660
    %v6946 = vunpack.c.l.b16 %v6661
    %v6947 = vunpack.c.h.b16 %v6661
    %v6948 = vunpack.c.l.b16 %v6662
    %v6949 = vunpack.c.h.b16 %v6662
    %v6950 = vunpack.c.l.b16 %v6663
    %v6951 = vunpack.c.h.b16 %v6663
    %v6952 = vunpack.c.l.b16 %v6664
    %v6953 = vunpack.c.h.b16 %v6664
    %v6954 = vunpack.c.l.b16 %v6665
    %v6955 = vunpack.c.h.b16 %v6665
    %v6956 = vunpack.c.l.b16 %v6666
    %v6957 = vunpack.c.h.b16 %v6666
    %v6958 = vunpack.c.l.b16 %v6667
    %v6959 = vunpack.c.h.b16 %v6667
    %v6960 = vunpack.c.l.b16 %v6668
    %v6961 = vunpack.c.h.b16 %v6668
    %v6962 = vunpack.c.l.b16 %v6669
    %v6963 = vunpack.c.h.b16 %v6669
    %v6964 = vunpack.c.l.b16 %v6670
    %v6965 = vunpack.c.h.b16 %v6670
    %v6966 = vunpack.c.l.b16 %v6671
    %v6967 = vunpack.c.h.b16 %v6671
    %v6968 = vunpack.c.l.b16 %v6672
    %v6969 = vunpack.c.h.b16 %v6672
    %v6970 = vunpack.c.l.b16 %v6673
    %v6971 = vunpack.c.h.b16 %v6673
    %v6972 = vunpack.c.l.b16 %v6674
    %v6973 = vunpack.c.h.b16 %v6674
    %v6974 = vunpack.c.l.b16 %v6675
    %v6975 = vunpack.c.h.b16 %v6675
    %v6976 = vunpack.c.l.b16 %v6676
    %v6977 = vunpack.c.h.b16 %v6676
    %v6978 = vunpack.c.l.b16 %v6677
    %v6979 = vunpack.c.h.b16 %v6677
    %v6980 = vunpack.c.l.b16 %v6678
    %v6981 = vunpack.c.h.b16 %v6678
    %v6982 = vunpack.c.l.b16 %v6679
    %v6983 = vunpack.c.h.b16 %v6679
    %v6984 = vunpack.c.l.b16 %v6680
    %v6985 = vunpack.c.h.b16 %v6680
    %v6986 = vunpack.c.l.b16 %v6681
    %v6987 = vunpack.c.h.b16 %v6681
    %v6988 = vunpack.c.l.b16 %v6682
    %v6989 = vunpack.c.h.b16 %v6682
    %v6990 = vunpack.c.l.b16 %v6683
    %v6991 = vunpack.c.h.b16 %v6683
    %v6992 = vunpack.c.l.b16 %v6684
    %v6993 = vunpack.c.h.b16 %v6684
    %v6994 = vunpack.c.l.b16 %v6685
    %v6995 = vunpack.c.h.b16 %v6685
    %v6996 = vunpack.c.l.b16 %v6686
    %v6997 = vunpack.c.h.b16 %v6686
    %v6998 = vunpack.c.l.b16 %v6687
    %v6999 = vunpack.c.h.b16 %v6687
    %v7000 = vunpack.c.l.b16 %v6688
    %v7001 = vunpack.c.h.b16 %v6688
    %v7002 = vunpack.c.l.b16 %v6689
    %v7003 = vunpack.c.h.b16 %v6689
    %v7004 = vunpack.c.l.b16 %v6690
    %v7005 = vunpack.c.h.b16 %v6690
    %v7006 = vunpack.c.l.b16 %v6691
    %v7007 = vunpack.c.h.b16 %v6691
    %v7008 = vunpack.c.l.b16 %v6692
    %v7009 = vunpack.c.h.b16 %v6692
    %v7010 = vunpack.c.l.b16 %v6693
    %v7011 = vunpack.c.h.b16 %v6693
    %v7012 = vunpack.c.l.b16 %v6694
    %v7013 = vunpack.c.h.b16 %v6694
    %v7014 = vunpack.c.l.b16 %v6695
    %v7015 = vunpack.c.h.b16 %v6695
    %v7016 = vunpack.c.l.b16 %v6696
    %v7017 = vunpack.c.h.b16 %v6696
    %v7018 = vunpack.c.l.b16 %v6697
    %v7019 = vunpack.c.h.b16 %v6697
    %v7020 = vunpack.c.l.b16 %v6698
    %v7021 = vunpack.c.h.b16 %v6698
    %v7022 = vunpack.c.l.b16 %v6699
    %v7023 = vunpack.c.h.b16 %v6699
    %v7024 = vunpack.c.l.b16 %v6700
    %v7025 = vunpack.c.h.b16 %v6700
    %v7026 = vunpack.c.l.b16 %v6701
    %v7027 = vunpack.c.h.b16 %v6701
    %v7028 = vunpack.c.l.b16 %v6702
    %v7029 = vunpack.c.h.b16 %v6702
    %v7030 = vunpack.c.l.b16 %v6703
    %v7031 = vunpack.c.h.b16 %v6703
    %v7032 = vunpack.c.l.b16 %v6704
    %v7033 = vunpack.c.h.b16 %v6704
    %v7034 = vunpack.c.l.b16 %v6705
    %v7035 = vunpack.c.h.b16 %v6705
    %v7036 = vunpack.c.l.b16 %v6706
    %v7037 = vunpack.c.h.b16 %v6706
    %v7038 = vunpack.c.l.b16 %v6707
    %v7039 = vunpack.c.h.b16 %v6707
    %v7040 = vunpack.c.l.b16 %v6708
    %v7041 = vunpack.c.h.b16 %v6708
    %v7042 = vunpack.c.l.b16 %v6709
    %v7043 = vunpack.c.h.b16 %v6709
    %v7044 = vunpack.c.l.b16 %v6710
    %v7045 = vunpack.c.h.b16 %v6710
    %v7046 = vunpack.c.l.b16 %v6711
    %v7047 = vunpack.c.h.b16 %v6711
    %v7048 = vunpack.c.l.b16 %v6712
    %v7049 = vunpack.c.h.b16 %v6712
    %v7050 = vunpack.c.l.b16 %v6713
    %v7051 = vunpack.c.h.b16 %v6713
    %v7052 = vunpack.c.l.b16 %v6714
    %v7053 = vunpack.c.h.b16 %v6714
    %v7054 = vunpack.c.l.b16 %v6715
    %v7055 = vunpack.c.h.b16 %v6715
    %v7056 = vunpack.c.l.b16 %v6716
    %v7057 = vunpack.c.h.b16 %v6716
    %v7058 = vunpack.c.l.b16 %v6717
    %v7059 = vunpack.c.h.b16 %v6717
    %v7060 = vunpack.c.l.b16 %v6718
    %v7061 = vunpack.c.h.b16 %v6718
    %v7062 = vunpack.c.l.b16 %v6719
    %v7063 = vunpack.c.h.b16 %v6719
    %v7064 = vunpack.c.l.b16 %v6720
    %v7065 = vunpack.c.h.b16 %v6720
    %v7066 = vunpack.c.l.b16 %v6721
    %v7067 = vunpack.c.h.b16 %v6721
    %v7068 = vunpack.c.l.b16 %v6722
    %v7069 = vunpack.c.h.b16 %v6722
    %v7070 = vunpack.c.l.b16 %v6723
    %v7071 = vunpack.c.h.b16 %v6723
    %v7072 = vunpack.c.l.b16 %v6724
    %v7073 = vunpack.c.h.b16 %v6724
    %v7074 = vunpack.c.l.b16 %v6725
    %v7075 = vunpack.c.h.b16 %v6725
    %v7076 = vunpack.c.l.b16 %v6726
    %v7077 = vunpack.c.h.b16 %v6726
    %v7078 = vunpack.c.l.b16 %v6727
    %v7079 = vunpack.c.h.b16 %v6727
    %v7080 = vunpack.c.l.b16 %v6728
    %v7081 = vunpack.c.h.b16 %v6728
    %v7082 = vunpack.c.l.b16 %v6729
    %v7083 = vunpack.c.h.b16 %v6729
    %v7084 = vunpack.c.l.b16 %v6730
    %v7085 = vunpack.c.h.b16 %v6730
    %v7086 = vunpack.c.l.b16 %v6731
    %v7087 = vunpack.c.h.b16 %v6731
    %v7088 = vunpack.c.l.b16 %v6732
    %v7089 = vunpack.c.h.b16 %v6732
    %v7090 = vunpack.c.l.b16 %v6733
    %v7091 = vunpack.c.h.b16 %v6733
    %v7092 = vunpack.c.l.b16 %v6734
    %v7093 = vunpack.c.h.b16 %v6734
    %v7094 = vunpack.c.l.b16 %v6735
    %v7095 = vunpack.c.h.b16 %v6735
    %v7096 = vunpack.c.l.b16 %v6736
    %v7097 = vunpack.c.h.b16 %v6736
    %v7098 = vunpack.c.l.b16 %v6737
    %v7099 = vunpack.c.h.b16 %v6737
    %v7100 = vunpack.c.l.b16 %v6738
    %v7101 = vunpack.c.h.b16 %v6738
    %v7102 = vunpack.c.l.b16 %v6739
    %v7103 = vunpack.c.h.b16 %v6739
    %v7104 = vunpack.c.l.b16 %v6740
    %v7105 = vunpack.c.h.b16 %v6740
    %v7106 = vunpack.c.l.b16 %v6741
    %v7107 = vunpack.c.h.b16 %v6741
    %v7108 = vunpack.c.l.b16 %v6742
    %v7109 = vunpack.c.h.b16 %v6742
    %v7110 = vunpack.c.l.b16 %v6743
    %v7111 = vunpack.c.h.b16 %v6743
    %v7112 = vunpack.c.l.b16 %v6744
    %v7113 = vunpack.c.h.b16 %v6744
    %v7114 = vunpack.c.l.b16 %v6745
    %v7115 = vunpack.c.h.b16 %v6745
    %v7116 = vunpack.c.l.b16 %v6746
    %v7117 = vunpack.c.h.b16 %v6746
    %v7118 = vunpack.c.l.b16 %v6747
    %v7119 = vunpack.c.h.b16 %v6747
    %v7120 = vunpack.c.l.b16 %v6748
    %v7121 = vunpack.c.h.b16 %v6748
    %v7122 = vunpack.c.l.b16 %v6749
    %v7123 = vunpack.c.h.b16 %v6749
    %v7124 = vunpack.c.l.b16 %v6750
    %v7125 = vunpack.c.h.b16 %v6750
    %v7126 = vunpack.c.l.b16 %v6751
    %v7127 = vunpack.c.h.b16 %v6751
    %v7128 = vunpack.c.l.b16 %v6752
    %v7129 = vunpack.c.h.b16 %v6752
    %v7130 = vunpack.c.l.b16 %v6753
    %v7131 = vunpack.c.h.b16 %v6753
    %v7132 = vunpack.c.l.b16 %v6754
    %v7133 = vunpack.c.h.b16 %v6754
    %v7134 = vunpack.c.l.b16 %v6755
    %v7135 = vunpack.c.h.b16 %v6755
    %v7136 = vunpack.c.l.b16 %v6756
    %v7137 = vunpack.c.h.b16 %v6756
    %v7138 = vunpack.c.l.b16 %v6757
    %v7139 = vunpack.c.h.b16 %v6757
    %v7140 = vunpack.c.l.b16 %v6758
    %v7141 = vunpack.c.h.b16 %v6758
    %v7142 = vunpack.c.l.b16 %v6759
    %v7143 = vunpack.c.h.b16 %v6759
    %v7144 = vpack.c.b16 %v6896, %v6888
    %v7145 = vpack.c.b16 %v6897, %v6889
    %v7146 = vpack.c.b16 %v6898, %v6890
    %v7147 = vpack.c.b16 %v6899, %v6891
    %v7148 = vpack.c.b16 %v6900, %v6892
    %v7149 = vpack.c.b16 %v6901, %v6893
    %v7150 = vpack.c.b16 %v6902, %v6894
    %v7151 = vpack.c.b16 %v6903, %v6895
    %v7152 = vpack.c.b16 %v6912, %v6904
    %v7153 = vpack.c.b16 %v6913, %v6905
    %v7154 = vpack.c.b16 %v6914, %v6906
    %v7155 = vpack.c.b16 %v6915, %v6907
    %v7156 = vpack.c.b16 %v6916, %v6908
    %v7157 = vpack.c.b16 %v6917, %v6909
    %v7158 = vpack.c.b16 %v6918, %v6910
    %v7159 = vpack.c.b16 %v6919, %v6911
    %v7160 = vpack.c.b16 %v6928, %v6920
    %v7161 = vpack.c.b16 %v6929, %v6921
    %v7162 = vpack.c.b16 %v6930, %v6922
    %v7163 = vpack.c.b16 %v6931, %v6923
    %v7164 = vpack.c.b16 %v6932, %v6924
    %v7165 = vpack.c.b16 %v6933, %v6925
    %v7166 = vpack.c.b16 %v6934, %v6926
    %v7167 = vpack.c.b16 %v6935, %v6927
    %v7168 = vpack.c.b16 %v6944, %v6936
    %v7169 = vpack.c.b16 %v6945, %v6937
    %v7170 = vpack.c.b16 %v6946, %v6938
    %v7171 = vpack.c.b16 %v6947, %v6939
    %v7172 = vpack.c.b16 %v6948, %v6940
    %v7173 = vpack.c.b16 %v6949, %v6941
    %v7174 = vpack.c.b16 %v6950, %v6942
    %v7175 = vpack.c.b16 %v6951, %v6943
    %v7176 = vpack.c.b16 %v6960, %v6952
    %v7177 = vpack.c.b16 %v6961, %v6953
    %v7178 = vpack.c.b16 %v6962, %v6954
    %v7179 = vpack.c.b16 %v6963, %v6955
    %v7180 = vpack.c.b16 %v6964, %v6956
    %v7181 = vpack.c.b16 %v6965, %v6957
    %v7182 = vpack.c.b16 %v6966, %v6958
    %v7183 = vpack.c.b16 %v6967, %v6959
    %v7184 = vpack.c.b16 %v6976, %v6968
    %v7185 = vpack.c.b16 %v6977, %v6969
    %v7186 = vpack.c.b16 %v6978, %v6970
    %v7187 = vpack.c.b16 %v6979, %v6971
    %v7188 = vpack.c.b16 %v6980, %v6972
    %v7189 = vpack.c.b16 %v6981, %v6973
    %v7190 = vpack.c.b16 %v6982, %v6974
    %v7191 = vpack.c.b16 %v6983, %v6975
    %v7192 = vpack.c.b16 %v6992, %v6984
    %v7193 = vpack.c.b16 %v6993, %v6985
    %v7194 = vpack.c.b16 %v6994, %v6986
    %v7195 = vpack.c.b16 %v6995, %v6987
    %v7196 = vpack.c.b16 %v6996, %v6988
    %v7197 = vpack.c.b16 %v6997, %v6989
    %v7198 = vpack.c.b16 %v6998, %v6990
    %v7199 = vpack.c.b16 %v6999, %v6991
    %v7200 = vpack.c.b16 %v7008, %v7000
    %v7201 = vpack.c.b16 %v7009, %v7001
    %v7202 = vpack.c.b16 %v7010, %v7002
    %v7203 = vpack.c.b16 %v7011, %v7003
    %v7204 = vpack.c.b16 %v7012, %v7004
    %v7205 = vpack.c.b16 %v7013, %v7005
    %v7206 = vpack.c.b16 %v7014, %v7006
    %v7207 = vpack.c.b16 %v7015, %v7007
    %v7208 = vpack.c.b16 %v7024, %v7016
    %v7209 = vpack.c.b16 %v7025, %v7017
    %v7210 = vpack.c.b16 %v7026, %v7018
    %v7211 = vpack.c.b16 %v7027, %v7019
    %v7212 = vpack.c.b16 %v7028, %v7020
    %v7213 = vpack.c.b16 %v7029, %v7021
    %v7214 = vpack.c.b16 %v7030, %v7022
    %v7215 = vpack.c.b16 %v7031, %v7023
    %v7216 = vpack.c.b16 %v7040, %v7032
    %v7217 = vpack.c.b16 %v7041, %v7033
    %v7218 = vpack.c.b16 %v7042, %v7034
    %v7219 = vpack.c.b16 %v7043, %v7035
    %v7220 = vpack.c.b16 %v7044, %v7036
    %v7221 = vpack.c.b16 %v7045, %v7037
    %v7222 = vpack.c.b16 %v7046, %v7038
    %v7223 = vpack.c.b16 %v7047, %v7039
    %v7224 = vpack.c.b16 %v7056, %v7048
    %v7225 = vpack.c.b16 %v7057, %v7049
    %v7226 = vpack.c.b16 %v7058, %v7050
    %v7227 = vpack.c.b16 %v7059, %v7051
    %v7228 = vpack.c.b16 %v7060, %v7052
    %v7229 = vpack.c.b16 %v7061, %v7053
    %v7230 = vpack.c.b16 %v7062, %v7054
    %v7231 = vpack.c.b16 %v7063, %v7055
    %v7232 = vpack.c.b16 %v7072, %v7064
    %v7233 = vpack.c.b16 %v7073, %v7065
    %v7234 = vpack.c.b16 %v7074, %v7066
    %v7235 = vpack.c.b16 %v7075, %v7067
    %v7236 = vpack.c.b16 %v7076, %v7068
    %v7237 = vpack.c.b16 %v7077, %v7069
    %v7238 = vpack.c.b16 %v7078, %v7070
    %v7239 = vpack.c.b16 %v7079, %v7071
    %v7240 = vpack.c.b16 %v7088, %v7080
    %v7241 = vpack.c.b16 %v7089, %v7081
    %v7242 = vpack.c.b16 %v7090, %v7082
    %v7243 = vpack.c.b16 %v7091, %v7083
    %v7244 = vpack.c.b16 %v7092, %v7084
    %v7245 = vpack.c.b16 %v7093, %v7085
    %v7246 = vpack.c.b16 %v7094, %v7086
    %v7247 = vpack.c.b16 %v7095, %v7087
    %v7248 = vpack.c.b16 %v7104, %v7096
    %v7249 = vpack.c.b16 %v7105, %v7097
    %v7250 = vpack.c.b16 %v7106, %v7098
    %v7251 = vpack.c.b16 %v7107, %v7099
    %v7252 = vpack.c.b16 %v7108, %v7100
    %v7253 = vpack.c.b16 %v7109, %v7101
    %v7254 = vpack.c.b16 %v7110, %v7102
    %v7255 = vpack.c.b16 %v7111, %v7103
    %v7256 = vpack.c.b16 %v7120, %v7112
    %v7257 = vpack.c.b16 %v7121, %v7113
    %v7258 = vpack.c.b16 %v7122, %v7114
    %v7259 = vpack.c.b16 %v7123, %v7115
    %v7260 = vpack.c.b16 %v7124, %v7116
    %v7261 = vpack.c.b16 %v7125, %v7117
    %v7262 = vpack.c.b16 %v7126, %v7118
    %v7263 = vpack.c.b16 %v7127, %v7119
    %v7264 = vpack.c.b16 %v7136, %v7128
    %v7265 = vpack.c.b16 %v7137, %v7129
    %v7266 = vpack.c.b16 %v7138, %v7130
    %v7267 = vpack.c.b16 %v7139, %v7131
    %v7268 = vpack.c.b16 %v7140, %v7132
    %v7269 = vpack.c.b16 %v7141, %v7133
    %v7270 = vpack.c.b16 %v7142, %v7134
    %v7271 = vpack.c.b16 %v7143, %v7135
    %7400 = vmatprep.subr.bf16.mxu0 %v7201
    %7401 = vmatpush1.bf16.msra.mxu0 %v7200
    %7402 = vmatprep.subr.bf16.mxu0 %v7193
    %7403 = vmatpush1.bf16.msra.mxu0 %v7192
    %7404 = vmatprep.subr.bf16.mxu0 %v7185
    %7405 = vmatpush1.bf16.msra.mxu0 %v7184
    %7406 = vmatprep.subr.bf16.mxu0 %v7177
    %7407 = vmatpush1.bf16.msra.mxu0 %v7176
    %7408 = vmatprep.subr.bf16.mxu0 %v7169
    %7409 = vmatpush1.bf16.msra.mxu0 %v7168
    %7410 = vmatprep.subr.bf16.mxu0 %v7161
    %7411 = vmatpush1.bf16.msra.mxu0 %v7160
    %7412 = vmatprep.subr.bf16.mxu0 %v7153
    %7413 = vmatpush1.bf16.msra.mxu0 %v7152
    %7414 = vmatprep.subr.bf16.mxu0 %v7145
    %7415 = vmatpush1.bf16.msra.mxu0 %v7144
    %7416 = vmatprep.subr.bf16.mxu0 %v7265
    %7417 = vmatpush2.bf16.msra.mxu0 %v7264
    %7418 = vmatprep.subr.bf16.mxu0 %v7257
    %7419 = vmatpush2.bf16.msra.mxu0 %v7256
    %7420 = vmatprep.subr.bf16.mxu0 %v7249
    %7421 = vmatpush2.bf16.msra.mxu0 %v7248
    %7422 = vmatprep.subr.bf16.mxu0 %v7241
    %7423 = vmatpush2.bf16.msra.mxu0 %v7240
    %7424 = vmatprep.subr.bf16.mxu0 %v7233
    %7425 = vmatpush2.bf16.msra.mxu0 %v7232
    %7426 = vmatprep.subr.bf16.mxu0 %v7225
    %7427 = vmatpush2.bf16.msra.mxu0 %v7224
    %7428 = vmatprep.subr.bf16.mxu0 %v7217
    %7429 = vmatpush2.bf16.msra.mxu0 %v7216
    %7430 = vmatprep.subr.bf16.mxu0 %v7209
    %7431 = vmatpush2.bf16.msra.mxu0 %v7208
    %7432 = vmatprep.mubr.bf16.mxu0 %v4723
    %7433 = vmatmul.mubr.bf16.gmra.mxu0 %v4722
    %v7434 = vpop.f32.mrf.mxu0
    %v7435 = vadd.f32 0.0, %v7434
    %v7436 = vpop.f32.mrf.mxu0
    %v7437 = vadd.f32 0.0, %v7436
    %v7438 = vpop.f32.mrf.mxu0
    %v7439 = vpop.f32.mrf.mxu0
    %7440 = vdwg.mxu0
    %7441 = vmatprep.subr.bf16.mxu0 %v7203
    %7442 = vmatpush1.bf16.msra.mxu0 %v7202
    %7443 = vmatprep.subr.bf16.mxu0 %v7195
    %7444 = vmatpush1.bf16.msra.mxu0 %v7194
    %7445 = vmatprep.subr.bf16.mxu0 %v7187
    %7446 = vmatpush1.bf16.msra.mxu0 %v7186
    %7447 = vmatprep.subr.bf16.mxu0 %v7179
    %7448 = vmatpush1.bf16.msra.mxu0 %v7178
    %7449 = vmatprep.subr.bf16.mxu0 %v7171
    %7450 = vmatpush1.bf16.msra.mxu0 %v7170
    %7451 = vmatprep.subr.bf16.mxu0 %v7163
    %7452 = vmatpush1.bf16.msra.mxu0 %v7162
    %7453 = vmatprep.subr.bf16.mxu0 %v7155
    %7454 = vmatpush1.bf16.msra.mxu0 %v7154
    %7455 = vmatprep.subr.bf16.mxu0 %v7147
    %7456 = vmatpush1.bf16.msra.mxu0 %v7146
    %7457 = vmatprep.subr.bf16.mxu0 %v7267
    %7458 = vmatpush2.bf16.msra.mxu0 %v7266
    %7459 = vmatprep.subr.bf16.mxu0 %v7259
    %7460 = vmatpush2.bf16.msra.mxu0 %v7258
    %7461 = vmatprep.subr.bf16.mxu0 %v7251
    %7462 = vmatpush2.bf16.msra.mxu0 %v7250
    %7463 = vmatprep.subr.bf16.mxu0 %v7243
    %7464 = vmatpush2.bf16.msra.mxu0 %v7242
    %7465 = vmatprep.subr.bf16.mxu0 %v7235
    %7466 = vmatpush2.bf16.msra.mxu0 %v7234
    %7467 = vmatprep.subr.bf16.mxu0 %v7227
    %7468 = vmatpush2.bf16.msra.mxu0 %v7226
    %7469 = vmatprep.subr.bf16.mxu0 %v7219
    %7470 = vmatpush2.bf16.msra.mxu0 %v7218
    %7471 = vmatprep.subr.bf16.mxu0 %v7211
    %7472 = vmatpush2.bf16.msra.mxu0 %v7210
    %7473 = vmatprep.mubr.bf16.mxu0 %v4723
    %7474 = vmatmul.mubr.bf16.gmra.mxu0 %v4722
    %v7475 = vpop.f32.mrf.mxu0
    %v7476 = vadd.f32 0.0, %v7475
    %v7477 = vpop.f32.mrf.mxu0
    %v7478 = vadd.f32 0.0, %v7477
    %v7479 = vpop.f32.mrf.mxu0
    %v7480 = vpop.f32.mrf.mxu0
    %7481 = vdwg.mxu0
    %7482 = vmatprep.subr.bf16.mxu0 %v7205
    %7483 = vmatpush1.bf16.msra.mxu0 %v7204
    %7484 = vmatprep.subr.bf16.mxu0 %v7197
    %7485 = vmatpush1.bf16.msra.mxu0 %v7196
    %7486 = vmatprep.subr.bf16.mxu0 %v7189
    %7487 = vmatpush1.bf16.msra.mxu0 %v7188
    %7488 = vmatprep.subr.bf16.mxu0 %v7181
    %7489 = vmatpush1.bf16.msra.mxu0 %v7180
    %7490 = vmatprep.subr.bf16.mxu0 %v7173
    %7491 = vmatpush1.bf16.msra.mxu0 %v7172
    %7492 = vmatprep.subr.bf16.mxu0 %v7165
    %7493 = vmatpush1.bf16.msra.mxu0 %v7164
    %7494 = vmatprep.subr.bf16.mxu0 %v7157
    %7495 = vmatpush1.bf16.msra.mxu0 %v7156
    %7496 = vmatprep.subr.bf16.mxu0 %v7149
    %7497 = vmatpush1.bf16.msra.mxu0 %v7148
    %7498 = vmatprep.subr.bf16.mxu0 %v7269
    %7499 = vmatpush2.bf16.msra.mxu0 %v7268
    %7500 = vmatprep.subr.bf16.mxu0 %v7261
    %7501 = vmatpush2.bf16.msra.mxu0 %v7260
    %7502 = vmatprep.subr.bf16.mxu0 %v7253
    %7503 = vmatpush2.bf16.msra.mxu0 %v7252
    %7504 = vmatprep.subr.bf16.mxu0 %v7245
    %7505 = vmatpush2.bf16.msra.mxu0 %v7244
    %7506 = vmatprep.subr.bf16.mxu0 %v7237
    %7507 = vmatpush2.bf16.msra.mxu0 %v7236
    %7508 = vmatprep.subr.bf16.mxu0 %v7229
    %7509 = vmatpush2.bf16.msra.mxu0 %v7228
    %7510 = vmatprep.subr.bf16.mxu0 %v7221
    %7511 = vmatpush2.bf16.msra.mxu0 %v7220
    %7512 = vmatprep.subr.bf16.mxu0 %v7213
    %7513 = vmatpush2.bf16.msra.mxu0 %v7212
    %7514 = vmatprep.mubr.bf16.mxu0 %v4723
    %7515 = vmatmul.mubr.bf16.gmra.mxu0 %v4722
    %v7516 = vpop.f32.mrf.mxu0
    %v7517 = vadd.f32 0.0, %v7516
    %v7518 = vpop.f32.mrf.mxu0
    %v7519 = vadd.f32 0.0, %v7518
    %v7520 = vpop.f32.mrf.mxu0
    %v7521 = vpop.f32.mrf.mxu0
    %7522 = vdwg.mxu0
    %7523 = vmatprep.subr.bf16.mxu0 %v7207
    %7524 = vmatpush1.bf16.msra.mxu0 %v7206
    %7525 = vmatprep.subr.bf16.mxu0 %v7199
    %7526 = vmatpush1.bf16.msra.mxu0 %v7198
    %7527 = vmatprep.subr.bf16.mxu0 %v7191
    %7528 = vmatpush1.bf16.msra.mxu0 %v7190
    %7529 = vmatprep.subr.bf16.mxu0 %v7183
    %7530 = vmatpush1.bf16.msra.mxu0 %v7182
    %7531 = vmatprep.subr.bf16.mxu0 %v7175
    %7532 = vmatpush1.bf16.msra.mxu0 %v7174
    %7533 = vmatprep.subr.bf16.mxu0 %v7167
    %7534 = vmatpush1.bf16.msra.mxu0 %v7166
    %7535 = vmatprep.subr.bf16.mxu0 %v7159
    %7536 = vmatpush1.bf16.msra.mxu0 %v7158
    %7537 = vmatprep.subr.bf16.mxu0 %v7151
    %7538 = vmatpush1.bf16.msra.mxu0 %v7150
    %7539 = vmatprep.subr.bf16.mxu0 %v7271
    %7540 = vmatpush2.bf16.msra.mxu0 %v7270
    %7541 = vmatprep.subr.bf16.mxu0 %v7263
    %7542 = vmatpush2.bf16.msra.mxu0 %v7262
    %7543 = vmatprep.subr.bf16.mxu0 %v7255
    %7544 = vmatpush2.bf16.msra.mxu0 %v7254
    %7545 = vmatprep.subr.bf16.mxu0 %v7247
    %7546 = vmatpush2.bf16.msra.mxu0 %v7246
    %7547 = vmatprep.subr.bf16.mxu0 %v7239
    %7548 = vmatpush2.bf16.msra.mxu0 %v7238
    %7549 = vmatprep.subr.bf16.mxu0 %v7231
    %7550 = vmatpush2.bf16.msra.mxu0 %v7230
    %7551 = vmatprep.subr.bf16.mxu0 %v7223
    %7552 = vmatpush2.bf16.msra.mxu0 %v7222
    %7553 = vmatprep.subr.bf16.mxu0 %v7215
    %7554 = vmatpush2.bf16.msra.mxu0 %v7214
    %7555 = vmatprep.mubr.bf16.mxu0 %v4723
    %7556 = vmatmul.mubr.bf16.gmra.mxu0 %v4722
    %v7557 = vpop.f32.mrf.mxu0
    %v7558 = vadd.f32 0.0, %v7557
    %v7559 = vpop.f32.mrf.mxu0
    %v7560 = vadd.f32 0.0, %v7559
    %v7561 = vpop.f32.mrf.mxu0
    %v7562 = vpop.f32.mrf.mxu0
    %7563 = vdwg.mxu0
    %v7564 = vadd.f32 %v6489, %v7435
    %v7565 = vadd.f32 %v6491, %v7437
    %v7566 = vadd.f32 %v6530, %v7476
    %v7567 = vadd.f32 %v6532, %v7478
    %v7568 = vadd.f32 %v6571, %v7517
    %v7569 = vadd.f32 %v6573, %v7519
    %v7570 = vadd.f32 %v6612, %v7558
    %v7571 = vadd.f32 %v6614, %v7560
    %s7572 = sshll.u32 %s826, 4
    %7573 = dma.done %s831, %s7572
    %v7574 = vld [vmem:[%s830] sm:$0xff]
    %v7575 = vld [vmem:[%s830 + $0x8] sm:$0xff]
    %v7576 = vld [vmem:[%s830 + $0x10] sm:$0xff]
    %v7577 = vld [vmem:[%s830 + $0x18] sm:$0xff]
    %v7578 = vld [vmem:[%s830 + $0x20] sm:$0xff]
    %v7579 = vld [vmem:[%s830 + $0x28] sm:$0xff]
    %v7580 = vld [vmem:[%s830 + $0x30] sm:$0xff]
    %v7581 = vld [vmem:[%s830 + $0x38] sm:$0xff]
    %v7582 = vld [vmem:[%s830 + $0x40] sm:$0xff]
    %v7583 = vld [vmem:[%s830 + $0x48] sm:$0xff]
    %v7584 = vld [vmem:[%s830 + $0x50] sm:$0xff]
    %v7585 = vld [vmem:[%s830 + $0x58] sm:$0xff]
    %v7586 = vld [vmem:[%s830 + $0x60] sm:$0xff]
    %v7587 = vld [vmem:[%s830 + $0x68] sm:$0xff]
    %v7588 = vld [vmem:[%s830 + $0x70] sm:$0xff]
    %v7589 = vld [vmem:[%s830 + $0x78] sm:$0xff]
    %v7590 = vld [vmem:[%s830 + $0x80] sm:$0xff]
    %v7591 = vld [vmem:[%s830 + $0x88] sm:$0xff]
    %v7592 = vld [vmem:[%s830 + $0x90] sm:$0xff]
    %v7593 = vld [vmem:[%s830 + $0x98] sm:$0xff]
    %v7594 = vld [vmem:[%s830 + $0xa0] sm:$0xff]
    %v7595 = vld [vmem:[%s830 + $0xa8] sm:$0xff]
    %v7596 = vld [vmem:[%s830 + $0xb0] sm:$0xff]
    %v7597 = vld [vmem:[%s830 + $0xb8] sm:$0xff]
    %v7598 = vld [vmem:[%s830 + $0xc0] sm:$0xff]
    %v7599 = vld [vmem:[%s830 + $0xc8] sm:$0xff]
    %v7600 = vld [vmem:[%s830 + $0xd0] sm:$0xff]
    %v7601 = vld [vmem:[%s830 + $0xd8] sm:$0xff]
    %v7602 = vld [vmem:[%s830 + $0xe0] sm:$0xff]
    %v7603 = vld [vmem:[%s830 + $0xe8] sm:$0xff]
    %v7604 = vld [vmem:[%s830 + $0xf0] sm:$0xff]
    %v7605 = vld [vmem:[%s830 + $0xf8] sm:$0xff]
    %v7606 = vld [vmem:[%s830 + $0x100] sm:$0xff]
    %v7607 = vld [vmem:[%s830 + $0x108] sm:$0xff]
    %v7608 = vld [vmem:[%s830 + $0x110] sm:$0xff]
    %v7609 = vld [vmem:[%s830 + $0x118] sm:$0xff]
    %v7610 = vld [vmem:[%s830 + $0x120] sm:$0xff]
    %v7611 = vld [vmem:[%s830 + $0x128] sm:$0xff]
    %v7612 = vld [vmem:[%s830 + $0x130] sm:$0xff]
    %v7613 = vld [vmem:[%s830 + $0x138] sm:$0xff]
    %v7614 = vld [vmem:[%s830 + $0x140] sm:$0xff]
    %v7615 = vld [vmem:[%s830 + $0x148] sm:$0xff]
    %v7616 = vld [vmem:[%s830 + $0x150] sm:$0xff]
    %v7617 = vld [vmem:[%s830 + $0x158] sm:$0xff]
    %v7618 = vld [vmem:[%s830 + $0x160] sm:$0xff]
    %v7619 = vld [vmem:[%s830 + $0x168] sm:$0xff]
    %v7620 = vld [vmem:[%s830 + $0x170] sm:$0xff]
    %v7621 = vld [vmem:[%s830 + $0x178] sm:$0xff]
    %v7622 = vld [vmem:[%s830 + $0x180] sm:$0xff]
    %v7623 = vld [vmem:[%s830 + $0x188] sm:$0xff]
    %v7624 = vld [vmem:[%s830 + $0x190] sm:$0xff]
    %v7625 = vld [vmem:[%s830 + $0x198] sm:$0xff]
    %v7626 = vld [vmem:[%s830 + $0x1a0] sm:$0xff]
    %v7627 = vld [vmem:[%s830 + $0x1a8] sm:$0xff]
    %v7628 = vld [vmem:[%s830 + $0x1b0] sm:$0xff]
    %v7629 = vld [vmem:[%s830 + $0x1b8] sm:$0xff]
    %v7630 = vld [vmem:[%s830 + $0x1c0] sm:$0xff]
    %v7631 = vld [vmem:[%s830 + $0x1c8] sm:$0xff]
    %v7632 = vld [vmem:[%s830 + $0x1d0] sm:$0xff]
    %v7633 = vld [vmem:[%s830 + $0x1d8] sm:$0xff]
    %v7634 = vld [vmem:[%s830 + $0x1e0] sm:$0xff]
    %v7635 = vld [vmem:[%s830 + $0x1e8] sm:$0xff]
    %v7636 = vld [vmem:[%s830 + $0x1f0] sm:$0xff]
    %v7637 = vld [vmem:[%s830 + $0x1f8] sm:$0xff]
    %v7638 = vld [vmem:[%s830 + $0x200] sm:$0xff]
    %v7639 = vld [vmem:[%s830 + $0x208] sm:$0xff]
    %v7640 = vld [vmem:[%s830 + $0x210] sm:$0xff]
    %v7641 = vld [vmem:[%s830 + $0x218] sm:$0xff]
    %v7642 = vld [vmem:[%s830 + $0x220] sm:$0xff]
    %v7643 = vld [vmem:[%s830 + $0x228] sm:$0xff]
    %v7644 = vld [vmem:[%s830 + $0x230] sm:$0xff]
    %v7645 = vld [vmem:[%s830 + $0x238] sm:$0xff]
    %v7646 = vld [vmem:[%s830 + $0x240] sm:$0xff]
    %v7647 = vld [vmem:[%s830 + $0x248] sm:$0xff]
    %v7648 = vld [vmem:[%s830 + $0x250] sm:$0xff]
    %v7649 = vld [vmem:[%s830 + $0x258] sm:$0xff]
    %v7650 = vld [vmem:[%s830 + $0x260] sm:$0xff]
    %v7651 = vld [vmem:[%s830 + $0x268] sm:$0xff]
    %v7652 = vld [vmem:[%s830 + $0x270] sm:$0xff]
    %v7653 = vld [vmem:[%s830 + $0x278] sm:$0xff]
    %v7654 = vld [vmem:[%s830 + $0x280] sm:$0xff]
    %v7655 = vld [vmem:[%s830 + $0x288] sm:$0xff]
    %v7656 = vld [vmem:[%s830 + $0x290] sm:$0xff]
    %v7657 = vld [vmem:[%s830 + $0x298] sm:$0xff]
    %v7658 = vld [vmem:[%s830 + $0x2a0] sm:$0xff]
    %v7659 = vld [vmem:[%s830 + $0x2a8] sm:$0xff]
    %v7660 = vld [vmem:[%s830 + $0x2b0] sm:$0xff]
    %v7661 = vld [vmem:[%s830 + $0x2b8] sm:$0xff]
    %v7662 = vld [vmem:[%s830 + $0x2c0] sm:$0xff]
    %v7663 = vld [vmem:[%s830 + $0x2c8] sm:$0xff]
    %v7664 = vld [vmem:[%s830 + $0x2d0] sm:$0xff]
    %v7665 = vld [vmem:[%s830 + $0x2d8] sm:$0xff]
    %v7666 = vld [vmem:[%s830 + $0x2e0] sm:$0xff]
    %v7667 = vld [vmem:[%s830 + $0x2e8] sm:$0xff]
    %v7668 = vld [vmem:[%s830 + $0x2f0] sm:$0xff]
    %v7669 = vld [vmem:[%s830 + $0x2f8] sm:$0xff]
    %v7670 = vld [vmem:[%s830 + $0x300] sm:$0xff]
    %v7671 = vld [vmem:[%s830 + $0x308] sm:$0xff]
    %v7672 = vld [vmem:[%s830 + $0x310] sm:$0xff]
    %v7673 = vld [vmem:[%s830 + $0x318] sm:$0xff]
    %v7674 = vld [vmem:[%s830 + $0x320] sm:$0xff]
    %v7675 = vld [vmem:[%s830 + $0x328] sm:$0xff]
    %v7676 = vld [vmem:[%s830 + $0x330] sm:$0xff]
    %v7677 = vld [vmem:[%s830 + $0x338] sm:$0xff]
    %v7678 = vld [vmem:[%s830 + $0x340] sm:$0xff]
    %v7679 = vld [vmem:[%s830 + $0x348] sm:$0xff]
    %v7680 = vld [vmem:[%s830 + $0x350] sm:$0xff]
    %v7681 = vld [vmem:[%s830 + $0x358] sm:$0xff]
    %v7682 = vld [vmem:[%s830 + $0x360] sm:$0xff]
    %v7683 = vld [vmem:[%s830 + $0x368] sm:$0xff]
    %v7684 = vld [vmem:[%s830 + $0x370] sm:$0xff]
    %v7685 = vld [vmem:[%s830 + $0x378] sm:$0xff]
    %v7686 = vld [vmem:[%s830 + $0x380] sm:$0xff]
    %v7687 = vld [vmem:[%s830 + $0x388] sm:$0xff]
    %v7688 = vld [vmem:[%s830 + $0x390] sm:$0xff]
    %v7689 = vld [vmem:[%s830 + $0x398] sm:$0xff]
    %v7690 = vld [vmem:[%s830 + $0x3a0] sm:$0xff]
    %v7691 = vld [vmem:[%s830 + $0x3a8] sm:$0xff]
    %v7692 = vld [vmem:[%s830 + $0x3b0] sm:$0xff]
    %v7693 = vld [vmem:[%s830 + $0x3b8] sm:$0xff]
    %v7694 = vld [vmem:[%s830 + $0x3c0] sm:$0xff]
    %v7695 = vld [vmem:[%s830 + $0x3c8] sm:$0xff]
    %v7696 = vld [vmem:[%s830 + $0x3d0] sm:$0xff]
    %v7697 = vld [vmem:[%s830 + $0x3d8] sm:$0xff]
    %v7698 = vld [vmem:[%s830 + $0x3e0] sm:$0xff]
    %v7699 = vld [vmem:[%s830 + $0x3e8] sm:$0xff]
    %v7700 = vld [vmem:[%s830 + $0x3f0] sm:$0xff]
    %v7701 = vld [vmem:[%s830 + $0x3f8] sm:$0xff]
    %v7830 = vunpack.c.l.b16 %v7574
    %v7831 = vunpack.c.h.b16 %v7574
    %v7832 = vunpack.c.l.b16 %v7575
    %v7833 = vunpack.c.h.b16 %v7575
    %v7834 = vunpack.c.l.b16 %v7576
    %v7835 = vunpack.c.h.b16 %v7576
    %v7836 = vunpack.c.l.b16 %v7577
    %v7837 = vunpack.c.h.b16 %v7577
    %v7838 = vunpack.c.l.b16 %v7578
    %v7839 = vunpack.c.h.b16 %v7578
    %v7840 = vunpack.c.l.b16 %v7579
    %v7841 = vunpack.c.h.b16 %v7579
    %v7842 = vunpack.c.l.b16 %v7580
    %v7843 = vunpack.c.h.b16 %v7580
    %v7844 = vunpack.c.l.b16 %v7581
    %v7845 = vunpack.c.h.b16 %v7581
    %v7846 = vunpack.c.l.b16 %v7582
    %v7847 = vunpack.c.h.b16 %v7582
    %v7848 = vunpack.c.l.b16 %v7583
    %v7849 = vunpack.c.h.b16 %v7583
    %v7850 = vunpack.c.l.b16 %v7584
    %v7851 = vunpack.c.h.b16 %v7584
    %v7852 = vunpack.c.l.b16 %v7585
    %v7853 = vunpack.c.h.b16 %v7585
    %v7854 = vunpack.c.l.b16 %v7586
    %v7855 = vunpack.c.h.b16 %v7586
    %v7856 = vunpack.c.l.b16 %v7587
    %v7857 = vunpack.c.h.b16 %v7587
    %v7858 = vunpack.c.l.b16 %v7588
    %v7859 = vunpack.c.h.b16 %v7588
    %v7860 = vunpack.c.l.b16 %v7589
    %v7861 = vunpack.c.h.b16 %v7589
    %v7862 = vunpack.c.l.b16 %v7590
    %v7863 = vunpack.c.h.b16 %v7590
    %v7864 = vunpack.c.l.b16 %v7591
    %v7865 = vunpack.c.h.b16 %v7591
    %v7866 = vunpack.c.l.b16 %v7592
    %v7867 = vunpack.c.h.b16 %v7592
    %v7868 = vunpack.c.l.b16 %v7593
    %v7869 = vunpack.c.h.b16 %v7593
    %v7870 = vunpack.c.l.b16 %v7594
    %v7871 = vunpack.c.h.b16 %v7594
    %v7872 = vunpack.c.l.b16 %v7595
    %v7873 = vunpack.c.h.b16 %v7595
    %v7874 = vunpack.c.l.b16 %v7596
    %v7875 = vunpack.c.h.b16 %v7596
    %v7876 = vunpack.c.l.b16 %v7597
    %v7877 = vunpack.c.h.b16 %v7597
    %v7878 = vunpack.c.l.b16 %v7598
    %v7879 = vunpack.c.h.b16 %v7598
    %v7880 = vunpack.c.l.b16 %v7599
    %v7881 = vunpack.c.h.b16 %v7599
    %v7882 = vunpack.c.l.b16 %v7600
    %v7883 = vunpack.c.h.b16 %v7600
    %v7884 = vunpack.c.l.b16 %v7601
    %v7885 = vunpack.c.h.b16 %v7601
    %v7886 = vunpack.c.l.b16 %v7602
    %v7887 = vunpack.c.h.b16 %v7602
    %v7888 = vunpack.c.l.b16 %v7603
    %v7889 = vunpack.c.h.b16 %v7603
    %v7890 = vunpack.c.l.b16 %v7604
    %v7891 = vunpack.c.h.b16 %v7604
    %v7892 = vunpack.c.l.b16 %v7605
    %v7893 = vunpack.c.h.b16 %v7605
    %v7894 = vunpack.c.l.b16 %v7606
    %v7895 = vunpack.c.h.b16 %v7606
    %v7896 = vunpack.c.l.b16 %v7607
    %v7897 = vunpack.c.h.b16 %v7607
    %v7898 = vunpack.c.l.b16 %v7608
    %v7899 = vunpack.c.h.b16 %v7608
    %v7900 = vunpack.c.l.b16 %v7609
    %v7901 = vunpack.c.h.b16 %v7609
    %v7902 = vunpack.c.l.b16 %v7610
    %v7903 = vunpack.c.h.b16 %v7610
    %v7904 = vunpack.c.l.b16 %v7611
    %v7905 = vunpack.c.h.b16 %v7611
    %v7906 = vunpack.c.l.b16 %v7612
    %v7907 = vunpack.c.h.b16 %v7612
    %v7908 = vunpack.c.l.b16 %v7613
    %v7909 = vunpack.c.h.b16 %v7613
    %v7910 = vunpack.c.l.b16 %v7614
    %v7911 = vunpack.c.h.b16 %v7614
    %v7912 = vunpack.c.l.b16 %v7615
    %v7913 = vunpack.c.h.b16 %v7615
    %v7914 = vunpack.c.l.b16 %v7616
    %v7915 = vunpack.c.h.b16 %v7616
    %v7916 = vunpack.c.l.b16 %v7617
    %v7917 = vunpack.c.h.b16 %v7617
    %v7918 = vunpack.c.l.b16 %v7618
    %v7919 = vunpack.c.h.b16 %v7618
    %v7920 = vunpack.c.l.b16 %v7619
    %v7921 = vunpack.c.h.b16 %v7619
    %v7922 = vunpack.c.l.b16 %v7620
    %v7923 = vunpack.c.h.b16 %v7620
    %v7924 = vunpack.c.l.b16 %v7621
    %v7925 = vunpack.c.h.b16 %v7621
    %v7926 = vunpack.c.l.b16 %v7622
    %v7927 = vunpack.c.h.b16 %v7622
    %v7928 = vunpack.c.l.b16 %v7623
    %v7929 = vunpack.c.h.b16 %v7623
    %v7930 = vunpack.c.l.b16 %v7624
    %v7931 = vunpack.c.h.b16 %v7624
    %v7932 = vunpack.c.l.b16 %v7625
    %v7933 = vunpack.c.h.b16 %v7625
    %v7934 = vunpack.c.l.b16 %v7626
    %v7935 = vunpack.c.h.b16 %v7626
    %v7936 = vunpack.c.l.b16 %v7627
    %v7937 = vunpack.c.h.b16 %v7627
    %v7938 = vunpack.c.l.b16 %v7628
    %v7939 = vunpack.c.h.b16 %v7628
    %v7940 = vunpack.c.l.b16 %v7629
    %v7941 = vunpack.c.h.b16 %v7629
    %v7942 = vunpack.c.l.b16 %v7630
    %v7943 = vunpack.c.h.b16 %v7630
    %v7944 = vunpack.c.l.b16 %v7631
    %v7945 = vunpack.c.h.b16 %v7631
    %v7946 = vunpack.c.l.b16 %v7632
    %v7947 = vunpack.c.h.b16 %v7632
    %v7948 = vunpack.c.l.b16 %v7633
    %v7949 = vunpack.c.h.b16 %v7633
    %v7950 = vunpack.c.l.b16 %v7634
    %v7951 = vunpack.c.h.b16 %v7634
    %v7952 = vunpack.c.l.b16 %v7635
    %v7953 = vunpack.c.h.b16 %v7635
    %v7954 = vunpack.c.l.b16 %v7636
    %v7955 = vunpack.c.h.b16 %v7636
    %v7956 = vunpack.c.l.b16 %v7637
    %v7957 = vunpack.c.h.b16 %v7637
    %v7958 = vunpack.c.l.b16 %v7638
    %v7959 = vunpack.c.h.b16 %v7638
    %v7960 = vunpack.c.l.b16 %v7639
    %v7961 = vunpack.c.h.b16 %v7639
    %v7962 = vunpack.c.l.b16 %v7640
    %v7963 = vunpack.c.h.b16 %v7640
    %v7964 = vunpack.c.l.b16 %v7641
    %v7965 = vunpack.c.h.b16 %v7641
    %v7966 = vunpack.c.l.b16 %v7642
    %v7967 = vunpack.c.h.b16 %v7642
    %v7968 = vunpack.c.l.b16 %v7643
    %v7969 = vunpack.c.h.b16 %v7643
    %v7970 = vunpack.c.l.b16 %v7644
    %v7971 = vunpack.c.h.b16 %v7644
    %v7972 = vunpack.c.l.b16 %v7645
    %v7973 = vunpack.c.h.b16 %v7645
    %v7974 = vunpack.c.l.b16 %v7646
    %v7975 = vunpack.c.h.b16 %v7646
    %v7976 = vunpack.c.l.b16 %v7647
    %v7977 = vunpack.c.h.b16 %v7647
    %v7978 = vunpack.c.l.b16 %v7648
    %v7979 = vunpack.c.h.b16 %v7648
    %v7980 = vunpack.c.l.b16 %v7649
    %v7981 = vunpack.c.h.b16 %v7649
    %v7982 = vunpack.c.l.b16 %v7650
    %v7983 = vunpack.c.h.b16 %v7650
    %v7984 = vunpack.c.l.b16 %v7651
    %v7985 = vunpack.c.h.b16 %v7651
    %v7986 = vunpack.c.l.b16 %v7652
    %v7987 = vunpack.c.h.b16 %v7652
    %v7988 = vunpack.c.l.b16 %v7653
    %v7989 = vunpack.c.h.b16 %v7653
    %v7990 = vunpack.c.l.b16 %v7654
    %v7991 = vunpack.c.h.b16 %v7654
    %v7992 = vunpack.c.l.b16 %v7655
    %v7993 = vunpack.c.h.b16 %v7655
    %v7994 = vunpack.c.l.b16 %v7656
    %v7995 = vunpack.c.h.b16 %v7656
    %v7996 = vunpack.c.l.b16 %v7657
    %v7997 = vunpack.c.h.b16 %v7657
    %v7998 = vunpack.c.l.b16 %v7658
    %v7999 = vunpack.c.h.b16 %v7658
    %v8000 = vunpack.c.l.b16 %v7659
    %v8001 = vunpack.c.h.b16 %v7659
    %v8002 = vunpack.c.l.b16 %v7660
    %v8003 = vunpack.c.h.b16 %v7660
    %v8004 = vunpack.c.l.b16 %v7661
    %v8005 = vunpack.c.h.b16 %v7661
    %v8006 = vunpack.c.l.b16 %v7662
    %v8007 = vunpack.c.h.b16 %v7662
    %v8008 = vunpack.c.l.b16 %v7663
    %v8009 = vunpack.c.h.b16 %v7663
    %v8010 = vunpack.c.l.b16 %v7664
    %v8011 = vunpack.c.h.b16 %v7664
    %v8012 = vunpack.c.l.b16 %v7665
    %v8013 = vunpack.c.h.b16 %v7665
    %v8014 = vunpack.c.l.b16 %v7666
    %v8015 = vunpack.c.h.b16 %v7666
    %v8016 = vunpack.c.l.b16 %v7667
    %v8017 = vunpack.c.h.b16 %v7667
    %v8018 = vunpack.c.l.b16 %v7668
    %v8019 = vunpack.c.h.b16 %v7668
    %v8020 = vunpack.c.l.b16 %v7669
    %v8021 = vunpack.c.h.b16 %v7669
    %v8022 = vunpack.c.l.b16 %v7670
    %v8023 = vunpack.c.h.b16 %v7670
    %v8024 = vunpack.c.l.b16 %v7671
    %v8025 = vunpack.c.h.b16 %v7671
    %v8026 = vunpack.c.l.b16 %v7672
    %v8027 = vunpack.c.h.b16 %v7672
    %v8028 = vunpack.c.l.b16 %v7673
    %v8029 = vunpack.c.h.b16 %v7673
    %v8030 = vunpack.c.l.b16 %v7674
    %v8031 = vunpack.c.h.b16 %v7674
    %v8032 = vunpack.c.l.b16 %v7675
    %v8033 = vunpack.c.h.b16 %v7675
    %v8034 = vunpack.c.l.b16 %v7676
    %v8035 = vunpack.c.h.b16 %v7676
    %v8036 = vunpack.c.l.b16 %v7677
    %v8037 = vunpack.c.h.b16 %v7677
    %v8038 = vunpack.c.l.b16 %v7678
    %v8039 = vunpack.c.h.b16 %v7678
    %v8040 = vunpack.c.l.b16 %v7679
    %v8041 = vunpack.c.h.b16 %v7679
    %v8042 = vunpack.c.l.b16 %v7680
    %v8043 = vunpack.c.h.b16 %v7680
    %v8044 = vunpack.c.l.b16 %v7681
    %v8045 = vunpack.c.h.b16 %v7681
    %v8046 = vunpack.c.l.b16 %v7682
    %v8047 = vunpack.c.h.b16 %v7682
    %v8048 = vunpack.c.l.b16 %v7683
    %v8049 = vunpack.c.h.b16 %v7683
    %v8050 = vunpack.c.l.b16 %v7684
    %v8051 = vunpack.c.h.b16 %v7684
    %v8052 = vunpack.c.l.b16 %v7685
    %v8053 = vunpack.c.h.b16 %v7685
    %v8054 = vunpack.c.l.b16 %v7686
    %v8055 = vunpack.c.h.b16 %v7686
    %v8056 = vunpack.c.l.b16 %v7687
    %v8057 = vunpack.c.h.b16 %v7687
    %v8058 = vunpack.c.l.b16 %v7688
    %v8059 = vunpack.c.h.b16 %v7688
    %v8060 = vunpack.c.l.b16 %v7689
    %v8061 = vunpack.c.h.b16 %v7689
    %v8062 = vunpack.c.l.b16 %v7690
    %v8063 = vunpack.c.h.b16 %v7690
    %v8064 = vunpack.c.l.b16 %v7691
    %v8065 = vunpack.c.h.b16 %v7691
    %v8066 = vunpack.c.l.b16 %v7692
    %v8067 = vunpack.c.h.b16 %v7692
    %v8068 = vunpack.c.l.b16 %v7693
    %v8069 = vunpack.c.h.b16 %v7693
    %v8070 = vunpack.c.l.b16 %v7694
    %v8071 = vunpack.c.h.b16 %v7694
    %v8072 = vunpack.c.l.b16 %v7695
    %v8073 = vunpack.c.h.b16 %v7695
    %v8074 = vunpack.c.l.b16 %v7696
    %v8075 = vunpack.c.h.b16 %v7696
    %v8076 = vunpack.c.l.b16 %v7697
    %v8077 = vunpack.c.h.b16 %v7697
    %v8078 = vunpack.c.l.b16 %v7698
    %v8079 = vunpack.c.h.b16 %v7698
    %v8080 = vunpack.c.l.b16 %v7699
    %v8081 = vunpack.c.h.b16 %v7699
    %v8082 = vunpack.c.l.b16 %v7700
    %v8083 = vunpack.c.h.b16 %v7700
    %v8084 = vunpack.c.l.b16 %v7701
    %v8085 = vunpack.c.h.b16 %v7701
    %v8086 = vpack.c.b16 %v7838, %v7830
    %v8087 = vpack.c.b16 %v7839, %v7831
    %v8088 = vpack.c.b16 %v7840, %v7832
    %v8089 = vpack.c.b16 %v7841, %v7833
    %v8090 = vpack.c.b16 %v7842, %v7834
    %v8091 = vpack.c.b16 %v7843, %v7835
    %v8092 = vpack.c.b16 %v7844, %v7836
    %v8093 = vpack.c.b16 %v7845, %v7837
    %v8094 = vpack.c.b16 %v7854, %v7846
    %v8095 = vpack.c.b16 %v7855, %v7847
    %v8096 = vpack.c.b16 %v7856, %v7848
    %v8097 = vpack.c.b16 %v7857, %v7849
    %v8098 = vpack.c.b16 %v7858, %v7850
    %v8099 = vpack.c.b16 %v7859, %v7851
    %v8100 = vpack.c.b16 %v7860, %v7852
    %v8101 = vpack.c.b16 %v7861, %v7853
    %v8102 = vpack.c.b16 %v7870, %v7862
    %v8103 = vpack.c.b16 %v7871, %v7863
    %v8104 = vpack.c.b16 %v7872, %v7864
    %v8105 = vpack.c.b16 %v7873, %v7865
    %v8106 = vpack.c.b16 %v7874, %v7866
    %v8107 = vpack.c.b16 %v7875, %v7867
    %v8108 = vpack.c.b16 %v7876, %v7868
    %v8109 = vpack.c.b16 %v7877, %v7869
    %v8110 = vpack.c.b16 %v7886, %v7878
    %v8111 = vpack.c.b16 %v7887, %v7879
    %v8112 = vpack.c.b16 %v7888, %v7880
    %v8113 = vpack.c.b16 %v7889, %v7881
    %v8114 = vpack.c.b16 %v7890, %v7882
    %v8115 = vpack.c.b16 %v7891, %v7883
    %v8116 = vpack.c.b16 %v7892, %v7884
    %v8117 = vpack.c.b16 %v7893, %v7885
    %v8118 = vpack.c.b16 %v7902, %v7894
    %v8119 = vpack.c.b16 %v7903, %v7895
    %v8120 = vpack.c.b16 %v7904, %v7896
    %v8121 = vpack.c.b16 %v7905, %v7897
    %v8122 = vpack.c.b16 %v7906, %v7898
    %v8123 = vpack.c.b16 %v7907, %v7899
    %v8124 = vpack.c.b16 %v7908, %v7900
    %v8125 = vpack.c.b16 %v7909, %v7901
    %v8126 = vpack.c.b16 %v7918, %v7910
    %v8127 = vpack.c.b16 %v7919, %v7911
    %v8128 = vpack.c.b16 %v7920, %v7912
    %v8129 = vpack.c.b16 %v7921, %v7913
    %v8130 = vpack.c.b16 %v7922, %v7914
    %v8131 = vpack.c.b16 %v7923, %v7915
    %v8132 = vpack.c.b16 %v7924, %v7916
    %v8133 = vpack.c.b16 %v7925, %v7917
    %v8134 = vpack.c.b16 %v7934, %v7926
    %v8135 = vpack.c.b16 %v7935, %v7927
    %v8136 = vpack.c.b16 %v7936, %v7928
    %v8137 = vpack.c.b16 %v7937, %v7929
    %v8138 = vpack.c.b16 %v7938, %v7930
    %v8139 = vpack.c.b16 %v7939, %v7931
    %v8140 = vpack.c.b16 %v7940, %v7932
    %v8141 = vpack.c.b16 %v7941, %v7933
    %v8142 = vpack.c.b16 %v7950, %v7942
    %v8143 = vpack.c.b16 %v7951, %v7943
    %v8144 = vpack.c.b16 %v7952, %v7944
    %v8145 = vpack.c.b16 %v7953, %v7945
    %v8146 = vpack.c.b16 %v7954, %v7946
    %v8147 = vpack.c.b16 %v7955, %v7947
    %v8148 = vpack.c.b16 %v7956, %v7948
    %v8149 = vpack.c.b16 %v7957, %v7949
    %v8150 = vpack.c.b16 %v7966, %v7958
    %v8151 = vpack.c.b16 %v7967, %v7959
    %v8152 = vpack.c.b16 %v7968, %v7960
    %v8153 = vpack.c.b16 %v7969, %v7961
    %v8154 = vpack.c.b16 %v7970, %v7962
    %v8155 = vpack.c.b16 %v7971, %v7963
    %v8156 = vpack.c.b16 %v7972, %v7964
    %v8157 = vpack.c.b16 %v7973, %v7965
    %v8158 = vpack.c.b16 %v7982, %v7974
    %v8159 = vpack.c.b16 %v7983, %v7975
    %v8160 = vpack.c.b16 %v7984, %v7976
    %v8161 = vpack.c.b16 %v7985, %v7977
    %v8162 = vpack.c.b16 %v7986, %v7978
    %v8163 = vpack.c.b16 %v7987, %v7979
    %v8164 = vpack.c.b16 %v7988, %v7980
    %v8165 = vpack.c.b16 %v7989, %v7981
    %v8166 = vpack.c.b16 %v7998, %v7990
    %v8167 = vpack.c.b16 %v7999, %v7991
    %v8168 = vpack.c.b16 %v8000, %v7992
    %v8169 = vpack.c.b16 %v8001, %v7993
    %v8170 = vpack.c.b16 %v8002, %v7994
    %v8171 = vpack.c.b16 %v8003, %v7995
    %v8172 = vpack.c.b16 %v8004, %v7996
    %v8173 = vpack.c.b16 %v8005, %v7997
    %v8174 = vpack.c.b16 %v8014, %v8006
    %v8175 = vpack.c.b16 %v8015, %v8007
    %v8176 = vpack.c.b16 %v8016, %v8008
    %v8177 = vpack.c.b16 %v8017, %v8009
    %v8178 = vpack.c.b16 %v8018, %v8010
    %v8179 = vpack.c.b16 %v8019, %v8011
    %v8180 = vpack.c.b16 %v8020, %v8012
    %v8181 = vpack.c.b16 %v8021, %v8013
    %v8182 = vpack.c.b16 %v8030, %v8022
    %v8183 = vpack.c.b16 %v8031, %v8023
    %v8184 = vpack.c.b16 %v8032, %v8024
    %v8185 = vpack.c.b16 %v8033, %v8025
    %v8186 = vpack.c.b16 %v8034, %v8026
    %v8187 = vpack.c.b16 %v8035, %v8027
    %v8188 = vpack.c.b16 %v8036, %v8028
    %v8189 = vpack.c.b16 %v8037, %v8029
    %v8190 = vpack.c.b16 %v8046, %v8038
    %v8191 = vpack.c.b16 %v8047, %v8039
    %v8192 = vpack.c.b16 %v8048, %v8040
    %v8193 = vpack.c.b16 %v8049, %v8041
    %v8194 = vpack.c.b16 %v8050, %v8042
    %v8195 = vpack.c.b16 %v8051, %v8043
    %v8196 = vpack.c.b16 %v8052, %v8044
    %v8197 = vpack.c.b16 %v8053, %v8045
    %v8198 = vpack.c.b16 %v8062, %v8054
    %v8199 = vpack.c.b16 %v8063, %v8055
    %v8200 = vpack.c.b16 %v8064, %v8056
    %v8201 = vpack.c.b16 %v8065, %v8057
    %v8202 = vpack.c.b16 %v8066, %v8058
    %v8203 = vpack.c.b16 %v8067, %v8059
    %v8204 = vpack.c.b16 %v8068, %v8060
    %v8205 = vpack.c.b16 %v8069, %v8061
    %v8206 = vpack.c.b16 %v8078, %v8070
    %v8207 = vpack.c.b16 %v8079, %v8071
    %v8208 = vpack.c.b16 %v8080, %v8072
    %v8209 = vpack.c.b16 %v8081, %v8073
    %v8210 = vpack.c.b16 %v8082, %v8074
    %v8211 = vpack.c.b16 %v8083, %v8075
    %v8212 = vpack.c.b16 %v8084, %v8076
    %v8213 = vpack.c.b16 %v8085, %v8077
    %8342 = vmatprep.subr.bf16.mxu0 %v8143
    %8343 = vmatpush1.bf16.msra.mxu0 %v8142
    %8344 = vmatprep.subr.bf16.mxu0 %v8135
    %8345 = vmatpush1.bf16.msra.mxu0 %v8134
    %8346 = vmatprep.subr.bf16.mxu0 %v8127
    %8347 = vmatpush1.bf16.msra.mxu0 %v8126
    %8348 = vmatprep.subr.bf16.mxu0 %v8119
    %8349 = vmatpush1.bf16.msra.mxu0 %v8118
    %8350 = vmatprep.subr.bf16.mxu0 %v8111
    %8351 = vmatpush1.bf16.msra.mxu0 %v8110
    %8352 = vmatprep.subr.bf16.mxu0 %v8103
    %8353 = vmatpush1.bf16.msra.mxu0 %v8102
    %8354 = vmatprep.subr.bf16.mxu0 %v8095
    %8355 = vmatpush1.bf16.msra.mxu0 %v8094
    %8356 = vmatprep.subr.bf16.mxu0 %v8087
    %8357 = vmatpush1.bf16.msra.mxu0 %v8086
    %8358 = vmatprep.subr.bf16.mxu0 %v8207
    %8359 = vmatpush2.bf16.msra.mxu0 %v8206
    %8360 = vmatprep.subr.bf16.mxu0 %v8199
    %8361 = vmatpush2.bf16.msra.mxu0 %v8198
    %8362 = vmatprep.subr.bf16.mxu0 %v8191
    %8363 = vmatpush2.bf16.msra.mxu0 %v8190
    %8364 = vmatprep.subr.bf16.mxu0 %v8183
    %8365 = vmatpush2.bf16.msra.mxu0 %v8182
    %8366 = vmatprep.subr.bf16.mxu0 %v8175
    %8367 = vmatpush2.bf16.msra.mxu0 %v8174
    %8368 = vmatprep.subr.bf16.mxu0 %v8167
    %8369 = vmatpush2.bf16.msra.mxu0 %v8166
    %8370 = vmatprep.subr.bf16.mxu0 %v8159
    %8371 = vmatpush2.bf16.msra.mxu0 %v8158
    %8372 = vmatprep.subr.bf16.mxu0 %v8151
    %8373 = vmatpush2.bf16.msra.mxu0 %v8150
    %8374 = vmatprep.mubr.bf16.mxu0 %v4725
    %8375 = vmatmul.mubr.bf16.gmra.mxu0 %v4724
    %v8376 = vpop.f32.mrf.mxu0
    %v8377 = vadd.f32 0.0, %v8376
    %v8378 = vpop.f32.mrf.mxu0
    %v8379 = vadd.f32 0.0, %v8378
    %v8380 = vpop.f32.mrf.mxu0
    %v8381 = vpop.f32.mrf.mxu0
    %8382 = vdwg.mxu0
    %8383 = vmatprep.subr.bf16.mxu0 %v8145
    %8384 = vmatpush1.bf16.msra.mxu0 %v8144
    %8385 = vmatprep.subr.bf16.mxu0 %v8137
    %8386 = vmatpush1.bf16.msra.mxu0 %v8136
    %8387 = vmatprep.subr.bf16.mxu0 %v8129
    %8388 = vmatpush1.bf16.msra.mxu0 %v8128
    %8389 = vmatprep.subr.bf16.mxu0 %v8121
    %8390 = vmatpush1.bf16.msra.mxu0 %v8120
    %8391 = vmatprep.subr.bf16.mxu0 %v8113
    %8392 = vmatpush1.bf16.msra.mxu0 %v8112
    %8393 = vmatprep.subr.bf16.mxu0 %v8105
    %8394 = vmatpush1.bf16.msra.mxu0 %v8104
    %8395 = vmatprep.subr.bf16.mxu0 %v8097
    %8396 = vmatpush1.bf16.msra.mxu0 %v8096
    %8397 = vmatprep.subr.bf16.mxu0 %v8089
    %8398 = vmatpush1.bf16.msra.mxu0 %v8088
    %8399 = vmatprep.subr.bf16.mxu0 %v8209
    %8400 = vmatpush2.bf16.msra.mxu0 %v8208
    %8401 = vmatprep.subr.bf16.mxu0 %v8201
    %8402 = vmatpush2.bf16.msra.mxu0 %v8200
    %8403 = vmatprep.subr.bf16.mxu0 %v8193
    %8404 = vmatpush2.bf16.msra.mxu0 %v8192
    %8405 = vmatprep.subr.bf16.mxu0 %v8185
    %8406 = vmatpush2.bf16.msra.mxu0 %v8184
    %8407 = vmatprep.subr.bf16.mxu0 %v8177
    %8408 = vmatpush2.bf16.msra.mxu0 %v8176
    %8409 = vmatprep.subr.bf16.mxu0 %v8169
    %8410 = vmatpush2.bf16.msra.mxu0 %v8168
    %8411 = vmatprep.subr.bf16.mxu0 %v8161
    %8412 = vmatpush2.bf16.msra.mxu0 %v8160
    %8413 = vmatprep.subr.bf16.mxu0 %v8153
    %8414 = vmatpush2.bf16.msra.mxu0 %v8152
    %8415 = vmatprep.mubr.bf16.mxu0 %v4725
    %8416 = vmatmul.mubr.bf16.gmra.mxu0 %v4724
    %v8417 = vpop.f32.mrf.mxu0
    %v8418 = vadd.f32 0.0, %v8417
    %v8419 = vpop.f32.mrf.mxu0
    %v8420 = vadd.f32 0.0, %v8419
    %v8421 = vpop.f32.mrf.mxu0
    %v8422 = vpop.f32.mrf.mxu0
    %8423 = vdwg.mxu0
    %8424 = vmatprep.subr.bf16.mxu0 %v8147
    %8425 = vmatpush1.bf16.msra.mxu0 %v8146
    %8426 = vmatprep.subr.bf16.mxu0 %v8139
    %8427 = vmatpush1.bf16.msra.mxu0 %v8138
    %8428 = vmatprep.subr.bf16.mxu0 %v8131
    %8429 = vmatpush1.bf16.msra.mxu0 %v8130
    %8430 = vmatprep.subr.bf16.mxu0 %v8123
    %8431 = vmatpush1.bf16.msra.mxu0 %v8122
    %8432 = vmatprep.subr.bf16.mxu0 %v8115
    %8433 = vmatpush1.bf16.msra.mxu0 %v8114
    %8434 = vmatprep.subr.bf16.mxu0 %v8107
    %8435 = vmatpush1.bf16.msra.mxu0 %v8106
    %8436 = vmatprep.subr.bf16.mxu0 %v8099
    %8437 = vmatpush1.bf16.msra.mxu0 %v8098
    %8438 = vmatprep.subr.bf16.mxu0 %v8091
    %8439 = vmatpush1.bf16.msra.mxu0 %v8090
    %8440 = vmatprep.subr.bf16.mxu0 %v8211
    %8441 = vmatpush2.bf16.msra.mxu0 %v8210
    %8442 = vmatprep.subr.bf16.mxu0 %v8203
    %8443 = vmatpush2.bf16.msra.mxu0 %v8202
    %8444 = vmatprep.subr.bf16.mxu0 %v8195
    %8445 = vmatpush2.bf16.msra.mxu0 %v8194
    %8446 = vmatprep.subr.bf16.mxu0 %v8187
    %8447 = vmatpush2.bf16.msra.mxu0 %v8186
    %8448 = vmatprep.subr.bf16.mxu0 %v8179
    %8449 = vmatpush2.bf16.msra.mxu0 %v8178
    %8450 = vmatprep.subr.bf16.mxu0 %v8171
    %8451 = vmatpush2.bf16.msra.mxu0 %v8170
    %8452 = vmatprep.subr.bf16.mxu0 %v8163
    %8453 = vmatpush2.bf16.msra.mxu0 %v8162
    %8454 = vmatprep.subr.bf16.mxu0 %v8155
    %8455 = vmatpush2.bf16.msra.mxu0 %v8154
    %8456 = vmatprep.mubr.bf16.mxu0 %v4725
    %8457 = vmatmul.mubr.bf16.gmra.mxu0 %v4724
    %v8458 = vpop.f32.mrf.mxu0
    %v8459 = vadd.f32 0.0, %v8458
    %v8460 = vpop.f32.mrf.mxu0
    %v8461 = vadd.f32 0.0, %v8460
    %v8462 = vpop.f32.mrf.mxu0
    %v8463 = vpop.f32.mrf.mxu0
    %8464 = vdwg.mxu0
    %8465 = vmatprep.subr.bf16.mxu0 %v8149
    %8466 = vmatpush1.bf16.msra.mxu0 %v8148
    %8467 = vmatprep.subr.bf16.mxu0 %v8141
    %8468 = vmatpush1.bf16.msra.mxu0 %v8140
    %8469 = vmatprep.subr.bf16.mxu0 %v8133
    %8470 = vmatpush1.bf16.msra.mxu0 %v8132
    %8471 = vmatprep.subr.bf16.mxu0 %v8125
    %8472 = vmatpush1.bf16.msra.mxu0 %v8124
    %8473 = vmatprep.subr.bf16.mxu0 %v8117
    %8474 = vmatpush1.bf16.msra.mxu0 %v8116
    %8475 = vmatprep.subr.bf16.mxu0 %v8109
    %8476 = vmatpush1.bf16.msra.mxu0 %v8108
    %8477 = vmatprep.subr.bf16.mxu0 %v8101
    %8478 = vmatpush1.bf16.msra.mxu0 %v8100
    %8479 = vmatprep.subr.bf16.mxu0 %v8093
    %8480 = vmatpush1.bf16.msra.mxu0 %v8092
    %8481 = vmatprep.subr.bf16.mxu0 %v8213
    %8482 = vmatpush2.bf16.msra.mxu0 %v8212
    %8483 = vmatprep.subr.bf16.mxu0 %v8205
    %8484 = vmatpush2.bf16.msra.mxu0 %v8204
    %8485 = vmatprep.subr.bf16.mxu0 %v8197
    %8486 = vmatpush2.bf16.msra.mxu0 %v8196
    %8487 = vmatprep.subr.bf16.mxu0 %v8189
    %8488 = vmatpush2.bf16.msra.mxu0 %v8188
    %8489 = vmatprep.subr.bf16.mxu0 %v8181
    %8490 = vmatpush2.bf16.msra.mxu0 %v8180
    %8491 = vmatprep.subr.bf16.mxu0 %v8173
    %8492 = vmatpush2.bf16.msra.mxu0 %v8172
    %8493 = vmatprep.subr.bf16.mxu0 %v8165
    %8494 = vmatpush2.bf16.msra.mxu0 %v8164
    %8495 = vmatprep.subr.bf16.mxu0 %v8157
    %8496 = vmatpush2.bf16.msra.mxu0 %v8156
    %8497 = vmatprep.mubr.bf16.mxu0 %v4725
    %8498 = vmatmul.mubr.bf16.gmra.mxu0 %v4724
    %v8499 = vpop.f32.mrf.mxu0
    %v8500 = vadd.f32 0.0, %v8499
    %v8501 = vpop.f32.mrf.mxu0
    %v8502 = vadd.f32 0.0, %v8501
    %v8503 = vpop.f32.mrf.mxu0
    %v8504 = vpop.f32.mrf.mxu0
    %8505 = vdwg.mxu0
    %v8506 = vadd.f32 %v7564, %v8377
    %v8507 = vadd.f32 %v7565, %v8379
    %v8508 = vadd.f32 %v7566, %v8418
    %v8509 = vadd.f32 %v7567, %v8420
    %v8510 = vadd.f32 %v7568, %v8459
    %v8511 = vadd.f32 %v7569, %v8461
    %v8512 = vadd.f32 %v7570, %v8500
    %v8513 = vadd.f32 %v7571, %v8502
    %v8514 = vld [vmem:[#allocation16] sm:$0xff]
    %v8516 = vlaneseq
    %v8517 = vshrl.u32 %v8516, 7
    %v8518 = vsub.s32 0, %v8517
    %v8519 = vrot.slane %v8514, %v8518
    %v8520 = vlaneseq
    %v8521 = vshrl.u32 %v8520, 7
    %v8522 = vsub.s32 1, %v8521
    %v8523 = vrot.slane %v8514, %v8522
    %v8524 = vlaneseq
    %v8525 = vshrl.u32 %v8524, 7
    %v8526 = vsub.s32 2, %v8525
    %v8527 = vrot.slane %v8514, %v8526
    %v8528 = vlaneseq
    %v8529 = vshrl.u32 %v8528, 7
    %v8530 = vsub.s32 3, %v8529
    %v8531 = vrot.slane %v8514, %v8530
    %v8532 = vlaneseq
    %v8533 = vshrl.u32 %v8532, 7
    %v8534 = vsub.s32 4, %v8533
    %v8535 = vrot.slane %v8514, %v8534
    %v8536 = vlaneseq
    %v8537 = vshrl.u32 %v8536, 7
    %v8538 = vsub.s32 5, %v8537
    %v8539 = vrot.slane %v8514, %v8538
    %v8540 = vlaneseq
    %v8541 = vshrl.u32 %v8540, 7
    %v8542 = vsub.s32 6, %v8541
    %v8543 = vrot.slane %v8514, %v8542
    %v8544 = vlaneseq
    %v8545 = vshrl.u32 %v8544, 7
    %v8546 = vsub.s32 7, %v8545
    %v8547 = vrot.slane %v8514, %v8546
    %v8556 = vadd.f32 %v8506, %v8519
    %v8557 = vadd.f32 %v8507, %v8523
    %v8558 = vadd.f32 %v8508, %v8527
    %v8559 = vadd.f32 %v8509, %v8531
    %v8560 = vadd.f32 %v8510, %v8535
    %v8561 = vadd.f32 %v8511, %v8539
    %v8562 = vadd.f32 %v8512, %v8543
    %v8563 = vadd.f32 %v8513, %v8547
    %v8564 = vmax.f32 %v8556, 0.0
    %v8565 = vmax.f32 %v8557, 0.0
    %v8566 = vmax.f32 %v8558, 0.0
    %v8567 = vmax.f32 %v8559, 0.0
    %v8568 = vmax.f32 %v8560, 0.0
    %v8569 = vmax.f32 %v8561, 0.0
    %v8570 = vmax.f32 %v8562, 0.0
    %v8571 = vmax.f32 %v8563, 0.0
    %v8572 = vld [vmem:[%s9] sm:$0xff]
    %v8573 = vld [vmem:[%s9 + $0x8] sm:$0xff]
    %v8574 = vld [vmem:[%s9 + $0x10] sm:$0xff]
    %v8575 = vld [vmem:[%s9 + $0x18] sm:$0xff]
    %v8576 = vld [vmem:[%s9 + $0x20] sm:$0xff]
    %v8577 = vld [vmem:[%s9 + $0x28] sm:$0xff]
    %v8578 = vld [vmem:[%s9 + $0x30] sm:$0xff]
    %v8579 = vld [vmem:[%s9 + $0x38] sm:$0xff]
    %v8580 = vld [vmem:[%s9 + $0x40] sm:$0xff]
    %v8581 = vld [vmem:[%s9 + $0x48] sm:$0xff]
    %v8582 = vld [vmem:[%s9 + $0x50] sm:$0xff]
    %v8583 = vld [vmem:[%s9 + $0x58] sm:$0xff]
    %v8584 = vld [vmem:[%s9 + $0x60] sm:$0xff]
    %v8585 = vld [vmem:[%s9 + $0x68] sm:$0xff]
    %v8586 = vld [vmem:[%s9 + $0x70] sm:$0xff]
    %v8587 = vld [vmem:[%s9 + $0x78] sm:$0xff]
    %v8588 = vld [vmem:[%s9 + $0x80] sm:$0xff]
    %v8589 = vld [vmem:[%s9 + $0x88] sm:$0xff]
    %v8590 = vld [vmem:[%s9 + $0x90] sm:$0xff]
    %v8591 = vld [vmem:[%s9 + $0x98] sm:$0xff]
    %v8592 = vld [vmem:[%s9 + $0xa0] sm:$0xff]
    %v8593 = vld [vmem:[%s9 + $0xa8] sm:$0xff]
    %v8594 = vld [vmem:[%s9 + $0xb0] sm:$0xff]
    %v8595 = vld [vmem:[%s9 + $0xb8] sm:$0xff]
    %v8596 = vld [vmem:[%s9 + $0xc0] sm:$0xff]
    %v8597 = vld [vmem:[%s9 + $0xc8] sm:$0xff]
    %v8598 = vld [vmem:[%s9 + $0xd0] sm:$0xff]
    %v8599 = vld [vmem:[%s9 + $0xd8] sm:$0xff]
    %v8600 = vld [vmem:[%s9 + $0xe0] sm:$0xff]
    %v8601 = vld [vmem:[%s9 + $0xe8] sm:$0xff]
    %v8602 = vld [vmem:[%s9 + $0xf0] sm:$0xff]
    %v8603 = vld [vmem:[%s9 + $0xf8] sm:$0xff]
    %v8604 = vld [vmem:[%s9 + $0x100] sm:$0xff]
    %v8605 = vld [vmem:[%s9 + $0x108] sm:$0xff]
    %v8606 = vld [vmem:[%s9 + $0x110] sm:$0xff]
    %v8607 = vld [vmem:[%s9 + $0x118] sm:$0xff]
    %v8608 = vld [vmem:[%s9 + $0x120] sm:$0xff]
    %v8609 = vld [vmem:[%s9 + $0x128] sm:$0xff]
    %v8610 = vld [vmem:[%s9 + $0x130] sm:$0xff]
    %v8611 = vld [vmem:[%s9 + $0x138] sm:$0xff]
    %v8612 = vld [vmem:[%s9 + $0x140] sm:$0xff]
    %v8613 = vld [vmem:[%s9 + $0x148] sm:$0xff]
    %v8614 = vld [vmem:[%s9 + $0x150] sm:$0xff]
    %v8615 = vld [vmem:[%s9 + $0x158] sm:$0xff]
    %v8616 = vld [vmem:[%s9 + $0x160] sm:$0xff]
    %v8617 = vld [vmem:[%s9 + $0x168] sm:$0xff]
    %v8618 = vld [vmem:[%s9 + $0x170] sm:$0xff]
    %v8619 = vld [vmem:[%s9 + $0x178] sm:$0xff]
    %v8620 = vld [vmem:[%s9 + $0x180] sm:$0xff]
    %v8621 = vld [vmem:[%s9 + $0x188] sm:$0xff]
    %v8622 = vld [vmem:[%s9 + $0x190] sm:$0xff]
    %v8623 = vld [vmem:[%s9 + $0x198] sm:$0xff]
    %v8624 = vld [vmem:[%s9 + $0x1a0] sm:$0xff]
    %v8625 = vld [vmem:[%s9 + $0x1a8] sm:$0xff]
    %v8626 = vld [vmem:[%s9 + $0x1b0] sm:$0xff]
    %v8627 = vld [vmem:[%s9 + $0x1b8] sm:$0xff]
    %v8628 = vld [vmem:[%s9 + $0x1c0] sm:$0xff]
    %v8629 = vld [vmem:[%s9 + $0x1c8] sm:$0xff]
    %v8630 = vld [vmem:[%s9 + $0x1d0] sm:$0xff]
    %v8631 = vld [vmem:[%s9 + $0x1d8] sm:$0xff]
    %v8632 = vld [vmem:[%s9 + $0x1e0] sm:$0xff]
    %v8633 = vld [vmem:[%s9 + $0x1e8] sm:$0xff]
    %v8634 = vld [vmem:[%s9 + $0x1f0] sm:$0xff]
    %v8635 = vld [vmem:[%s9 + $0x1f8] sm:$0xff]
    %v8636 = vld [vmem:[%s9 + $0x200] sm:$0xff]
    %v8637 = vld [vmem:[%s9 + $0x208] sm:$0xff]
    %v8638 = vld [vmem:[%s9 + $0x210] sm:$0xff]
    %v8639 = vld [vmem:[%s9 + $0x218] sm:$0xff]
    %v8640 = vld [vmem:[%s9 + $0x220] sm:$0xff]
    %v8641 = vld [vmem:[%s9 + $0x228] sm:$0xff]
    %v8642 = vld [vmem:[%s9 + $0x230] sm:$0xff]
    %v8643 = vld [vmem:[%s9 + $0x238] sm:$0xff]
    %v8644 = vld [vmem:[%s9 + $0x240] sm:$0xff]
    %v8645 = vld [vmem:[%s9 + $0x248] sm:$0xff]
    %v8646 = vld [vmem:[%s9 + $0x250] sm:$0xff]
    %v8647 = vld [vmem:[%s9 + $0x258] sm:$0xff]
    %v8648 = vld [vmem:[%s9 + $0x260] sm:$0xff]
    %v8649 = vld [vmem:[%s9 + $0x268] sm:$0xff]
    %v8650 = vld [vmem:[%s9 + $0x270] sm:$0xff]
    %v8651 = vld [vmem:[%s9 + $0x278] sm:$0xff]
    %v8652 = vld [vmem:[%s9 + $0x280] sm:$0xff]
    %v8653 = vld [vmem:[%s9 + $0x288] sm:$0xff]
    %v8654 = vld [vmem:[%s9 + $0x290] sm:$0xff]
    %v8655 = vld [vmem:[%s9 + $0x298] sm:$0xff]
    %v8656 = vld [vmem:[%s9 + $0x2a0] sm:$0xff]
    %v8657 = vld [vmem:[%s9 + $0x2a8] sm:$0xff]
    %v8658 = vld [vmem:[%s9 + $0x2b0] sm:$0xff]
    %v8659 = vld [vmem:[%s9 + $0x2b8] sm:$0xff]
    %v8660 = vld [vmem:[%s9 + $0x2c0] sm:$0xff]
    %v8661 = vld [vmem:[%s9 + $0x2c8] sm:$0xff]
    %v8662 = vld [vmem:[%s9 + $0x2d0] sm:$0xff]
    %v8663 = vld [vmem:[%s9 + $0x2d8] sm:$0xff]
    %v8664 = vld [vmem:[%s9 + $0x2e0] sm:$0xff]
    %v8665 = vld [vmem:[%s9 + $0x2e8] sm:$0xff]
    %v8666 = vld [vmem:[%s9 + $0x2f0] sm:$0xff]
    %v8667 = vld [vmem:[%s9 + $0x2f8] sm:$0xff]
    %v8668 = vld [vmem:[%s9 + $0x300] sm:$0xff]
    %v8669 = vld [vmem:[%s9 + $0x308] sm:$0xff]
    %v8670 = vld [vmem:[%s9 + $0x310] sm:$0xff]
    %v8671 = vld [vmem:[%s9 + $0x318] sm:$0xff]
    %v8672 = vld [vmem:[%s9 + $0x320] sm:$0xff]
    %v8673 = vld [vmem:[%s9 + $0x328] sm:$0xff]
    %v8674 = vld [vmem:[%s9 + $0x330] sm:$0xff]
    %v8675 = vld [vmem:[%s9 + $0x338] sm:$0xff]
    %v8676 = vld [vmem:[%s9 + $0x340] sm:$0xff]
    %v8677 = vld [vmem:[%s9 + $0x348] sm:$0xff]
    %v8678 = vld [vmem:[%s9 + $0x350] sm:$0xff]
    %v8679 = vld [vmem:[%s9 + $0x358] sm:$0xff]
    %v8680 = vld [vmem:[%s9 + $0x360] sm:$0xff]
    %v8681 = vld [vmem:[%s9 + $0x368] sm:$0xff]
    %v8682 = vld [vmem:[%s9 + $0x370] sm:$0xff]
    %v8683 = vld [vmem:[%s9 + $0x378] sm:$0xff]
    %v8684 = vld [vmem:[%s9 + $0x380] sm:$0xff]
    %v8685 = vld [vmem:[%s9 + $0x388] sm:$0xff]
    %v8686 = vld [vmem:[%s9 + $0x390] sm:$0xff]
    %v8687 = vld [vmem:[%s9 + $0x398] sm:$0xff]
    %v8688 = vld [vmem:[%s9 + $0x3a0] sm:$0xff]
    %v8689 = vld [vmem:[%s9 + $0x3a8] sm:$0xff]
    %v8690 = vld [vmem:[%s9 + $0x3b0] sm:$0xff]
    %v8691 = vld [vmem:[%s9 + $0x3b8] sm:$0xff]
    %v8692 = vld [vmem:[%s9 + $0x3c0] sm:$0xff]
    %v8693 = vld [vmem:[%s9 + $0x3c8] sm:$0xff]
    %v8694 = vld [vmem:[%s9 + $0x3d0] sm:$0xff]
    %v8695 = vld [vmem:[%s9 + $0x3d8] sm:$0xff]
    %v8696 = vld [vmem:[%s9 + $0x3e0] sm:$0xff]
    %v8697 = vld [vmem:[%s9 + $0x3e8] sm:$0xff]
    %v8698 = vld [vmem:[%s9 + $0x3f0] sm:$0xff]
    %v8699 = vld [vmem:[%s9 + $0x3f8] sm:$0xff]
    %v8700 = vld [vmem:[#allocation17] sm:$0x1]
    %v8702 = vlaneseq
    %v8703 = vshrl.u32 %v8702, 7
    %v8704 = vsub.s32 0, %v8703
    %v8705 = vrot.slane %v8700, %v8704
    %8707 = vmatprep.subr.mxu0 0.0
    %8708 = vmatpush1.msra.mxu0 %v8587
    %8709 = vmatprep.subr.mxu0 0.0
    %8710 = vmatpush1.msra.mxu0 %v8586
    %8711 = vmatprep.subr.mxu0 0.0
    %8712 = vmatpush1.msra.mxu0 %v8585
    %8713 = vmatprep.subr.mxu0 0.0
    %8714 = vmatpush1.msra.mxu0 %v8584
    %8715 = vmatprep.subr.mxu0 0.0
    %8716 = vmatpush1.msra.mxu0 %v8583
    %8717 = vmatprep.subr.mxu0 0.0
    %8718 = vmatpush1.msra.mxu0 %v8582
    %8719 = vmatprep.subr.mxu0 0.0
    %8720 = vmatpush1.msra.mxu0 %v8581
    %8721 = vmatprep.subr.mxu0 0.0
    %8722 = vmatpush1.msra.mxu0 %v8580
    %8723 = vmatprep.subr.mxu0 0.0
    %8724 = vmatpush1.msra.mxu0 %v8579
    %8725 = vmatprep.subr.mxu0 0.0
    %8726 = vmatpush1.msra.mxu0 %v8578
    %8727 = vmatprep.subr.mxu0 0.0
    %8728 = vmatpush1.msra.mxu0 %v8577
    %8729 = vmatprep.subr.mxu0 0.0
    %8730 = vmatpush1.msra.mxu0 %v8576
    %8731 = vmatprep.subr.mxu0 0.0
    %8732 = vmatpush1.msra.mxu0 %v8575
    %8733 = vmatprep.subr.mxu0 0.0
    %8734 = vmatpush1.msra.mxu0 %v8574
    %8735 = vmatprep.subr.mxu0 0.0
    %8736 = vmatpush1.msra.mxu0 %v8573
    %8737 = vmatprep.subr.mxu0 0.0
    %8738 = vmatpush1.msra.mxu0 %v8572
    %8739 = vmatprep.subr.mxu0 0.0
    %8740 = vmatpush2.msra.mxu0 %v8603
    %8741 = vmatprep.subr.mxu0 0.0
    %8742 = vmatpush2.msra.mxu0 %v8602
    %8743 = vmatprep.subr.mxu0 0.0
    %8744 = vmatpush2.msra.mxu0 %v8601
    %8745 = vmatprep.subr.mxu0 0.0
    %8746 = vmatpush2.msra.mxu0 %v8600
    %8747 = vmatprep.subr.mxu0 0.0
    %8748 = vmatpush2.msra.mxu0 %v8599
    %8749 = vmatprep.subr.mxu0 0.0
    %8750 = vmatpush2.msra.mxu0 %v8598
    %8751 = vmatprep.subr.mxu0 0.0
    %8752 = vmatpush2.msra.mxu0 %v8597
    %8753 = vmatprep.subr.mxu0 0.0
    %8754 = vmatpush2.msra.mxu0 %v8596
    %8755 = vmatprep.subr.mxu0 0.0
    %8756 = vmatpush2.msra.mxu0 %v8595
    %8757 = vmatprep.subr.mxu0 0.0
    %8758 = vmatpush2.msra.mxu0 %v8594
    %8759 = vmatprep.subr.mxu0 0.0
    %8760 = vmatpush2.msra.mxu0 %v8593
    %8761 = vmatprep.subr.mxu0 0.0
    %8762 = vmatpush2.msra.mxu0 %v8592
    %8763 = vmatprep.subr.mxu0 0.0
    %8764 = vmatpush2.msra.mxu0 %v8591
    %8765 = vmatprep.subr.mxu0 0.0
    %8766 = vmatpush2.msra.mxu0 %v8590
    %8767 = vmatprep.subr.mxu0 0.0
    %8768 = vmatpush2.msra.mxu0 %v8589
    %8769 = vmatprep.subr.mxu0 0.0
    %8770 = vmatpush2.msra.mxu0 %v8588
    %8771 = vmatprep.mubr.f32.mxu0 %v8565
    %8772 = vmatmul.mubr.f32.gmra.mxu0 %v8564
    %v8773 = vpop.f32.mrf.mxu0
    %v8774 = vadd.f32 %v8705, %v8773
    %v8775 = vpop.f32.mrf.mxu0
    %8776 = vdwg.mxu0
    %8777 = vmatprep.subr.mxu0 0.0
    %8778 = vmatpush1.msra.mxu0 %v8619
    %8779 = vmatprep.subr.mxu0 0.0
    %8780 = vmatpush1.msra.mxu0 %v8618
    %8781 = vmatprep.subr.mxu0 0.0
    %8782 = vmatpush1.msra.mxu0 %v8617
    %8783 = vmatprep.subr.mxu0 0.0
    %8784 = vmatpush1.msra.mxu0 %v8616
    %8785 = vmatprep.subr.mxu0 0.0
    %8786 = vmatpush1.msra.mxu0 %v8615
    %8787 = vmatprep.subr.mxu0 0.0
    %8788 = vmatpush1.msra.mxu0 %v8614
    %8789 = vmatprep.subr.mxu0 0.0
    %8790 = vmatpush1.msra.mxu0 %v8613
    %8791 = vmatprep.subr.mxu0 0.0
    %8792 = vmatpush1.msra.mxu0 %v8612
    %8793 = vmatprep.subr.mxu0 0.0
    %8794 = vmatpush1.msra.mxu0 %v8611
    %8795 = vmatprep.subr.mxu0 0.0
    %8796 = vmatpush1.msra.mxu0 %v8610
    %8797 = vmatprep.subr.mxu0 0.0
    %8798 = vmatpush1.msra.mxu0 %v8609
    %8799 = vmatprep.subr.mxu0 0.0
    %8800 = vmatpush1.msra.mxu0 %v8608
    %8801 = vmatprep.subr.mxu0 0.0
    %8802 = vmatpush1.msra.mxu0 %v8607
    %8803 = vmatprep.subr.mxu0 0.0
    %8804 = vmatpush1.msra.mxu0 %v8606
    %8805 = vmatprep.subr.mxu0 0.0
    %8806 = vmatpush1.msra.mxu0 %v8605
    %8807 = vmatprep.subr.mxu0 0.0
    %8808 = vmatpush1.msra.mxu0 %v8604
    %8809 = vmatprep.subr.mxu0 0.0
    %8810 = vmatpush2.msra.mxu0 %v8635
    %8811 = vmatprep.subr.mxu0 0.0
    %8812 = vmatpush2.msra.mxu0 %v8634
    %8813 = vmatprep.subr.mxu0 0.0
    %8814 = vmatpush2.msra.mxu0 %v8633
    %8815 = vmatprep.subr.mxu0 0.0
    %8816 = vmatpush2.msra.mxu0 %v8632
    %8817 = vmatprep.subr.mxu0 0.0
    %8818 = vmatpush2.msra.mxu0 %v8631
    %8819 = vmatprep.subr.mxu0 0.0
    %8820 = vmatpush2.msra.mxu0 %v8630
    %8821 = vmatprep.subr.mxu0 0.0
    %8822 = vmatpush2.msra.mxu0 %v8629
    %8823 = vmatprep.subr.mxu0 0.0
    %8824 = vmatpush2.msra.mxu0 %v8628
    %8825 = vmatprep.subr.mxu0 0.0
    %8826 = vmatpush2.msra.mxu0 %v8627
    %8827 = vmatprep.subr.mxu0 0.0
    %8828 = vmatpush2.msra.mxu0 %v8626
    %8829 = vmatprep.subr.mxu0 0.0
    %8830 = vmatpush2.msra.mxu0 %v8625
    %8831 = vmatprep.subr.mxu0 0.0
    %8832 = vmatpush2.msra.mxu0 %v8624
    %8833 = vmatprep.subr.mxu0 0.0
    %8834 = vmatpush2.msra.mxu0 %v8623
    %8835 = vmatprep.subr.mxu0 0.0
    %8836 = vmatpush2.msra.mxu0 %v8622
    %8837 = vmatprep.subr.mxu0 0.0
    %8838 = vmatpush2.msra.mxu0 %v8621
    %8839 = vmatprep.subr.mxu0 0.0
    %8840 = vmatpush2.msra.mxu0 %v8620
    %8841 = vmatprep.mubr.f32.mxu0 %v8567
    %8842 = vmatmul.mubr.f32.gmra.mxu0 %v8566
    %v8843 = vpop.f32.mrf.mxu0
    %v8844 = vadd.f32 %v8774, %v8843
    %v8845 = vpop.f32.mrf.mxu0
    %8846 = vdwg.mxu0
    %8847 = vmatprep.subr.mxu0 0.0
    %8848 = vmatpush1.msra.mxu0 %v8651
    %8849 = vmatprep.subr.mxu0 0.0
    %8850 = vmatpush1.msra.mxu0 %v8650
    %8851 = vmatprep.subr.mxu0 0.0
    %8852 = vmatpush1.msra.mxu0 %v8649
    %8853 = vmatprep.subr.mxu0 0.0
    %8854 = vmatpush1.msra.mxu0 %v8648
    %8855 = vmatprep.subr.mxu0 0.0
    %8856 = vmatpush1.msra.mxu0 %v8647
    %8857 = vmatprep.subr.mxu0 0.0
    %8858 = vmatpush1.msra.mxu0 %v8646
    %8859 = vmatprep.subr.mxu0 0.0
    %8860 = vmatpush1.msra.mxu0 %v8645
    %8861 = vmatprep.subr.mxu0 0.0
    %8862 = vmatpush1.msra.mxu0 %v8644
    %8863 = vmatprep.subr.mxu0 0.0
    %8864 = vmatpush1.msra.mxu0 %v8643
    %8865 = vmatprep.subr.mxu0 0.0
    %8866 = vmatpush1.msra.mxu0 %v8642
    %8867 = vmatprep.subr.mxu0 0.0
    %8868 = vmatpush1.msra.mxu0 %v8641
    %8869 = vmatprep.subr.mxu0 0.0
    %8870 = vmatpush1.msra.mxu0 %v8640
    %8871 = vmatprep.subr.mxu0 0.0
    %8872 = vmatpush1.msra.mxu0 %v8639
    %8873 = vmatprep.subr.mxu0 0.0
    %8874 = vmatpush1.msra.mxu0 %v8638
    %8875 = vmatprep.subr.mxu0 0.0
    %8876 = vmatpush1.msra.mxu0 %v8637
    %8877 = vmatprep.subr.mxu0 0.0
    %8878 = vmatpush1.msra.mxu0 %v8636
    %8879 = vmatprep.subr.mxu0 0.0
    %8880 = vmatpush2.msra.mxu0 %v8667
    %8881 = vmatprep.subr.mxu0 0.0
    %8882 = vmatpush2.msra.mxu0 %v8666
    %8883 = vmatprep.subr.mxu0 0.0
    %8884 = vmatpush2.msra.mxu0 %v8665
    %8885 = vmatprep.subr.mxu0 0.0
    %8886 = vmatpush2.msra.mxu0 %v8664
    %8887 = vmatprep.subr.mxu0 0.0
    %8888 = vmatpush2.msra.mxu0 %v8663
    %8889 = vmatprep.subr.mxu0 0.0
    %8890 = vmatpush2.msra.mxu0 %v8662
    %8891 = vmatprep.subr.mxu0 0.0
    %8892 = vmatpush2.msra.mxu0 %v8661
    %8893 = vmatprep.subr.mxu0 0.0
    %8894 = vmatpush2.msra.mxu0 %v8660
    %8895 = vmatprep.subr.mxu0 0.0
    %8896 = vmatpush2.msra.mxu0 %v8659
    %8897 = vmatprep.subr.mxu0 0.0
    %8898 = vmatpush2.msra.mxu0 %v8658
    %8899 = vmatprep.subr.mxu0 0.0
    %8900 = vmatpush2.msra.mxu0 %v8657
    %8901 = vmatprep.subr.mxu0 0.0
    %8902 = vmatpush2.msra.mxu0 %v8656
    %8903 = vmatprep.subr.mxu0 0.0
    %8904 = vmatpush2.msra.mxu0 %v8655
    %8905 = vmatprep.subr.mxu0 0.0
    %8906 = vmatpush2.msra.mxu0 %v8654
    %8907 = vmatprep.subr.mxu0 0.0
    %8908 = vmatpush2.msra.mxu0 %v8653
    %8909 = vmatprep.subr.mxu0 0.0
    %8910 = vmatpush2.msra.mxu0 %v8652
    %8911 = vmatprep.mubr.f32.mxu0 %v8569
    %8912 = vmatmul.mubr.f32.gmra.mxu0 %v8568
    %v8913 = vpop.f32.mrf.mxu0
    %v8914 = vadd.f32 %v8844, %v8913
    %v8915 = vpop.f32.mrf.mxu0
    %8916 = vdwg.mxu0
    %8917 = vmatprep.subr.mxu0 0.0
    %8918 = vmatpush1.msra.mxu0 %v8683
    %8919 = vmatprep.subr.mxu0 0.0
    %8920 = vmatpush1.msra.mxu0 %v8682
    %8921 = vmatprep.subr.mxu0 0.0
    %8922 = vmatpush1.msra.mxu0 %v8681
    %8923 = vmatprep.subr.mxu0 0.0
    %8924 = vmatpush1.msra.mxu0 %v8680
    %8925 = vmatprep.subr.mxu0 0.0
    %8926 = vmatpush1.msra.mxu0 %v8679
    %8927 = vmatprep.subr.mxu0 0.0
    %8928 = vmatpush1.msra.mxu0 %v8678
    %8929 = vmatprep.subr.mxu0 0.0
    %8930 = vmatpush1.msra.mxu0 %v8677
    %8931 = vmatprep.subr.mxu0 0.0
    %8932 = vmatpush1.msra.mxu0 %v8676
    %8933 = vmatprep.subr.mxu0 0.0
    %8934 = vmatpush1.msra.mxu0 %v8675
    %8935 = vmatprep.subr.mxu0 0.0
    %8936 = vmatpush1.msra.mxu0 %v8674
    %8937 = vmatprep.subr.mxu0 0.0
    %8938 = vmatpush1.msra.mxu0 %v8673
    %8939 = vmatprep.subr.mxu0 0.0
    %8940 = vmatpush1.msra.mxu0 %v8672
    %8941 = vmatprep.subr.mxu0 0.0
    %8942 = vmatpush1.msra.mxu0 %v8671
    %8943 = vmatprep.subr.mxu0 0.0
    %8944 = vmatpush1.msra.mxu0 %v8670
    %8945 = vmatprep.subr.mxu0 0.0
    %8946 = vmatpush1.msra.mxu0 %v8669
    %8947 = vmatprep.subr.mxu0 0.0
    %8948 = vmatpush1.msra.mxu0 %v8668
    %8949 = vmatprep.subr.mxu0 0.0
    %8950 = vmatpush2.msra.mxu0 %v8699
    %8951 = vmatprep.subr.mxu0 0.0
    %8952 = vmatpush2.msra.mxu0 %v8698
    %8953 = vmatprep.subr.mxu0 0.0
    %8954 = vmatpush2.msra.mxu0 %v8697
    %8955 = vmatprep.subr.mxu0 0.0
    %8956 = vmatpush2.msra.mxu0 %v8696
    %8957 = vmatprep.subr.mxu0 0.0
    %8958 = vmatpush2.msra.mxu0 %v8695
    %8959 = vmatprep.subr.mxu0 0.0
    %8960 = vmatpush2.msra.mxu0 %v8694
    %8961 = vmatprep.subr.mxu0 0.0
    %8962 = vmatpush2.msra.mxu0 %v8693
    %8963 = vmatprep.subr.mxu0 0.0
    %8964 = vmatpush2.msra.mxu0 %v8692
    %8965 = vmatprep.subr.mxu0 0.0
    %8966 = vmatpush2.msra.mxu0 %v8691
    %8967 = vmatprep.subr.mxu0 0.0
    %8968 = vmatpush2.msra.mxu0 %v8690
    %8969 = vmatprep.subr.mxu0 0.0
    %8970 = vmatpush2.msra.mxu0 %v8689
    %8971 = vmatprep.subr.mxu0 0.0
    %8972 = vmatpush2.msra.mxu0 %v8688
    %8973 = vmatprep.subr.mxu0 0.0
    %8974 = vmatpush2.msra.mxu0 %v8687
    %8975 = vmatprep.subr.mxu0 0.0
    %8976 = vmatpush2.msra.mxu0 %v8686
    %8977 = vmatprep.subr.mxu0 0.0
    %8978 = vmatpush2.msra.mxu0 %v8685
    %8979 = vmatprep.subr.mxu0 0.0
    %8980 = vmatpush2.msra.mxu0 %v8684
    %8981 = vmatprep.mubr.f32.mxu0 %v8571
    %8982 = vmatmul.mubr.f32.gmra.mxu0 %v8570
    %v8983 = vpop.f32.mrf.mxu0
    %v8984 = vadd.f32 %v8914, %v8983
    %v8985 = vpop.f32.mrf.mxu0
    %8986 = vdwg.mxu0
    %vm8987 = vcmask 31744
    %8988 = vst.msk [vmem:[%s14] sm:$0xff] %vm8987, %v8984
    // Predicated region
    $region110: #{tpu_custom_call.1} parent=1 // pred_check
      _
    $region111: #{tpu_custom_call.1} parent=1 // pred_check_branch
      %8990 = sbr.rel (0) target = $region113
    $region112: #{tpu_custom_call.1} parent=1 // pred_region
      %s8992 = ssub.s32 128, 128
      %8993 = vsyncadd [#allocation7], %s8992
      %s8995 = sshll.u32 [#allocation19], 4
      %s8996 = int_to_ptr.vmem [resolvable:$true] %s8995
      %8998 = dma.vmem_to_hbm [thread:$0]  %s8996, 128, %s13, [#allocation7]
    $region113: #{tpu_custom_call.1} parent=1 // pred_fallthru
      _
    // Predicated region
    $region114: #{tpu_custom_call.1} parent=1 // pred_check
      _
    $region115: #{tpu_custom_call.1} parent=1 // pred_check_branch
      %9000 = sbr.rel (0) target = $region117
    $region116: #{tpu_custom_call.1} parent=1 // pred_region
      _
    $region117: #{tpu_custom_call.1} parent=1 // pred_fallthru
      _
    // Predicated region
    $region118: #{tpu_custom_call.1} parent=1 // pred_check
      _
    $region119: #{tpu_custom_call.1} parent=1 // pred_check_branch
      %9002 = sbr.rel (0) target = $region121
    $region120: #{tpu_custom_call.1} parent=1 // pred_region
      %9003 = dma.done [#allocation7], 128
    $region121: #{tpu_custom_call.1} parent=1 // pred_fallthru
      _
    // Predicated region
    $region122: #{tpu_custom_call.1} parent=1 // pred_check
      _
    $region123: #{tpu_custom_call.1} parent=1 // pred_check_branch
      %9005 = sbr.rel (0) target = $region125
    $region124: #{tpu_custom_call.1} parent=1 // pred_region
      _
    $region125: #{tpu_custom_call.1} parent=1 // pred_fallthru
      _
    %9006 = vsyncpa [#allocation6], 1
    %9007 = vsyncpa [#allocation9], 1
    %9008 = vsyncpa [#allocation12], 1
    %9009 = vsyncpa [#allocation15], 1
    %9010 = vsyncpa [#allocation18], 1
    %9011 = vsyncpa [#allocation7], 1
  %9012 = vsyncmov [#allocation4]
  %s9013 = vpop.sfrf %9012
  %p9014 = scmp.eq.s32.totalorder %s9013, 0
  %p9015 = pneg %p9014
  %9017 = shalt.err (%p9015)
  %s9018 = scalar_lea.sflag [#allocation4], 1
  %9019 = vsyncmov %s9018
  %s9020 = vpop.sfrf %9019
  %p9021 = scmp.eq.s32.totalorder %s9020, 0
  %p9022 = pneg %p9021
  %9024 = shalt.err (%p9022)

</llo_original>
